<compile_context>
chip_gen: v5e
topology: v5e:2x2
jax: 0.10.0
libtpu: 0.0.40
codegen_flags: <defaults>
</compile_context>

<pallas_src>
import jax
import jax.numpy as jnp
import numpy as np
from jax import lax
from jax.experimental import pallas as pl
from jax.experimental.pallas import tpu as pltpu

HIGH = lax.Precision.HIGHEST


# ---------------------------- fused Pallas kernel ----------------------------

def _cnn_fused_kernel(a1_ref, w1b_ref, w2b_ref, b2_ref, fw1_ref, fb1_ref,
                      fw2_ref, fb2_ref, o_ref):
    f32 = jnp.float32
    bf16 = jnp.bfloat16
    n = o_ref.shape[0]                           # images in this batch tile

    # ---- conv1 (+ bias folded into the banded weight) + ReLU: one MXU GEMM ----------
    # a1 rows: b*32 + y (y<28 valid, 28..31 zero); lanes: ky*30 + ix, plus a ones column.
    # w1b:     [91, 448]; output lanes: x*16 + c  (x<28, c<16).
    c1 = jnp.dot(a1_ref[...], w1b_ref[...], preferred_element_type=f32)
    c1 = jnp.maximum(c1, 0.0)                    # [n*32, 448]; rows y>=28 stay exactly 0

    # ---- maxpool1 2x2 / stride 2  ->  [n*16, 224] (rows b*16+Y, lanes X*16+c) --------
    mx = jnp.maximum(c1[:, :432], c1[:, 16:])    # x-pair max, valid at lanes 32X + c
    px = jnp.concatenate([mx[:, 32 * X:32 * X + 16] for X in range(14)], axis=1)
    p1 = jnp.max(px.reshape(n * 16, 2, 224), axis=1)   # y-pair max; rows 14,15/img are 0

    # ---- conv2 + ReLU: y-im2col (3 row-shifted copies along lanes) + one banded GEMM -
    zrow = jnp.zeros((1, 224), f32)
    above = jnp.concatenate([zrow, p1[:-1, :]], axis=0)   # row Y-1 (zero rows = y-padding)
    below = jnp.concatenate([p1[1:, :], zrow], axis=0)    # row Y+1
    a2 = jnp.concatenate([above, p1, below], axis=1)      # [n*16, 672]
    c2 = jnp.dot(a2.astype(bf16), w2b_ref[...],
                 preferred_element_type=f32) + b2_ref[...]
    c2 = jnp.maximum(c2, 0.0)                    # [n*16, 448]; lanes X*32 + co

    # ---- maxpool2 2x2 / stride 2  ->  [n*8, 224] (rows b*8+Y2, lanes X2*32+co) -------
    mx2 = jnp.maximum(c2[:, :416], c2[:, 32:])   # x-pair max, valid at lanes 64X2 + co
    qx = jnp.concatenate([mx2[:, 64 * X:64 * X + 32] for X in range(7)], axis=1)
    p2 = jnp.max(qx.reshape(n * 8, 2, 224), axis=1)       # [n*8, 224]; row 7/img is junk

    # ---- fc1 + ReLU: flatten each image's 8 pooled rows into lanes -> one GEMM -------
    # fw1 rows for the junk pooled row (Y2==7) are zero, so it never contributes.
    p2_3d = p2.reshape(n, 8, 224)
    p2f = jnp.concatenate([p2_3d[:, j, :] for j in range(8)], axis=1)      # [n, 1792]
    h = jnp.dot(p2f.astype(bf16), fw1_ref[...],
                preferred_element_type=f32) + fb1_ref[...]
    h = jnp.maximum(h, 0.0)                      # [n, 128] f32

    # ---- fc2 (kept f32) on a padded 128-lane class tile + log_softmax ----------------
    logits = jnp.dot(h, fw2_ref[...], preferred_element_type=f32) + fb2_ref[...]
    z = logits - jnp.max(logits, axis=1, keepdims=True)
    lse = jnp.log(jnp.sum(jnp.exp(z), axis=1, keepdims=True))
    o_ref[...] = z - lse


def cnn_forward_pallas(x_nchw, kp, block_b=64):
    """x_nchw: [B, 1, 28, 28] f32; kp: prepared params (see prepare_params)."""
    B = x_nchw.shape[0]
    bb = min(block_b, B)
    bb = max(8, ((bb + 7) // 8) * 8)             # batch tile, multiple of 8
    B_pad = ((B + bb - 1) // bb) * bb

    # Host-side layout glue (cheap, fused by XLA): zero-pad each image to 30x30, build
    # the conv1 y-im2col (3 consecutive padded rows -> 90 lanes) + a ones column (folds
    # the conv1 bias into the GEMM so padding rows stay exactly zero), and give each
    # image 32 GEMM rows (28 valid + 4 zero).
    xp = jnp.pad(x_nchw[:, 0], ((0, B_pad - B), (1, 1), (1, 1)))             # [B_pad,30,30]
    rows = jnp.concatenate([xp[:, 0:28], xp[:, 1:29], xp[:, 2:30]], axis=2)  # [B_pad,28,90]
    ones = jnp.ones((B_pad, 28, 1), xp.dtype)
    a1 = jnp.concatenate([rows, ones], axis=2)                               # [B_pad,28,91]
    a1 = jnp.pad(a1, ((0, 0), (0, 4), (0, 0))).reshape(B_pad * 32, 91)
    a1 = a1.astype(jnp.bfloat16)

    out = pl.pallas_call(
        _cnn_fused_kernel,
        out_shape=jax.ShapeDtypeStruct((B_pad, 128), jnp.float32),
        grid=(B_pad // bb,),
        in_specs=[
            pl.BlockSpec((bb * 32, 91), lambda i: (i, 0)),   # conv1 im2col rows (per-tile)
            pl.BlockSpec((91, 448), lambda i: (0, 0)),       # banded conv1 weight (+bias row)
            pl.BlockSpec((672, 448), lambda i: (0, 0)),      # banded conv2 weight
            pl.BlockSpec((1, 448), lambda i: (0, 0)),        # conv2 bias (tiled over x)
            pl.BlockSpec((1792, 128), lambda i: (0, 0)),     # fc1 weight (pool-layout order)
            pl.BlockSpec((1, 128), lambda i: (0, 0)),        # fc1 bias
            pl.BlockSpec((128, 128), lambda i: (0, 0)),      # fc2 weight (padded classes)
            pl.BlockSpec((1, 128), lambda i: (0, 0)),        # fc2 bias (-1e30 on padding)
        ],
        out_specs=pl.BlockSpec((bb, 128), lambda i: (i, 0)),
        compiler_params=pltpu.CompilerParams(
            dimension_semantics=("parallel",),
            vmem_limit_bytes=32 * 1024 * 1024),
    )(a1, kp["w1b"], kp["w2b"], kp["b2"], kp["fw1"], kp["fb1"], kp["fw2"], kp["fb2"])

    return out[:B, :10]


# ---------------------------- parameter prep (one-time) ----------------------------

def prepare_params(p):
    """Hoist ALL layout plumbing out of the forward path (done once, on the host)."""
    w1 = np.asarray(p["conv1_w"], np.float32)    # [16, 1, 3, 3]  (OIHW)
    b1 = np.asarray(p["conv1_b"], np.float32)
    w2 = np.asarray(p["conv2_w"], np.float32)    # [32, 16, 3, 3]
    b2 = np.asarray(p["conv2_b"], np.float32)

    # conv1 banded weight [91, 448]: rows ky*30 + ix (+ bias row 90), cols x*16 + c.
    w1b = np.zeros((91, 448), np.float32)
    for ky in range(3):
        for kx in range(3):
            for x in range(28):
                w1b[ky * 30 + x + kx, x * 16:(x + 1) * 16] = w1[:, 0, ky, kx]
    for x in range(28):
        w1b[90, x * 16:(x + 1) * 16] = b1        # bias row (pairs with the ones column)

    # conv2 banded weight [672, 448]: rows ky*224 + X'*16 + ci, cols X*32 + co,
    # filled where kx = X' - X + 1 is a valid tap and X' is inside the 14-wide row.
    w2b = np.zeros((672, 448), np.float32)
    for ky in range(3):
        for kx in range(3):
            for X in range(14):
                Xp = X + kx - 1
                if 0 <= Xp < 14:
                    w2b[ky * 224 + Xp * 16: ky * 224 + (Xp + 1) * 16,
                        X * 32:(X + 1) * 32] = w2[:, :, ky, kx].T
    b2t = np.tile(b2, 14).reshape(1, 448)

    # fc1: torch weight [128, 1568] with input index c*49 + Y*7 + X  (NCHW flatten).
    # Re-order once to the kernel's pooled layout Y*224 + X*32 + c, padded to 8 Y-rows
    # (the 8th pooled row per image is junk -> zero weights).
    fw1 = np.asarray(p["fc1_w"], np.float32).reshape(128, 32, 7, 7)
    fw1 = fw1.transpose(2, 3, 1, 0).reshape(7, 224, 128)
    fw1 = np.pad(fw1, ((0, 1), (0, 0), (0, 0))).reshape(1792, 128)
    fb1 = np.asarray(p["fc1_b"], np.float32).reshape(1, 128)

    # fc2: [10, 128] -> [128, 128] (zero-padded classes, f32 for accuracy); padded class
    # biases at -1e30 so they vanish from the in-kernel log_softmax.
    fw2 = np.pad(np.asarray(p["fc2_w"], np.float32).T, ((0, 0), (0, 118)))
    fb2 = np.pad(np.asarray(p["fc2_b"], np.float32), (0, 118),
                 constant_values=-1e30).reshape(1, 128)

    return {"w1b": jnp.asarray(w1b, jnp.bfloat16),
            "w2b": jnp.asarray(w2b, jnp.bfloat16),
            "b2": jnp.asarray(b2t, jnp.float32),
            "fw1": jnp.asarray(fw1, jnp.bfloat16),
            "fb1": jnp.asarray(fb1, jnp.float32),
            "fw2": jnp.asarray(fw2, jnp.float32),
            "fb2": jnp.asarray(fb2, jnp.float32)}


def init_params(key):
    ks = jax.random.split(key, 8)

    def norm(k, shape, fan_in):
        return jax.random.normal(k, shape, jnp.float32) / jnp.sqrt(jnp.float32(fan_in))

    return {
        "conv1_w": norm(ks[0], (16, 1, 3, 3), 9.0),         # OIHW, like PyTorch
        "conv1_b": norm(ks[1], (16,), 9.0),
        "conv2_w": norm(ks[2], (32, 16, 3, 3), 144.0),
        "conv2_b": norm(ks[3], (32,), 144.0),
        "fc1_w": norm(ks[4], (128, 32 * 7 * 7), 1568.0),    # [out, in], like nn.Linear
        "fc1_b": norm(ks[5], (128,), 1568.0),
        "fc2_w": norm(ks[6], (10, 128), 128.0),
        "fc2_b": norm(ks[7], (10,), 128.0),
    }


# ---------------------------- pure-JAX reference ----------------------------

def cnn_forward_reference(x_nchw, p):
    dn = ("NCHW", "OIHW", "NCHW")
    y = lax.conv_general_dilated(x_nchw, p["conv1_w"], (1, 1), ((1, 1), (1, 1)),
                                 dimension_numbers=dn, precision=HIGH)
    y = jnp.maximum(y + p["conv1_b"][None, :, None, None], 0.0)
    B, C, H, W = y.shape
    y = y.reshape(B, C, H // 2, 2, W // 2, 2).max(axis=(3, 5))
    y = lax.conv_general_dilated(y, p["conv2_w"], (1, 1), ((1, 1), (1, 1)),
                                 dimension_numbers=dn, precision=HIGH)
    y = jnp.maximum(y + p["conv2_b"][None, :, None, None], 0.0)
    B, C, H, W = y.shape
    y = y.reshape(B, C, H // 2, 2, W // 2, 2).max(axis=(3, 5))
    flat = y.reshape(B, 32 * 7 * 7)
    h = jnp.maximum(jnp.dot(flat, p["fc1_w"].T, precision=HIGH) + p["fc1_b"], 0.0)
    logits = jnp.dot(h, p["fc2_w"].T, precision=HIGH) + p["fc2_b"]
    return jax.nn.log_softmax(logits, axis=1)


if __name__ == "__main__":
    key = jax.random.PRNGKey(0)
    pkey, xkey = jax.random.split(key)
    params = init_params(pkey)
    kparams = prepare_params(params)     # one-time layout prep, off the forward path

    # MNIST-style input: fc1 size (32*7*7) implies 28x28 spatial, 1 channel.
    x = jax.random.normal(xkey, (6, 1, 28, 28), jnp.float32)

    fwd = jax.jit(cnn_forward_pallas)
    out = jax.block_until_ready(fwd(x, kparams))
    assert out.shape == (6, 10)

    ref = cnn_forward_reference(x, params)
    # bf16 MXU inputs with f32 accumulation -> ~1e-2 deviation on log-probs is expected.
    if not jnp.allclose(out, ref, atol=5e-2, rtol=5e-2):
        raise AssertionError(
            f"Pallas output mismatch vs reference, max abs err = {jnp.max(jnp.abs(out - ref))}")
    print("KERNEL_OK")
</pallas_src>

<mosaic_0001>
module attributes {stable_mosaic.version = 11 : i64} {
  func.func @_cnn_fused_kernel(%arg0: i32, %arg1: memref<256x91xbf16, #tpu.memory_space<vmem>>, %arg2: memref<91x448xbf16, #tpu.memory_space<vmem>>, %arg3: memref<672x448xbf16, #tpu.memory_space<vmem>>, %arg4: memref<1x448xf32, #tpu.memory_space<vmem>>, %arg5: memref<1792x128xbf16, #tpu.memory_space<vmem>>, %arg6: memref<1x128xf32, #tpu.memory_space<vmem>>, %arg7: memref<128x128xf32, #tpu.memory_space<vmem>>, %arg8: memref<1x128xf32, #tpu.memory_space<vmem>>, %arg9: memref<8x128xf32, #tpu.memory_space<vmem>>) attributes {dimension_semantics = [#tpu.dimension_semantics<parallel>], iteration_bounds = array<i64: 1>, scalar_prefetch = 0 : i64, scratch_operands = 0 : i64, tpu.core_type = #tpu.core_type<tc>, window_params = [{transform_indices = @transform_0, window_bounds = array<i64: 256, 91>}, {pipeline_mode = #tpu.pipeline_mode<synchronous>, transform_indices = @transform_1, window_bounds = array<i64: 91, 448>}, {pipeline_mode = #tpu.pipeline_mode<synchronous>, transform_indices = @transform_2, window_bounds = array<i64: 672, 448>}, {pipeline_mode = #tpu.pipeline_mode<synchronous>, transform_indices = @transform_3, window_bounds = array<i64: 1, 448>}, {pipeline_mode = #tpu.pipeline_mode<synchronous>, transform_indices = @transform_4, window_bounds = array<i64: 1792, 128>}, {pipeline_mode = #tpu.pipeline_mode<synchronous>, transform_indices = @transform_5, window_bounds = array<i64: 1, 128>}, {pipeline_mode = #tpu.pipeline_mode<synchronous>, transform_indices = @transform_6, window_bounds = array<i64: 128, 128>}, {pipeline_mode = #tpu.pipeline_mode<synchronous>, transform_indices = @transform_7, window_bounds = array<i64: 1, 128>}, {transform_indices = @transform_8, window_bounds = array<i64: 8, 128>}]} {
    %c0 = arith.constant 0 : index
    %c0_0 = arith.constant 0 : index
    %0 = vector.load %arg1[%c0, %c0_0] : memref<256x91xbf16, #tpu.memory_space<vmem>>, vector<256x91xbf16>
    %c0_1 = arith.constant 0 : index
    %c0_2 = arith.constant 0 : index
    %1 = vector.load %arg2[%c0_1, %c0_2] : memref<91x448xbf16, #tpu.memory_space<vmem>>, vector<91x448xbf16>
    %cst = arith.constant dense<0.000000e+00> : vector<256x448xf32>
    %2 = tpu.matmul %0, %1, %cst {dimension_numbers = #tpu.dot_dimension_numbers<[1], [0], [0], [1], [0, 0, 1, 1], [], []>} : vector<256x91xbf16>, vector<91x448xbf16>, vector<256x448xf32> -> vector<256x448xf32>
    %cst_3 = arith.constant 0.000000e+00 : f32
    %3 = vector.broadcast %cst_3 : f32 to vector<256x448xf32>
    %4 = arith.maximumf %2, %3 : vector<256x448xf32>
    %5 = vector.extract_strided_slice %4 {offsets = [0, 0], sizes = [256, 432], strides = [1, 1]} : vector<256x448xf32> to vector<256x432xf32>
    %6 = vector.extract_strided_slice %4 {offsets = [0, 16], sizes = [256, 432], strides = [1, 1]} : vector<256x448xf32> to vector<256x432xf32>
    %7 = arith.maximumf %5, %6 : vector<256x432xf32>
    %8 = vector.extract_strided_slice %7 {offsets = [0, 0], sizes = [256, 16], strides = [1, 1]} : vector<256x432xf32> to vector<256x16xf32>
    %9 = vector.extract_strided_slice %7 {offsets = [0, 32], sizes = [256, 16], strides = [1, 1]} : vector<256x432xf32> to vector<256x16xf32>
    %10 = vector.extract_strided_slice %7 {offsets = [0, 64], sizes = [256, 16], strides = [1, 1]} : vector<256x432xf32> to vector<256x16xf32>
    %11 = vector.extract_strided_slice %7 {offsets = [0, 96], sizes = [256, 16], strides = [1, 1]} : vector<256x432xf32> to vector<256x16xf32>
    %12 = vector.extract_strided_slice %7 {offsets = [0, 128], sizes = [256, 16], strides = [1, 1]} : vector<256x432xf32> to vector<256x16xf32>
    %13 = vector.extract_strided_slice %7 {offsets = [0, 160], sizes = [256, 16], strides = [1, 1]} : vector<256x432xf32> to vector<256x16xf32>
    %14 = vector.extract_strided_slice %7 {offsets = [0, 192], sizes = [256, 16], strides = [1, 1]} : vector<256x432xf32> to vector<256x16xf32>
    %15 = vector.extract_strided_slice %7 {offsets = [0, 224], sizes = [256, 16], strides = [1, 1]} : vector<256x432xf32> to vector<256x16xf32>
    %16 = vector.extract_strided_slice %7 {offsets = [0, 256], sizes = [256, 16], strides = [1, 1]} : vector<256x432xf32> to vector<256x16xf32>
    %17 = vector.extract_strided_slice %7 {offsets = [0, 288], sizes = [256, 16], strides = [1, 1]} : vector<256x432xf32> to vector<256x16xf32>
    %18 = vector.extract_strided_slice %7 {offsets = [0, 320], sizes = [256, 16], strides = [1, 1]} : vector<256x432xf32> to vector<256x16xf32>
    %19 = vector.extract_strided_slice %7 {offsets = [0, 352], sizes = [256, 16], strides = [1, 1]} : vector<256x432xf32> to vector<256x16xf32>
    %20 = vector.extract_strided_slice %7 {offsets = [0, 384], sizes = [256, 16], strides = [1, 1]} : vector<256x432xf32> to vector<256x16xf32>
    %21 = vector.extract_strided_slice %7 {offsets = [0, 416], sizes = [256, 16], strides = [1, 1]} : vector<256x432xf32> to vector<256x16xf32>
    %22 = tpu.concatenate %8, %9, %10, %11, %12, %13, %14, %15, %16, %17, %18, %19, %20, %21 in 1 : vector<256x16xf32>, vector<256x16xf32>, vector<256x16xf32>, vector<256x16xf32>, vector<256x16xf32>, vector<256x16xf32>, vector<256x16xf32>, vector<256x16xf32>, vector<256x16xf32>, vector<256x16xf32>, vector<256x16xf32>, vector<256x16xf32>, vector<256x16xf32>, vector<256x16xf32> -> vector<256x224xf32>
    %23 = vector.shape_cast %22 : vector<256x224xf32> to vector<128x2x224xf32>
    %cst_4 = arith.constant dense<0xFF800000> : vector<128x224xf32>
    %24 = vector.multi_reduction <maximumf>, %23, %cst_4 [1] : vector<128x2x224xf32> to vector<128x224xf32>
    %cst_5 = arith.constant 0.000000e+00 : f32
    %25 = vector.broadcast %cst_5 : f32 to vector<1x224xf32>
    %26 = vector.extract_strided_slice %24 {offsets = [0, 0], sizes = [127, 224], strides = [1, 1]} : vector<128x224xf32> to vector<127x224xf32>
    %27 = tpu.concatenate %25, %26 in 0 : vector<1x224xf32>, vector<127x224xf32> -> vector<128x224xf32>
    %28 = vector.extract_strided_slice %24 {offsets = [1, 0], sizes = [127, 224], strides = [1, 1]} : vector<128x224xf32> to vector<127x224xf32>
    %29 = tpu.concatenate %28, %25 in 0 : vector<127x224xf32>, vector<1x224xf32> -> vector<128x224xf32>
    %30 = tpu.concatenate %27, %24, %29 in 1 : vector<128x224xf32>, vector<128x224xf32>, vector<128x224xf32> -> vector<128x672xf32>
    %31 = arith.truncf %30 : vector<128x672xf32> to vector<128x672xbf16>
    %c0_6 = arith.constant 0 : index
    %c0_7 = arith.constant 0 : index
    %32 = vector.load %arg3[%c0_6, %c0_7] : memref<672x448xbf16, #tpu.memory_space<vmem>>, vector<672x448xbf16>
    %cst_8 = arith.constant dense<0.000000e+00> : vector<128x448xf32>
    %33 = tpu.matmul %31, %32, %cst_8 {dimension_numbers = #tpu.dot_dimension_numbers<[1], [0], [0], [1], [0, 0, 1, 1], [], []>} : vector<128x672xbf16>, vector<672x448xbf16>, vector<128x448xf32> -> vector<128x448xf32>
    %c0_9 = arith.constant 0 : index
    %c0_10 = arith.constant 0 : index
    %34 = vector.load %arg4[%c0_9, %c0_10] : memref<1x448xf32, #tpu.memory_space<vmem>>, vector<1x448xf32>
    %35 = vector.broadcast %34 : vector<1x448xf32> to vector<128x448xf32>
    %36 = arith.addf %33, %35 : vector<128x448xf32>
    %cst_11 = arith.constant 0.000000e+00 : f32
    %37 = vector.broadcast %cst_11 : f32 to vector<128x448xf32>
    %38 = arith.maximumf %36, %37 : vector<128x448xf32>
    %39 = vector.extract_strided_slice %38 {offsets = [0, 0], sizes = [128, 416], strides = [1, 1]} : vector<128x448xf32> to vector<128x416xf32>
    %40 = vector.extract_strided_slice %38 {offsets = [0, 32], sizes = [128, 416], strides = [1, 1]} : vector<128x448xf32> to vector<128x416xf32>
    %41 = arith.maximumf %39, %40 : vector<128x416xf32>
    %42 = vector.extract_strided_slice %41 {offsets = [0, 0], sizes = [128, 32], strides = [1, 1]} : vector<128x416xf32> to vector<128x32xf32>
    %43 = vector.extract_strided_slice %41 {offsets = [0, 64], sizes = [128, 32], strides = [1, 1]} : vector<128x416xf32> to vector<128x32xf32>
    %44 = vector.extract_strided_slice %41 {offsets = [0, 128], sizes = [128, 32], strides = [1, 1]} : vector<128x416xf32> to vector<128x32xf32>
    %45 = vector.extract_strided_slice %41 {offsets = [0, 192], sizes = [128, 32], strides = [1, 1]} : vector<128x416xf32> to vector<128x32xf32>
    %46 = vector.extract_strided_slice %41 {offsets = [0, 256], sizes = [128, 32], strides = [1, 1]} : vector<128x416xf32> to vector<128x32xf32>
    %47 = vector.extract_strided_slice %41 {offsets = [0, 320], sizes = [128, 32], strides = [1, 1]} : vector<128x416xf32> to vector<128x32xf32>
    %48 = vector.extract_strided_slice %41 {offsets = [0, 384], sizes = [128, 32], strides = [1, 1]} : vector<128x416xf32> to vector<128x32xf32>
    %49 = tpu.concatenate %42, %43, %44, %45, %46, %47, %48 in 1 : vector<128x32xf32>, vector<128x32xf32>, vector<128x32xf32>, vector<128x32xf32>, vector<128x32xf32>, vector<128x32xf32>, vector<128x32xf32> -> vector<128x224xf32>
    %50 = vector.shape_cast %49 : vector<128x224xf32> to vector<64x2x224xf32>
    %cst_12 = arith.constant dense<0xFF800000> : vector<64x224xf32>
    %51 = vector.multi_reduction <maximumf>, %50, %cst_12 [1] : vector<64x2x224xf32> to vector<64x224xf32>
    %52 = vector.shape_cast %51 : vector<64x224xf32> to vector<8x8x224xf32>
    %53 = vector.extract_strided_slice %52 {offsets = [0, 0, 0], sizes = [8, 1, 224], strides = [1, 1, 1]} : vector<8x8x224xf32> to vector<8x1x224xf32>
    %54 = vector.shape_cast %53 : vector<8x1x224xf32> to vector<8x224xf32>
    %55 = vector.extract_strided_slice %52 {offsets = [0, 1, 0], sizes = [8, 1, 224], strides = [1, 1, 1]} : vector<8x8x224xf32> to vector<8x1x224xf32>
    %56 = vector.shape_cast %55 : vector<8x1x224xf32> to vector<8x224xf32>
    %57 = vector.extract_strided_slice %52 {offsets = [0, 2, 0], sizes = [8, 1, 224], strides = [1, 1, 1]} : vector<8x8x224xf32> to vector<8x1x224xf32>
    %58 = vector.shape_cast %57 : vector<8x1x224xf32> to vector<8x224xf32>
    %59 = vector.extract_strided_slice %52 {offsets = [0, 3, 0], sizes = [8, 1, 224], strides = [1, 1, 1]} : vector<8x8x224xf32> to vector<8x1x224xf32>
    %60 = vector.shape_cast %59 : vector<8x1x224xf32> to vector<8x224xf32>
    %61 = vector.extract_strided_slice %52 {offsets = [0, 4, 0], sizes = [8, 1, 224], strides = [1, 1, 1]} : vector<8x8x224xf32> to vector<8x1x224xf32>
    %62 = vector.shape_cast %61 : vector<8x1x224xf32> to vector<8x224xf32>
    %63 = vector.extract_strided_slice %52 {offsets = [0, 5, 0], sizes = [8, 1, 224], strides = [1, 1, 1]} : vector<8x8x224xf32> to vector<8x1x224xf32>
    %64 = vector.shape_cast %63 : vector<8x1x224xf32> to vector<8x224xf32>
    %65 = vector.extract_strided_slice %52 {offsets = [0, 6, 0], sizes = [8, 1, 224], strides = [1, 1, 1]} : vector<8x8x224xf32> to vector<8x1x224xf32>
    %66 = vector.shape_cast %65 : vector<8x1x224xf32> to vector<8x224xf32>
    %67 = vector.extract_strided_slice %52 {offsets = [0, 7, 0], sizes = [8, 1, 224], strides = [1, 1, 1]} : vector<8x8x224xf32> to vector<8x1x224xf32>
    %68 = vector.shape_cast %67 : vector<8x1x224xf32> to vector<8x224xf32>
    %69 = tpu.concatenate %54, %56, %58, %60, %62, %64, %66, %68 in 1 : vector<8x224xf32>, vector<8x224xf32>, vector<8x224xf32>, vector<8x224xf32>, vector<8x224xf32>, vector<8x224xf32>, vector<8x224xf32>, vector<8x224xf32> -> vector<8x1792xf32>
    %70 = arith.truncf %69 : vector<8x1792xf32> to vector<8x1792xbf16>
    %c0_13 = arith.constant 0 : index
    %c0_14 = arith.constant 0 : index
    %71 = vector.load %arg5[%c0_13, %c0_14] : memref<1792x128xbf16, #tpu.memory_space<vmem>>, vector<1792x128xbf16>
    %cst_15 = arith.constant dense<0.000000e+00> : vector<8x128xf32>
    %72 = tpu.matmul %70, %71, %cst_15 {dimension_numbers = #tpu.dot_dimension_numbers<[1], [0], [0], [1], [0, 0, 1, 1], [], []>} : vector<8x1792xbf16>, vector<1792x128xbf16>, vector<8x128xf32> -> vector<8x128xf32>
    %c0_16 = arith.constant 0 : index
    %c0_17 = arith.constant 0 : index
    %73 = vector.load %arg6[%c0_16, %c0_17] : memref<1x128xf32, #tpu.memory_space<vmem>>, vector<1x128xf32>
    %74 = vector.broadcast %73 : vector<1x128xf32> to vector<8x128xf32>
    %75 = arith.addf %72, %74 : vector<8x128xf32>
    %cst_18 = arith.constant 0.000000e+00 : f32
    %76 = vector.broadcast %cst_18 : f32 to vector<8x128xf32>
    %77 = arith.maximumf %75, %76 : vector<8x128xf32>
    %c0_19 = arith.constant 0 : index
    %c0_20 = arith.constant 0 : index
    %78 = vector.load %arg7[%c0_19, %c0_20] : memref<128x128xf32, #tpu.memory_space<vmem>>, vector<128x128xf32>
    %cst_21 = arith.constant dense<0.000000e+00> : vector<8x128xf32>
    %79 = tpu.matmul %77, %78, %cst_21 {dimension_numbers = #tpu.dot_dimension_numbers<[1], [0], [0], [1], [0, 0, 1, 1], [], []>} : vector<8x128xf32>, vector<128x128xf32>, vector<8x128xf32> -> vector<8x128xf32>
    %c0_22 = arith.constant 0 : index
    %c0_23 = arith.constant 0 : index
    %80 = vector.load %arg8[%c0_22, %c0_23] : memref<1x128xf32, #tpu.memory_space<vmem>>, vector<1x128xf32>
    %81 = vector.broadcast %80 : vector<1x128xf32> to vector<8x128xf32>
    %82 = arith.addf %79, %81 : vector<8x128xf32>
    %cst_24 = arith.constant dense<0xFF800000> : vector<8xf32>
    %83 = vector.multi_reduction <maximumf>, %82, %cst_24 [1] : vector<8x128xf32> to vector<8xf32>
    %84 = vector.shape_cast %83 : vector<8xf32> to vector<8x1xf32>
    %85 = vector.broadcast %84 : vector<8x1xf32> to vector<8x128xf32>
    %86 = arith.subf %82, %85 : vector<8x128xf32>
    %87 = math.exp %86 : vector<8x128xf32>
    %cst_25 = arith.constant dense<0.000000e+00> : vector<8xf32>
    %88 = vector.multi_reduction <add>, %87, %cst_25 [1] : vector<8x128xf32> to vector<8xf32>
    %89 = vector.shape_cast %88 : vector<8xf32> to vector<8x1xf32>
    %90 = math.log %89 : vector<8x1xf32>
    %91 = vector.broadcast %90 : vector<8x1xf32> to vector<8x128xf32>
    %92 = arith.subf %86, %91 : vector<8x128xf32>
    %c0_26 = arith.constant 0 : index
    %c0_27 = arith.constant 0 : index
    %93 = vector.load %arg9[%c0_26, %c0_27] : memref<8x128xf32, #tpu.memory_space<vmem>>, vector<8x128xf32>
    tpu.vector_store %arg9[%c0_26, %c0_27], %92 {strides = array<i32>} : memref<8x128xf32, #tpu.memory_space<vmem>>, vector<8x128xf32>,
    return
  }
  func.func @transform_0(%arg0: i32) -> (i32, i32) {
    %c0_i32 = arith.constant 0 : i32
    %c0_i32_0 = arith.constant 0 : i32
    return %arg0, %c0_i32 : i32, i32
  }
  func.func @transform_1(%arg0: i32) -> (i32, i32) {
    %c0_i32 = arith.constant 0 : i32
    %c0_i32_0 = arith.constant 0 : i32
    %c0_i32_1 = arith.constant 0 : i32
    return %c0_i32, %c0_i32_0 : i32, i32
  }
  func.func @transform_2(%arg0: i32) -> (i32, i32) {
    %c0_i32 = arith.constant 0 : i32
    %c0_i32_0 = arith.constant 0 : i32
    %c0_i32_1 = arith.constant 0 : i32
    return %c0_i32, %c0_i32_0 : i32, i32
  }
  func.func @transform_3(%arg0: i32) -> (i32, i32) {
    %c0_i32 = arith.constant 0 : i32
    %c0_i32_0 = arith.constant 0 : i32
    %c0_i32_1 = arith.constant 0 : i32
    return %c0_i32, %c0_i32_0 : i32, i32
  }
  func.func @transform_4(%arg0: i32) -> (i32, i32) {
    %c0_i32 = arith.constant 0 : i32
    %c0_i32_0 = arith.constant 0 : i32
    %c0_i32_1 = arith.constant 0 : i32
    return %c0_i32, %c0_i32_0 : i32, i32
  }
  func.func @transform_5(%arg0: i32) -> (i32, i32) {
    %c0_i32 = arith.constant 0 : i32
    %c0_i32_0 = arith.constant 0 : i32
    %c0_i32_1 = arith.constant 0 : i32
    return %c0_i32, %c0_i32_0 : i32, i32
  }
  func.func @transform_6(%arg0: i32) -> (i32, i32) {
    %c0_i32 = arith.constant 0 : i32
    %c0_i32_0 = arith.constant 0 : i32
    %c0_i32_1 = arith.constant 0 : i32
    return %c0_i32, %c0_i32_0 : i32, i32
  }
  func.func @transform_7(%arg0: i32) -> (i32, i32) {
    %c0_i32 = arith.constant 0 : i32
    %c0_i32_0 = arith.constant 0 : i32
    %c0_i32_1 = arith.constant 0 : i32
    return %c0_i32, %c0_i32_0 : i32, i32
  }
  func.func @transform_8(%arg0: i32) -> (i32, i32) {
    %c0_i32 = arith.constant 0 : i32
    %c0_i32_0 = arith.constant 0 : i32
    return %arg0, %c0_i32 : i32, i32
  }
}

</mosaic_0001>

<llo_original>
// kernel: cnn_forward_pallas.1
$region0: #{cnn_forward_pallas.1}
  #allocation0 [shape = 'u32[]', space=smem, size = 0x4, offset = 0x4, fixed_abs, tag = 'smem constant byte address 0x4 - core index']
  #allocation1 [shape = 'u32[72,128]{1,0:T(1,128)}', space=vmem, size = 0x9000, scoped, tag = 'internal scratch']
  %s0 = inlined_call_operand.vmem [shape: bf16[256,91], index: 0, kind: input, shape index: {}]
  %s1 = inlined_call_operand.vmem [shape: bf16[91,448], index: 1, kind: input, shape index: {}]
  %s2 = inlined_call_operand.vmem [shape: bf16[672,448], index: 2, kind: input, shape index: {}]
  %s3 = inlined_call_operand.vmem [shape: f32[1,448], index: 3, kind: input, shape index: {}]
  %s4 = inlined_call_operand.hbm [shape: bf16[1792,128], index: 4, kind: input, shape index: {}]
  %s5 = inlined_call_operand.vmem [shape: f32[1,128], index: 5, kind: input, shape index: {}]
  %s6 = inlined_call_operand.vmem [shape: f32[128,128], index: 6, kind: input, shape index: {}]
  %s7 = inlined_call_operand.vmem [shape: f32[1,128], index: 7, kind: input, shape index: {}]
  %s8 = inlined_call_operand.hbm [shape: f32[8,128], index: 8, kind: output, shape index: {}]
  %s9 = sld [smem:[#allocation0]]
  $region46: #{cnn_forward_pallas.1} parent=0
    _
  %s11 = ssub.s32 1, %s9
  %s12 = scalar_select 0, %s11, %s9
  $region1: #{cnn_forward_pallas.1} parent=0
    #allocation2 [shape = 'u8[458752]{0}', space=vmem, size = 0x70000, scoped, tag = 'input window, operand 4, single buffered']
    #allocation3 [shape = 's32[1]{0}', space=sflag, size = 0x4, scoped, tag = 'scoped memory for cnn_forward_pallas.1']
    #allocation4 [shape = 's32[1]{0}', space=sflag, size = 0x4, scoped, tag = 'scoped memory for cnn_forward_pallas.1']
    #allocation5 [shape = 'u8[4096]{0}', space=vmem, size = 0x1000, scoped, tag = 'output window, operand 0, single buffered']
    %13 = vsyncpa [#allocation3], 0
    %14 = vsyncpa [#allocation4], 0
    // Predicated region
    $region2: #{cnn_forward_pallas.1} parent=1 // pred_check
      _
    $region3: #{cnn_forward_pallas.1} parent=1 // pred_check_branch
      %16 = sbr.rel (0) target = $region5
    $region4: #{cnn_forward_pallas.1} parent=1 // pred_region
      _
    $region5: #{cnn_forward_pallas.1} parent=1 // pred_fallthru
      _
    // Predicated region
    $region6: #{cnn_forward_pallas.1} parent=1 // pred_check
      _
    $region7: #{cnn_forward_pallas.1} parent=1 // pred_check_branch
      %18 = sbr.rel (0) target = $region9
    $region8: #{cnn_forward_pallas.1} parent=1 // pred_region
      _
    $region9: #{cnn_forward_pallas.1} parent=1 // pred_fallthru
      _
    // Predicated region
    $region10: #{cnn_forward_pallas.1} parent=1 // pred_check
      _
    $region11: #{cnn_forward_pallas.1} parent=1 // pred_check_branch
      %20 = sbr.rel (0) target = $region13
    $region12: #{cnn_forward_pallas.1} parent=1 // pred_region
      _
    $region13: #{cnn_forward_pallas.1} parent=1 // pred_fallthru
      _
    // Predicated region
    $region14: #{cnn_forward_pallas.1} parent=1 // pred_check
      _
    $region15: #{cnn_forward_pallas.1} parent=1 // pred_check_branch
      %22 = sbr.rel (0) target = $region17
    $region16: #{cnn_forward_pallas.1} parent=1 // pred_region
      _
    $region17: #{cnn_forward_pallas.1} parent=1 // pred_fallthru
      _
    // Predicated region
    $region18: #{cnn_forward_pallas.1} parent=1 // pred_check
      _
    $region19: #{cnn_forward_pallas.1} parent=1 // pred_check_branch
      %24 = sbr.rel (0) target = $region21
    $region20: #{cnn_forward_pallas.1} parent=1 // pred_region
      %26 = vsyncadd [#allocation3], 0
      %s27 = sshll.u32 %s4, 4
      %s28 = int_to_ptr.hbm [resolvable:$true] %s27
      %s29 = sshll.u32 [#allocation2], 4
      %s30 = int_to_ptr.vmem [resolvable:$true] %s29
      %35 = dma.hbm_to_vmem [thread:$0]  %s28, 14336, %s30, [#allocation3], 64, 64, 4
    $region21: #{cnn_forward_pallas.1} parent=1 // pred_fallthru
      _
    // Predicated region
    $region22: #{cnn_forward_pallas.1} parent=1 // pred_check
      _
    $region23: #{cnn_forward_pallas.1} parent=1 // pred_check_branch
      %37 = sbr.rel (0) target = $region25
    $region24: #{cnn_forward_pallas.1} parent=1 // pred_region
      _
    $region25: #{cnn_forward_pallas.1} parent=1 // pred_fallthru
      _
    // Predicated region
    $region26: #{cnn_forward_pallas.1} parent=1 // pred_check
      _
    $region27: #{cnn_forward_pallas.1} parent=1 // pred_check_branch
      %39 = sbr.rel (0) target = $region29
    $region28: #{cnn_forward_pallas.1} parent=1 // pred_region
      _
    $region29: #{cnn_forward_pallas.1} parent=1 // pred_fallthru
      _
    // Predicated region
    $region30: #{cnn_forward_pallas.1} parent=1 // pred_check
      _
    $region31: #{cnn_forward_pallas.1} parent=1 // pred_check_branch
      %41 = sbr.rel (0) target = $region33
    $region32: #{cnn_forward_pallas.1} parent=1 // pred_region
      _
    $region33: #{cnn_forward_pallas.1} parent=1 // pred_fallthru
      _
    // Predicated region
    $region34: #{cnn_forward_pallas.1} parent=1 // pred_check
      _
    $region35: #{cnn_forward_pallas.1} parent=1 // pred_check_branch
      %43 = sbr.rel (0) target = $region37
    $region36: #{cnn_forward_pallas.1} parent=1 // pred_region
      %45 = dma.done [#allocation3], 14336
    $region37: #{cnn_forward_pallas.1} parent=1 // pred_fallthru
      _
    %v47 = vld [vmem:[%s0] sm:$0xf]
    %v48 = vld [vmem:[%s0 + $0x4] sm:$0xf]
    %v49 = vld [vmem:[%s0 + $0x8] sm:$0xf]
    %v50 = vld [vmem:[%s0 + $0xc] sm:$0xf]
    %v51 = vld [vmem:[%s0 + $0x10] sm:$0xf]
    %v52 = vld [vmem:[%s0 + $0x14] sm:$0xf]
    %v53 = vld [vmem:[%s0 + $0x18] sm:$0xf]
    %v54 = vld [vmem:[%s0 + $0x1c] sm:$0xf]
    %v55 = vld [vmem:[%s0 + $0x20] sm:$0xf]
    %v56 = vld [vmem:[%s0 + $0x24] sm:$0xf]
    %v57 = vld [vmem:[%s0 + $0x28] sm:$0xf]
    %v58 = vld [vmem:[%s0 + $0x2c] sm:$0xf]
    %v59 = vld [vmem:[%s0 + $0x30] sm:$0xf]
    %v60 = vld [vmem:[%s0 + $0x34] sm:$0xf]
    %v61 = vld [vmem:[%s0 + $0x38] sm:$0xf]
    %v62 = vld [vmem:[%s0 + $0x3c] sm:$0xf]
    %v63 = vld [vmem:[%s0 + $0x40] sm:$0xf]
    %v64 = vld [vmem:[%s0 + $0x44] sm:$0xf]
    %v65 = vld [vmem:[%s0 + $0x48] sm:$0xf]
    %v66 = vld [vmem:[%s0 + $0x4c] sm:$0xf]
    %v67 = vld [vmem:[%s0 + $0x50] sm:$0xf]
    %v68 = vld [vmem:[%s0 + $0x54] sm:$0xf]
    %v69 = vld [vmem:[%s0 + $0x58] sm:$0xf]
    %v70 = vld [vmem:[%s0 + $0x5c] sm:$0xf]
    %v71 = vld [vmem:[%s0 + $0x60] sm:$0xf]
    %v72 = vld [vmem:[%s0 + $0x64] sm:$0xf]
    %v73 = vld [vmem:[%s0 + $0x68] sm:$0xf]
    %v74 = vld [vmem:[%s0 + $0x6c] sm:$0xf]
    %v75 = vld [vmem:[%s0 + $0x70] sm:$0xf]
    %v76 = vld [vmem:[%s0 + $0x74] sm:$0xf]
    %v77 = vld [vmem:[%s0 + $0x78] sm:$0xf]
    %v78 = vld [vmem:[%s0 + $0x7c] sm:$0xf]
    %v79 = vld [vmem:[%s1] sm:$0xff]
    %v80 = vld [vmem:[%s1 + $0x8] sm:$0xff]
    %v81 = vld [vmem:[%s1 + $0x10] sm:$0xff]
    %v82 = vld [vmem:[%s1 + $0x18] sm:$0xff]
    %v83 = vld [vmem:[%s1 + $0x20] sm:$0xff]
    %v84 = vld [vmem:[%s1 + $0x28] sm:$0xff]
    %v85 = vld [vmem:[%s1 + $0x30] sm:$0xff]
    %v86 = vld [vmem:[%s1 + $0x38] sm:$0xff]
    %v87 = vld [vmem:[%s1 + $0x40] sm:$0xff]
    %v88 = vld [vmem:[%s1 + $0x48] sm:$0xff]
    %v89 = vld [vmem:[%s1 + $0x50] sm:$0xff]
    %v90 = vld [vmem:[%s1 + $0x58] sm:$0xff]
    %v91 = vld [vmem:[%s1 + $0x60] sm:$0xff]
    %v92 = vld [vmem:[%s1 + $0x68] sm:$0xff]
    %v93 = vld [vmem:[%s1 + $0x70] sm:$0xff]
    %v94 = vld [vmem:[%s1 + $0x78] sm:$0xff]
    %v95 = vld [vmem:[%s1 + $0x80] sm:$0xff]
    %v96 = vld [vmem:[%s1 + $0x88] sm:$0xff]
    %v97 = vld [vmem:[%s1 + $0x90] sm:$0xff]
    %v98 = vld [vmem:[%s1 + $0x98] sm:$0xff]
    %v99 = vld [vmem:[%s1 + $0xa0] sm:$0xff]
    %v100 = vld [vmem:[%s1 + $0xa8] sm:$0xff]
    %v101 = vld [vmem:[%s1 + $0xb0] sm:$0x33]
    %v102 = vld [vmem:[%s1 + $0xb8] sm:$0x33]
    %v135 = vunpack.c.l.b16 %v47
    %v136 = vunpack.c.l.b16 %v48
    %v137 = vunpack.c.l.b16 %v49
    %v138 = vunpack.c.l.b16 %v50
    %v139 = vunpack.c.l.b16 %v51
    %v140 = vunpack.c.l.b16 %v52
    %v141 = vunpack.c.l.b16 %v53
    %v142 = vunpack.c.l.b16 %v54
    %v143 = vunpack.c.l.b16 %v55
    %v144 = vunpack.c.l.b16 %v56
    %v145 = vunpack.c.l.b16 %v57
    %v146 = vunpack.c.l.b16 %v58
    %v147 = vunpack.c.l.b16 %v59
    %v148 = vunpack.c.l.b16 %v60
    %v149 = vunpack.c.l.b16 %v61
    %v150 = vunpack.c.l.b16 %v62
    %v151 = vunpack.c.l.b16 %v63
    %v152 = vunpack.c.l.b16 %v64
    %v153 = vunpack.c.l.b16 %v65
    %v154 = vunpack.c.l.b16 %v66
    %v155 = vunpack.c.l.b16 %v67
    %v156 = vunpack.c.l.b16 %v68
    %v157 = vunpack.c.l.b16 %v69
    %v158 = vunpack.c.l.b16 %v70
    %v159 = vunpack.c.l.b16 %v71
    %v160 = vunpack.c.l.b16 %v72
    %v161 = vunpack.c.l.b16 %v73
    %v162 = vunpack.c.l.b16 %v74
    %v163 = vunpack.c.l.b16 %v75
    %v164 = vunpack.c.l.b16 %v76
    %v165 = vunpack.c.l.b16 %v77
    %v166 = vunpack.c.l.b16 %v78
    %v167 = vpack.c.b16 %v136, %v135
    %v168 = vpack.c.b16 %v138, %v137
    %v169 = vpack.c.b16 %v140, %v139
    %v170 = vpack.c.b16 %v142, %v141
    %v171 = vpack.c.b16 %v144, %v143
    %v172 = vpack.c.b16 %v146, %v145
    %v173 = vpack.c.b16 %v148, %v147
    %v174 = vpack.c.b16 %v150, %v149
    %v175 = vpack.c.b16 %v152, %v151
    %v176 = vpack.c.b16 %v154, %v153
    %v177 = vpack.c.b16 %v156, %v155
    %v178 = vpack.c.b16 %v158, %v157
    %v179 = vpack.c.b16 %v160, %v159
    %v180 = vpack.c.b16 %v162, %v161
    %v181 = vpack.c.b16 %v164, %v163
    %v182 = vpack.c.b16 %v166, %v165
    %v207 = vunpack.c.l.b16 %v79
    %v208 = vunpack.c.h.b16 %v79
    %v209 = vunpack.c.l.b16 %v80
    %v210 = vunpack.c.h.b16 %v80
    %v211 = vunpack.c.l.b16 %v81
    %v212 = vunpack.c.h.b16 %v81
    %v213 = vunpack.c.l.b16 %v82
    %v214 = vunpack.c.h.b16 %v82
    %v215 = vunpack.c.l.b16 %v83
    %v216 = vunpack.c.h.b16 %v83
    %v217 = vunpack.c.l.b16 %v84
    %v218 = vunpack.c.h.b16 %v84
    %v219 = vunpack.c.l.b16 %v85
    %v220 = vunpack.c.h.b16 %v85
    %v221 = vunpack.c.l.b16 %v86
    %v222 = vunpack.c.h.b16 %v86
    %v223 = vunpack.c.l.b16 %v87
    %v224 = vunpack.c.h.b16 %v87
    %v225 = vunpack.c.l.b16 %v88
    %v226 = vunpack.c.h.b16 %v88
    %v227 = vunpack.c.l.b16 %v89
    %v228 = vunpack.c.h.b16 %v89
    %v229 = vunpack.c.l.b16 %v90
    %v230 = vunpack.c.h.b16 %v90
    %v231 = vunpack.c.l.b16 %v91
    %v232 = vunpack.c.h.b16 %v91
    %v233 = vunpack.c.l.b16 %v92
    %v234 = vunpack.c.h.b16 %v92
    %v235 = vunpack.c.l.b16 %v93
    %v236 = vunpack.c.h.b16 %v93
    %v237 = vunpack.c.l.b16 %v94
    %v238 = vunpack.c.h.b16 %v94
    %v239 = vunpack.c.l.b16 %v95
    %v240 = vunpack.c.h.b16 %v95
    %v241 = vunpack.c.l.b16 %v96
    %v242 = vunpack.c.h.b16 %v96
    %v243 = vunpack.c.l.b16 %v97
    %v244 = vunpack.c.h.b16 %v97
    %v245 = vunpack.c.l.b16 %v98
    %v246 = vunpack.c.h.b16 %v98
    %v247 = vunpack.c.l.b16 %v99
    %v248 = vunpack.c.h.b16 %v99
    %v249 = vunpack.c.l.b16 %v100
    %v250 = vunpack.c.h.b16 %v100
    %v251 = vunpack.c.l.b16 %v101
    %v252 = vunpack.c.h.b16 %v101
    %v253 = vunpack.c.l.b16 %v102
    %v254 = vunpack.c.h.b16 %v102
    %v255 = vpack.c.b16 %v211, %v207
    %v256 = vpack.c.b16 %v212, %v208
    %v257 = vpack.c.b16 %v213, %v209
    %v258 = vpack.c.b16 %v214, %v210
    %v259 = vpack.c.b16 %v219, %v215
    %v260 = vpack.c.b16 %v220, %v216
    %v261 = vpack.c.b16 %v221, %v217
    %v262 = vpack.c.b16 %v222, %v218
    %v263 = vpack.c.b16 %v227, %v223
    %v264 = vpack.c.b16 %v228, %v224
    %v265 = vpack.c.b16 %v229, %v225
    %v266 = vpack.c.b16 %v230, %v226
    %v267 = vpack.c.b16 %v235, %v231
    %v268 = vpack.c.b16 %v236, %v232
    %v269 = vpack.c.b16 %v237, %v233
    %v270 = vpack.c.b16 %v238, %v234
    %v271 = vpack.c.b16 %v243, %v239
    %v272 = vpack.c.b16 %v244, %v240
    %v273 = vpack.c.b16 %v245, %v241
    %v274 = vpack.c.b16 %v246, %v242
    %v275 = vpack.c.b16 %v251, %v247
    %v276 = vpack.c.b16 %v252, %v248
    %v277 = vpack.c.b16 %v253, %v249
    %v278 = vpack.c.b16 %v254, %v250
    %vm299 = vcmask 744448
    %v301 = vsel %vm299, %v167, 0
    %v304 = vsel %vm299, %v168, 0
    %v307 = vsel %vm299, %v169, 0
    %v310 = vsel %vm299, %v170, 0
    %v313 = vsel %vm299, %v171, 0
    %v316 = vsel %vm299, %v172, 0
    %v319 = vsel %vm299, %v173, 0
    %v322 = vsel %vm299, %v174, 0
    %v325 = vsel %vm299, %v175, 0
    %v328 = vsel %vm299, %v176, 0
    %v331 = vsel %vm299, %v177, 0
    %v334 = vsel %vm299, %v178, 0
    %v337 = vsel %vm299, %v179, 0
    %v340 = vsel %vm299, %v180, 0
    %v343 = vsel %vm299, %v181, 0
    %v346 = vsel %vm299, %v182, 0
    %vm348 = vcmask 1044480
    %vm349 = vcmask 1045504
    %v350 = vsel %vm348, 4294967295, 65535
    %v351 = vsel %vm349, %v350, 0
    %v353 = vand.u32 %v275, %v351
    %v356 = vand.u32 %v276, %v351
    %v359 = vand.u32 %v277, %v351
    %v362 = vand.u32 %v278, %v351
    %364 = vmatpush.bf16.msra.mxu0 0
    %365 = vmatpush.bf16.msra.mxu0 0
    %366 = vmatpush.bf16.msra.mxu0 %v353
    %367 = vmatpush.bf16.msra.mxu0 %v271
    %368 = vmatpush.bf16.msra.mxu0 %v267
    %369 = vmatpush.bf16.msra.mxu0 %v263
    %370 = vmatpush.bf16.msra.mxu0 %v259
    %371 = vmatpush.bf16.msra.mxu0 %v255
    %372 = vmatmul.bf16.gmra.mxu0 %v301
    %v373 = vpop.f32.mrf.mxu0
    %v374 = vadd.f32 0.0, %v373
    %v375 = vpop.f32.mrf.mxu0
    %v376 = vadd.f32 0.0, %v375
    %377 = vmatmul.bf16.gmra.mxu0 %v304
    %v378 = vpop.f32.mrf.mxu0
    %v379 = vadd.f32 0.0, %v378
    %v380 = vpop.f32.mrf.mxu0
    %v381 = vadd.f32 0.0, %v380
    %382 = vmatmul.bf16.gmra.mxu0 %v307
    %v383 = vpop.f32.mrf.mxu0
    %v384 = vadd.f32 0.0, %v383
    %v385 = vpop.f32.mrf.mxu0
    %v386 = vadd.f32 0.0, %v385
    %387 = vmatmul.bf16.gmra.mxu0 %v310
    %v388 = vpop.f32.mrf.mxu0
    %v389 = vadd.f32 0.0, %v388
    %v390 = vpop.f32.mrf.mxu0
    %v391 = vadd.f32 0.0, %v390
    %392 = vmatmul.bf16.gmra.mxu0 %v313
    %v393 = vpop.f32.mrf.mxu0
    %v394 = vadd.f32 0.0, %v393
    %v395 = vpop.f32.mrf.mxu0
    %v396 = vadd.f32 0.0, %v395
    %397 = vmatmul.bf16.gmra.mxu0 %v316
    %v398 = vpop.f32.mrf.mxu0
    %v399 = vadd.f32 0.0, %v398
    %v400 = vpop.f32.mrf.mxu0
    %v401 = vadd.f32 0.0, %v400
    %402 = vmatmul.bf16.gmra.mxu0 %v319
    %v403 = vpop.f32.mrf.mxu0
    %v404 = vadd.f32 0.0, %v403
    %v405 = vpop.f32.mrf.mxu0
    %v406 = vadd.f32 0.0, %v405
    %407 = vmatmul.bf16.gmra.mxu0 %v322
    %v408 = vpop.f32.mrf.mxu0
    %v409 = vadd.f32 0.0, %v408
    %v410 = vpop.f32.mrf.mxu0
    %v411 = vadd.f32 0.0, %v410
    %412 = vmatmul.bf16.gmra.mxu0 %v325
    %v413 = vpop.f32.mrf.mxu0
    %v414 = vadd.f32 0.0, %v413
    %v415 = vpop.f32.mrf.mxu0
    %v416 = vadd.f32 0.0, %v415
    %417 = vmatmul.bf16.gmra.mxu0 %v328
    %v418 = vpop.f32.mrf.mxu0
    %v419 = vadd.f32 0.0, %v418
    %v420 = vpop.f32.mrf.mxu0
    %v421 = vadd.f32 0.0, %v420
    %422 = vmatmul.bf16.gmra.mxu0 %v331
    %v423 = vpop.f32.mrf.mxu0
    %v424 = vadd.f32 0.0, %v423
    %v425 = vpop.f32.mrf.mxu0
    %v426 = vadd.f32 0.0, %v425
    %427 = vmatmul.bf16.gmra.mxu0 %v334
    %v428 = vpop.f32.mrf.mxu0
    %v429 = vadd.f32 0.0, %v428
    %v430 = vpop.f32.mrf.mxu0
    %v431 = vadd.f32 0.0, %v430
    %432 = vmatmul.bf16.gmra.mxu0 %v337
    %v433 = vpop.f32.mrf.mxu0
    %v434 = vadd.f32 0.0, %v433
    %v435 = vpop.f32.mrf.mxu0
    %v436 = vadd.f32 0.0, %v435
    %437 = vmatmul.bf16.gmra.mxu0 %v340
    %v438 = vpop.f32.mrf.mxu0
    %v439 = vadd.f32 0.0, %v438
    %v440 = vpop.f32.mrf.mxu0
    %v441 = vadd.f32 0.0, %v440
    %442 = vmatmul.bf16.gmra.mxu0 %v343
    %v443 = vpop.f32.mrf.mxu0
    %v444 = vadd.f32 0.0, %v443
    %v445 = vpop.f32.mrf.mxu0
    %v446 = vadd.f32 0.0, %v445
    %447 = vmatmul.bf16.gmra.mxu0 %v346
    %v448 = vpop.f32.mrf.mxu0
    %v449 = vadd.f32 0.0, %v448
    %v450 = vpop.f32.mrf.mxu0
    %v451 = vadd.f32 0.0, %v450
    %452 = vdwg.mxu0
    %453 = vmatpush.bf16.msra.mxu0 0
    %454 = vmatpush.bf16.msra.mxu0 0
    %455 = vmatpush.bf16.msra.mxu0 %v356
    %456 = vmatpush.bf16.msra.mxu0 %v272
    %457 = vmatpush.bf16.msra.mxu0 %v268
    %458 = vmatpush.bf16.msra.mxu0 %v264
    %459 = vmatpush.bf16.msra.mxu0 %v260
    %460 = vmatpush.bf16.msra.mxu0 %v256
    %461 = vmatmul.bf16.gmra.mxu0 %v301
    %v462 = vpop.f32.mrf.mxu0
    %v463 = vadd.f32 0.0, %v462
    %v464 = vpop.f32.mrf.mxu0
    %v465 = vadd.f32 0.0, %v464
    %466 = vmatmul.bf16.gmra.mxu0 %v304
    %v467 = vpop.f32.mrf.mxu0
    %v468 = vadd.f32 0.0, %v467
    %v469 = vpop.f32.mrf.mxu0
    %v470 = vadd.f32 0.0, %v469
    %471 = vmatmul.bf16.gmra.mxu0 %v307
    %v472 = vpop.f32.mrf.mxu0
    %v473 = vadd.f32 0.0, %v472
    %v474 = vpop.f32.mrf.mxu0
    %v475 = vadd.f32 0.0, %v474
    %476 = vmatmul.bf16.gmra.mxu0 %v310
    %v477 = vpop.f32.mrf.mxu0
    %v478 = vadd.f32 0.0, %v477
    %v479 = vpop.f32.mrf.mxu0
    %v480 = vadd.f32 0.0, %v479
    %481 = vmatmul.bf16.gmra.mxu0 %v313
    %v482 = vpop.f32.mrf.mxu0
    %v483 = vadd.f32 0.0, %v482
    %v484 = vpop.f32.mrf.mxu0
    %v485 = vadd.f32 0.0, %v484
    %486 = vmatmul.bf16.gmra.mxu0 %v316
    %v487 = vpop.f32.mrf.mxu0
    %v488 = vadd.f32 0.0, %v487
    %v489 = vpop.f32.mrf.mxu0
    %v490 = vadd.f32 0.0, %v489
    %491 = vmatmul.bf16.gmra.mxu0 %v319
    %v492 = vpop.f32.mrf.mxu0
    %v493 = vadd.f32 0.0, %v492
    %v494 = vpop.f32.mrf.mxu0
    %v495 = vadd.f32 0.0, %v494
    %496 = vmatmul.bf16.gmra.mxu0 %v322
    %v497 = vpop.f32.mrf.mxu0
    %v498 = vadd.f32 0.0, %v497
    %v499 = vpop.f32.mrf.mxu0
    %v500 = vadd.f32 0.0, %v499
    %501 = vmatmul.bf16.gmra.mxu0 %v325
    %v502 = vpop.f32.mrf.mxu0
    %v503 = vadd.f32 0.0, %v502
    %v504 = vpop.f32.mrf.mxu0
    %v505 = vadd.f32 0.0, %v504
    %506 = vmatmul.bf16.gmra.mxu0 %v328
    %v507 = vpop.f32.mrf.mxu0
    %v508 = vadd.f32 0.0, %v507
    %v509 = vpop.f32.mrf.mxu0
    %v510 = vadd.f32 0.0, %v509
    %511 = vmatmul.bf16.gmra.mxu0 %v331
    %v512 = vpop.f32.mrf.mxu0
    %v513 = vadd.f32 0.0, %v512
    %v514 = vpop.f32.mrf.mxu0
    %v515 = vadd.f32 0.0, %v514
    %516 = vmatmul.bf16.gmra.mxu0 %v334
    %v517 = vpop.f32.mrf.mxu0
    %v518 = vadd.f32 0.0, %v517
    %v519 = vpop.f32.mrf.mxu0
    %v520 = vadd.f32 0.0, %v519
    %521 = vmatmul.bf16.gmra.mxu0 %v337
    %v522 = vpop.f32.mrf.mxu0
    %v523 = vadd.f32 0.0, %v522
    %v524 = vpop.f32.mrf.mxu0
    %v525 = vadd.f32 0.0, %v524
    %526 = vmatmul.bf16.gmra.mxu0 %v340
    %v527 = vpop.f32.mrf.mxu0
    %v528 = vadd.f32 0.0, %v527
    %v529 = vpop.f32.mrf.mxu0
    %v530 = vadd.f32 0.0, %v529
    %531 = vmatmul.bf16.gmra.mxu0 %v343
    %v532 = vpop.f32.mrf.mxu0
    %v533 = vadd.f32 0.0, %v532
    %v534 = vpop.f32.mrf.mxu0
    %v535 = vadd.f32 0.0, %v534
    %536 = vmatmul.bf16.gmra.mxu0 %v346
    %v537 = vpop.f32.mrf.mxu0
    %v538 = vadd.f32 0.0, %v537
    %v539 = vpop.f32.mrf.mxu0
    %v540 = vadd.f32 0.0, %v539
    %541 = vdwg.mxu0
    %542 = vmatpush.bf16.msra.mxu0 0
    %543 = vmatpush.bf16.msra.mxu0 0
    %544 = vmatpush.bf16.msra.mxu0 %v359
    %545 = vmatpush.bf16.msra.mxu0 %v273
    %546 = vmatpush.bf16.msra.mxu0 %v269
    %547 = vmatpush.bf16.msra.mxu0 %v265
    %548 = vmatpush.bf16.msra.mxu0 %v261
    %549 = vmatpush.bf16.msra.mxu0 %v257
    %550 = vmatmul.bf16.gmra.mxu0 %v301
    %v551 = vpop.f32.mrf.mxu0
    %v552 = vadd.f32 0.0, %v551
    %v553 = vpop.f32.mrf.mxu0
    %v554 = vadd.f32 0.0, %v553
    %555 = vmatmul.bf16.gmra.mxu0 %v304
    %v556 = vpop.f32.mrf.mxu0
    %v557 = vadd.f32 0.0, %v556
    %v558 = vpop.f32.mrf.mxu0
    %v559 = vadd.f32 0.0, %v558
    %560 = vmatmul.bf16.gmra.mxu0 %v307
    %v561 = vpop.f32.mrf.mxu0
    %v562 = vadd.f32 0.0, %v561
    %v563 = vpop.f32.mrf.mxu0
    %v564 = vadd.f32 0.0, %v563
    %565 = vmatmul.bf16.gmra.mxu0 %v310
    %v566 = vpop.f32.mrf.mxu0
    %v567 = vadd.f32 0.0, %v566
    %v568 = vpop.f32.mrf.mxu0
    %v569 = vadd.f32 0.0, %v568
    %570 = vmatmul.bf16.gmra.mxu0 %v313
    %v571 = vpop.f32.mrf.mxu0
    %v572 = vadd.f32 0.0, %v571
    %v573 = vpop.f32.mrf.mxu0
    %v574 = vadd.f32 0.0, %v573
    %575 = vmatmul.bf16.gmra.mxu0 %v316
    %v576 = vpop.f32.mrf.mxu0
    %v577 = vadd.f32 0.0, %v576
    %v578 = vpop.f32.mrf.mxu0
    %v579 = vadd.f32 0.0, %v578
    %580 = vmatmul.bf16.gmra.mxu0 %v319
    %v581 = vpop.f32.mrf.mxu0
    %v582 = vadd.f32 0.0, %v581
    %v583 = vpop.f32.mrf.mxu0
    %v584 = vadd.f32 0.0, %v583
    %585 = vmatmul.bf16.gmra.mxu0 %v322
    %v586 = vpop.f32.mrf.mxu0
    %v587 = vadd.f32 0.0, %v586
    %v588 = vpop.f32.mrf.mxu0
    %v589 = vadd.f32 0.0, %v588
    %590 = vmatmul.bf16.gmra.mxu0 %v325
    %v591 = vpop.f32.mrf.mxu0
    %v592 = vadd.f32 0.0, %v591
    %v593 = vpop.f32.mrf.mxu0
    %v594 = vadd.f32 0.0, %v593
    %595 = vmatmul.bf16.gmra.mxu0 %v328
    %v596 = vpop.f32.mrf.mxu0
    %v597 = vadd.f32 0.0, %v596
    %v598 = vpop.f32.mrf.mxu0
    %v599 = vadd.f32 0.0, %v598
    %600 = vmatmul.bf16.gmra.mxu0 %v331
    %v601 = vpop.f32.mrf.mxu0
    %v602 = vadd.f32 0.0, %v601
    %v603 = vpop.f32.mrf.mxu0
    %v604 = vadd.f32 0.0, %v603
    %605 = vmatmul.bf16.gmra.mxu0 %v334
    %v606 = vpop.f32.mrf.mxu0
    %v607 = vadd.f32 0.0, %v606
    %v608 = vpop.f32.mrf.mxu0
    %v609 = vadd.f32 0.0, %v608
    %610 = vmatmul.bf16.gmra.mxu0 %v337
    %v611 = vpop.f32.mrf.mxu0
    %v612 = vadd.f32 0.0, %v611
    %v613 = vpop.f32.mrf.mxu0
    %v614 = vadd.f32 0.0, %v613
    %615 = vmatmul.bf16.gmra.mxu0 %v340
    %v616 = vpop.f32.mrf.mxu0
    %v617 = vadd.f32 0.0, %v616
    %v618 = vpop.f32.mrf.mxu0
    %v619 = vadd.f32 0.0, %v618
    %620 = vmatmul.bf16.gmra.mxu0 %v343
    %v621 = vpop.f32.mrf.mxu0
    %v622 = vadd.f32 0.0, %v621
    %v623 = vpop.f32.mrf.mxu0
    %v624 = vadd.f32 0.0, %v623
    %625 = vmatmul.bf16.gmra.mxu0 %v346
    %v626 = vpop.f32.mrf.mxu0
    %v627 = vadd.f32 0.0, %v626
    %v628 = vpop.f32.mrf.mxu0
    %v629 = vadd.f32 0.0, %v628
    %630 = vdwg.mxu0
    %631 = vmatpush.bf16.msra.mxu0 0
    %632 = vmatpush.bf16.msra.mxu0 0
    %633 = vmatpush.bf16.msra.mxu0 %v362
    %634 = vmatpush.bf16.msra.mxu0 %v274
    %635 = vmatpush.bf16.msra.mxu0 %v270
    %636 = vmatpush.bf16.msra.mxu0 %v266
    %637 = vmatpush.bf16.msra.mxu0 %v262
    %638 = vmatpush.bf16.msra.mxu0 %v258
    %639 = vmatmul.bf16.gmra.mxu0 %v301
    %v640 = vpop.f32.mrf.mxu0
    %v641 = vadd.f32 0.0, %v640
    %v642 = vpop.f32.mrf.mxu0
    %v643 = vadd.f32 0.0, %v642
    %644 = vmatmul.bf16.gmra.mxu0 %v304
    %v645 = vpop.f32.mrf.mxu0
    %v646 = vadd.f32 0.0, %v645
    %v647 = vpop.f32.mrf.mxu0
    %v648 = vadd.f32 0.0, %v647
    %649 = vmatmul.bf16.gmra.mxu0 %v307
    %v650 = vpop.f32.mrf.mxu0
    %v651 = vadd.f32 0.0, %v650
    %v652 = vpop.f32.mrf.mxu0
    %v653 = vadd.f32 0.0, %v652
    %654 = vmatmul.bf16.gmra.mxu0 %v310
    %v655 = vpop.f32.mrf.mxu0
    %v656 = vadd.f32 0.0, %v655
    %v657 = vpop.f32.mrf.mxu0
    %v658 = vadd.f32 0.0, %v657
    %659 = vmatmul.bf16.gmra.mxu0 %v313
    %v660 = vpop.f32.mrf.mxu0
    %v661 = vadd.f32 0.0, %v660
    %v662 = vpop.f32.mrf.mxu0
    %v663 = vadd.f32 0.0, %v662
    %664 = vmatmul.bf16.gmra.mxu0 %v316
    %v665 = vpop.f32.mrf.mxu0
    %v666 = vadd.f32 0.0, %v665
    %v667 = vpop.f32.mrf.mxu0
    %v668 = vadd.f32 0.0, %v667
    %669 = vmatmul.bf16.gmra.mxu0 %v319
    %v670 = vpop.f32.mrf.mxu0
    %v671 = vadd.f32 0.0, %v670
    %v672 = vpop.f32.mrf.mxu0
    %v673 = vadd.f32 0.0, %v672
    %674 = vmatmul.bf16.gmra.mxu0 %v322
    %v675 = vpop.f32.mrf.mxu0
    %v676 = vadd.f32 0.0, %v675
    %v677 = vpop.f32.mrf.mxu0
    %v678 = vadd.f32 0.0, %v677
    %679 = vmatmul.bf16.gmra.mxu0 %v325
    %v680 = vpop.f32.mrf.mxu0
    %v681 = vadd.f32 0.0, %v680
    %v682 = vpop.f32.mrf.mxu0
    %v683 = vadd.f32 0.0, %v682
    %684 = vmatmul.bf16.gmra.mxu0 %v328
    %v685 = vpop.f32.mrf.mxu0
    %v686 = vadd.f32 0.0, %v685
    %v687 = vpop.f32.mrf.mxu0
    %v688 = vadd.f32 0.0, %v687
    %689 = vmatmul.bf16.gmra.mxu0 %v331
    %v690 = vpop.f32.mrf.mxu0
    %v691 = vadd.f32 0.0, %v690
    %v692 = vpop.f32.mrf.mxu0
    %v693 = vadd.f32 0.0, %v692
    %694 = vmatmul.bf16.gmra.mxu0 %v334
    %v695 = vpop.f32.mrf.mxu0
    %v696 = vadd.f32 0.0, %v695
    %v697 = vpop.f32.mrf.mxu0
    %v698 = vadd.f32 0.0, %v697
    %699 = vmatmul.bf16.gmra.mxu0 %v337
    %v700 = vpop.f32.mrf.mxu0
    %v701 = vadd.f32 0.0, %v700
    %v702 = vpop.f32.mrf.mxu0
    %v703 = vadd.f32 0.0, %v702
    %704 = vmatmul.bf16.gmra.mxu0 %v340
    %v705 = vpop.f32.mrf.mxu0
    %v706 = vadd.f32 0.0, %v705
    %v707 = vpop.f32.mrf.mxu0
    %v708 = vadd.f32 0.0, %v707
    %709 = vmatmul.bf16.gmra.mxu0 %v343
    %v710 = vpop.f32.mrf.mxu0
    %v711 = vadd.f32 0.0, %v710
    %v712 = vpop.f32.mrf.mxu0
    %v713 = vadd.f32 0.0, %v712
    %714 = vmatmul.bf16.gmra.mxu0 %v346
    %v715 = vpop.f32.mrf.mxu0
    %v716 = vadd.f32 0.0, %v715
    %v717 = vpop.f32.mrf.mxu0
    %v718 = vadd.f32 0.0, %v717
    %719 = vdwg.mxu0
    %v720 = vmax.f32 %v374, 0.0
    %v721 = vmax.f32 %v463, 0.0
    %v722 = vmax.f32 %v552, 0.0
    %v723 = vmax.f32 %v641, 0.0
    %v724 = vmax.f32 %v376, 0.0
    %v725 = vmax.f32 %v465, 0.0
    %v726 = vmax.f32 %v554, 0.0
    %v727 = vmax.f32 %v643, 0.0
    %v728 = vmax.f32 %v379, 0.0
    %v729 = vmax.f32 %v468, 0.0
    %v730 = vmax.f32 %v557, 0.0
    %v731 = vmax.f32 %v646, 0.0
    %v732 = vmax.f32 %v381, 0.0
    %v733 = vmax.f32 %v470, 0.0
    %v734 = vmax.f32 %v559, 0.0
    %v735 = vmax.f32 %v648, 0.0
    %v736 = vmax.f32 %v384, 0.0
    %v737 = vmax.f32 %v473, 0.0
    %v738 = vmax.f32 %v562, 0.0
    %v739 = vmax.f32 %v651, 0.0
    %v740 = vmax.f32 %v386, 0.0
    %v741 = vmax.f32 %v475, 0.0
    %v742 = vmax.f32 %v564, 0.0
    %v743 = vmax.f32 %v653, 0.0
    %v744 = vmax.f32 %v389, 0.0
    %v745 = vmax.f32 %v478, 0.0
    %v746 = vmax.f32 %v567, 0.0
    %v747 = vmax.f32 %v656, 0.0
    %v748 = vmax.f32 %v391, 0.0
    %v749 = vmax.f32 %v480, 0.0
    %v750 = vmax.f32 %v569, 0.0
    %v751 = vmax.f32 %v658, 0.0
    %v752 = vmax.f32 %v394, 0.0
    %v753 = vmax.f32 %v483, 0.0
    %v754 = vmax.f32 %v572, 0.0
    %v755 = vmax.f32 %v661, 0.0
    %v756 = vmax.f32 %v396, 0.0
    %v757 = vmax.f32 %v485, 0.0
    %v758 = vmax.f32 %v574, 0.0
    %v759 = vmax.f32 %v663, 0.0
    %v760 = vmax.f32 %v399, 0.0
    %v761 = vmax.f32 %v488, 0.0
    %v762 = vmax.f32 %v577, 0.0
    %v763 = vmax.f32 %v666, 0.0
    %v764 = vmax.f32 %v401, 0.0
    %v765 = vmax.f32 %v490, 0.0
    %v766 = vmax.f32 %v579, 0.0
    %v767 = vmax.f32 %v668, 0.0
    %v768 = vmax.f32 %v404, 0.0
    %v769 = vmax.f32 %v493, 0.0
    %v770 = vmax.f32 %v582, 0.0
    %v771 = vmax.f32 %v671, 0.0
    %v772 = vmax.f32 %v406, 0.0
    %v773 = vmax.f32 %v495, 0.0
    %v774 = vmax.f32 %v584, 0.0
    %v775 = vmax.f32 %v673, 0.0
    %v776 = vmax.f32 %v409, 0.0
    %v777 = vmax.f32 %v498, 0.0
    %v778 = vmax.f32 %v587, 0.0
    %v779 = vmax.f32 %v676, 0.0
    %v780 = vmax.f32 %v411, 0.0
    %v781 = vmax.f32 %v500, 0.0
    %v782 = vmax.f32 %v589, 0.0
    %v783 = vmax.f32 %v678, 0.0
    %v784 = vmax.f32 %v414, 0.0
    %v785 = vmax.f32 %v503, 0.0
    %v786 = vmax.f32 %v592, 0.0
    %v787 = vmax.f32 %v681, 0.0
    %v788 = vmax.f32 %v416, 0.0
    %v789 = vmax.f32 %v505, 0.0
    %v790 = vmax.f32 %v594, 0.0
    %v791 = vmax.f32 %v683, 0.0
    %v792 = vmax.f32 %v419, 0.0
    %v793 = vmax.f32 %v508, 0.0
    %v794 = vmax.f32 %v597, 0.0
    %v795 = vmax.f32 %v686, 0.0
    %v796 = vmax.f32 %v421, 0.0
    %v797 = vmax.f32 %v510, 0.0
    %v798 = vmax.f32 %v599, 0.0
    %v799 = vmax.f32 %v688, 0.0
    %v800 = vmax.f32 %v424, 0.0
    %v801 = vmax.f32 %v513, 0.0
    %v802 = vmax.f32 %v602, 0.0
    %v803 = vmax.f32 %v691, 0.0
    %v804 = vmax.f32 %v426, 0.0
    %v805 = vmax.f32 %v515, 0.0
    %v806 = vmax.f32 %v604, 0.0
    %v807 = vmax.f32 %v693, 0.0
    %v808 = vmax.f32 %v429, 0.0
    %v809 = vmax.f32 %v518, 0.0
    %v810 = vmax.f32 %v607, 0.0
    %v811 = vmax.f32 %v696, 0.0
    %v812 = vmax.f32 %v431, 0.0
    %v813 = vmax.f32 %v520, 0.0
    %v814 = vmax.f32 %v609, 0.0
    %v815 = vmax.f32 %v698, 0.0
    %v816 = vmax.f32 %v434, 0.0
    %v817 = vmax.f32 %v523, 0.0
    %v818 = vmax.f32 %v612, 0.0
    %v819 = vmax.f32 %v701, 0.0
    %v820 = vmax.f32 %v436, 0.0
    %v821 = vmax.f32 %v525, 0.0
    %v822 = vmax.f32 %v614, 0.0
    %v823 = vmax.f32 %v703, 0.0
    %v824 = vmax.f32 %v439, 0.0
    %v825 = vmax.f32 %v528, 0.0
    %v826 = vmax.f32 %v617, 0.0
    %v827 = vmax.f32 %v706, 0.0
    %v828 = vmax.f32 %v441, 0.0
    %v829 = vmax.f32 %v530, 0.0
    %v830 = vmax.f32 %v619, 0.0
    %v831 = vmax.f32 %v708, 0.0
    %v832 = vmax.f32 %v444, 0.0
    %v833 = vmax.f32 %v533, 0.0
    %v834 = vmax.f32 %v622, 0.0
    %v835 = vmax.f32 %v711, 0.0
    %v836 = vmax.f32 %v446, 0.0
    %v837 = vmax.f32 %v535, 0.0
    %v838 = vmax.f32 %v624, 0.0
    %v839 = vmax.f32 %v713, 0.0
    %v840 = vmax.f32 %v449, 0.0
    %v841 = vmax.f32 %v538, 0.0
    %v842 = vmax.f32 %v627, 0.0
    %v843 = vmax.f32 %v716, 0.0
    %v844 = vmax.f32 %v451, 0.0
    %v845 = vmax.f32 %v540, 0.0
    %v846 = vmax.f32 %v629, 0.0
    %v847 = vmax.f32 %v718, 0.0
    %976 = vrot.lane.b32.xlu0 %v720, 112
    %v977 = vpop.permute.xlu0 %976
    %978 = vrot.lane.b32.xlu0 %v721, 112
    %v979 = vpop.permute.xlu0 %978
    %980 = vrot.lane.b32.xlu0 %v722, 112
    %v981 = vpop.permute.xlu0 %980
    %982 = vrot.lane.b32.xlu0 %v723, 112
    %v983 = vpop.permute.xlu0 %982
    %984 = vrot.lane.b32.xlu0 %v724, 112
    %v985 = vpop.permute.xlu0 %984
    %986 = vrot.lane.b32.xlu0 %v725, 112
    %v987 = vpop.permute.xlu0 %986
    %988 = vrot.lane.b32.xlu0 %v726, 112
    %v989 = vpop.permute.xlu0 %988
    %990 = vrot.lane.b32.xlu0 %v727, 112
    %v991 = vpop.permute.xlu0 %990
    %992 = vrot.lane.b32.xlu0 %v728, 112
    %v993 = vpop.permute.xlu0 %992
    %994 = vrot.lane.b32.xlu0 %v729, 112
    %v995 = vpop.permute.xlu0 %994
    %996 = vrot.lane.b32.xlu0 %v730, 112
    %v997 = vpop.permute.xlu0 %996
    %998 = vrot.lane.b32.xlu0 %v731, 112
    %v999 = vpop.permute.xlu0 %998
    %1000 = vrot.lane.b32.xlu0 %v732, 112
    %v1001 = vpop.permute.xlu0 %1000
    %1002 = vrot.lane.b32.xlu0 %v733, 112
    %v1003 = vpop.permute.xlu0 %1002
    %1004 = vrot.lane.b32.xlu0 %v734, 112
    %v1005 = vpop.permute.xlu0 %1004
    %1006 = vrot.lane.b32.xlu0 %v735, 112
    %v1007 = vpop.permute.xlu0 %1006
    %1008 = vrot.lane.b32.xlu0 %v736, 112
    %v1009 = vpop.permute.xlu0 %1008
    %1010 = vrot.lane.b32.xlu0 %v737, 112
    %v1011 = vpop.permute.xlu0 %1010
    %1012 = vrot.lane.b32.xlu0 %v738, 112
    %v1013 = vpop.permute.xlu0 %1012
    %1014 = vrot.lane.b32.xlu0 %v739, 112
    %v1015 = vpop.permute.xlu0 %1014
    %1016 = vrot.lane.b32.xlu0 %v740, 112
    %v1017 = vpop.permute.xlu0 %1016
    %1018 = vrot.lane.b32.xlu0 %v741, 112
    %v1019 = vpop.permute.xlu0 %1018
    %1020 = vrot.lane.b32.xlu0 %v742, 112
    %v1021 = vpop.permute.xlu0 %1020
    %1022 = vrot.lane.b32.xlu0 %v743, 112
    %v1023 = vpop.permute.xlu0 %1022
    %1024 = vrot.lane.b32.xlu0 %v744, 112
    %v1025 = vpop.permute.xlu0 %1024
    %1026 = vrot.lane.b32.xlu0 %v745, 112
    %v1027 = vpop.permute.xlu0 %1026
    %1028 = vrot.lane.b32.xlu0 %v746, 112
    %v1029 = vpop.permute.xlu0 %1028
    %1030 = vrot.lane.b32.xlu0 %v747, 112
    %v1031 = vpop.permute.xlu0 %1030
    %1032 = vrot.lane.b32.xlu0 %v748, 112
    %v1033 = vpop.permute.xlu0 %1032
    %1034 = vrot.lane.b32.xlu0 %v749, 112
    %v1035 = vpop.permute.xlu0 %1034
    %1036 = vrot.lane.b32.xlu0 %v750, 112
    %v1037 = vpop.permute.xlu0 %1036
    %1038 = vrot.lane.b32.xlu0 %v751, 112
    %v1039 = vpop.permute.xlu0 %1038
    %1040 = vrot.lane.b32.xlu0 %v752, 112
    %v1041 = vpop.permute.xlu0 %1040
    %1042 = vrot.lane.b32.xlu0 %v753, 112
    %v1043 = vpop.permute.xlu0 %1042
    %1044 = vrot.lane.b32.xlu0 %v754, 112
    %v1045 = vpop.permute.xlu0 %1044
    %1046 = vrot.lane.b32.xlu0 %v755, 112
    %v1047 = vpop.permute.xlu0 %1046
    %1048 = vrot.lane.b32.xlu0 %v756, 112
    %v1049 = vpop.permute.xlu0 %1048
    %1050 = vrot.lane.b32.xlu0 %v757, 112
    %v1051 = vpop.permute.xlu0 %1050
    %1052 = vrot.lane.b32.xlu0 %v758, 112
    %v1053 = vpop.permute.xlu0 %1052
    %1054 = vrot.lane.b32.xlu0 %v759, 112
    %v1055 = vpop.permute.xlu0 %1054
    %1056 = vrot.lane.b32.xlu0 %v760, 112
    %v1057 = vpop.permute.xlu0 %1056
    %1058 = vrot.lane.b32.xlu0 %v761, 112
    %v1059 = vpop.permute.xlu0 %1058
    %1060 = vrot.lane.b32.xlu0 %v762, 112
    %v1061 = vpop.permute.xlu0 %1060
    %1062 = vrot.lane.b32.xlu0 %v763, 112
    %v1063 = vpop.permute.xlu0 %1062
    %1064 = vrot.lane.b32.xlu0 %v764, 112
    %v1065 = vpop.permute.xlu0 %1064
    %1066 = vrot.lane.b32.xlu0 %v765, 112
    %v1067 = vpop.permute.xlu0 %1066
    %1068 = vrot.lane.b32.xlu0 %v766, 112
    %v1069 = vpop.permute.xlu0 %1068
    %1070 = vrot.lane.b32.xlu0 %v767, 112
    %v1071 = vpop.permute.xlu0 %1070
    %1072 = vrot.lane.b32.xlu0 %v768, 112
    %v1073 = vpop.permute.xlu0 %1072
    %1074 = vrot.lane.b32.xlu0 %v769, 112
    %v1075 = vpop.permute.xlu0 %1074
    %1076 = vrot.lane.b32.xlu0 %v770, 112
    %v1077 = vpop.permute.xlu0 %1076
    %1078 = vrot.lane.b32.xlu0 %v771, 112
    %v1079 = vpop.permute.xlu0 %1078
    %1080 = vrot.lane.b32.xlu0 %v772, 112
    %v1081 = vpop.permute.xlu0 %1080
    %1082 = vrot.lane.b32.xlu0 %v773, 112
    %v1083 = vpop.permute.xlu0 %1082
    %1084 = vrot.lane.b32.xlu0 %v774, 112
    %v1085 = vpop.permute.xlu0 %1084
    %1086 = vrot.lane.b32.xlu0 %v775, 112
    %v1087 = vpop.permute.xlu0 %1086
    %1088 = vrot.lane.b32.xlu0 %v776, 112
    %v1089 = vpop.permute.xlu0 %1088
    %1090 = vrot.lane.b32.xlu0 %v777, 112
    %v1091 = vpop.permute.xlu0 %1090
    %1092 = vrot.lane.b32.xlu0 %v778, 112
    %v1093 = vpop.permute.xlu0 %1092
    %1094 = vrot.lane.b32.xlu0 %v779, 112
    %v1095 = vpop.permute.xlu0 %1094
    %1096 = vrot.lane.b32.xlu0 %v780, 112
    %v1097 = vpop.permute.xlu0 %1096
    %1098 = vrot.lane.b32.xlu0 %v781, 112
    %v1099 = vpop.permute.xlu0 %1098
    %1100 = vrot.lane.b32.xlu0 %v782, 112
    %v1101 = vpop.permute.xlu0 %1100
    %1102 = vrot.lane.b32.xlu0 %v783, 112
    %v1103 = vpop.permute.xlu0 %1102
    %1104 = vrot.lane.b32.xlu0 %v784, 112
    %v1105 = vpop.permute.xlu0 %1104
    %1106 = vrot.lane.b32.xlu0 %v785, 112
    %v1107 = vpop.permute.xlu0 %1106
    %1108 = vrot.lane.b32.xlu0 %v786, 112
    %v1109 = vpop.permute.xlu0 %1108
    %1110 = vrot.lane.b32.xlu0 %v787, 112
    %v1111 = vpop.permute.xlu0 %1110
    %1112 = vrot.lane.b32.xlu0 %v788, 112
    %v1113 = vpop.permute.xlu0 %1112
    %1114 = vrot.lane.b32.xlu0 %v789, 112
    %v1115 = vpop.permute.xlu0 %1114
    %1116 = vrot.lane.b32.xlu0 %v790, 112
    %v1117 = vpop.permute.xlu0 %1116
    %1118 = vrot.lane.b32.xlu0 %v791, 112
    %v1119 = vpop.permute.xlu0 %1118
    %1120 = vrot.lane.b32.xlu0 %v792, 112
    %v1121 = vpop.permute.xlu0 %1120
    %1122 = vrot.lane.b32.xlu0 %v793, 112
    %v1123 = vpop.permute.xlu0 %1122
    %1124 = vrot.lane.b32.xlu0 %v794, 112
    %v1125 = vpop.permute.xlu0 %1124
    %1126 = vrot.lane.b32.xlu0 %v795, 112
    %v1127 = vpop.permute.xlu0 %1126
    %1128 = vrot.lane.b32.xlu0 %v796, 112
    %v1129 = vpop.permute.xlu0 %1128
    %1130 = vrot.lane.b32.xlu0 %v797, 112
    %v1131 = vpop.permute.xlu0 %1130
    %1132 = vrot.lane.b32.xlu0 %v798, 112
    %v1133 = vpop.permute.xlu0 %1132
    %1134 = vrot.lane.b32.xlu0 %v799, 112
    %v1135 = vpop.permute.xlu0 %1134
    %1136 = vrot.lane.b32.xlu0 %v800, 112
    %v1137 = vpop.permute.xlu0 %1136
    %1138 = vrot.lane.b32.xlu0 %v801, 112
    %v1139 = vpop.permute.xlu0 %1138
    %1140 = vrot.lane.b32.xlu0 %v802, 112
    %v1141 = vpop.permute.xlu0 %1140
    %1142 = vrot.lane.b32.xlu0 %v803, 112
    %v1143 = vpop.permute.xlu0 %1142
    %1144 = vrot.lane.b32.xlu0 %v804, 112
    %v1145 = vpop.permute.xlu0 %1144
    %1146 = vrot.lane.b32.xlu0 %v805, 112
    %v1147 = vpop.permute.xlu0 %1146
    %1148 = vrot.lane.b32.xlu0 %v806, 112
    %v1149 = vpop.permute.xlu0 %1148
    %1150 = vrot.lane.b32.xlu0 %v807, 112
    %v1151 = vpop.permute.xlu0 %1150
    %1152 = vrot.lane.b32.xlu0 %v808, 112
    %v1153 = vpop.permute.xlu0 %1152
    %1154 = vrot.lane.b32.xlu0 %v809, 112
    %v1155 = vpop.permute.xlu0 %1154
    %1156 = vrot.lane.b32.xlu0 %v810, 112
    %v1157 = vpop.permute.xlu0 %1156
    %1158 = vrot.lane.b32.xlu0 %v811, 112
    %v1159 = vpop.permute.xlu0 %1158
    %1160 = vrot.lane.b32.xlu0 %v812, 112
    %v1161 = vpop.permute.xlu0 %1160
    %1162 = vrot.lane.b32.xlu0 %v813, 112
    %v1163 = vpop.permute.xlu0 %1162
    %1164 = vrot.lane.b32.xlu0 %v814, 112
    %v1165 = vpop.permute.xlu0 %1164
    %1166 = vrot.lane.b32.xlu0 %v815, 112
    %v1167 = vpop.permute.xlu0 %1166
    %1168 = vrot.lane.b32.xlu0 %v816, 112
    %v1169 = vpop.permute.xlu0 %1168
    %1170 = vrot.lane.b32.xlu0 %v817, 112
    %v1171 = vpop.permute.xlu0 %1170
    %1172 = vrot.lane.b32.xlu0 %v818, 112
    %v1173 = vpop.permute.xlu0 %1172
    %1174 = vrot.lane.b32.xlu0 %v819, 112
    %v1175 = vpop.permute.xlu0 %1174
    %1176 = vrot.lane.b32.xlu0 %v820, 112
    %v1177 = vpop.permute.xlu0 %1176
    %1178 = vrot.lane.b32.xlu0 %v821, 112
    %v1179 = vpop.permute.xlu0 %1178
    %1180 = vrot.lane.b32.xlu0 %v822, 112
    %v1181 = vpop.permute.xlu0 %1180
    %1182 = vrot.lane.b32.xlu0 %v823, 112
    %v1183 = vpop.permute.xlu0 %1182
    %1184 = vrot.lane.b32.xlu0 %v824, 112
    %v1185 = vpop.permute.xlu0 %1184
    %1186 = vrot.lane.b32.xlu0 %v825, 112
    %v1187 = vpop.permute.xlu0 %1186
    %1188 = vrot.lane.b32.xlu0 %v826, 112
    %v1189 = vpop.permute.xlu0 %1188
    %1190 = vrot.lane.b32.xlu0 %v827, 112
    %v1191 = vpop.permute.xlu0 %1190
    %1192 = vrot.lane.b32.xlu0 %v828, 112
    %v1193 = vpop.permute.xlu0 %1192
    %1194 = vrot.lane.b32.xlu0 %v829, 112
    %v1195 = vpop.permute.xlu0 %1194
    %1196 = vrot.lane.b32.xlu0 %v830, 112
    %v1197 = vpop.permute.xlu0 %1196
    %1198 = vrot.lane.b32.xlu0 %v831, 112
    %v1199 = vpop.permute.xlu0 %1198
    %1200 = vrot.lane.b32.xlu0 %v832, 112
    %v1201 = vpop.permute.xlu0 %1200
    %1202 = vrot.lane.b32.xlu0 %v833, 112
    %v1203 = vpop.permute.xlu0 %1202
    %1204 = vrot.lane.b32.xlu0 %v834, 112
    %v1205 = vpop.permute.xlu0 %1204
    %1206 = vrot.lane.b32.xlu0 %v835, 112
    %v1207 = vpop.permute.xlu0 %1206
    %1208 = vrot.lane.b32.xlu0 %v836, 112
    %v1209 = vpop.permute.xlu0 %1208
    %1210 = vrot.lane.b32.xlu0 %v837, 112
    %v1211 = vpop.permute.xlu0 %1210
    %1212 = vrot.lane.b32.xlu0 %v838, 112
    %v1213 = vpop.permute.xlu0 %1212
    %1214 = vrot.lane.b32.xlu0 %v839, 112
    %v1215 = vpop.permute.xlu0 %1214
    %1216 = vrot.lane.b32.xlu0 %v840, 112
    %v1217 = vpop.permute.xlu0 %1216
    %1218 = vrot.lane.b32.xlu0 %v841, 112
    %v1219 = vpop.permute.xlu0 %1218
    %1220 = vrot.lane.b32.xlu0 %v842, 112
    %v1221 = vpop.permute.xlu0 %1220
    %1222 = vrot.lane.b32.xlu0 %v843, 112
    %v1223 = vpop.permute.xlu0 %1222
    %1224 = vrot.lane.b32.xlu0 %v844, 112
    %v1225 = vpop.permute.xlu0 %1224
    %1226 = vrot.lane.b32.xlu0 %v845, 112
    %v1227 = vpop.permute.xlu0 %1226
    %1228 = vrot.lane.b32.xlu0 %v846, 112
    %v1229 = vpop.permute.xlu0 %1228
    %1230 = vrot.lane.b32.xlu0 %v847, 112
    %v1231 = vpop.permute.xlu0 %1230
    %vm1232 = vcmask 916480
    %v1233 = vsel %vm1232, %v977, %v979
    %v1234 = vsel %vm1232, %v979, %v981
    %v1235 = vsel %vm1232, %v981, %v983
    %v1236 = vsel %vm1232, %v985, %v987
    %v1237 = vsel %vm1232, %v987, %v989
    %v1238 = vsel %vm1232, %v989, %v991
    %v1239 = vsel %vm1232, %v993, %v995
    %v1240 = vsel %vm1232, %v995, %v997
    %v1241 = vsel %vm1232, %v997, %v999
    %v1242 = vsel %vm1232, %v1001, %v1003
    %v1243 = vsel %vm1232, %v1003, %v1005
    %v1244 = vsel %vm1232, %v1005, %v1007
    %v1245 = vsel %vm1232, %v1009, %v1011
    %v1246 = vsel %vm1232, %v1011, %v1013
    %v1247 = vsel %vm1232, %v1013, %v1015
    %v1248 = vsel %vm1232, %v1017, %v1019
    %v1249 = vsel %vm1232, %v1019, %v1021
    %v1250 = vsel %vm1232, %v1021, %v1023
    %v1251 = vsel %vm1232, %v1025, %v1027
    %v1252 = vsel %vm1232, %v1027, %v1029
    %v1253 = vsel %vm1232, %v1029, %v1031
    %v1254 = vsel %vm1232, %v1033, %v1035
    %v1255 = vsel %vm1232, %v1035, %v1037
    %v1256 = vsel %vm1232, %v1037, %v1039
    %v1257 = vsel %vm1232, %v1041, %v1043
    %v1258 = vsel %vm1232, %v1043, %v1045
    %v1259 = vsel %vm1232, %v1045, %v1047
    %v1260 = vsel %vm1232, %v1049, %v1051
    %v1261 = vsel %vm1232, %v1051, %v1053
    %v1262 = vsel %vm1232, %v1053, %v1055
    %v1263 = vsel %vm1232, %v1057, %v1059
    %v1264 = vsel %vm1232, %v1059, %v1061
    %v1265 = vsel %vm1232, %v1061, %v1063
    %v1266 = vsel %vm1232, %v1065, %v1067
    %v1267 = vsel %vm1232, %v1067, %v1069
    %v1268 = vsel %vm1232, %v1069, %v1071
    %v1269 = vsel %vm1232, %v1073, %v1075
    %v1270 = vsel %vm1232, %v1075, %v1077
    %v1271 = vsel %vm1232, %v1077, %v1079
    %v1272 = vsel %vm1232, %v1081, %v1083
    %v1273 = vsel %vm1232, %v1083, %v1085
    %v1274 = vsel %vm1232, %v1085, %v1087
    %v1275 = vsel %vm1232, %v1089, %v1091
    %v1276 = vsel %vm1232, %v1091, %v1093
    %v1277 = vsel %vm1232, %v1093, %v1095
    %v1278 = vsel %vm1232, %v1097, %v1099
    %v1279 = vsel %vm1232, %v1099, %v1101
    %v1280 = vsel %vm1232, %v1101, %v1103
    %v1281 = vsel %vm1232, %v1105, %v1107
    %v1282 = vsel %vm1232, %v1107, %v1109
    %v1283 = vsel %vm1232, %v1109, %v1111
    %v1284 = vsel %vm1232, %v1113, %v1115
    %v1285 = vsel %vm1232, %v1115, %v1117
    %v1286 = vsel %vm1232, %v1117, %v1119
    %v1287 = vsel %vm1232, %v1121, %v1123
    %v1288 = vsel %vm1232, %v1123, %v1125
    %v1289 = vsel %vm1232, %v1125, %v1127
    %v1290 = vsel %vm1232, %v1129, %v1131
    %v1291 = vsel %vm1232, %v1131, %v1133
    %v1292 = vsel %vm1232, %v1133, %v1135
    %v1293 = vsel %vm1232, %v1137, %v1139
    %v1294 = vsel %vm1232, %v1139, %v1141
    %v1295 = vsel %vm1232, %v1141, %v1143
    %v1296 = vsel %vm1232, %v1145, %v1147
    %v1297 = vsel %vm1232, %v1147, %v1149
    %v1298 = vsel %vm1232, %v1149, %v1151
    %v1299 = vsel %vm1232, %v1153, %v1155
    %v1300 = vsel %vm1232, %v1155, %v1157
    %v1301 = vsel %vm1232, %v1157, %v1159
    %v1302 = vsel %vm1232, %v1161, %v1163
    %v1303 = vsel %vm1232, %v1163, %v1165
    %v1304 = vsel %vm1232, %v1165, %v1167
    %v1305 = vsel %vm1232, %v1169, %v1171
    %v1306 = vsel %vm1232, %v1171, %v1173
    %v1307 = vsel %vm1232, %v1173, %v1175
    %v1308 = vsel %vm1232, %v1177, %v1179
    %v1309 = vsel %vm1232, %v1179, %v1181
    %v1310 = vsel %vm1232, %v1181, %v1183
    %v1311 = vsel %vm1232, %v1185, %v1187
    %v1312 = vsel %vm1232, %v1187, %v1189
    %v1313 = vsel %vm1232, %v1189, %v1191
    %v1314 = vsel %vm1232, %v1193, %v1195
    %v1315 = vsel %vm1232, %v1195, %v1197
    %v1316 = vsel %vm1232, %v1197, %v1199
    %v1317 = vsel %vm1232, %v1201, %v1203
    %v1318 = vsel %vm1232, %v1203, %v1205
    %v1319 = vsel %vm1232, %v1205, %v1207
    %v1320 = vsel %vm1232, %v1209, %v1211
    %v1321 = vsel %vm1232, %v1211, %v1213
    %v1322 = vsel %vm1232, %v1213, %v1215
    %v1323 = vsel %vm1232, %v1217, %v1219
    %v1324 = vsel %vm1232, %v1219, %v1221
    %v1325 = vsel %vm1232, %v1221, %v1223
    %v1326 = vsel %vm1232, %v1225, %v1227
    %v1327 = vsel %vm1232, %v1227, %v1229
    %v1328 = vsel %vm1232, %v1229, %v1231
    %v1457 = vmax.f32 %v720, %v1233
    %v1458 = vmax.f32 %v721, %v1234
    %v1459 = vmax.f32 %v722, %v1235
    %v1460 = vmax.f32 %v723, %v983
    %v1461 = vmax.f32 %v724, %v1236
    %v1462 = vmax.f32 %v725, %v1237
    %v1463 = vmax.f32 %v726, %v1238
    %v1464 = vmax.f32 %v727, %v991
    %v1465 = vmax.f32 %v728, %v1239
    %v1466 = vmax.f32 %v729, %v1240
    %v1467 = vmax.f32 %v730, %v1241
    %v1468 = vmax.f32 %v731, %v999
    %v1469 = vmax.f32 %v732, %v1242
    %v1470 = vmax.f32 %v733, %v1243
    %v1471 = vmax.f32 %v734, %v1244
    %v1472 = vmax.f32 %v735, %v1007
    %v1473 = vmax.f32 %v736, %v1245
    %v1474 = vmax.f32 %v737, %v1246
    %v1475 = vmax.f32 %v738, %v1247
    %v1476 = vmax.f32 %v739, %v1015
    %v1477 = vmax.f32 %v740, %v1248
    %v1478 = vmax.f32 %v741, %v1249
    %v1479 = vmax.f32 %v742, %v1250
    %v1480 = vmax.f32 %v743, %v1023
    %v1481 = vmax.f32 %v744, %v1251
    %v1482 = vmax.f32 %v745, %v1252
    %v1483 = vmax.f32 %v746, %v1253
    %v1484 = vmax.f32 %v747, %v1031
    %v1485 = vmax.f32 %v748, %v1254
    %v1486 = vmax.f32 %v749, %v1255
    %v1487 = vmax.f32 %v750, %v1256
    %v1488 = vmax.f32 %v751, %v1039
    %v1489 = vmax.f32 %v752, %v1257
    %v1490 = vmax.f32 %v753, %v1258
    %v1491 = vmax.f32 %v754, %v1259
    %v1492 = vmax.f32 %v755, %v1047
    %v1493 = vmax.f32 %v756, %v1260
    %v1494 = vmax.f32 %v757, %v1261
    %v1495 = vmax.f32 %v758, %v1262
    %v1496 = vmax.f32 %v759, %v1055
    %v1497 = vmax.f32 %v760, %v1263
    %v1498 = vmax.f32 %v761, %v1264
    %v1499 = vmax.f32 %v762, %v1265
    %v1500 = vmax.f32 %v763, %v1063
    %v1501 = vmax.f32 %v764, %v1266
    %v1502 = vmax.f32 %v765, %v1267
    %v1503 = vmax.f32 %v766, %v1268
    %v1504 = vmax.f32 %v767, %v1071
    %v1505 = vmax.f32 %v768, %v1269
    %v1506 = vmax.f32 %v769, %v1270
    %v1507 = vmax.f32 %v770, %v1271
    %v1508 = vmax.f32 %v771, %v1079
    %v1509 = vmax.f32 %v772, %v1272
    %v1510 = vmax.f32 %v773, %v1273
    %v1511 = vmax.f32 %v774, %v1274
    %v1512 = vmax.f32 %v775, %v1087
    %v1513 = vmax.f32 %v776, %v1275
    %v1514 = vmax.f32 %v777, %v1276
    %v1515 = vmax.f32 %v778, %v1277
    %v1516 = vmax.f32 %v779, %v1095
    %v1517 = vmax.f32 %v780, %v1278
    %v1518 = vmax.f32 %v781, %v1279
    %v1519 = vmax.f32 %v782, %v1280
    %v1520 = vmax.f32 %v783, %v1103
    %v1521 = vmax.f32 %v784, %v1281
    %v1522 = vmax.f32 %v785, %v1282
    %v1523 = vmax.f32 %v786, %v1283
    %v1524 = vmax.f32 %v787, %v1111
    %v1525 = vmax.f32 %v788, %v1284
    %v1526 = vmax.f32 %v789, %v1285
    %v1527 = vmax.f32 %v790, %v1286
    %v1528 = vmax.f32 %v791, %v1119
    %v1529 = vmax.f32 %v792, %v1287
    %v1530 = vmax.f32 %v793, %v1288
    %v1531 = vmax.f32 %v794, %v1289
    %v1532 = vmax.f32 %v795, %v1127
    %v1533 = vmax.f32 %v796, %v1290
    %v1534 = vmax.f32 %v797, %v1291
    %v1535 = vmax.f32 %v798, %v1292
    %v1536 = vmax.f32 %v799, %v1135
    %v1537 = vmax.f32 %v800, %v1293
    %v1538 = vmax.f32 %v801, %v1294
    %v1539 = vmax.f32 %v802, %v1295
    %v1540 = vmax.f32 %v803, %v1143
    %v1541 = vmax.f32 %v804, %v1296
    %v1542 = vmax.f32 %v805, %v1297
    %v1543 = vmax.f32 %v806, %v1298
    %v1544 = vmax.f32 %v807, %v1151
    %v1545 = vmax.f32 %v808, %v1299
    %v1546 = vmax.f32 %v809, %v1300
    %v1547 = vmax.f32 %v810, %v1301
    %v1548 = vmax.f32 %v811, %v1159
    %v1549 = vmax.f32 %v812, %v1302
    %v1550 = vmax.f32 %v813, %v1303
    %v1551 = vmax.f32 %v814, %v1304
    %v1552 = vmax.f32 %v815, %v1167
    %v1553 = vmax.f32 %v816, %v1305
    %v1554 = vmax.f32 %v817, %v1306
    %v1555 = vmax.f32 %v818, %v1307
    %v1556 = vmax.f32 %v819, %v1175
    %v1557 = vmax.f32 %v820, %v1308
    %v1558 = vmax.f32 %v821, %v1309
    %v1559 = vmax.f32 %v822, %v1310
    %v1560 = vmax.f32 %v823, %v1183
    %v1561 = vmax.f32 %v824, %v1311
    %v1562 = vmax.f32 %v825, %v1312
    %v1563 = vmax.f32 %v826, %v1313
    %v1564 = vmax.f32 %v827, %v1191
    %v1565 = vmax.f32 %v828, %v1314
    %v1566 = vmax.f32 %v829, %v1315
    %v1567 = vmax.f32 %v830, %v1316
    %v1568 = vmax.f32 %v831, %v1199
    %v1569 = vmax.f32 %v832, %v1317
    %v1570 = vmax.f32 %v833, %v1318
    %v1571 = vmax.f32 %v834, %v1319
    %v1572 = vmax.f32 %v835, %v1207
    %v1573 = vmax.f32 %v836, %v1320
    %v1574 = vmax.f32 %v837, %v1321
    %v1575 = vmax.f32 %v838, %v1322
    %v1576 = vmax.f32 %v839, %v1215
    %v1577 = vmax.f32 %v840, %v1323
    %v1578 = vmax.f32 %v841, %v1324
    %v1579 = vmax.f32 %v842, %v1325
    %v1580 = vmax.f32 %v843, %v1223
    %v1581 = vmax.f32 %v844, %v1326
    %v1582 = vmax.f32 %v845, %v1327
    %v1583 = vmax.f32 %v846, %v1328
    %v1584 = vmax.f32 %v847, %v1231
    %1617 = vrot.lane.b32.xlu0 %v1457, 112
    %v1618 = vpop.permute.xlu0 %1617
    %1619 = vrot.lane.b32.xlu0 %v1461, 112
    %v1620 = vpop.permute.xlu0 %1619
    %1621 = vrot.lane.b32.xlu0 %v1465, 112
    %v1622 = vpop.permute.xlu0 %1621
    %1623 = vrot.lane.b32.xlu0 %v1469, 112
    %v1624 = vpop.permute.xlu0 %1623
    %1625 = vrot.lane.b32.xlu0 %v1473, 112
    %v1626 = vpop.permute.xlu0 %1625
    %1627 = vrot.lane.b32.xlu0 %v1477, 112
    %v1628 = vpop.permute.xlu0 %1627
    %1629 = vrot.lane.b32.xlu0 %v1481, 112
    %v1630 = vpop.permute.xlu0 %1629
    %1631 = vrot.lane.b32.xlu0 %v1485, 112
    %v1632 = vpop.permute.xlu0 %1631
    %1633 = vrot.lane.b32.xlu0 %v1489, 112
    %v1634 = vpop.permute.xlu0 %1633
    %1635 = vrot.lane.b32.xlu0 %v1493, 112
    %v1636 = vpop.permute.xlu0 %1635
    %1637 = vrot.lane.b32.xlu0 %v1497, 112
    %v1638 = vpop.permute.xlu0 %1637
    %1639 = vrot.lane.b32.xlu0 %v1501, 112
    %v1640 = vpop.permute.xlu0 %1639
    %1641 = vrot.lane.b32.xlu0 %v1505, 112
    %v1642 = vpop.permute.xlu0 %1641
    %1643 = vrot.lane.b32.xlu0 %v1509, 112
    %v1644 = vpop.permute.xlu0 %1643
    %1645 = vrot.lane.b32.xlu0 %v1513, 112
    %v1646 = vpop.permute.xlu0 %1645
    %1647 = vrot.lane.b32.xlu0 %v1517, 112
    %v1648 = vpop.permute.xlu0 %1647
    %1649 = vrot.lane.b32.xlu0 %v1521, 112
    %v1650 = vpop.permute.xlu0 %1649
    %1651 = vrot.lane.b32.xlu0 %v1525, 112
    %v1652 = vpop.permute.xlu0 %1651
    %1653 = vrot.lane.b32.xlu0 %v1529, 112
    %v1654 = vpop.permute.xlu0 %1653
    %1655 = vrot.lane.b32.xlu0 %v1533, 112
    %v1656 = vpop.permute.xlu0 %1655
    %1657 = vrot.lane.b32.xlu0 %v1537, 112
    %v1658 = vpop.permute.xlu0 %1657
    %1659 = vrot.lane.b32.xlu0 %v1541, 112
    %v1660 = vpop.permute.xlu0 %1659
    %1661 = vrot.lane.b32.xlu0 %v1545, 112
    %v1662 = vpop.permute.xlu0 %1661
    %1663 = vrot.lane.b32.xlu0 %v1549, 112
    %v1664 = vpop.permute.xlu0 %1663
    %1665 = vrot.lane.b32.xlu0 %v1553, 112
    %v1666 = vpop.permute.xlu0 %1665
    %1667 = vrot.lane.b32.xlu0 %v1557, 112
    %v1668 = vpop.permute.xlu0 %1667
    %1669 = vrot.lane.b32.xlu0 %v1561, 112
    %v1670 = vpop.permute.xlu0 %1669
    %1671 = vrot.lane.b32.xlu0 %v1565, 112
    %v1672 = vpop.permute.xlu0 %1671
    %1673 = vrot.lane.b32.xlu0 %v1569, 112
    %v1674 = vpop.permute.xlu0 %1673
    %1675 = vrot.lane.b32.xlu0 %v1573, 112
    %v1676 = vpop.permute.xlu0 %1675
    %1677 = vrot.lane.b32.xlu0 %v1577, 112
    %v1678 = vpop.permute.xlu0 %1677
    %1679 = vrot.lane.b32.xlu0 %v1581, 112
    %v1680 = vpop.permute.xlu0 %1679
    %1713 = vrot.lane.b32.xlu0 %v1457, 96
    %v1714 = vpop.permute.xlu0 %1713
    %1715 = vrot.lane.b32.xlu0 %v1461, 96
    %v1716 = vpop.permute.xlu0 %1715
    %1717 = vrot.lane.b32.xlu0 %v1465, 96
    %v1718 = vpop.permute.xlu0 %1717
    %1719 = vrot.lane.b32.xlu0 %v1469, 96
    %v1720 = vpop.permute.xlu0 %1719
    %1721 = vrot.lane.b32.xlu0 %v1473, 96
    %v1722 = vpop.permute.xlu0 %1721
    %1723 = vrot.lane.b32.xlu0 %v1477, 96
    %v1724 = vpop.permute.xlu0 %1723
    %1725 = vrot.lane.b32.xlu0 %v1481, 96
    %v1726 = vpop.permute.xlu0 %1725
    %1727 = vrot.lane.b32.xlu0 %v1485, 96
    %v1728 = vpop.permute.xlu0 %1727
    %1729 = vrot.lane.b32.xlu0 %v1489, 96
    %v1730 = vpop.permute.xlu0 %1729
    %1731 = vrot.lane.b32.xlu0 %v1493, 96
    %v1732 = vpop.permute.xlu0 %1731
    %1733 = vrot.lane.b32.xlu0 %v1497, 96
    %v1734 = vpop.permute.xlu0 %1733
    %1735 = vrot.lane.b32.xlu0 %v1501, 96
    %v1736 = vpop.permute.xlu0 %1735
    %1737 = vrot.lane.b32.xlu0 %v1505, 96
    %v1738 = vpop.permute.xlu0 %1737
    %1739 = vrot.lane.b32.xlu0 %v1509, 96
    %v1740 = vpop.permute.xlu0 %1739
    %1741 = vrot.lane.b32.xlu0 %v1513, 96
    %v1742 = vpop.permute.xlu0 %1741
    %1743 = vrot.lane.b32.xlu0 %v1517, 96
    %v1744 = vpop.permute.xlu0 %1743
    %1745 = vrot.lane.b32.xlu0 %v1521, 96
    %v1746 = vpop.permute.xlu0 %1745
    %1747 = vrot.lane.b32.xlu0 %v1525, 96
    %v1748 = vpop.permute.xlu0 %1747
    %1749 = vrot.lane.b32.xlu0 %v1529, 96
    %v1750 = vpop.permute.xlu0 %1749
    %1751 = vrot.lane.b32.xlu0 %v1533, 96
    %v1752 = vpop.permute.xlu0 %1751
    %1753 = vrot.lane.b32.xlu0 %v1537, 96
    %v1754 = vpop.permute.xlu0 %1753
    %1755 = vrot.lane.b32.xlu0 %v1541, 96
    %v1756 = vpop.permute.xlu0 %1755
    %1757 = vrot.lane.b32.xlu0 %v1545, 96
    %v1758 = vpop.permute.xlu0 %1757
    %1759 = vrot.lane.b32.xlu0 %v1549, 96
    %v1760 = vpop.permute.xlu0 %1759
    %1761 = vrot.lane.b32.xlu0 %v1553, 96
    %v1762 = vpop.permute.xlu0 %1761
    %1763 = vrot.lane.b32.xlu0 %v1557, 96
    %v1764 = vpop.permute.xlu0 %1763
    %1765 = vrot.lane.b32.xlu0 %v1561, 96
    %v1766 = vpop.permute.xlu0 %1765
    %1767 = vrot.lane.b32.xlu0 %v1565, 96
    %v1768 = vpop.permute.xlu0 %1767
    %1769 = vrot.lane.b32.xlu0 %v1569, 96
    %v1770 = vpop.permute.xlu0 %1769
    %1771 = vrot.lane.b32.xlu0 %v1573, 96
    %v1772 = vpop.permute.xlu0 %1771
    %1773 = vrot.lane.b32.xlu0 %v1577, 96
    %v1774 = vpop.permute.xlu0 %1773
    %1775 = vrot.lane.b32.xlu0 %v1581, 96
    %v1776 = vpop.permute.xlu0 %1775
    %1809 = vrot.lane.b32.xlu0 %v1457, 80
    %v1810 = vpop.permute.xlu0 %1809
    %1811 = vrot.lane.b32.xlu0 %v1461, 80
    %v1812 = vpop.permute.xlu0 %1811
    %1813 = vrot.lane.b32.xlu0 %v1465, 80
    %v1814 = vpop.permute.xlu0 %1813
    %1815 = vrot.lane.b32.xlu0 %v1469, 80
    %v1816 = vpop.permute.xlu0 %1815
    %1817 = vrot.lane.b32.xlu0 %v1473, 80
    %v1818 = vpop.permute.xlu0 %1817
    %1819 = vrot.lane.b32.xlu0 %v1477, 80
    %v1820 = vpop.permute.xlu0 %1819
    %1821 = vrot.lane.b32.xlu0 %v1481, 80
    %v1822 = vpop.permute.xlu0 %1821
    %1823 = vrot.lane.b32.xlu0 %v1485, 80
    %v1824 = vpop.permute.xlu0 %1823
    %1825 = vrot.lane.b32.xlu0 %v1489, 80
    %v1826 = vpop.permute.xlu0 %1825
    %1827 = vrot.lane.b32.xlu0 %v1493, 80
    %v1828 = vpop.permute.xlu0 %1827
    %1829 = vrot.lane.b32.xlu0 %v1497, 80
    %v1830 = vpop.permute.xlu0 %1829
    %1831 = vrot.lane.b32.xlu0 %v1501, 80
    %v1832 = vpop.permute.xlu0 %1831
    %1833 = vrot.lane.b32.xlu0 %v1505, 80
    %v1834 = vpop.permute.xlu0 %1833
    %1835 = vrot.lane.b32.xlu0 %v1509, 80
    %v1836 = vpop.permute.xlu0 %1835
    %1837 = vrot.lane.b32.xlu0 %v1513, 80
    %v1838 = vpop.permute.xlu0 %1837
    %1839 = vrot.lane.b32.xlu0 %v1517, 80
    %v1840 = vpop.permute.xlu0 %1839
    %1841 = vrot.lane.b32.xlu0 %v1521, 80
    %v1842 = vpop.permute.xlu0 %1841
    %1843 = vrot.lane.b32.xlu0 %v1525, 80
    %v1844 = vpop.permute.xlu0 %1843
    %1845 = vrot.lane.b32.xlu0 %v1529, 80
    %v1846 = vpop.permute.xlu0 %1845
    %1847 = vrot.lane.b32.xlu0 %v1533, 80
    %v1848 = vpop.permute.xlu0 %1847
    %1849 = vrot.lane.b32.xlu0 %v1537, 80
    %v1850 = vpop.permute.xlu0 %1849
    %1851 = vrot.lane.b32.xlu0 %v1541, 80
    %v1852 = vpop.permute.xlu0 %1851
    %1853 = vrot.lane.b32.xlu0 %v1545, 80
    %v1854 = vpop.permute.xlu0 %1853
    %1855 = vrot.lane.b32.xlu0 %v1549, 80
    %v1856 = vpop.permute.xlu0 %1855
    %1857 = vrot.lane.b32.xlu0 %v1553, 80
    %v1858 = vpop.permute.xlu0 %1857
    %1859 = vrot.lane.b32.xlu0 %v1557, 80
    %v1860 = vpop.permute.xlu0 %1859
    %1861 = vrot.lane.b32.xlu0 %v1561, 80
    %v1862 = vpop.permute.xlu0 %1861
    %1863 = vrot.lane.b32.xlu0 %v1565, 80
    %v1864 = vpop.permute.xlu0 %1863
    %1865 = vrot.lane.b32.xlu0 %v1569, 80
    %v1866 = vpop.permute.xlu0 %1865
    %1867 = vrot.lane.b32.xlu0 %v1573, 80
    %v1868 = vpop.permute.xlu0 %1867
    %1869 = vrot.lane.b32.xlu0 %v1577, 80
    %v1870 = vpop.permute.xlu0 %1869
    %1871 = vrot.lane.b32.xlu0 %v1581, 80
    %v1872 = vpop.permute.xlu0 %1871
    %1937 = vrot.lane.b32.xlu0 %v1458, 64
    %v1938 = vpop.permute.xlu0 %1937
    %1939 = vrot.lane.b32.xlu0 %v1462, 64
    %v1940 = vpop.permute.xlu0 %1939
    %1941 = vrot.lane.b32.xlu0 %v1466, 64
    %v1942 = vpop.permute.xlu0 %1941
    %1943 = vrot.lane.b32.xlu0 %v1470, 64
    %v1944 = vpop.permute.xlu0 %1943
    %1945 = vrot.lane.b32.xlu0 %v1474, 64
    %v1946 = vpop.permute.xlu0 %1945
    %1947 = vrot.lane.b32.xlu0 %v1478, 64
    %v1948 = vpop.permute.xlu0 %1947
    %1949 = vrot.lane.b32.xlu0 %v1482, 64
    %v1950 = vpop.permute.xlu0 %1949
    %1951 = vrot.lane.b32.xlu0 %v1486, 64
    %v1952 = vpop.permute.xlu0 %1951
    %1953 = vrot.lane.b32.xlu0 %v1490, 64
    %v1954 = vpop.permute.xlu0 %1953
    %1955 = vrot.lane.b32.xlu0 %v1494, 64
    %v1956 = vpop.permute.xlu0 %1955
    %1957 = vrot.lane.b32.xlu0 %v1498, 64
    %v1958 = vpop.permute.xlu0 %1957
    %1959 = vrot.lane.b32.xlu0 %v1502, 64
    %v1960 = vpop.permute.xlu0 %1959
    %1961 = vrot.lane.b32.xlu0 %v1506, 64
    %v1962 = vpop.permute.xlu0 %1961
    %1963 = vrot.lane.b32.xlu0 %v1510, 64
    %v1964 = vpop.permute.xlu0 %1963
    %1965 = vrot.lane.b32.xlu0 %v1514, 64
    %v1966 = vpop.permute.xlu0 %1965
    %1967 = vrot.lane.b32.xlu0 %v1518, 64
    %v1968 = vpop.permute.xlu0 %1967
    %1969 = vrot.lane.b32.xlu0 %v1522, 64
    %v1970 = vpop.permute.xlu0 %1969
    %1971 = vrot.lane.b32.xlu0 %v1526, 64
    %v1972 = vpop.permute.xlu0 %1971
    %1973 = vrot.lane.b32.xlu0 %v1530, 64
    %v1974 = vpop.permute.xlu0 %1973
    %1975 = vrot.lane.b32.xlu0 %v1534, 64
    %v1976 = vpop.permute.xlu0 %1975
    %1977 = vrot.lane.b32.xlu0 %v1538, 64
    %v1978 = vpop.permute.xlu0 %1977
    %1979 = vrot.lane.b32.xlu0 %v1542, 64
    %v1980 = vpop.permute.xlu0 %1979
    %1981 = vrot.lane.b32.xlu0 %v1546, 64
    %v1982 = vpop.permute.xlu0 %1981
    %1983 = vrot.lane.b32.xlu0 %v1550, 64
    %v1984 = vpop.permute.xlu0 %1983
    %1985 = vrot.lane.b32.xlu0 %v1554, 64
    %v1986 = vpop.permute.xlu0 %1985
    %1987 = vrot.lane.b32.xlu0 %v1558, 64
    %v1988 = vpop.permute.xlu0 %1987
    %1989 = vrot.lane.b32.xlu0 %v1562, 64
    %v1990 = vpop.permute.xlu0 %1989
    %1991 = vrot.lane.b32.xlu0 %v1566, 64
    %v1992 = vpop.permute.xlu0 %1991
    %1993 = vrot.lane.b32.xlu0 %v1570, 64
    %v1994 = vpop.permute.xlu0 %1993
    %1995 = vrot.lane.b32.xlu0 %v1574, 64
    %v1996 = vpop.permute.xlu0 %1995
    %1997 = vrot.lane.b32.xlu0 %v1578, 64
    %v1998 = vpop.permute.xlu0 %1997
    %1999 = vrot.lane.b32.xlu0 %v1582, 64
    %v2000 = vpop.permute.xlu0 %1999
    %2033 = vrot.lane.b32.xlu0 %v1458, 48
    %v2034 = vpop.permute.xlu0 %2033
    %2035 = vrot.lane.b32.xlu0 %v1462, 48
    %v2036 = vpop.permute.xlu0 %2035
    %2037 = vrot.lane.b32.xlu0 %v1466, 48
    %v2038 = vpop.permute.xlu0 %2037
    %2039 = vrot.lane.b32.xlu0 %v1470, 48
    %v2040 = vpop.permute.xlu0 %2039
    %2041 = vrot.lane.b32.xlu0 %v1474, 48
    %v2042 = vpop.permute.xlu0 %2041
    %2043 = vrot.lane.b32.xlu0 %v1478, 48
    %v2044 = vpop.permute.xlu0 %2043
    %2045 = vrot.lane.b32.xlu0 %v1482, 48
    %v2046 = vpop.permute.xlu0 %2045
    %2047 = vrot.lane.b32.xlu0 %v1486, 48
    %v2048 = vpop.permute.xlu0 %2047
    %2049 = vrot.lane.b32.xlu0 %v1490, 48
    %v2050 = vpop.permute.xlu0 %2049
    %2051 = vrot.lane.b32.xlu0 %v1494, 48
    %v2052 = vpop.permute.xlu0 %2051
    %2053 = vrot.lane.b32.xlu0 %v1498, 48
    %v2054 = vpop.permute.xlu0 %2053
    %2055 = vrot.lane.b32.xlu0 %v1502, 48
    %v2056 = vpop.permute.xlu0 %2055
    %2057 = vrot.lane.b32.xlu0 %v1506, 48
    %v2058 = vpop.permute.xlu0 %2057
    %2059 = vrot.lane.b32.xlu0 %v1510, 48
    %v2060 = vpop.permute.xlu0 %2059
    %2061 = vrot.lane.b32.xlu0 %v1514, 48
    %v2062 = vpop.permute.xlu0 %2061
    %2063 = vrot.lane.b32.xlu0 %v1518, 48
    %v2064 = vpop.permute.xlu0 %2063
    %2065 = vrot.lane.b32.xlu0 %v1522, 48
    %v2066 = vpop.permute.xlu0 %2065
    %2067 = vrot.lane.b32.xlu0 %v1526, 48
    %v2068 = vpop.permute.xlu0 %2067
    %2069 = vrot.lane.b32.xlu0 %v1530, 48
    %v2070 = vpop.permute.xlu0 %2069
    %2071 = vrot.lane.b32.xlu0 %v1534, 48
    %v2072 = vpop.permute.xlu0 %2071
    %2073 = vrot.lane.b32.xlu0 %v1538, 48
    %v2074 = vpop.permute.xlu0 %2073
    %2075 = vrot.lane.b32.xlu0 %v1542, 48
    %v2076 = vpop.permute.xlu0 %2075
    %2077 = vrot.lane.b32.xlu0 %v1546, 48
    %v2078 = vpop.permute.xlu0 %2077
    %2079 = vrot.lane.b32.xlu0 %v1550, 48
    %v2080 = vpop.permute.xlu0 %2079
    %2081 = vrot.lane.b32.xlu0 %v1554, 48
    %v2082 = vpop.permute.xlu0 %2081
    %2083 = vrot.lane.b32.xlu0 %v1558, 48
    %v2084 = vpop.permute.xlu0 %2083
    %2085 = vrot.lane.b32.xlu0 %v1562, 48
    %v2086 = vpop.permute.xlu0 %2085
    %2087 = vrot.lane.b32.xlu0 %v1566, 48
    %v2088 = vpop.permute.xlu0 %2087
    %2089 = vrot.lane.b32.xlu0 %v1570, 48
    %v2090 = vpop.permute.xlu0 %2089
    %2091 = vrot.lane.b32.xlu0 %v1574, 48
    %v2092 = vpop.permute.xlu0 %2091
    %2093 = vrot.lane.b32.xlu0 %v1578, 48
    %v2094 = vpop.permute.xlu0 %2093
    %2095 = vrot.lane.b32.xlu0 %v1582, 48
    %v2096 = vpop.permute.xlu0 %2095
    %2129 = vrot.lane.b32.xlu0 %v1458, 32
    %v2130 = vpop.permute.xlu0 %2129
    %2131 = vrot.lane.b32.xlu0 %v1462, 32
    %v2132 = vpop.permute.xlu0 %2131
    %2133 = vrot.lane.b32.xlu0 %v1466, 32
    %v2134 = vpop.permute.xlu0 %2133
    %2135 = vrot.lane.b32.xlu0 %v1470, 32
    %v2136 = vpop.permute.xlu0 %2135
    %2137 = vrot.lane.b32.xlu0 %v1474, 32
    %v2138 = vpop.permute.xlu0 %2137
    %2139 = vrot.lane.b32.xlu0 %v1478, 32
    %v2140 = vpop.permute.xlu0 %2139
    %2141 = vrot.lane.b32.xlu0 %v1482, 32
    %v2142 = vpop.permute.xlu0 %2141
    %2143 = vrot.lane.b32.xlu0 %v1486, 32
    %v2144 = vpop.permute.xlu0 %2143
    %2145 = vrot.lane.b32.xlu0 %v1490, 32
    %v2146 = vpop.permute.xlu0 %2145
    %2147 = vrot.lane.b32.xlu0 %v1494, 32
    %v2148 = vpop.permute.xlu0 %2147
    %2149 = vrot.lane.b32.xlu0 %v1498, 32
    %v2150 = vpop.permute.xlu0 %2149
    %2151 = vrot.lane.b32.xlu0 %v1502, 32
    %v2152 = vpop.permute.xlu0 %2151
    %2153 = vrot.lane.b32.xlu0 %v1506, 32
    %v2154 = vpop.permute.xlu0 %2153
    %2155 = vrot.lane.b32.xlu0 %v1510, 32
    %v2156 = vpop.permute.xlu0 %2155
    %2157 = vrot.lane.b32.xlu0 %v1514, 32
    %v2158 = vpop.permute.xlu0 %2157
    %2159 = vrot.lane.b32.xlu0 %v1518, 32
    %v2160 = vpop.permute.xlu0 %2159
    %2161 = vrot.lane.b32.xlu0 %v1522, 32
    %v2162 = vpop.permute.xlu0 %2161
    %2163 = vrot.lane.b32.xlu0 %v1526, 32
    %v2164 = vpop.permute.xlu0 %2163
    %2165 = vrot.lane.b32.xlu0 %v1530, 32
    %v2166 = vpop.permute.xlu0 %2165
    %2167 = vrot.lane.b32.xlu0 %v1534, 32
    %v2168 = vpop.permute.xlu0 %2167
    %2169 = vrot.lane.b32.xlu0 %v1538, 32
    %v2170 = vpop.permute.xlu0 %2169
    %2171 = vrot.lane.b32.xlu0 %v1542, 32
    %v2172 = vpop.permute.xlu0 %2171
    %2173 = vrot.lane.b32.xlu0 %v1546, 32
    %v2174 = vpop.permute.xlu0 %2173
    %2175 = vrot.lane.b32.xlu0 %v1550, 32
    %v2176 = vpop.permute.xlu0 %2175
    %2177 = vrot.lane.b32.xlu0 %v1554, 32
    %v2178 = vpop.permute.xlu0 %2177
    %2179 = vrot.lane.b32.xlu0 %v1558, 32
    %v2180 = vpop.permute.xlu0 %2179
    %2181 = vrot.lane.b32.xlu0 %v1562, 32
    %v2182 = vpop.permute.xlu0 %2181
    %2183 = vrot.lane.b32.xlu0 %v1566, 32
    %v2184 = vpop.permute.xlu0 %2183
    %2185 = vrot.lane.b32.xlu0 %v1570, 32
    %v2186 = vpop.permute.xlu0 %2185
    %2187 = vrot.lane.b32.xlu0 %v1574, 32
    %v2188 = vpop.permute.xlu0 %2187
    %2189 = vrot.lane.b32.xlu0 %v1578, 32
    %v2190 = vpop.permute.xlu0 %2189
    %2191 = vrot.lane.b32.xlu0 %v1582, 32
    %v2192 = vpop.permute.xlu0 %2191
    %2225 = vrot.lane.b32.xlu0 %v1458, 16
    %v2226 = vpop.permute.xlu0 %2225
    %2227 = vrot.lane.b32.xlu0 %v1462, 16
    %v2228 = vpop.permute.xlu0 %2227
    %2229 = vrot.lane.b32.xlu0 %v1466, 16
    %v2230 = vpop.permute.xlu0 %2229
    %2231 = vrot.lane.b32.xlu0 %v1470, 16
    %v2232 = vpop.permute.xlu0 %2231
    %2233 = vrot.lane.b32.xlu0 %v1474, 16
    %v2234 = vpop.permute.xlu0 %2233
    %2235 = vrot.lane.b32.xlu0 %v1478, 16
    %v2236 = vpop.permute.xlu0 %2235
    %2237 = vrot.lane.b32.xlu0 %v1482, 16
    %v2238 = vpop.permute.xlu0 %2237
    %2239 = vrot.lane.b32.xlu0 %v1486, 16
    %v2240 = vpop.permute.xlu0 %2239
    %2241 = vrot.lane.b32.xlu0 %v1490, 16
    %v2242 = vpop.permute.xlu0 %2241
    %2243 = vrot.lane.b32.xlu0 %v1494, 16
    %v2244 = vpop.permute.xlu0 %2243
    %2245 = vrot.lane.b32.xlu0 %v1498, 16
    %v2246 = vpop.permute.xlu0 %2245
    %2247 = vrot.lane.b32.xlu0 %v1502, 16
    %v2248 = vpop.permute.xlu0 %2247
    %2249 = vrot.lane.b32.xlu0 %v1506, 16
    %v2250 = vpop.permute.xlu0 %2249
    %2251 = vrot.lane.b32.xlu0 %v1510, 16
    %v2252 = vpop.permute.xlu0 %2251
    %2253 = vrot.lane.b32.xlu0 %v1514, 16
    %v2254 = vpop.permute.xlu0 %2253
    %2255 = vrot.lane.b32.xlu0 %v1518, 16
    %v2256 = vpop.permute.xlu0 %2255
    %2257 = vrot.lane.b32.xlu0 %v1522, 16
    %v2258 = vpop.permute.xlu0 %2257
    %2259 = vrot.lane.b32.xlu0 %v1526, 16
    %v2260 = vpop.permute.xlu0 %2259
    %2261 = vrot.lane.b32.xlu0 %v1530, 16
    %v2262 = vpop.permute.xlu0 %2261
    %2263 = vrot.lane.b32.xlu0 %v1534, 16
    %v2264 = vpop.permute.xlu0 %2263
    %2265 = vrot.lane.b32.xlu0 %v1538, 16
    %v2266 = vpop.permute.xlu0 %2265
    %2267 = vrot.lane.b32.xlu0 %v1542, 16
    %v2268 = vpop.permute.xlu0 %2267
    %2269 = vrot.lane.b32.xlu0 %v1546, 16
    %v2270 = vpop.permute.xlu0 %2269
    %2271 = vrot.lane.b32.xlu0 %v1550, 16
    %v2272 = vpop.permute.xlu0 %2271
    %2273 = vrot.lane.b32.xlu0 %v1554, 16
    %v2274 = vpop.permute.xlu0 %2273
    %2275 = vrot.lane.b32.xlu0 %v1558, 16
    %v2276 = vpop.permute.xlu0 %2275
    %2277 = vrot.lane.b32.xlu0 %v1562, 16
    %v2278 = vpop.permute.xlu0 %2277
    %2279 = vrot.lane.b32.xlu0 %v1566, 16
    %v2280 = vpop.permute.xlu0 %2279
    %2281 = vrot.lane.b32.xlu0 %v1570, 16
    %v2282 = vpop.permute.xlu0 %2281
    %2283 = vrot.lane.b32.xlu0 %v1574, 16
    %v2284 = vpop.permute.xlu0 %2283
    %2285 = vrot.lane.b32.xlu0 %v1578, 16
    %v2286 = vpop.permute.xlu0 %2285
    %2287 = vrot.lane.b32.xlu0 %v1582, 16
    %v2288 = vpop.permute.xlu0 %2287
    %2353 = vrot.lane.b32.xlu0 %v1459, 112
    %v2354 = vpop.permute.xlu0 %2353
    %2355 = vrot.lane.b32.xlu0 %v1463, 112
    %v2356 = vpop.permute.xlu0 %2355
    %2357 = vrot.lane.b32.xlu0 %v1467, 112
    %v2358 = vpop.permute.xlu0 %2357
    %2359 = vrot.lane.b32.xlu0 %v1471, 112
    %v2360 = vpop.permute.xlu0 %2359
    %2361 = vrot.lane.b32.xlu0 %v1475, 112
    %v2362 = vpop.permute.xlu0 %2361
    %2363 = vrot.lane.b32.xlu0 %v1479, 112
    %v2364 = vpop.permute.xlu0 %2363
    %2365 = vrot.lane.b32.xlu0 %v1483, 112
    %v2366 = vpop.permute.xlu0 %2365
    %2367 = vrot.lane.b32.xlu0 %v1487, 112
    %v2368 = vpop.permute.xlu0 %2367
    %2369 = vrot.lane.b32.xlu0 %v1491, 112
    %v2370 = vpop.permute.xlu0 %2369
    %2371 = vrot.lane.b32.xlu0 %v1495, 112
    %v2372 = vpop.permute.xlu0 %2371
    %2373 = vrot.lane.b32.xlu0 %v1499, 112
    %v2374 = vpop.permute.xlu0 %2373
    %2375 = vrot.lane.b32.xlu0 %v1503, 112
    %v2376 = vpop.permute.xlu0 %2375
    %2377 = vrot.lane.b32.xlu0 %v1507, 112
    %v2378 = vpop.permute.xlu0 %2377
    %2379 = vrot.lane.b32.xlu0 %v1511, 112
    %v2380 = vpop.permute.xlu0 %2379
    %2381 = vrot.lane.b32.xlu0 %v1515, 112
    %v2382 = vpop.permute.xlu0 %2381
    %2383 = vrot.lane.b32.xlu0 %v1519, 112
    %v2384 = vpop.permute.xlu0 %2383
    %2385 = vrot.lane.b32.xlu0 %v1523, 112
    %v2386 = vpop.permute.xlu0 %2385
    %2387 = vrot.lane.b32.xlu0 %v1527, 112
    %v2388 = vpop.permute.xlu0 %2387
    %2389 = vrot.lane.b32.xlu0 %v1531, 112
    %v2390 = vpop.permute.xlu0 %2389
    %2391 = vrot.lane.b32.xlu0 %v1535, 112
    %v2392 = vpop.permute.xlu0 %2391
    %2393 = vrot.lane.b32.xlu0 %v1539, 112
    %v2394 = vpop.permute.xlu0 %2393
    %2395 = vrot.lane.b32.xlu0 %v1543, 112
    %v2396 = vpop.permute.xlu0 %2395
    %2397 = vrot.lane.b32.xlu0 %v1547, 112
    %v2398 = vpop.permute.xlu0 %2397
    %2399 = vrot.lane.b32.xlu0 %v1551, 112
    %v2400 = vpop.permute.xlu0 %2399
    %2401 = vrot.lane.b32.xlu0 %v1555, 112
    %v2402 = vpop.permute.xlu0 %2401
    %2403 = vrot.lane.b32.xlu0 %v1559, 112
    %v2404 = vpop.permute.xlu0 %2403
    %2405 = vrot.lane.b32.xlu0 %v1563, 112
    %v2406 = vpop.permute.xlu0 %2405
    %2407 = vrot.lane.b32.xlu0 %v1567, 112
    %v2408 = vpop.permute.xlu0 %2407
    %2409 = vrot.lane.b32.xlu0 %v1571, 112
    %v2410 = vpop.permute.xlu0 %2409
    %2411 = vrot.lane.b32.xlu0 %v1575, 112
    %v2412 = vpop.permute.xlu0 %2411
    %2413 = vrot.lane.b32.xlu0 %v1579, 112
    %v2414 = vpop.permute.xlu0 %2413
    %2415 = vrot.lane.b32.xlu0 %v1583, 112
    %v2416 = vpop.permute.xlu0 %2415
    %2449 = vrot.lane.b32.xlu0 %v1459, 96
    %v2450 = vpop.permute.xlu0 %2449
    %2451 = vrot.lane.b32.xlu0 %v1463, 96
    %v2452 = vpop.permute.xlu0 %2451
    %2453 = vrot.lane.b32.xlu0 %v1467, 96
    %v2454 = vpop.permute.xlu0 %2453
    %2455 = vrot.lane.b32.xlu0 %v1471, 96
    %v2456 = vpop.permute.xlu0 %2455
    %2457 = vrot.lane.b32.xlu0 %v1475, 96
    %v2458 = vpop.permute.xlu0 %2457
    %2459 = vrot.lane.b32.xlu0 %v1479, 96
    %v2460 = vpop.permute.xlu0 %2459
    %2461 = vrot.lane.b32.xlu0 %v1483, 96
    %v2462 = vpop.permute.xlu0 %2461
    %2463 = vrot.lane.b32.xlu0 %v1487, 96
    %v2464 = vpop.permute.xlu0 %2463
    %2465 = vrot.lane.b32.xlu0 %v1491, 96
    %v2466 = vpop.permute.xlu0 %2465
    %2467 = vrot.lane.b32.xlu0 %v1495, 96
    %v2468 = vpop.permute.xlu0 %2467
    %2469 = vrot.lane.b32.xlu0 %v1499, 96
    %v2470 = vpop.permute.xlu0 %2469
    %2471 = vrot.lane.b32.xlu0 %v1503, 96
    %v2472 = vpop.permute.xlu0 %2471
    %2473 = vrot.lane.b32.xlu0 %v1507, 96
    %v2474 = vpop.permute.xlu0 %2473
    %2475 = vrot.lane.b32.xlu0 %v1511, 96
    %v2476 = vpop.permute.xlu0 %2475
    %2477 = vrot.lane.b32.xlu0 %v1515, 96
    %v2478 = vpop.permute.xlu0 %2477
    %2479 = vrot.lane.b32.xlu0 %v1519, 96
    %v2480 = vpop.permute.xlu0 %2479
    %2481 = vrot.lane.b32.xlu0 %v1523, 96
    %v2482 = vpop.permute.xlu0 %2481
    %2483 = vrot.lane.b32.xlu0 %v1527, 96
    %v2484 = vpop.permute.xlu0 %2483
    %2485 = vrot.lane.b32.xlu0 %v1531, 96
    %v2486 = vpop.permute.xlu0 %2485
    %2487 = vrot.lane.b32.xlu0 %v1535, 96
    %v2488 = vpop.permute.xlu0 %2487
    %2489 = vrot.lane.b32.xlu0 %v1539, 96
    %v2490 = vpop.permute.xlu0 %2489
    %2491 = vrot.lane.b32.xlu0 %v1543, 96
    %v2492 = vpop.permute.xlu0 %2491
    %2493 = vrot.lane.b32.xlu0 %v1547, 96
    %v2494 = vpop.permute.xlu0 %2493
    %2495 = vrot.lane.b32.xlu0 %v1551, 96
    %v2496 = vpop.permute.xlu0 %2495
    %2497 = vrot.lane.b32.xlu0 %v1555, 96
    %v2498 = vpop.permute.xlu0 %2497
    %2499 = vrot.lane.b32.xlu0 %v1559, 96
    %v2500 = vpop.permute.xlu0 %2499
    %2501 = vrot.lane.b32.xlu0 %v1563, 96
    %v2502 = vpop.permute.xlu0 %2501
    %2503 = vrot.lane.b32.xlu0 %v1567, 96
    %v2504 = vpop.permute.xlu0 %2503
    %2505 = vrot.lane.b32.xlu0 %v1571, 96
    %v2506 = vpop.permute.xlu0 %2505
    %2507 = vrot.lane.b32.xlu0 %v1575, 96
    %v2508 = vpop.permute.xlu0 %2507
    %2509 = vrot.lane.b32.xlu0 %v1579, 96
    %v2510 = vpop.permute.xlu0 %2509
    %2511 = vrot.lane.b32.xlu0 %v1583, 96
    %v2512 = vpop.permute.xlu0 %2511
    %2545 = vrot.lane.b32.xlu0 %v1459, 80
    %v2546 = vpop.permute.xlu0 %2545
    %2547 = vrot.lane.b32.xlu0 %v1463, 80
    %v2548 = vpop.permute.xlu0 %2547
    %2549 = vrot.lane.b32.xlu0 %v1467, 80
    %v2550 = vpop.permute.xlu0 %2549
    %2551 = vrot.lane.b32.xlu0 %v1471, 80
    %v2552 = vpop.permute.xlu0 %2551
    %2553 = vrot.lane.b32.xlu0 %v1475, 80
    %v2554 = vpop.permute.xlu0 %2553
    %2555 = vrot.lane.b32.xlu0 %v1479, 80
    %v2556 = vpop.permute.xlu0 %2555
    %2557 = vrot.lane.b32.xlu0 %v1483, 80
    %v2558 = vpop.permute.xlu0 %2557
    %2559 = vrot.lane.b32.xlu0 %v1487, 80
    %v2560 = vpop.permute.xlu0 %2559
    %2561 = vrot.lane.b32.xlu0 %v1491, 80
    %v2562 = vpop.permute.xlu0 %2561
    %2563 = vrot.lane.b32.xlu0 %v1495, 80
    %v2564 = vpop.permute.xlu0 %2563
    %2565 = vrot.lane.b32.xlu0 %v1499, 80
    %v2566 = vpop.permute.xlu0 %2565
    %2567 = vrot.lane.b32.xlu0 %v1503, 80
    %v2568 = vpop.permute.xlu0 %2567
    %2569 = vrot.lane.b32.xlu0 %v1507, 80
    %v2570 = vpop.permute.xlu0 %2569
    %2571 = vrot.lane.b32.xlu0 %v1511, 80
    %v2572 = vpop.permute.xlu0 %2571
    %2573 = vrot.lane.b32.xlu0 %v1515, 80
    %v2574 = vpop.permute.xlu0 %2573
    %2575 = vrot.lane.b32.xlu0 %v1519, 80
    %v2576 = vpop.permute.xlu0 %2575
    %2577 = vrot.lane.b32.xlu0 %v1523, 80
    %v2578 = vpop.permute.xlu0 %2577
    %2579 = vrot.lane.b32.xlu0 %v1527, 80
    %v2580 = vpop.permute.xlu0 %2579
    %2581 = vrot.lane.b32.xlu0 %v1531, 80
    %v2582 = vpop.permute.xlu0 %2581
    %2583 = vrot.lane.b32.xlu0 %v1535, 80
    %v2584 = vpop.permute.xlu0 %2583
    %2585 = vrot.lane.b32.xlu0 %v1539, 80
    %v2586 = vpop.permute.xlu0 %2585
    %2587 = vrot.lane.b32.xlu0 %v1543, 80
    %v2588 = vpop.permute.xlu0 %2587
    %2589 = vrot.lane.b32.xlu0 %v1547, 80
    %v2590 = vpop.permute.xlu0 %2589
    %2591 = vrot.lane.b32.xlu0 %v1551, 80
    %v2592 = vpop.permute.xlu0 %2591
    %2593 = vrot.lane.b32.xlu0 %v1555, 80
    %v2594 = vpop.permute.xlu0 %2593
    %2595 = vrot.lane.b32.xlu0 %v1559, 80
    %v2596 = vpop.permute.xlu0 %2595
    %2597 = vrot.lane.b32.xlu0 %v1563, 80
    %v2598 = vpop.permute.xlu0 %2597
    %2599 = vrot.lane.b32.xlu0 %v1567, 80
    %v2600 = vpop.permute.xlu0 %2599
    %2601 = vrot.lane.b32.xlu0 %v1571, 80
    %v2602 = vpop.permute.xlu0 %2601
    %2603 = vrot.lane.b32.xlu0 %v1575, 80
    %v2604 = vpop.permute.xlu0 %2603
    %2605 = vrot.lane.b32.xlu0 %v1579, 80
    %v2606 = vpop.permute.xlu0 %2605
    %2607 = vrot.lane.b32.xlu0 %v1583, 80
    %v2608 = vpop.permute.xlu0 %2607
    %2673 = vrot.lane.b32.xlu0 %v1460, 64
    %v2674 = vpop.permute.xlu0 %2673
    %2675 = vrot.lane.b32.xlu0 %v1464, 64
    %v2676 = vpop.permute.xlu0 %2675
    %2677 = vrot.lane.b32.xlu0 %v1468, 64
    %v2678 = vpop.permute.xlu0 %2677
    %2679 = vrot.lane.b32.xlu0 %v1472, 64
    %v2680 = vpop.permute.xlu0 %2679
    %2681 = vrot.lane.b32.xlu0 %v1476, 64
    %v2682 = vpop.permute.xlu0 %2681
    %2683 = vrot.lane.b32.xlu0 %v1480, 64
    %v2684 = vpop.permute.xlu0 %2683
    %2685 = vrot.lane.b32.xlu0 %v1484, 64
    %v2686 = vpop.permute.xlu0 %2685
    %2687 = vrot.lane.b32.xlu0 %v1488, 64
    %v2688 = vpop.permute.xlu0 %2687
    %2689 = vrot.lane.b32.xlu0 %v1492, 64
    %v2690 = vpop.permute.xlu0 %2689
    %2691 = vrot.lane.b32.xlu0 %v1496, 64
    %v2692 = vpop.permute.xlu0 %2691
    %2693 = vrot.lane.b32.xlu0 %v1500, 64
    %v2694 = vpop.permute.xlu0 %2693
    %2695 = vrot.lane.b32.xlu0 %v1504, 64
    %v2696 = vpop.permute.xlu0 %2695
    %2697 = vrot.lane.b32.xlu0 %v1508, 64
    %v2698 = vpop.permute.xlu0 %2697
    %2699 = vrot.lane.b32.xlu0 %v1512, 64
    %v2700 = vpop.permute.xlu0 %2699
    %2701 = vrot.lane.b32.xlu0 %v1516, 64
    %v2702 = vpop.permute.xlu0 %2701
    %2703 = vrot.lane.b32.xlu0 %v1520, 64
    %v2704 = vpop.permute.xlu0 %2703
    %2705 = vrot.lane.b32.xlu0 %v1524, 64
    %v2706 = vpop.permute.xlu0 %2705
    %2707 = vrot.lane.b32.xlu0 %v1528, 64
    %v2708 = vpop.permute.xlu0 %2707
    %2709 = vrot.lane.b32.xlu0 %v1532, 64
    %v2710 = vpop.permute.xlu0 %2709
    %2711 = vrot.lane.b32.xlu0 %v1536, 64
    %v2712 = vpop.permute.xlu0 %2711
    %2713 = vrot.lane.b32.xlu0 %v1540, 64
    %v2714 = vpop.permute.xlu0 %2713
    %2715 = vrot.lane.b32.xlu0 %v1544, 64
    %v2716 = vpop.permute.xlu0 %2715
    %2717 = vrot.lane.b32.xlu0 %v1548, 64
    %v2718 = vpop.permute.xlu0 %2717
    %2719 = vrot.lane.b32.xlu0 %v1552, 64
    %v2720 = vpop.permute.xlu0 %2719
    %2721 = vrot.lane.b32.xlu0 %v1556, 64
    %v2722 = vpop.permute.xlu0 %2721
    %2723 = vrot.lane.b32.xlu0 %v1560, 64
    %v2724 = vpop.permute.xlu0 %2723
    %2725 = vrot.lane.b32.xlu0 %v1564, 64
    %v2726 = vpop.permute.xlu0 %2725
    %2727 = vrot.lane.b32.xlu0 %v1568, 64
    %v2728 = vpop.permute.xlu0 %2727
    %2729 = vrot.lane.b32.xlu0 %v1572, 64
    %v2730 = vpop.permute.xlu0 %2729
    %2731 = vrot.lane.b32.xlu0 %v1576, 64
    %v2732 = vpop.permute.xlu0 %2731
    %2733 = vrot.lane.b32.xlu0 %v1580, 64
    %v2734 = vpop.permute.xlu0 %2733
    %2735 = vrot.lane.b32.xlu0 %v1584, 64
    %v2736 = vpop.permute.xlu0 %2735
    %2769 = vrot.lane.b32.xlu0 %v1460, 48
    %v2770 = vpop.permute.xlu0 %2769
    %2771 = vrot.lane.b32.xlu0 %v1464, 48
    %v2772 = vpop.permute.xlu0 %2771
    %2773 = vrot.lane.b32.xlu0 %v1468, 48
    %v2774 = vpop.permute.xlu0 %2773
    %2775 = vrot.lane.b32.xlu0 %v1472, 48
    %v2776 = vpop.permute.xlu0 %2775
    %2777 = vrot.lane.b32.xlu0 %v1476, 48
    %v2778 = vpop.permute.xlu0 %2777
    %2779 = vrot.lane.b32.xlu0 %v1480, 48
    %v2780 = vpop.permute.xlu0 %2779
    %2781 = vrot.lane.b32.xlu0 %v1484, 48
    %v2782 = vpop.permute.xlu0 %2781
    %2783 = vrot.lane.b32.xlu0 %v1488, 48
    %v2784 = vpop.permute.xlu0 %2783
    %2785 = vrot.lane.b32.xlu0 %v1492, 48
    %v2786 = vpop.permute.xlu0 %2785
    %2787 = vrot.lane.b32.xlu0 %v1496, 48
    %v2788 = vpop.permute.xlu0 %2787
    %2789 = vrot.lane.b32.xlu0 %v1500, 48
    %v2790 = vpop.permute.xlu0 %2789
    %2791 = vrot.lane.b32.xlu0 %v1504, 48
    %v2792 = vpop.permute.xlu0 %2791
    %2793 = vrot.lane.b32.xlu0 %v1508, 48
    %v2794 = vpop.permute.xlu0 %2793
    %2795 = vrot.lane.b32.xlu0 %v1512, 48
    %v2796 = vpop.permute.xlu0 %2795
    %2797 = vrot.lane.b32.xlu0 %v1516, 48
    %v2798 = vpop.permute.xlu0 %2797
    %2799 = vrot.lane.b32.xlu0 %v1520, 48
    %v2800 = vpop.permute.xlu0 %2799
    %2801 = vrot.lane.b32.xlu0 %v1524, 48
    %v2802 = vpop.permute.xlu0 %2801
    %2803 = vrot.lane.b32.xlu0 %v1528, 48
    %v2804 = vpop.permute.xlu0 %2803
    %2805 = vrot.lane.b32.xlu0 %v1532, 48
    %v2806 = vpop.permute.xlu0 %2805
    %2807 = vrot.lane.b32.xlu0 %v1536, 48
    %v2808 = vpop.permute.xlu0 %2807
    %2809 = vrot.lane.b32.xlu0 %v1540, 48
    %v2810 = vpop.permute.xlu0 %2809
    %2811 = vrot.lane.b32.xlu0 %v1544, 48
    %v2812 = vpop.permute.xlu0 %2811
    %2813 = vrot.lane.b32.xlu0 %v1548, 48
    %v2814 = vpop.permute.xlu0 %2813
    %2815 = vrot.lane.b32.xlu0 %v1552, 48
    %v2816 = vpop.permute.xlu0 %2815
    %2817 = vrot.lane.b32.xlu0 %v1556, 48
    %v2818 = vpop.permute.xlu0 %2817
    %2819 = vrot.lane.b32.xlu0 %v1560, 48
    %v2820 = vpop.permute.xlu0 %2819
    %2821 = vrot.lane.b32.xlu0 %v1564, 48
    %v2822 = vpop.permute.xlu0 %2821
    %2823 = vrot.lane.b32.xlu0 %v1568, 48
    %v2824 = vpop.permute.xlu0 %2823
    %2825 = vrot.lane.b32.xlu0 %v1572, 48
    %v2826 = vpop.permute.xlu0 %2825
    %2827 = vrot.lane.b32.xlu0 %v1576, 48
    %v2828 = vpop.permute.xlu0 %2827
    %2829 = vrot.lane.b32.xlu0 %v1580, 48
    %v2830 = vpop.permute.xlu0 %2829
    %2831 = vrot.lane.b32.xlu0 %v1584, 48
    %v2832 = vpop.permute.xlu0 %2831
    %vm2865 = vcmask 130048
    %v2866 = vsel %vm2865, %v1457, %v1618
    %v2867 = vsel %vm2865, %v1461, %v1620
    %v2868 = vsel %vm2865, %v1465, %v1622
    %v2869 = vsel %vm2865, %v1469, %v1624
    %v2870 = vsel %vm2865, %v1473, %v1626
    %v2871 = vsel %vm2865, %v1477, %v1628
    %v2872 = vsel %vm2865, %v1481, %v1630
    %v2873 = vsel %vm2865, %v1485, %v1632
    %v2874 = vsel %vm2865, %v1489, %v1634
    %v2875 = vsel %vm2865, %v1493, %v1636
    %v2876 = vsel %vm2865, %v1497, %v1638
    %v2877 = vsel %vm2865, %v1501, %v1640
    %v2878 = vsel %vm2865, %v1505, %v1642
    %v2879 = vsel %vm2865, %v1509, %v1644
    %v2880 = vsel %vm2865, %v1513, %v1646
    %v2881 = vsel %vm2865, %v1517, %v1648
    %v2882 = vsel %vm2865, %v1521, %v1650
    %v2883 = vsel %vm2865, %v1525, %v1652
    %v2884 = vsel %vm2865, %v1529, %v1654
    %v2885 = vsel %vm2865, %v1533, %v1656
    %v2886 = vsel %vm2865, %v1537, %v1658
    %v2887 = vsel %vm2865, %v1541, %v1660
    %v2888 = vsel %vm2865, %v1545, %v1662
    %v2889 = vsel %vm2865, %v1549, %v1664
    %v2890 = vsel %vm2865, %v1553, %v1666
    %v2891 = vsel %vm2865, %v1557, %v1668
    %v2892 = vsel %vm2865, %v1561, %v1670
    %v2893 = vsel %vm2865, %v1565, %v1672
    %v2894 = vsel %vm2865, %v1569, %v1674
    %v2895 = vsel %vm2865, %v1573, %v1676
    %v2896 = vsel %vm2865, %v1577, %v1678
    %v2897 = vsel %vm2865, %v1581, %v1680
    %vm2898 = vcmask 261120
    %v2899 = vsel %vm2898, %v2866, %v1714
    %v2900 = vsel %vm2898, %v2867, %v1716
    %v2901 = vsel %vm2898, %v2868, %v1718
    %v2902 = vsel %vm2898, %v2869, %v1720
    %v2903 = vsel %vm2898, %v2870, %v1722
    %v2904 = vsel %vm2898, %v2871, %v1724
    %v2905 = vsel %vm2898, %v2872, %v1726
    %v2906 = vsel %vm2898, %v2873, %v1728
    %v2907 = vsel %vm2898, %v2874, %v1730
    %v2908 = vsel %vm2898, %v2875, %v1732
    %v2909 = vsel %vm2898, %v2876, %v1734
    %v2910 = vsel %vm2898, %v2877, %v1736
    %v2911 = vsel %vm2898, %v2878, %v1738
    %v2912 = vsel %vm2898, %v2879, %v1740
    %v2913 = vsel %vm2898, %v2880, %v1742
    %v2914 = vsel %vm2898, %v2881, %v1744
    %v2915 = vsel %vm2898, %v2882, %v1746
    %v2916 = vsel %vm2898, %v2883, %v1748
    %v2917 = vsel %vm2898, %v2884, %v1750
    %v2918 = vsel %vm2898, %v2885, %v1752
    %v2919 = vsel %vm2898, %v2886, %v1754
    %v2920 = vsel %vm2898, %v2887, %v1756
    %v2921 = vsel %vm2898, %v2888, %v1758
    %v2922 = vsel %vm2898, %v2889, %v1760
    %v2923 = vsel %vm2898, %v2890, %v1762
    %v2924 = vsel %vm2898, %v2891, %v1764
    %v2925 = vsel %vm2898, %v2892, %v1766
    %v2926 = vsel %vm2898, %v2893, %v1768
    %v2927 = vsel %vm2898, %v2894, %v1770
    %v2928 = vsel %vm2898, %v2895, %v1772
    %v2929 = vsel %vm2898, %v2896, %v1774
    %v2930 = vsel %vm2898, %v2897, %v1776
    %vm2931 = vcmask 392192
    %v2932 = vsel %vm2931, %v2899, %v1810
    %v2933 = vsel %vm2931, %v2900, %v1812
    %v2934 = vsel %vm2931, %v2901, %v1814
    %v2935 = vsel %vm2931, %v2902, %v1816
    %v2936 = vsel %vm2931, %v2903, %v1818
    %v2937 = vsel %vm2931, %v2904, %v1820
    %v2938 = vsel %vm2931, %v2905, %v1822
    %v2939 = vsel %vm2931, %v2906, %v1824
    %v2940 = vsel %vm2931, %v2907, %v1826
    %v2941 = vsel %vm2931, %v2908, %v1828
    %v2942 = vsel %vm2931, %v2909, %v1830
    %v2943 = vsel %vm2931, %v2910, %v1832
    %v2944 = vsel %vm2931, %v2911, %v1834
    %v2945 = vsel %vm2931, %v2912, %v1836
    %v2946 = vsel %vm2931, %v2913, %v1838
    %v2947 = vsel %vm2931, %v2914, %v1840
    %v2948 = vsel %vm2931, %v2915, %v1842
    %v2949 = vsel %vm2931, %v2916, %v1844
    %v2950 = vsel %vm2931, %v2917, %v1846
    %v2951 = vsel %vm2931, %v2918, %v1848
    %v2952 = vsel %vm2931, %v2919, %v1850
    %v2953 = vsel %vm2931, %v2920, %v1852
    %v2954 = vsel %vm2931, %v2921, %v1854
    %v2955 = vsel %vm2931, %v2922, %v1856
    %v2956 = vsel %vm2931, %v2923, %v1858
    %v2957 = vsel %vm2931, %v2924, %v1860
    %v2958 = vsel %vm2931, %v2925, %v1862
    %v2959 = vsel %vm2931, %v2926, %v1864
    %v2960 = vsel %vm2931, %v2927, %v1866
    %v2961 = vsel %vm2931, %v2928, %v1868
    %v2962 = vsel %vm2931, %v2929, %v1870
    %v2963 = vsel %vm2931, %v2930, %v1872
    %vm2964 = vcmask 523264
    %v2965 = vsel %vm2964, %v2932, %v1938
    %v2966 = vsel %vm2964, %v2933, %v1940
    %v2967 = vsel %vm2964, %v2934, %v1942
    %v2968 = vsel %vm2964, %v2935, %v1944
    %v2969 = vsel %vm2964, %v2936, %v1946
    %v2970 = vsel %vm2964, %v2937, %v1948
    %v2971 = vsel %vm2964, %v2938, %v1950
    %v2972 = vsel %vm2964, %v2939, %v1952
    %v2973 = vsel %vm2964, %v2940, %v1954
    %v2974 = vsel %vm2964, %v2941, %v1956
    %v2975 = vsel %vm2964, %v2942, %v1958
    %v2976 = vsel %vm2964, %v2943, %v1960
    %v2977 = vsel %vm2964, %v2944, %v1962
    %v2978 = vsel %vm2964, %v2945, %v1964
    %v2979 = vsel %vm2964, %v2946, %v1966
    %v2980 = vsel %vm2964, %v2947, %v1968
    %v2981 = vsel %vm2964, %v2948, %v1970
    %v2982 = vsel %vm2964, %v2949, %v1972
    %v2983 = vsel %vm2964, %v2950, %v1974
    %v2984 = vsel %vm2964, %v2951, %v1976
    %v2985 = vsel %vm2964, %v2952, %v1978
    %v2986 = vsel %vm2964, %v2953, %v1980
    %v2987 = vsel %vm2964, %v2954, %v1982
    %v2988 = vsel %vm2964, %v2955, %v1984
    %v2989 = vsel %vm2964, %v2956, %v1986
    %v2990 = vsel %vm2964, %v2957, %v1988
    %v2991 = vsel %vm2964, %v2958, %v1990
    %v2992 = vsel %vm2964, %v2959, %v1992
    %v2993 = vsel %vm2964, %v2960, %v1994
    %v2994 = vsel %vm2964, %v2961, %v1996
    %v2995 = vsel %vm2964, %v2962, %v1998
    %v2996 = vsel %vm2964, %v2963, %v2000
    %vm2997 = vcmask 654336
    %v2998 = vsel %vm2997, %v2965, %v2034
    %v2999 = vsel %vm2997, %v2966, %v2036
    %v3000 = vsel %vm2997, %v2967, %v2038
    %v3001 = vsel %vm2997, %v2968, %v2040
    %v3002 = vsel %vm2997, %v2969, %v2042
    %v3003 = vsel %vm2997, %v2970, %v2044
    %v3004 = vsel %vm2997, %v2971, %v2046
    %v3005 = vsel %vm2997, %v2972, %v2048
    %v3006 = vsel %vm2997, %v2973, %v2050
    %v3007 = vsel %vm2997, %v2974, %v2052
    %v3008 = vsel %vm2997, %v2975, %v2054
    %v3009 = vsel %vm2997, %v2976, %v2056
    %v3010 = vsel %vm2997, %v2977, %v2058
    %v3011 = vsel %vm2997, %v2978, %v2060
    %v3012 = vsel %vm2997, %v2979, %v2062
    %v3013 = vsel %vm2997, %v2980, %v2064
    %v3014 = vsel %vm2997, %v2981, %v2066
    %v3015 = vsel %vm2997, %v2982, %v2068
    %v3016 = vsel %vm2997, %v2983, %v2070
    %v3017 = vsel %vm2997, %v2984, %v2072
    %v3018 = vsel %vm2997, %v2985, %v2074
    %v3019 = vsel %vm2997, %v2986, %v2076
    %v3020 = vsel %vm2997, %v2987, %v2078
    %v3021 = vsel %vm2997, %v2988, %v2080
    %v3022 = vsel %vm2997, %v2989, %v2082
    %v3023 = vsel %vm2997, %v2990, %v2084
    %v3024 = vsel %vm2997, %v2991, %v2086
    %v3025 = vsel %vm2997, %v2992, %v2088
    %v3026 = vsel %vm2997, %v2993, %v2090
    %v3027 = vsel %vm2997, %v2994, %v2092
    %v3028 = vsel %vm2997, %v2995, %v2094
    %v3029 = vsel %vm2997, %v2996, %v2096
    %vm3030 = vcmask 785408
    %v3031 = vsel %vm3030, %v2998, %v2130
    %v3032 = vsel %vm3030, %v2999, %v2132
    %v3033 = vsel %vm3030, %v3000, %v2134
    %v3034 = vsel %vm3030, %v3001, %v2136
    %v3035 = vsel %vm3030, %v3002, %v2138
    %v3036 = vsel %vm3030, %v3003, %v2140
    %v3037 = vsel %vm3030, %v3004, %v2142
    %v3038 = vsel %vm3030, %v3005, %v2144
    %v3039 = vsel %vm3030, %v3006, %v2146
    %v3040 = vsel %vm3030, %v3007, %v2148
    %v3041 = vsel %vm3030, %v3008, %v2150
    %v3042 = vsel %vm3030, %v3009, %v2152
    %v3043 = vsel %vm3030, %v3010, %v2154
    %v3044 = vsel %vm3030, %v3011, %v2156
    %v3045 = vsel %vm3030, %v3012, %v2158
    %v3046 = vsel %vm3030, %v3013, %v2160
    %v3047 = vsel %vm3030, %v3014, %v2162
    %v3048 = vsel %vm3030, %v3015, %v2164
    %v3049 = vsel %vm3030, %v3016, %v2166
    %v3050 = vsel %vm3030, %v3017, %v2168
    %v3051 = vsel %vm3030, %v3018, %v2170
    %v3052 = vsel %vm3030, %v3019, %v2172
    %v3053 = vsel %vm3030, %v3020, %v2174
    %v3054 = vsel %vm3030, %v3021, %v2176
    %v3055 = vsel %vm3030, %v3022, %v2178
    %v3056 = vsel %vm3030, %v3023, %v2180
    %v3057 = vsel %vm3030, %v3024, %v2182
    %v3058 = vsel %vm3030, %v3025, %v2184
    %v3059 = vsel %vm3030, %v3026, %v2186
    %v3060 = vsel %vm3030, %v3027, %v2188
    %v3061 = vsel %vm3030, %v3028, %v2190
    %v3062 = vsel %vm3030, %v3029, %v2192
    %v3063 = vsel %vm1232, %v3031, %v2226
    %v3064 = vsel %vm1232, %v3032, %v2228
    %v3065 = vsel %vm1232, %v3033, %v2230
    %v3066 = vsel %vm1232, %v3034, %v2232
    %v3067 = vsel %vm1232, %v3035, %v2234
    %v3068 = vsel %vm1232, %v3036, %v2236
    %v3069 = vsel %vm1232, %v3037, %v2238
    %v3070 = vsel %vm1232, %v3038, %v2240
    %v3071 = vsel %vm1232, %v3039, %v2242
    %v3072 = vsel %vm1232, %v3040, %v2244
    %v3073 = vsel %vm1232, %v3041, %v2246
    %v3074 = vsel %vm1232, %v3042, %v2248
    %v3075 = vsel %vm1232, %v3043, %v2250
    %v3076 = vsel %vm1232, %v3044, %v2252
    %v3077 = vsel %vm1232, %v3045, %v2254
    %v3078 = vsel %vm1232, %v3046, %v2256
    %v3079 = vsel %vm1232, %v3047, %v2258
    %v3080 = vsel %vm1232, %v3048, %v2260
    %v3081 = vsel %vm1232, %v3049, %v2262
    %v3082 = vsel %vm1232, %v3050, %v2264
    %v3083 = vsel %vm1232, %v3051, %v2266
    %v3084 = vsel %vm1232, %v3052, %v2268
    %v3085 = vsel %vm1232, %v3053, %v2270
    %v3086 = vsel %vm1232, %v3054, %v2272
    %v3087 = vsel %vm1232, %v3055, %v2274
    %v3088 = vsel %vm1232, %v3056, %v2276
    %v3089 = vsel %vm1232, %v3057, %v2278
    %v3090 = vsel %vm1232, %v3058, %v2280
    %v3091 = vsel %vm1232, %v3059, %v2282
    %v3092 = vsel %vm1232, %v3060, %v2284
    %v3093 = vsel %vm1232, %v3061, %v2286
    %v3094 = vsel %vm1232, %v3062, %v2288
    %v3095 = vsel %vm2865, %v1459, %v2354
    %v3096 = vsel %vm2865, %v1463, %v2356
    %v3097 = vsel %vm2865, %v1467, %v2358
    %v3098 = vsel %vm2865, %v1471, %v2360
    %v3099 = vsel %vm2865, %v1475, %v2362
    %v3100 = vsel %vm2865, %v1479, %v2364
    %v3101 = vsel %vm2865, %v1483, %v2366
    %v3102 = vsel %vm2865, %v1487, %v2368
    %v3103 = vsel %vm2865, %v1491, %v2370
    %v3104 = vsel %vm2865, %v1495, %v2372
    %v3105 = vsel %vm2865, %v1499, %v2374
    %v3106 = vsel %vm2865, %v1503, %v2376
    %v3107 = vsel %vm2865, %v1507, %v2378
    %v3108 = vsel %vm2865, %v1511, %v2380
    %v3109 = vsel %vm2865, %v1515, %v2382
    %v3110 = vsel %vm2865, %v1519, %v2384
    %v3111 = vsel %vm2865, %v1523, %v2386
    %v3112 = vsel %vm2865, %v1527, %v2388
    %v3113 = vsel %vm2865, %v1531, %v2390
    %v3114 = vsel %vm2865, %v1535, %v2392
    %v3115 = vsel %vm2865, %v1539, %v2394
    %v3116 = vsel %vm2865, %v1543, %v2396
    %v3117 = vsel %vm2865, %v1547, %v2398
    %v3118 = vsel %vm2865, %v1551, %v2400
    %v3119 = vsel %vm2865, %v1555, %v2402
    %v3120 = vsel %vm2865, %v1559, %v2404
    %v3121 = vsel %vm2865, %v1563, %v2406
    %v3122 = vsel %vm2865, %v1567, %v2408
    %v3123 = vsel %vm2865, %v1571, %v2410
    %v3124 = vsel %vm2865, %v1575, %v2412
    %v3125 = vsel %vm2865, %v1579, %v2414
    %v3126 = vsel %vm2865, %v1583, %v2416
    %v3127 = vsel %vm2898, %v3095, %v2450
    %v3128 = vsel %vm2898, %v3096, %v2452
    %v3129 = vsel %vm2898, %v3097, %v2454
    %v3130 = vsel %vm2898, %v3098, %v2456
    %v3131 = vsel %vm2898, %v3099, %v2458
    %v3132 = vsel %vm2898, %v3100, %v2460
    %v3133 = vsel %vm2898, %v3101, %v2462
    %v3134 = vsel %vm2898, %v3102, %v2464
    %v3135 = vsel %vm2898, %v3103, %v2466
    %v3136 = vsel %vm2898, %v3104, %v2468
    %v3137 = vsel %vm2898, %v3105, %v2470
    %v3138 = vsel %vm2898, %v3106, %v2472
    %v3139 = vsel %vm2898, %v3107, %v2474
    %v3140 = vsel %vm2898, %v3108, %v2476
    %v3141 = vsel %vm2898, %v3109, %v2478
    %v3142 = vsel %vm2898, %v3110, %v2480
    %v3143 = vsel %vm2898, %v3111, %v2482
    %v3144 = vsel %vm2898, %v3112, %v2484
    %v3145 = vsel %vm2898, %v3113, %v2486
    %v3146 = vsel %vm2898, %v3114, %v2488
    %v3147 = vsel %vm2898, %v3115, %v2490
    %v3148 = vsel %vm2898, %v3116, %v2492
    %v3149 = vsel %vm2898, %v3117, %v2494
    %v3150 = vsel %vm2898, %v3118, %v2496
    %v3151 = vsel %vm2898, %v3119, %v2498
    %v3152 = vsel %vm2898, %v3120, %v2500
    %v3153 = vsel %vm2898, %v3121, %v2502
    %v3154 = vsel %vm2898, %v3122, %v2504
    %v3155 = vsel %vm2898, %v3123, %v2506
    %v3156 = vsel %vm2898, %v3124, %v2508
    %v3157 = vsel %vm2898, %v3125, %v2510
    %v3158 = vsel %vm2898, %v3126, %v2512
    %v3159 = vsel %vm2931, %v3127, %v2546
    %v3160 = vsel %vm2931, %v3128, %v2548
    %v3161 = vsel %vm2931, %v3129, %v2550
    %v3162 = vsel %vm2931, %v3130, %v2552
    %v3163 = vsel %vm2931, %v3131, %v2554
    %v3164 = vsel %vm2931, %v3132, %v2556
    %v3165 = vsel %vm2931, %v3133, %v2558
    %v3166 = vsel %vm2931, %v3134, %v2560
    %v3167 = vsel %vm2931, %v3135, %v2562
    %v3168 = vsel %vm2931, %v3136, %v2564
    %v3169 = vsel %vm2931, %v3137, %v2566
    %v3170 = vsel %vm2931, %v3138, %v2568
    %v3171 = vsel %vm2931, %v3139, %v2570
    %v3172 = vsel %vm2931, %v3140, %v2572
    %v3173 = vsel %vm2931, %v3141, %v2574
    %v3174 = vsel %vm2931, %v3142, %v2576
    %v3175 = vsel %vm2931, %v3143, %v2578
    %v3176 = vsel %vm2931, %v3144, %v2580
    %v3177 = vsel %vm2931, %v3145, %v2582
    %v3178 = vsel %vm2931, %v3146, %v2584
    %v3179 = vsel %vm2931, %v3147, %v2586
    %v3180 = vsel %vm2931, %v3148, %v2588
    %v3181 = vsel %vm2931, %v3149, %v2590
    %v3182 = vsel %vm2931, %v3150, %v2592
    %v3183 = vsel %vm2931, %v3151, %v2594
    %v3184 = vsel %vm2931, %v3152, %v2596
    %v3185 = vsel %vm2931, %v3153, %v2598
    %v3186 = vsel %vm2931, %v3154, %v2600
    %v3187 = vsel %vm2931, %v3155, %v2602
    %v3188 = vsel %vm2931, %v3156, %v2604
    %v3189 = vsel %vm2931, %v3157, %v2606
    %v3190 = vsel %vm2931, %v3158, %v2608
    %v3191 = vsel %vm2964, %v3159, %v2674
    %v3192 = vsel %vm2964, %v3160, %v2676
    %v3193 = vsel %vm2964, %v3161, %v2678
    %v3194 = vsel %vm2964, %v3162, %v2680
    %v3195 = vsel %vm2964, %v3163, %v2682
    %v3196 = vsel %vm2964, %v3164, %v2684
    %v3197 = vsel %vm2964, %v3165, %v2686
    %v3198 = vsel %vm2964, %v3166, %v2688
    %v3199 = vsel %vm2964, %v3167, %v2690
    %v3200 = vsel %vm2964, %v3168, %v2692
    %v3201 = vsel %vm2964, %v3169, %v2694
    %v3202 = vsel %vm2964, %v3170, %v2696
    %v3203 = vsel %vm2964, %v3171, %v2698
    %v3204 = vsel %vm2964, %v3172, %v2700
    %v3205 = vsel %vm2964, %v3173, %v2702
    %v3206 = vsel %vm2964, %v3174, %v2704
    %v3207 = vsel %vm2964, %v3175, %v2706
    %v3208 = vsel %vm2964, %v3176, %v2708
    %v3209 = vsel %vm2964, %v3177, %v2710
    %v3210 = vsel %vm2964, %v3178, %v2712
    %v3211 = vsel %vm2964, %v3179, %v2714
    %v3212 = vsel %vm2964, %v3180, %v2716
    %v3213 = vsel %vm2964, %v3181, %v2718
    %v3214 = vsel %vm2964, %v3182, %v2720
    %v3215 = vsel %vm2964, %v3183, %v2722
    %v3216 = vsel %vm2964, %v3184, %v2724
    %v3217 = vsel %vm2964, %v3185, %v2726
    %v3218 = vsel %vm2964, %v3186, %v2728
    %v3219 = vsel %vm2964, %v3187, %v2730
    %v3220 = vsel %vm2964, %v3188, %v2732
    %v3221 = vsel %vm2964, %v3189, %v2734
    %v3222 = vsel %vm2964, %v3190, %v2736
    %v3223 = vsel %vm2997, %v3191, %v2770
    %v3224 = vsel %vm2997, %v3192, %v2772
    %v3225 = vsel %vm2997, %v3193, %v2774
    %v3226 = vsel %vm2997, %v3194, %v2776
    %v3227 = vsel %vm2997, %v3195, %v2778
    %v3228 = vsel %vm2997, %v3196, %v2780
    %v3229 = vsel %vm2997, %v3197, %v2782
    %v3230 = vsel %vm2997, %v3198, %v2784
    %v3231 = vsel %vm2997, %v3199, %v2786
    %v3232 = vsel %vm2997, %v3200, %v2788
    %v3233 = vsel %vm2997, %v3201, %v2790
    %v3234 = vsel %vm2997, %v3202, %v2792
    %v3235 = vsel %vm2997, %v3203, %v2794
    %v3236 = vsel %vm2997, %v3204, %v2796
    %v3237 = vsel %vm2997, %v3205, %v2798
    %v3238 = vsel %vm2997, %v3206, %v2800
    %v3239 = vsel %vm2997, %v3207, %v2802
    %v3240 = vsel %vm2997, %v3208, %v2804
    %v3241 = vsel %vm2997, %v3209, %v2806
    %v3242 = vsel %vm2997, %v3210, %v2808
    %v3243 = vsel %vm2997, %v3211, %v2810
    %v3244 = vsel %vm2997, %v3212, %v2812
    %v3245 = vsel %vm2997, %v3213, %v2814
    %v3246 = vsel %vm2997, %v3214, %v2816
    %v3247 = vsel %vm2997, %v3215, %v2818
    %v3248 = vsel %vm2997, %v3216, %v2820
    %v3249 = vsel %vm2997, %v3217, %v2822
    %v3250 = vsel %vm2997, %v3218, %v2824
    %v3251 = vsel %vm2997, %v3219, %v2826
    %v3252 = vsel %vm2997, %v3220, %v2828
    %v3253 = vsel %vm2997, %v3221, %v2830
    %v3254 = vsel %vm2997, %v3222, %v2832
    %v3319 = vrot.slane %v3223, 6
    %v3320 = vrot.slane %v3224, 6
    %v3321 = vrot.slane %v3225, 6
    %v3322 = vrot.slane %v3226, 6
    %v3323 = vrot.slane %v3227, 6
    %v3324 = vrot.slane %v3228, 6
    %v3325 = vrot.slane %v3229, 6
    %v3326 = vrot.slane %v3230, 6
    %v3327 = vrot.slane %v3231, 6
    %v3328 = vrot.slane %v3232, 6
    %v3329 = vrot.slane %v3233, 6
    %v3330 = vrot.slane %v3234, 6
    %v3331 = vrot.slane %v3235, 6
    %v3332 = vrot.slane %v3236, 6
    %v3333 = vrot.slane %v3237, 6
    %v3334 = vrot.slane %v3238, 6
    %v3335 = vrot.slane %v3239, 6
    %v3336 = vrot.slane %v3240, 6
    %v3337 = vrot.slane %v3241, 6
    %v3338 = vrot.slane %v3242, 6
    %v3339 = vrot.slane %v3243, 6
    %v3340 = vrot.slane %v3244, 6
    %v3341 = vrot.slane %v3245, 6
    %v3342 = vrot.slane %v3246, 6
    %v3343 = vrot.slane %v3247, 6
    %v3344 = vrot.slane %v3248, 6
    %v3345 = vrot.slane %v3249, 6
    %v3346 = vrot.slane %v3250, 6
    %v3347 = vrot.slane %v3251, 6
    %v3348 = vrot.slane %v3252, 6
    %v3349 = vrot.slane %v3253, 6
    %v3350 = vrot.slane %v3254, 6
    %vm3351 = vcmask 1041408
    %v3352 = vsel %vm3351, %v3063, %v3319
    %vm3353 = vcmask 1043458
    %v3354 = vsel %vm3353, %v3063, %v3319
    %v3355 = vrot.slane %v3354, 2
    %vm3356 = vcmask 1045508
    %v3357 = vsel %vm3356, %v3063, %v3319
    %v3358 = vrot.slane %v3357, 4
    %v3359 = vsel %vm349, %v3319, %v3063
    %v3360 = vrot.slane %v3359, 6
    %v3361 = vsel %vm3351, %v3064, %v3320
    %v3362 = vsel %vm3353, %v3064, %v3320
    %v3363 = vrot.slane %v3362, 2
    %v3364 = vsel %vm3356, %v3064, %v3320
    %v3365 = vrot.slane %v3364, 4
    %v3366 = vsel %vm349, %v3320, %v3064
    %v3367 = vrot.slane %v3366, 6
    %v3368 = vsel %vm3351, %v3065, %v3321
    %v3369 = vsel %vm3353, %v3065, %v3321
    %v3370 = vrot.slane %v3369, 2
    %v3371 = vsel %vm3356, %v3065, %v3321
    %v3372 = vrot.slane %v3371, 4
    %v3373 = vsel %vm349, %v3321, %v3065
    %v3374 = vrot.slane %v3373, 6
    %v3375 = vsel %vm3351, %v3066, %v3322
    %v3376 = vsel %vm3353, %v3066, %v3322
    %v3377 = vrot.slane %v3376, 2
    %v3378 = vsel %vm3356, %v3066, %v3322
    %v3379 = vrot.slane %v3378, 4
    %v3380 = vsel %vm349, %v3322, %v3066
    %v3381 = vrot.slane %v3380, 6
    %v3382 = vsel %vm3351, %v3067, %v3323
    %v3383 = vsel %vm3353, %v3067, %v3323
    %v3384 = vrot.slane %v3383, 2
    %v3385 = vsel %vm3356, %v3067, %v3323
    %v3386 = vrot.slane %v3385, 4
    %v3387 = vsel %vm349, %v3323, %v3067
    %v3388 = vrot.slane %v3387, 6
    %v3389 = vsel %vm3351, %v3068, %v3324
    %v3390 = vsel %vm3353, %v3068, %v3324
    %v3391 = vrot.slane %v3390, 2
    %v3392 = vsel %vm3356, %v3068, %v3324
    %v3393 = vrot.slane %v3392, 4
    %v3394 = vsel %vm349, %v3324, %v3068
    %v3395 = vrot.slane %v3394, 6
    %v3396 = vsel %vm3351, %v3069, %v3325
    %v3397 = vsel %vm3353, %v3069, %v3325
    %v3398 = vrot.slane %v3397, 2
    %v3399 = vsel %vm3356, %v3069, %v3325
    %v3400 = vrot.slane %v3399, 4
    %v3401 = vsel %vm349, %v3325, %v3069
    %v3402 = vrot.slane %v3401, 6
    %v3403 = vsel %vm3351, %v3070, %v3326
    %v3404 = vsel %vm3353, %v3070, %v3326
    %v3405 = vrot.slane %v3404, 2
    %v3406 = vsel %vm3356, %v3070, %v3326
    %v3407 = vrot.slane %v3406, 4
    %v3408 = vsel %vm349, %v3326, %v3070
    %v3409 = vrot.slane %v3408, 6
    %v3410 = vsel %vm3351, %v3071, %v3327
    %v3411 = vsel %vm3353, %v3071, %v3327
    %v3412 = vrot.slane %v3411, 2
    %v3413 = vsel %vm3356, %v3071, %v3327
    %v3414 = vrot.slane %v3413, 4
    %v3415 = vsel %vm349, %v3327, %v3071
    %v3416 = vrot.slane %v3415, 6
    %v3417 = vsel %vm3351, %v3072, %v3328
    %v3418 = vsel %vm3353, %v3072, %v3328
    %v3419 = vrot.slane %v3418, 2
    %v3420 = vsel %vm3356, %v3072, %v3328
    %v3421 = vrot.slane %v3420, 4
    %v3422 = vsel %vm349, %v3328, %v3072
    %v3423 = vrot.slane %v3422, 6
    %v3424 = vsel %vm3351, %v3073, %v3329
    %v3425 = vsel %vm3353, %v3073, %v3329
    %v3426 = vrot.slane %v3425, 2
    %v3427 = vsel %vm3356, %v3073, %v3329
    %v3428 = vrot.slane %v3427, 4
    %v3429 = vsel %vm349, %v3329, %v3073
    %v3430 = vrot.slane %v3429, 6
    %v3431 = vsel %vm3351, %v3074, %v3330
    %v3432 = vsel %vm3353, %v3074, %v3330
    %v3433 = vrot.slane %v3432, 2
    %v3434 = vsel %vm3356, %v3074, %v3330
    %v3435 = vrot.slane %v3434, 4
    %v3436 = vsel %vm349, %v3330, %v3074
    %v3437 = vrot.slane %v3436, 6
    %v3438 = vsel %vm3351, %v3075, %v3331
    %v3439 = vsel %vm3353, %v3075, %v3331
    %v3440 = vrot.slane %v3439, 2
    %v3441 = vsel %vm3356, %v3075, %v3331
    %v3442 = vrot.slane %v3441, 4
    %v3443 = vsel %vm349, %v3331, %v3075
    %v3444 = vrot.slane %v3443, 6
    %v3445 = vsel %vm3351, %v3076, %v3332
    %v3446 = vsel %vm3353, %v3076, %v3332
    %v3447 = vrot.slane %v3446, 2
    %v3448 = vsel %vm3356, %v3076, %v3332
    %v3449 = vrot.slane %v3448, 4
    %v3450 = vsel %vm349, %v3332, %v3076
    %v3451 = vrot.slane %v3450, 6
    %v3452 = vsel %vm3351, %v3077, %v3333
    %v3453 = vsel %vm3353, %v3077, %v3333
    %v3454 = vrot.slane %v3453, 2
    %v3455 = vsel %vm3356, %v3077, %v3333
    %v3456 = vrot.slane %v3455, 4
    %v3457 = vsel %vm349, %v3333, %v3077
    %v3458 = vrot.slane %v3457, 6
    %v3459 = vsel %vm3351, %v3078, %v3334
    %v3460 = vsel %vm3353, %v3078, %v3334
    %v3461 = vrot.slane %v3460, 2
    %v3462 = vsel %vm3356, %v3078, %v3334
    %v3463 = vrot.slane %v3462, 4
    %v3464 = vsel %vm349, %v3334, %v3078
    %v3465 = vrot.slane %v3464, 6
    %v3466 = vsel %vm3351, %v3079, %v3335
    %v3467 = vsel %vm3353, %v3079, %v3335
    %v3468 = vrot.slane %v3467, 2
    %v3469 = vsel %vm3356, %v3079, %v3335
    %v3470 = vrot.slane %v3469, 4
    %v3471 = vsel %vm349, %v3335, %v3079
    %v3472 = vrot.slane %v3471, 6
    %v3473 = vsel %vm3351, %v3080, %v3336
    %v3474 = vsel %vm3353, %v3080, %v3336
    %v3475 = vrot.slane %v3474, 2
    %v3476 = vsel %vm3356, %v3080, %v3336
    %v3477 = vrot.slane %v3476, 4
    %v3478 = vsel %vm349, %v3336, %v3080
    %v3479 = vrot.slane %v3478, 6
    %v3480 = vsel %vm3351, %v3081, %v3337
    %v3481 = vsel %vm3353, %v3081, %v3337
    %v3482 = vrot.slane %v3481, 2
    %v3483 = vsel %vm3356, %v3081, %v3337
    %v3484 = vrot.slane %v3483, 4
    %v3485 = vsel %vm349, %v3337, %v3081
    %v3486 = vrot.slane %v3485, 6
    %v3487 = vsel %vm3351, %v3082, %v3338
    %v3488 = vsel %vm3353, %v3082, %v3338
    %v3489 = vrot.slane %v3488, 2
    %v3490 = vsel %vm3356, %v3082, %v3338
    %v3491 = vrot.slane %v3490, 4
    %v3492 = vsel %vm349, %v3338, %v3082
    %v3493 = vrot.slane %v3492, 6
    %v3494 = vsel %vm3351, %v3083, %v3339
    %v3495 = vsel %vm3353, %v3083, %v3339
    %v3496 = vrot.slane %v3495, 2
    %v3497 = vsel %vm3356, %v3083, %v3339
    %v3498 = vrot.slane %v3497, 4
    %v3499 = vsel %vm349, %v3339, %v3083
    %v3500 = vrot.slane %v3499, 6
    %v3501 = vsel %vm3351, %v3084, %v3340
    %v3502 = vsel %vm3353, %v3084, %v3340
    %v3503 = vrot.slane %v3502, 2
    %v3504 = vsel %vm3356, %v3084, %v3340
    %v3505 = vrot.slane %v3504, 4
    %v3506 = vsel %vm349, %v3340, %v3084
    %v3507 = vrot.slane %v3506, 6
    %v3508 = vsel %vm3351, %v3085, %v3341
    %v3509 = vsel %vm3353, %v3085, %v3341
    %v3510 = vrot.slane %v3509, 2
    %v3511 = vsel %vm3356, %v3085, %v3341
    %v3512 = vrot.slane %v3511, 4
    %v3513 = vsel %vm349, %v3341, %v3085
    %v3514 = vrot.slane %v3513, 6
    %v3515 = vsel %vm3351, %v3086, %v3342
    %v3516 = vsel %vm3353, %v3086, %v3342
    %v3517 = vrot.slane %v3516, 2
    %v3518 = vsel %vm3356, %v3086, %v3342
    %v3519 = vrot.slane %v3518, 4
    %v3520 = vsel %vm349, %v3342, %v3086
    %v3521 = vrot.slane %v3520, 6
    %v3522 = vsel %vm3351, %v3087, %v3343
    %v3523 = vsel %vm3353, %v3087, %v3343
    %v3524 = vrot.slane %v3523, 2
    %v3525 = vsel %vm3356, %v3087, %v3343
    %v3526 = vrot.slane %v3525, 4
    %v3527 = vsel %vm349, %v3343, %v3087
    %v3528 = vrot.slane %v3527, 6
    %v3529 = vsel %vm3351, %v3088, %v3344
    %v3530 = vsel %vm3353, %v3088, %v3344
    %v3531 = vrot.slane %v3530, 2
    %v3532 = vsel %vm3356, %v3088, %v3344
    %v3533 = vrot.slane %v3532, 4
    %v3534 = vsel %vm349, %v3344, %v3088
    %v3535 = vrot.slane %v3534, 6
    %v3536 = vsel %vm3351, %v3089, %v3345
    %v3537 = vsel %vm3353, %v3089, %v3345
    %v3538 = vrot.slane %v3537, 2
    %v3539 = vsel %vm3356, %v3089, %v3345
    %v3540 = vrot.slane %v3539, 4
    %v3541 = vsel %vm349, %v3345, %v3089
    %v3542 = vrot.slane %v3541, 6
    %v3543 = vsel %vm3351, %v3090, %v3346
    %v3544 = vsel %vm3353, %v3090, %v3346
    %v3545 = vrot.slane %v3544, 2
    %v3546 = vsel %vm3356, %v3090, %v3346
    %v3547 = vrot.slane %v3546, 4
    %v3548 = vsel %vm349, %v3346, %v3090
    %v3549 = vrot.slane %v3548, 6
    %v3550 = vsel %vm3351, %v3091, %v3347
    %v3551 = vsel %vm3353, %v3091, %v3347
    %v3552 = vrot.slane %v3551, 2
    %v3553 = vsel %vm3356, %v3091, %v3347
    %v3554 = vrot.slane %v3553, 4
    %v3555 = vsel %vm349, %v3347, %v3091
    %v3556 = vrot.slane %v3555, 6
    %v3557 = vsel %vm3351, %v3092, %v3348
    %v3558 = vsel %vm3353, %v3092, %v3348
    %v3559 = vrot.slane %v3558, 2
    %v3560 = vsel %vm3356, %v3092, %v3348
    %v3561 = vrot.slane %v3560, 4
    %v3562 = vsel %vm349, %v3348, %v3092
    %v3563 = vrot.slane %v3562, 6
    %v3564 = vsel %vm3351, %v3093, %v3349
    %v3565 = vsel %vm3353, %v3093, %v3349
    %v3566 = vrot.slane %v3565, 2
    %v3567 = vsel %vm3356, %v3093, %v3349
    %v3568 = vrot.slane %v3567, 4
    %v3569 = vsel %vm349, %v3349, %v3093
    %v3570 = vrot.slane %v3569, 6
    %v3571 = vsel %vm3351, %v3094, %v3350
    %v3572 = vsel %vm3353, %v3094, %v3350
    %v3573 = vrot.slane %v3572, 2
    %v3574 = vsel %vm3356, %v3094, %v3350
    %v3575 = vrot.slane %v3574, 4
    %v3576 = vsel %vm349, %v3350, %v3094
    %v3577 = vrot.slane %v3576, 6
    %3578 = vst [vmem:[#allocation1] ss:$4 sm:$0xff] %v3352
    %v3579 = vld.sshfl [vmem:[#allocation1] sm:$0xff pattern:$0x73625140]
    %v3580 = vld.sshfl [vmem:[#allocation1 + $0x8] sm:$0xff pattern:$0x73625140]
    %s3581 = scalar_lea.vmem [#allocation1], 32
    %3582 = vst [vmem:[%s3581] ss:$4 sm:$0xff] %v3355
    %v3583 = vld.sshfl [vmem:[#allocation1 + $0x20] sm:$0xff pattern:$0x73625140]
    %v3584 = vld.sshfl [vmem:[#allocation1 + $0x28] sm:$0xff pattern:$0x73625140]
    %3585 = vst [vmem:[#allocation1] ss:$4 sm:$0xff] %v3358
    %v3586 = vld.sshfl [vmem:[#allocation1] sm:$0xff pattern:$0x73625140]
    %v3587 = vld.sshfl [vmem:[#allocation1 + $0x8] sm:$0xff pattern:$0x73625140]
    %3588 = vst [vmem:[%s3581] ss:$4 sm:$0xff] %v3360
    %v3589 = vld.sshfl [vmem:[#allocation1 + $0x20] sm:$0xff pattern:$0x73625140]
    %v3590 = vld.sshfl [vmem:[#allocation1 + $0x28] sm:$0xff pattern:$0x73625140]
    %3591 = vst [vmem:[#allocation1] ss:$4 sm:$0xff] %v3361
    %v3592 = vld.sshfl [vmem:[#allocation1] sm:$0xff pattern:$0x73625140]
    %v3593 = vld.sshfl [vmem:[#allocation1 + $0x8] sm:$0xff pattern:$0x73625140]
    %3594 = vst [vmem:[%s3581] ss:$4 sm:$0xff] %v3363
    %v3595 = vld.sshfl [vmem:[#allocation1 + $0x20] sm:$0xff pattern:$0x73625140]
    %v3596 = vld.sshfl [vmem:[#allocation1 + $0x28] sm:$0xff pattern:$0x73625140]
    %3597 = vst [vmem:[#allocation1] ss:$4 sm:$0xff] %v3365
    %v3598 = vld.sshfl [vmem:[#allocation1] sm:$0xff pattern:$0x73625140]
    %v3599 = vld.sshfl [vmem:[#allocation1 + $0x8] sm:$0xff pattern:$0x73625140]
    %3600 = vst [vmem:[%s3581] ss:$4 sm:$0xff] %v3367
    %v3601 = vld.sshfl [vmem:[#allocation1 + $0x20] sm:$0xff pattern:$0x73625140]
    %v3602 = vld.sshfl [vmem:[#allocation1 + $0x28] sm:$0xff pattern:$0x73625140]
    %3603 = vst [vmem:[#allocation1] ss:$4 sm:$0xff] %v3368
    %v3604 = vld.sshfl [vmem:[#allocation1] sm:$0xff pattern:$0x73625140]
    %v3605 = vld.sshfl [vmem:[#allocation1 + $0x8] sm:$0xff pattern:$0x73625140]
    %3606 = vst [vmem:[%s3581] ss:$4 sm:$0xff] %v3370
    %v3607 = vld.sshfl [vmem:[#allocation1 + $0x20] sm:$0xff pattern:$0x73625140]
    %v3608 = vld.sshfl [vmem:[#allocation1 + $0x28] sm:$0xff pattern:$0x73625140]
    %3609 = vst [vmem:[#allocation1] ss:$4 sm:$0xff] %v3372
    %v3610 = vld.sshfl [vmem:[#allocation1] sm:$0xff pattern:$0x73625140]
    %v3611 = vld.sshfl [vmem:[#allocation1 + $0x8] sm:$0xff pattern:$0x73625140]
    %3612 = vst [vmem:[%s3581] ss:$4 sm:$0xff] %v3374
    %v3613 = vld.sshfl [vmem:[#allocation1 + $0x20] sm:$0xff pattern:$0x73625140]
    %v3614 = vld.sshfl [vmem:[#allocation1 + $0x28] sm:$0xff pattern:$0x73625140]
    %3615 = vst [vmem:[#allocation1] ss:$4 sm:$0xff] %v3375
    %v3616 = vld.sshfl [vmem:[#allocation1] sm:$0xff pattern:$0x73625140]
    %v3617 = vld.sshfl [vmem:[#allocation1 + $0x8] sm:$0xff pattern:$0x73625140]
    %3618 = vst [vmem:[%s3581] ss:$4 sm:$0xff] %v3377
    %v3619 = vld.sshfl [vmem:[#allocation1 + $0x20] sm:$0xff pattern:$0x73625140]
    %v3620 = vld.sshfl [vmem:[#allocation1 + $0x28] sm:$0xff pattern:$0x73625140]
    %3621 = vst [vmem:[#allocation1] ss:$4 sm:$0xff] %v3379
    %v3622 = vld.sshfl [vmem:[#allocation1] sm:$0xff pattern:$0x73625140]
    %v3623 = vld.sshfl [vmem:[#allocation1 + $0x8] sm:$0xff pattern:$0x73625140]
    %3624 = vst [vmem:[%s3581] ss:$4 sm:$0xff] %v3381
    %v3625 = vld.sshfl [vmem:[#allocation1 + $0x20] sm:$0xff pattern:$0x73625140]
    %v3626 = vld.sshfl [vmem:[#allocation1 + $0x28] sm:$0xff pattern:$0x73625140]
    %3627 = vst [vmem:[#allocation1] ss:$4 sm:$0xff] %v3382
    %v3628 = vld.sshfl [vmem:[#allocation1] sm:$0xff pattern:$0x73625140]
    %v3629 = vld.sshfl [vmem:[#allocation1 + $0x8] sm:$0xff pattern:$0x73625140]
    %3630 = vst [vmem:[%s3581] ss:$4 sm:$0xff] %v3384
    %v3631 = vld.sshfl [vmem:[#allocation1 + $0x20] sm:$0xff pattern:$0x73625140]
    %v3632 = vld.sshfl [vmem:[#allocation1 + $0x28] sm:$0xff pattern:$0x73625140]
    %3633 = vst [vmem:[#allocation1] ss:$4 sm:$0xff] %v3386
    %v3634 = vld.sshfl [vmem:[#allocation1] sm:$0xff pattern:$0x73625140]
    %v3635 = vld.sshfl [vmem:[#allocation1 + $0x8] sm:$0xff pattern:$0x73625140]
    %3636 = vst [vmem:[%s3581] ss:$4 sm:$0xff] %v3388
    %v3637 = vld.sshfl [vmem:[#allocation1 + $0x20] sm:$0xff pattern:$0x73625140]
    %v3638 = vld.sshfl [vmem:[#allocation1 + $0x28] sm:$0xff pattern:$0x73625140]
    %3639 = vst [vmem:[#allocation1] ss:$4 sm:$0xff] %v3389
    %v3640 = vld.sshfl [vmem:[#allocation1] sm:$0xff pattern:$0x73625140]
    %v3641 = vld.sshfl [vmem:[#allocation1 + $0x8] sm:$0xff pattern:$0x73625140]
    %3642 = vst [vmem:[%s3581] ss:$4 sm:$0xff] %v3391
    %v3643 = vld.sshfl [vmem:[#allocation1 + $0x20] sm:$0xff pattern:$0x73625140]
    %v3644 = vld.sshfl [vmem:[#allocation1 + $0x28] sm:$0xff pattern:$0x73625140]
    %3645 = vst [vmem:[#allocation1] ss:$4 sm:$0xff] %v3393
    %v3646 = vld.sshfl [vmem:[#allocation1] sm:$0xff pattern:$0x73625140]
    %v3647 = vld.sshfl [vmem:[#allocation1 + $0x8] sm:$0xff pattern:$0x73625140]
    %3648 = vst [vmem:[%s3581] ss:$4 sm:$0xff] %v3395
    %v3649 = vld.sshfl [vmem:[#allocation1 + $0x20] sm:$0xff pattern:$0x73625140]
    %v3650 = vld.sshfl [vmem:[#allocation1 + $0x28] sm:$0xff pattern:$0x73625140]
    %3651 = vst [vmem:[#allocation1] ss:$4 sm:$0xff] %v3396
    %v3652 = vld.sshfl [vmem:[#allocation1] sm:$0xff pattern:$0x73625140]
    %v3653 = vld.sshfl [vmem:[#allocation1 + $0x8] sm:$0xff pattern:$0x73625140]
    %3654 = vst [vmem:[%s3581] ss:$4 sm:$0xff] %v3398
    %v3655 = vld.sshfl [vmem:[#allocation1 + $0x20] sm:$0xff pattern:$0x73625140]
    %v3656 = vld.sshfl [vmem:[#allocation1 + $0x28] sm:$0xff pattern:$0x73625140]
    %3657 = vst [vmem:[#allocation1] ss:$4 sm:$0xff] %v3400
    %v3658 = vld.sshfl [vmem:[#allocation1] sm:$0xff pattern:$0x73625140]
    %v3659 = vld.sshfl [vmem:[#allocation1 + $0x8] sm:$0xff pattern:$0x73625140]
    %3660 = vst [vmem:[%s3581] ss:$4 sm:$0xff] %v3402
    %v3661 = vld.sshfl [vmem:[#allocation1 + $0x20] sm:$0xff pattern:$0x73625140]
    %v3662 = vld.sshfl [vmem:[#allocation1 + $0x28] sm:$0xff pattern:$0x73625140]
    %3663 = vst [vmem:[#allocation1] ss:$4 sm:$0xff] %v3403
    %v3664 = vld.sshfl [vmem:[#allocation1] sm:$0xff pattern:$0x73625140]
    %v3665 = vld.sshfl [vmem:[#allocation1 + $0x8] sm:$0xff pattern:$0x73625140]
    %3666 = vst [vmem:[%s3581] ss:$4 sm:$0xff] %v3405
    %v3667 = vld.sshfl [vmem:[#allocation1 + $0x20] sm:$0xff pattern:$0x73625140]
    %v3668 = vld.sshfl [vmem:[#allocation1 + $0x28] sm:$0xff pattern:$0x73625140]
    %3669 = vst [vmem:[#allocation1] ss:$4 sm:$0xff] %v3407
    %v3670 = vld.sshfl [vmem:[#allocation1] sm:$0xff pattern:$0x73625140]
    %v3671 = vld.sshfl [vmem:[#allocation1 + $0x8] sm:$0xff pattern:$0x73625140]
    %3672 = vst [vmem:[%s3581] ss:$4 sm:$0xff] %v3409
    %v3673 = vld.sshfl [vmem:[#allocation1 + $0x20] sm:$0xff pattern:$0x73625140]
    %v3674 = vld.sshfl [vmem:[#allocation1 + $0x28] sm:$0xff pattern:$0x73625140]
    %3675 = vst [vmem:[#allocation1] ss:$4 sm:$0xff] %v3410
    %v3676 = vld.sshfl [vmem:[#allocation1] sm:$0xff pattern:$0x73625140]
    %v3677 = vld.sshfl [vmem:[#allocation1 + $0x8] sm:$0xff pattern:$0x73625140]
    %3678 = vst [vmem:[%s3581] ss:$4 sm:$0xff] %v3412
    %v3679 = vld.sshfl [vmem:[#allocation1 + $0x20] sm:$0xff pattern:$0x73625140]
    %v3680 = vld.sshfl [vmem:[#allocation1 + $0x28] sm:$0xff pattern:$0x73625140]
    %3681 = vst [vmem:[#allocation1] ss:$4 sm:$0xff] %v3414
    %v3682 = vld.sshfl [vmem:[#allocation1] sm:$0xff pattern:$0x73625140]
    %v3683 = vld.sshfl [vmem:[#allocation1 + $0x8] sm:$0xff pattern:$0x73625140]
    %3684 = vst [vmem:[%s3581] ss:$4 sm:$0xff] %v3416
    %v3685 = vld.sshfl [vmem:[#allocation1 + $0x20] sm:$0xff pattern:$0x73625140]
    %v3686 = vld.sshfl [vmem:[#allocation1 + $0x28] sm:$0xff pattern:$0x73625140]
    %3687 = vst [vmem:[#allocation1] ss:$4 sm:$0xff] %v3417
    %v3688 = vld.sshfl [vmem:[#allocation1] sm:$0xff pattern:$0x73625140]
    %v3689 = vld.sshfl [vmem:[#allocation1 + $0x8] sm:$0xff pattern:$0x73625140]
    %3690 = vst [vmem:[%s3581] ss:$4 sm:$0xff] %v3419
    %v3691 = vld.sshfl [vmem:[#allocation1 + $0x20] sm:$0xff pattern:$0x73625140]
    %v3692 = vld.sshfl [vmem:[#allocation1 + $0x28] sm:$0xff pattern:$0x73625140]
    %3693 = vst [vmem:[#allocation1] ss:$4 sm:$0xff] %v3421
    %v3694 = vld.sshfl [vmem:[#allocation1] sm:$0xff pattern:$0x73625140]
    %v3695 = vld.sshfl [vmem:[#allocation1 + $0x8] sm:$0xff pattern:$0x73625140]
    %3696 = vst [vmem:[%s3581] ss:$4 sm:$0xff] %v3423
    %v3697 = vld.sshfl [vmem:[#allocation1 + $0x20] sm:$0xff pattern:$0x73625140]
    %v3698 = vld.sshfl [vmem:[#allocation1 + $0x28] sm:$0xff pattern:$0x73625140]
    %3699 = vst [vmem:[#allocation1] ss:$4 sm:$0xff] %v3424
    %v3700 = vld.sshfl [vmem:[#allocation1] sm:$0xff pattern:$0x73625140]
    %v3701 = vld.sshfl [vmem:[#allocation1 + $0x8] sm:$0xff pattern:$0x73625140]
    %3702 = vst [vmem:[%s3581] ss:$4 sm:$0xff] %v3426
    %v3703 = vld.sshfl [vmem:[#allocation1 + $0x20] sm:$0xff pattern:$0x73625140]
    %v3704 = vld.sshfl [vmem:[#allocation1 + $0x28] sm:$0xff pattern:$0x73625140]
    %3705 = vst [vmem:[#allocation1] ss:$4 sm:$0xff] %v3428
    %v3706 = vld.sshfl [vmem:[#allocation1] sm:$0xff pattern:$0x73625140]
    %v3707 = vld.sshfl [vmem:[#allocation1 + $0x8] sm:$0xff pattern:$0x73625140]
    %3708 = vst [vmem:[%s3581] ss:$4 sm:$0xff] %v3430
    %v3709 = vld.sshfl [vmem:[#allocation1 + $0x20] sm:$0xff pattern:$0x73625140]
    %v3710 = vld.sshfl [vmem:[#allocation1 + $0x28] sm:$0xff pattern:$0x73625140]
    %3711 = vst [vmem:[#allocation1] ss:$4 sm:$0xff] %v3431
    %v3712 = vld.sshfl [vmem:[#allocation1] sm:$0xff pattern:$0x73625140]
    %v3713 = vld.sshfl [vmem:[#allocation1 + $0x8] sm:$0xff pattern:$0x73625140]
    %3714 = vst [vmem:[%s3581] ss:$4 sm:$0xff] %v3433
    %v3715 = vld.sshfl [vmem:[#allocation1 + $0x20] sm:$0xff pattern:$0x73625140]
    %v3716 = vld.sshfl [vmem:[#allocation1 + $0x28] sm:$0xff pattern:$0x73625140]
    %3717 = vst [vmem:[#allocation1] ss:$4 sm:$0xff] %v3435
    %v3718 = vld.sshfl [vmem:[#allocation1] sm:$0xff pattern:$0x73625140]
    %v3719 = vld.sshfl [vmem:[#allocation1 + $0x8] sm:$0xff pattern:$0x73625140]
    %3720 = vst [vmem:[%s3581] ss:$4 sm:$0xff] %v3437
    %v3721 = vld.sshfl [vmem:[#allocation1 + $0x20] sm:$0xff pattern:$0x73625140]
    %v3722 = vld.sshfl [vmem:[#allocation1 + $0x28] sm:$0xff pattern:$0x73625140]
    %3723 = vst [vmem:[#allocation1] ss:$4 sm:$0xff] %v3438
    %v3724 = vld.sshfl [vmem:[#allocation1] sm:$0xff pattern:$0x73625140]
    %v3725 = vld.sshfl [vmem:[#allocation1 + $0x8] sm:$0xff pattern:$0x73625140]
    %3726 = vst [vmem:[%s3581] ss:$4 sm:$0xff] %v3440
    %v3727 = vld.sshfl [vmem:[#allocation1 + $0x20] sm:$0xff pattern:$0x73625140]
    %v3728 = vld.sshfl [vmem:[#allocation1 + $0x28] sm:$0xff pattern:$0x73625140]
    %3729 = vst [vmem:[#allocation1] ss:$4 sm:$0xff] %v3442
    %v3730 = vld.sshfl [vmem:[#allocation1] sm:$0xff pattern:$0x73625140]
    %v3731 = vld.sshfl [vmem:[#allocation1 + $0x8] sm:$0xff pattern:$0x73625140]
    %3732 = vst [vmem:[%s3581] ss:$4 sm:$0xff] %v3444
    %v3733 = vld.sshfl [vmem:[#allocation1 + $0x20] sm:$0xff pattern:$0x73625140]
    %v3734 = vld.sshfl [vmem:[#allocation1 + $0x28] sm:$0xff pattern:$0x73625140]
    %3735 = vst [vmem:[#allocation1] ss:$4 sm:$0xff] %v3445
    %v3736 = vld.sshfl [vmem:[#allocation1] sm:$0xff pattern:$0x73625140]
    %v3737 = vld.sshfl [vmem:[#allocation1 + $0x8] sm:$0xff pattern:$0x73625140]
    %3738 = vst [vmem:[%s3581] ss:$4 sm:$0xff] %v3447
    %v3739 = vld.sshfl [vmem:[#allocation1 + $0x20] sm:$0xff pattern:$0x73625140]
    %v3740 = vld.sshfl [vmem:[#allocation1 + $0x28] sm:$0xff pattern:$0x73625140]
    %3741 = vst [vmem:[#allocation1] ss:$4 sm:$0xff] %v3449
    %v3742 = vld.sshfl [vmem:[#allocation1] sm:$0xff pattern:$0x73625140]
    %v3743 = vld.sshfl [vmem:[#allocation1 + $0x8] sm:$0xff pattern:$0x73625140]
    %3744 = vst [vmem:[%s3581] ss:$4 sm:$0xff] %v3451
    %v3745 = vld.sshfl [vmem:[#allocation1 + $0x20] sm:$0xff pattern:$0x73625140]
    %v3746 = vld.sshfl [vmem:[#allocation1 + $0x28] sm:$0xff pattern:$0x73625140]
    %3747 = vst [vmem:[#allocation1] ss:$4 sm:$0xff] %v3452
    %v3748 = vld.sshfl [vmem:[#allocation1] sm:$0xff pattern:$0x73625140]
    %v3749 = vld.sshfl [vmem:[#allocation1 + $0x8] sm:$0xff pattern:$0x73625140]
    %3750 = vst [vmem:[%s3581] ss:$4 sm:$0xff] %v3454
    %v3751 = vld.sshfl [vmem:[#allocation1 + $0x20] sm:$0xff pattern:$0x73625140]
    %v3752 = vld.sshfl [vmem:[#allocation1 + $0x28] sm:$0xff pattern:$0x73625140]
    %3753 = vst [vmem:[#allocation1] ss:$4 sm:$0xff] %v3456
    %v3754 = vld.sshfl [vmem:[#allocation1] sm:$0xff pattern:$0x73625140]
    %v3755 = vld.sshfl [vmem:[#allocation1 + $0x8] sm:$0xff pattern:$0x73625140]
    %3756 = vst [vmem:[%s3581] ss:$4 sm:$0xff] %v3458
    %v3757 = vld.sshfl [vmem:[#allocation1 + $0x20] sm:$0xff pattern:$0x73625140]
    %v3758 = vld.sshfl [vmem:[#allocation1 + $0x28] sm:$0xff pattern:$0x73625140]
    %3759 = vst [vmem:[#allocation1] ss:$4 sm:$0xff] %v3459
    %v3760 = vld.sshfl [vmem:[#allocation1] sm:$0xff pattern:$0x73625140]
    %v3761 = vld.sshfl [vmem:[#allocation1 + $0x8] sm:$0xff pattern:$0x73625140]
    %3762 = vst [vmem:[%s3581] ss:$4 sm:$0xff] %v3461
    %v3763 = vld.sshfl [vmem:[#allocation1 + $0x20] sm:$0xff pattern:$0x73625140]
    %v3764 = vld.sshfl [vmem:[#allocation1 + $0x28] sm:$0xff pattern:$0x73625140]
    %3765 = vst [vmem:[#allocation1] ss:$4 sm:$0xff] %v3463
    %v3766 = vld.sshfl [vmem:[#allocation1] sm:$0xff pattern:$0x73625140]
    %v3767 = vld.sshfl [vmem:[#allocation1 + $0x8] sm:$0xff pattern:$0x73625140]
    %3768 = vst [vmem:[%s3581] ss:$4 sm:$0xff] %v3465
    %v3769 = vld.sshfl [vmem:[#allocation1 + $0x20] sm:$0xff pattern:$0x73625140]
    %v3770 = vld.sshfl [vmem:[#allocation1 + $0x28] sm:$0xff pattern:$0x73625140]
    %3771 = vst [vmem:[#allocation1] ss:$4 sm:$0xff] %v3466
    %v3772 = vld.sshfl [vmem:[#allocation1] sm:$0xff pattern:$0x73625140]
    %v3773 = vld.sshfl [vmem:[#allocation1 + $0x8] sm:$0xff pattern:$0x73625140]
    %3774 = vst [vmem:[%s3581] ss:$4 sm:$0xff] %v3468
    %v3775 = vld.sshfl [vmem:[#allocation1 + $0x20] sm:$0xff pattern:$0x73625140]
    %v3776 = vld.sshfl [vmem:[#allocation1 + $0x28] sm:$0xff pattern:$0x73625140]
    %3777 = vst [vmem:[#allocation1] ss:$4 sm:$0xff] %v3470
    %v3778 = vld.sshfl [vmem:[#allocation1] sm:$0xff pattern:$0x73625140]
    %v3779 = vld.sshfl [vmem:[#allocation1 + $0x8] sm:$0xff pattern:$0x73625140]
    %3780 = vst [vmem:[%s3581] ss:$4 sm:$0xff] %v3472
    %v3781 = vld.sshfl [vmem:[#allocation1 + $0x20] sm:$0xff pattern:$0x73625140]
    %v3782 = vld.sshfl [vmem:[#allocation1 + $0x28] sm:$0xff pattern:$0x73625140]
    %3783 = vst [vmem:[#allocation1] ss:$4 sm:$0xff] %v3473
    %v3784 = vld.sshfl [vmem:[#allocation1] sm:$0xff pattern:$0x73625140]
    %v3785 = vld.sshfl [vmem:[#allocation1 + $0x8] sm:$0xff pattern:$0x73625140]
    %3786 = vst [vmem:[%s3581] ss:$4 sm:$0xff] %v3475
    %v3787 = vld.sshfl [vmem:[#allocation1 + $0x20] sm:$0xff pattern:$0x73625140]
    %v3788 = vld.sshfl [vmem:[#allocation1 + $0x28] sm:$0xff pattern:$0x73625140]
    %3789 = vst [vmem:[#allocation1] ss:$4 sm:$0xff] %v3477
    %v3790 = vld.sshfl [vmem:[#allocation1] sm:$0xff pattern:$0x73625140]
    %v3791 = vld.sshfl [vmem:[#allocation1 + $0x8] sm:$0xff pattern:$0x73625140]
    %3792 = vst [vmem:[%s3581] ss:$4 sm:$0xff] %v3479
    %v3793 = vld.sshfl [vmem:[#allocation1 + $0x20] sm:$0xff pattern:$0x73625140]
    %v3794 = vld.sshfl [vmem:[#allocation1 + $0x28] sm:$0xff pattern:$0x73625140]
    %3795 = vst [vmem:[#allocation1] ss:$4 sm:$0xff] %v3480
    %v3796 = vld.sshfl [vmem:[#allocation1] sm:$0xff pattern:$0x73625140]
    %v3797 = vld.sshfl [vmem:[#allocation1 + $0x8] sm:$0xff pattern:$0x73625140]
    %3798 = vst [vmem:[%s3581] ss:$4 sm:$0xff] %v3482
    %v3799 = vld.sshfl [vmem:[#allocation1 + $0x20] sm:$0xff pattern:$0x73625140]
    %v3800 = vld.sshfl [vmem:[#allocation1 + $0x28] sm:$0xff pattern:$0x73625140]
    %3801 = vst [vmem:[#allocation1] ss:$4 sm:$0xff] %v3484
    %v3802 = vld.sshfl [vmem:[#allocation1] sm:$0xff pattern:$0x73625140]
    %v3803 = vld.sshfl [vmem:[#allocation1 + $0x8] sm:$0xff pattern:$0x73625140]
    %3804 = vst [vmem:[%s3581] ss:$4 sm:$0xff] %v3486
    %v3805 = vld.sshfl [vmem:[#allocation1 + $0x20] sm:$0xff pattern:$0x73625140]
    %v3806 = vld.sshfl [vmem:[#allocation1 + $0x28] sm:$0xff pattern:$0x73625140]
    %3807 = vst [vmem:[#allocation1] ss:$4 sm:$0xff] %v3487
    %v3808 = vld.sshfl [vmem:[#allocation1] sm:$0xff pattern:$0x73625140]
    %v3809 = vld.sshfl [vmem:[#allocation1 + $0x8] sm:$0xff pattern:$0x73625140]
    %3810 = vst [vmem:[%s3581] ss:$4 sm:$0xff] %v3489
    %v3811 = vld.sshfl [vmem:[#allocation1 + $0x20] sm:$0xff pattern:$0x73625140]
    %v3812 = vld.sshfl [vmem:[#allocation1 + $0x28] sm:$0xff pattern:$0x73625140]
    %3813 = vst [vmem:[#allocation1] ss:$4 sm:$0xff] %v3491
    %v3814 = vld.sshfl [vmem:[#allocation1] sm:$0xff pattern:$0x73625140]
    %v3815 = vld.sshfl [vmem:[#allocation1 + $0x8] sm:$0xff pattern:$0x73625140]
    %3816 = vst [vmem:[%s3581] ss:$4 sm:$0xff] %v3493
    %v3817 = vld.sshfl [vmem:[#allocation1 + $0x20] sm:$0xff pattern:$0x73625140]
    %v3818 = vld.sshfl [vmem:[#allocation1 + $0x28] sm:$0xff pattern:$0x73625140]
    %3819 = vst [vmem:[#allocation1] ss:$4 sm:$0xff] %v3494
    %v3820 = vld.sshfl [vmem:[#allocation1] sm:$0xff pattern:$0x73625140]
    %v3821 = vld.sshfl [vmem:[#allocation1 + $0x8] sm:$0xff pattern:$0x73625140]
    %3822 = vst [vmem:[%s3581] ss:$4 sm:$0xff] %v3496
    %v3823 = vld.sshfl [vmem:[#allocation1 + $0x20] sm:$0xff pattern:$0x73625140]
    %v3824 = vld.sshfl [vmem:[#allocation1 + $0x28] sm:$0xff pattern:$0x73625140]
    %3825 = vst [vmem:[#allocation1] ss:$4 sm:$0xff] %v3498
    %v3826 = vld.sshfl [vmem:[#allocation1] sm:$0xff pattern:$0x73625140]
    %v3827 = vld.sshfl [vmem:[#allocation1 + $0x8] sm:$0xff pattern:$0x73625140]
    %3828 = vst [vmem:[%s3581] ss:$4 sm:$0xff] %v3500
    %v3829 = vld.sshfl [vmem:[#allocation1 + $0x20] sm:$0xff pattern:$0x73625140]
    %v3830 = vld.sshfl [vmem:[#allocation1 + $0x28] sm:$0xff pattern:$0x73625140]
    %3831 = vst [vmem:[#allocation1] ss:$4 sm:$0xff] %v3501
    %v3832 = vld.sshfl [vmem:[#allocation1] sm:$0xff pattern:$0x73625140]
    %v3833 = vld.sshfl [vmem:[#allocation1 + $0x8] sm:$0xff pattern:$0x73625140]
    %3834 = vst [vmem:[%s3581] ss:$4 sm:$0xff] %v3503
    %v3835 = vld.sshfl [vmem:[#allocation1 + $0x20] sm:$0xff pattern:$0x73625140]
    %v3836 = vld.sshfl [vmem:[#allocation1 + $0x28] sm:$0xff pattern:$0x73625140]
    %3837 = vst [vmem:[#allocation1] ss:$4 sm:$0xff] %v3505
    %v3838 = vld.sshfl [vmem:[#allocation1] sm:$0xff pattern:$0x73625140]
    %v3839 = vld.sshfl [vmem:[#allocation1 + $0x8] sm:$0xff pattern:$0x73625140]
    %3840 = vst [vmem:[%s3581] ss:$4 sm:$0xff] %v3507
    %v3841 = vld.sshfl [vmem:[#allocation1 + $0x20] sm:$0xff pattern:$0x73625140]
    %v3842 = vld.sshfl [vmem:[#allocation1 + $0x28] sm:$0xff pattern:$0x73625140]
    %3843 = vst [vmem:[#allocation1] ss:$4 sm:$0xff] %v3508
    %v3844 = vld.sshfl [vmem:[#allocation1] sm:$0xff pattern:$0x73625140]
    %v3845 = vld.sshfl [vmem:[#allocation1 + $0x8] sm:$0xff pattern:$0x73625140]
    %3846 = vst [vmem:[%s3581] ss:$4 sm:$0xff] %v3510
    %v3847 = vld.sshfl [vmem:[#allocation1 + $0x20] sm:$0xff pattern:$0x73625140]
    %v3848 = vld.sshfl [vmem:[#allocation1 + $0x28] sm:$0xff pattern:$0x73625140]
    %3849 = vst [vmem:[#allocation1] ss:$4 sm:$0xff] %v3512
    %v3850 = vld.sshfl [vmem:[#allocation1] sm:$0xff pattern:$0x73625140]
    %v3851 = vld.sshfl [vmem:[#allocation1 + $0x8] sm:$0xff pattern:$0x73625140]
    %3852 = vst [vmem:[%s3581] ss:$4 sm:$0xff] %v3514
    %v3853 = vld.sshfl [vmem:[#allocation1 + $0x20] sm:$0xff pattern:$0x73625140]
    %v3854 = vld.sshfl [vmem:[#allocation1 + $0x28] sm:$0xff pattern:$0x73625140]
    %3855 = vst [vmem:[#allocation1] ss:$4 sm:$0xff] %v3515
    %v3856 = vld.sshfl [vmem:[#allocation1] sm:$0xff pattern:$0x73625140]
    %v3857 = vld.sshfl [vmem:[#allocation1 + $0x8] sm:$0xff pattern:$0x73625140]
    %3858 = vst [vmem:[%s3581] ss:$4 sm:$0xff] %v3517
    %v3859 = vld.sshfl [vmem:[#allocation1 + $0x20] sm:$0xff pattern:$0x73625140]
    %v3860 = vld.sshfl [vmem:[#allocation1 + $0x28] sm:$0xff pattern:$0x73625140]
    %3861 = vst [vmem:[#allocation1] ss:$4 sm:$0xff] %v3519
    %v3862 = vld.sshfl [vmem:[#allocation1] sm:$0xff pattern:$0x73625140]
    %v3863 = vld.sshfl [vmem:[#allocation1 + $0x8] sm:$0xff pattern:$0x73625140]
    %3864 = vst [vmem:[%s3581] ss:$4 sm:$0xff] %v3521
    %v3865 = vld.sshfl [vmem:[#allocation1 + $0x20] sm:$0xff pattern:$0x73625140]
    %v3866 = vld.sshfl [vmem:[#allocation1 + $0x28] sm:$0xff pattern:$0x73625140]
    %3867 = vst [vmem:[#allocation1] ss:$4 sm:$0xff] %v3522
    %v3868 = vld.sshfl [vmem:[#allocation1] sm:$0xff pattern:$0x73625140]
    %v3869 = vld.sshfl [vmem:[#allocation1 + $0x8] sm:$0xff pattern:$0x73625140]
    %3870 = vst [vmem:[%s3581] ss:$4 sm:$0xff] %v3524
    %v3871 = vld.sshfl [vmem:[#allocation1 + $0x20] sm:$0xff pattern:$0x73625140]
    %v3872 = vld.sshfl [vmem:[#allocation1 + $0x28] sm:$0xff pattern:$0x73625140]
    %3873 = vst [vmem:[#allocation1] ss:$4 sm:$0xff] %v3526
    %v3874 = vld.sshfl [vmem:[#allocation1] sm:$0xff pattern:$0x73625140]
    %v3875 = vld.sshfl [vmem:[#allocation1 + $0x8] sm:$0xff pattern:$0x73625140]
    %3876 = vst [vmem:[%s3581] ss:$4 sm:$0xff] %v3528
    %v3877 = vld.sshfl [vmem:[#allocation1 + $0x20] sm:$0xff pattern:$0x73625140]
    %v3878 = vld.sshfl [vmem:[#allocation1 + $0x28] sm:$0xff pattern:$0x73625140]
    %3879 = vst [vmem:[#allocation1] ss:$4 sm:$0xff] %v3529
    %v3880 = vld.sshfl [vmem:[#allocation1] sm:$0xff pattern:$0x73625140]
    %v3881 = vld.sshfl [vmem:[#allocation1 + $0x8] sm:$0xff pattern:$0x73625140]
    %3882 = vst [vmem:[%s3581] ss:$4 sm:$0xff] %v3531
    %v3883 = vld.sshfl [vmem:[#allocation1 + $0x20] sm:$0xff pattern:$0x73625140]
    %v3884 = vld.sshfl [vmem:[#allocation1 + $0x28] sm:$0xff pattern:$0x73625140]
    %3885 = vst [vmem:[#allocation1] ss:$4 sm:$0xff] %v3533
    %v3886 = vld.sshfl [vmem:[#allocation1] sm:$0xff pattern:$0x73625140]
    %v3887 = vld.sshfl [vmem:[#allocation1 + $0x8] sm:$0xff pattern:$0x73625140]
    %3888 = vst [vmem:[%s3581] ss:$4 sm:$0xff] %v3535
    %v3889 = vld.sshfl [vmem:[#allocation1 + $0x20] sm:$0xff pattern:$0x73625140]
    %v3890 = vld.sshfl [vmem:[#allocation1 + $0x28] sm:$0xff pattern:$0x73625140]
    %3891 = vst [vmem:[#allocation1] ss:$4 sm:$0xff] %v3536
    %v3892 = vld.sshfl [vmem:[#allocation1] sm:$0xff pattern:$0x73625140]
    %v3893 = vld.sshfl [vmem:[#allocation1 + $0x8] sm:$0xff pattern:$0x73625140]
    %3894 = vst [vmem:[%s3581] ss:$4 sm:$0xff] %v3538
    %v3895 = vld.sshfl [vmem:[#allocation1 + $0x20] sm:$0xff pattern:$0x73625140]
    %v3896 = vld.sshfl [vmem:[#allocation1 + $0x28] sm:$0xff pattern:$0x73625140]
    %3897 = vst [vmem:[#allocation1] ss:$4 sm:$0xff] %v3540
    %v3898 = vld.sshfl [vmem:[#allocation1] sm:$0xff pattern:$0x73625140]
    %v3899 = vld.sshfl [vmem:[#allocation1 + $0x8] sm:$0xff pattern:$0x73625140]
    %3900 = vst [vmem:[%s3581] ss:$4 sm:$0xff] %v3542
    %v3901 = vld.sshfl [vmem:[#allocation1 + $0x20] sm:$0xff pattern:$0x73625140]
    %v3902 = vld.sshfl [vmem:[#allocation1 + $0x28] sm:$0xff pattern:$0x73625140]
    %3903 = vst [vmem:[#allocation1] ss:$4 sm:$0xff] %v3543
    %v3904 = vld.sshfl [vmem:[#allocation1] sm:$0xff pattern:$0x73625140]
    %v3905 = vld.sshfl [vmem:[#allocation1 + $0x8] sm:$0xff pattern:$0x73625140]
    %3906 = vst [vmem:[%s3581] ss:$4 sm:$0xff] %v3545
    %v3907 = vld.sshfl [vmem:[#allocation1 + $0x20] sm:$0xff pattern:$0x73625140]
    %v3908 = vld.sshfl [vmem:[#allocation1 + $0x28] sm:$0xff pattern:$0x73625140]
    %3909 = vst [vmem:[#allocation1] ss:$4 sm:$0xff] %v3547
    %v3910 = vld.sshfl [vmem:[#allocation1] sm:$0xff pattern:$0x73625140]
    %v3911 = vld.sshfl [vmem:[#allocation1 + $0x8] sm:$0xff pattern:$0x73625140]
    %3912 = vst [vmem:[%s3581] ss:$4 sm:$0xff] %v3549
    %v3913 = vld.sshfl [vmem:[#allocation1 + $0x20] sm:$0xff pattern:$0x73625140]
    %v3914 = vld.sshfl [vmem:[#allocation1 + $0x28] sm:$0xff pattern:$0x73625140]
    %3915 = vst [vmem:[#allocation1] ss:$4 sm:$0xff] %v3550
    %v3916 = vld.sshfl [vmem:[#allocation1] sm:$0xff pattern:$0x73625140]
    %v3917 = vld.sshfl [vmem:[#allocation1 + $0x8] sm:$0xff pattern:$0x73625140]
    %3918 = vst [vmem:[%s3581] ss:$4 sm:$0xff] %v3552
    %v3919 = vld.sshfl [vmem:[#allocation1 + $0x20] sm:$0xff pattern:$0x73625140]
    %v3920 = vld.sshfl [vmem:[#allocation1 + $0x28] sm:$0xff pattern:$0x73625140]
    %3921 = vst [vmem:[#allocation1] ss:$4 sm:$0xff] %v3554
    %v3922 = vld.sshfl [vmem:[#allocation1] sm:$0xff pattern:$0x73625140]
    %v3923 = vld.sshfl [vmem:[#allocation1 + $0x8] sm:$0xff pattern:$0x73625140]
    %3924 = vst [vmem:[%s3581] ss:$4 sm:$0xff] %v3556
    %v3925 = vld.sshfl [vmem:[#allocation1 + $0x20] sm:$0xff pattern:$0x73625140]
    %v3926 = vld.sshfl [vmem:[#allocation1 + $0x28] sm:$0xff pattern:$0x73625140]
    %3927 = vst [vmem:[#allocation1] ss:$4 sm:$0xff] %v3557
    %v3928 = vld.sshfl [vmem:[#allocation1] sm:$0xff pattern:$0x73625140]
    %v3929 = vld.sshfl [vmem:[#allocation1 + $0x8] sm:$0xff pattern:$0x73625140]
    %3930 = vst [vmem:[%s3581] ss:$4 sm:$0xff] %v3559
    %v3931 = vld.sshfl [vmem:[#allocation1 + $0x20] sm:$0xff pattern:$0x73625140]
    %v3932 = vld.sshfl [vmem:[#allocation1 + $0x28] sm:$0xff pattern:$0x73625140]
    %3933 = vst [vmem:[#allocation1] ss:$4 sm:$0xff] %v3561
    %v3934 = vld.sshfl [vmem:[#allocation1] sm:$0xff pattern:$0x73625140]
    %v3935 = vld.sshfl [vmem:[#allocation1 + $0x8] sm:$0xff pattern:$0x73625140]
    %3936 = vst [vmem:[%s3581] ss:$4 sm:$0xff] %v3563
    %v3937 = vld.sshfl [vmem:[#allocation1 + $0x20] sm:$0xff pattern:$0x73625140]
    %v3938 = vld.sshfl [vmem:[#allocation1 + $0x28] sm:$0xff pattern:$0x73625140]
    %3939 = vst [vmem:[#allocation1] ss:$4 sm:$0xff] %v3564
    %v3940 = vld.sshfl [vmem:[#allocation1] sm:$0xff pattern:$0x73625140]
    %v3941 = vld.sshfl [vmem:[#allocation1 + $0x8] sm:$0xff pattern:$0x73625140]
    %3942 = vst [vmem:[%s3581] ss:$4 sm:$0xff] %v3566
    %v3943 = vld.sshfl [vmem:[#allocation1 + $0x20] sm:$0xff pattern:$0x73625140]
    %v3944 = vld.sshfl [vmem:[#allocation1 + $0x28] sm:$0xff pattern:$0x73625140]
    %3945 = vst [vmem:[#allocation1] ss:$4 sm:$0xff] %v3568
    %v3946 = vld.sshfl [vmem:[#allocation1] sm:$0xff pattern:$0x73625140]
    %v3947 = vld.sshfl [vmem:[#allocation1 + $0x8] sm:$0xff pattern:$0x73625140]
    %3948 = vst [vmem:[%s3581] ss:$4 sm:$0xff] %v3570
    %v3949 = vld.sshfl [vmem:[#allocation1 + $0x20] sm:$0xff pattern:$0x73625140]
    %v3950 = vld.sshfl [vmem:[#allocation1 + $0x28] sm:$0xff pattern:$0x73625140]
    %3951 = vst [vmem:[#allocation1] ss:$4 sm:$0xff] %v3571
    %v3952 = vld.sshfl [vmem:[#allocation1] sm:$0xff pattern:$0x73625140]
    %v3953 = vld.sshfl [vmem:[#allocation1 + $0x8] sm:$0xff pattern:$0x73625140]
    %3954 = vst [vmem:[%s3581] ss:$4 sm:$0xff] %v3573
    %v3955 = vld.sshfl [vmem:[#allocation1 + $0x20] sm:$0xff pattern:$0x73625140]
    %v3956 = vld.sshfl [vmem:[#allocation1 + $0x28] sm:$0xff pattern:$0x73625140]
    %3957 = vst [vmem:[#allocation1] ss:$4 sm:$0xff] %v3575
    %v3958 = vld.sshfl [vmem:[#allocation1] sm:$0xff pattern:$0x73625140]
    %v3959 = vld.sshfl [vmem:[#allocation1 + $0x8] sm:$0xff pattern:$0x73625140]
    %3960 = vst [vmem:[%s3581] ss:$4 sm:$0xff] %v3577
    %v3961 = vld.sshfl [vmem:[#allocation1 + $0x20] sm:$0xff pattern:$0x73625140]
    %v3962 = vld.sshfl [vmem:[#allocation1 + $0x28] sm:$0xff pattern:$0x73625140]
    %v4219 = vsel %vm3351, %v3579, -inf
    %v4220 = vrot.slane %v4219, 4
    %v4221 = vmax.f32 %v4219, %v4220
    %v4222 = vrot.slane %v4221, 2
    %v4223 = vmax.f32 %v4221, %v4222
    %v4224 = vrot.slane %v4223, 1
    %v4225 = vmax.f32 %v4223, %v4224
    %vm4226 = vcmask 779264
    %v4227 = vsel %vm4226, %v3580, -inf
    %v4228 = vrot.slane %v4227, 4
    %v4229 = vmax.f32 %v4227, %v4228
    %v4230 = vrot.slane %v4229, 2
    %v4231 = vmax.f32 %v4229, %v4230
    %v4232 = vrot.slane %v4231, 1
    %v4233 = vmax.f32 %v4231, %v4232
    %v4234 = vsel %vm3351, %v3583, -inf
    %v4235 = vrot.slane %v4234, 4
    %v4236 = vmax.f32 %v4234, %v4235
    %v4237 = vrot.slane %v4236, 2
    %v4238 = vmax.f32 %v4236, %v4237
    %v4239 = vrot.slane %v4238, 1
    %v4240 = vmax.f32 %v4238, %v4239
    %v4241 = vsel %vm4226, %v3584, -inf
    %v4242 = vrot.slane %v4241, 4
    %v4243 = vmax.f32 %v4241, %v4242
    %v4244 = vrot.slane %v4243, 2
    %v4245 = vmax.f32 %v4243, %v4244
    %v4246 = vrot.slane %v4245, 1
    %v4247 = vmax.f32 %v4245, %v4246
    %v4248 = vsel %vm3351, %v3586, -inf
    %v4249 = vrot.slane %v4248, 4
    %v4250 = vmax.f32 %v4248, %v4249
    %v4251 = vrot.slane %v4250, 2
    %v4252 = vmax.f32 %v4250, %v4251
    %v4253 = vrot.slane %v4252, 1
    %v4254 = vmax.f32 %v4252, %v4253
    %v4255 = vsel %vm4226, %v3587, -inf
    %v4256 = vrot.slane %v4255, 4
    %v4257 = vmax.f32 %v4255, %v4256
    %v4258 = vrot.slane %v4257, 2
    %v4259 = vmax.f32 %v4257, %v4258
    %v4260 = vrot.slane %v4259, 1
    %v4261 = vmax.f32 %v4259, %v4260
    %v4262 = vsel %vm3351, %v3589, -inf
    %v4263 = vrot.slane %v4262, 4
    %v4264 = vmax.f32 %v4262, %v4263
    %v4265 = vrot.slane %v4264, 2
    %v4266 = vmax.f32 %v4264, %v4265
    %v4267 = vrot.slane %v4266, 1
    %v4268 = vmax.f32 %v4266, %v4267
    %v4269 = vsel %vm4226, %v3590, -inf
    %v4270 = vrot.slane %v4269, 4
    %v4271 = vmax.f32 %v4269, %v4270
    %v4272 = vrot.slane %v4271, 2
    %v4273 = vmax.f32 %v4271, %v4272
    %v4274 = vrot.slane %v4273, 1
    %v4275 = vmax.f32 %v4273, %v4274
    %v4276 = vsel %vm3351, %v3592, -inf
    %v4277 = vrot.slane %v4276, 4
    %v4278 = vmax.f32 %v4276, %v4277
    %v4279 = vrot.slane %v4278, 2
    %v4280 = vmax.f32 %v4278, %v4279
    %v4281 = vrot.slane %v4280, 1
    %v4282 = vmax.f32 %v4280, %v4281
    %v4283 = vsel %vm4226, %v3593, -inf
    %v4284 = vrot.slane %v4283, 4
    %v4285 = vmax.f32 %v4283, %v4284
    %v4286 = vrot.slane %v4285, 2
    %v4287 = vmax.f32 %v4285, %v4286
    %v4288 = vrot.slane %v4287, 1
    %v4289 = vmax.f32 %v4287, %v4288
    %v4290 = vsel %vm3351, %v3595, -inf
    %v4291 = vrot.slane %v4290, 4
    %v4292 = vmax.f32 %v4290, %v4291
    %v4293 = vrot.slane %v4292, 2
    %v4294 = vmax.f32 %v4292, %v4293
    %v4295 = vrot.slane %v4294, 1
    %v4296 = vmax.f32 %v4294, %v4295
    %v4297 = vsel %vm4226, %v3596, -inf
    %v4298 = vrot.slane %v4297, 4
    %v4299 = vmax.f32 %v4297, %v4298
    %v4300 = vrot.slane %v4299, 2
    %v4301 = vmax.f32 %v4299, %v4300
    %v4302 = vrot.slane %v4301, 1
    %v4303 = vmax.f32 %v4301, %v4302
    %v4304 = vsel %vm3351, %v3598, -inf
    %v4305 = vrot.slane %v4304, 4
    %v4306 = vmax.f32 %v4304, %v4305
    %v4307 = vrot.slane %v4306, 2
    %v4308 = vmax.f32 %v4306, %v4307
    %v4309 = vrot.slane %v4308, 1
    %v4310 = vmax.f32 %v4308, %v4309
    %v4311 = vsel %vm4226, %v3599, -inf
    %v4312 = vrot.slane %v4311, 4
    %v4313 = vmax.f32 %v4311, %v4312
    %v4314 = vrot.slane %v4313, 2
    %v4315 = vmax.f32 %v4313, %v4314
    %v4316 = vrot.slane %v4315, 1
    %v4317 = vmax.f32 %v4315, %v4316
    %v4318 = vsel %vm3351, %v3601, -inf
    %v4319 = vrot.slane %v4318, 4
    %v4320 = vmax.f32 %v4318, %v4319
    %v4321 = vrot.slane %v4320, 2
    %v4322 = vmax.f32 %v4320, %v4321
    %v4323 = vrot.slane %v4322, 1
    %v4324 = vmax.f32 %v4322, %v4323
    %v4325 = vsel %vm4226, %v3602, -inf
    %v4326 = vrot.slane %v4325, 4
    %v4327 = vmax.f32 %v4325, %v4326
    %v4328 = vrot.slane %v4327, 2
    %v4329 = vmax.f32 %v4327, %v4328
    %v4330 = vrot.slane %v4329, 1
    %v4331 = vmax.f32 %v4329, %v4330
    %v4332 = vsel %vm3351, %v3604, -inf
    %v4333 = vrot.slane %v4332, 4
    %v4334 = vmax.f32 %v4332, %v4333
    %v4335 = vrot.slane %v4334, 2
    %v4336 = vmax.f32 %v4334, %v4335
    %v4337 = vrot.slane %v4336, 1
    %v4338 = vmax.f32 %v4336, %v4337
    %v4339 = vsel %vm4226, %v3605, -inf
    %v4340 = vrot.slane %v4339, 4
    %v4341 = vmax.f32 %v4339, %v4340
    %v4342 = vrot.slane %v4341, 2
    %v4343 = vmax.f32 %v4341, %v4342
    %v4344 = vrot.slane %v4343, 1
    %v4345 = vmax.f32 %v4343, %v4344
    %v4346 = vsel %vm3351, %v3607, -inf
    %v4347 = vrot.slane %v4346, 4
    %v4348 = vmax.f32 %v4346, %v4347
    %v4349 = vrot.slane %v4348, 2
    %v4350 = vmax.f32 %v4348, %v4349
    %v4351 = vrot.slane %v4350, 1
    %v4352 = vmax.f32 %v4350, %v4351
    %v4353 = vsel %vm4226, %v3608, -inf
    %v4354 = vrot.slane %v4353, 4
    %v4355 = vmax.f32 %v4353, %v4354
    %v4356 = vrot.slane %v4355, 2
    %v4357 = vmax.f32 %v4355, %v4356
    %v4358 = vrot.slane %v4357, 1
    %v4359 = vmax.f32 %v4357, %v4358
    %v4360 = vsel %vm3351, %v3610, -inf
    %v4361 = vrot.slane %v4360, 4
    %v4362 = vmax.f32 %v4360, %v4361
    %v4363 = vrot.slane %v4362, 2
    %v4364 = vmax.f32 %v4362, %v4363
    %v4365 = vrot.slane %v4364, 1
    %v4366 = vmax.f32 %v4364, %v4365
    %v4367 = vsel %vm4226, %v3611, -inf
    %v4368 = vrot.slane %v4367, 4
    %v4369 = vmax.f32 %v4367, %v4368
    %v4370 = vrot.slane %v4369, 2
    %v4371 = vmax.f32 %v4369, %v4370
    %v4372 = vrot.slane %v4371, 1
    %v4373 = vmax.f32 %v4371, %v4372
    %v4374 = vsel %vm3351, %v3613, -inf
    %v4375 = vrot.slane %v4374, 4
    %v4376 = vmax.f32 %v4374, %v4375
    %v4377 = vrot.slane %v4376, 2
    %v4378 = vmax.f32 %v4376, %v4377
    %v4379 = vrot.slane %v4378, 1
    %v4380 = vmax.f32 %v4378, %v4379
    %v4381 = vsel %vm4226, %v3614, -inf
    %v4382 = vrot.slane %v4381, 4
    %v4383 = vmax.f32 %v4381, %v4382
    %v4384 = vrot.slane %v4383, 2
    %v4385 = vmax.f32 %v4383, %v4384
    %v4386 = vrot.slane %v4385, 1
    %v4387 = vmax.f32 %v4385, %v4386
    %v4388 = vsel %vm3351, %v3616, -inf
    %v4389 = vrot.slane %v4388, 4
    %v4390 = vmax.f32 %v4388, %v4389
    %v4391 = vrot.slane %v4390, 2
    %v4392 = vmax.f32 %v4390, %v4391
    %v4393 = vrot.slane %v4392, 1
    %v4394 = vmax.f32 %v4392, %v4393
    %v4395 = vsel %vm4226, %v3617, -inf
    %v4396 = vrot.slane %v4395, 4
    %v4397 = vmax.f32 %v4395, %v4396
    %v4398 = vrot.slane %v4397, 2
    %v4399 = vmax.f32 %v4397, %v4398
    %v4400 = vrot.slane %v4399, 1
    %v4401 = vmax.f32 %v4399, %v4400
    %v4402 = vsel %vm3351, %v3619, -inf
    %v4403 = vrot.slane %v4402, 4
    %v4404 = vmax.f32 %v4402, %v4403
    %v4405 = vrot.slane %v4404, 2
    %v4406 = vmax.f32 %v4404, %v4405
    %v4407 = vrot.slane %v4406, 1
    %v4408 = vmax.f32 %v4406, %v4407
    %v4409 = vsel %vm4226, %v3620, -inf
    %v4410 = vrot.slane %v4409, 4
    %v4411 = vmax.f32 %v4409, %v4410
    %v4412 = vrot.slane %v4411, 2
    %v4413 = vmax.f32 %v4411, %v4412
    %v4414 = vrot.slane %v4413, 1
    %v4415 = vmax.f32 %v4413, %v4414
    %v4416 = vsel %vm3351, %v3622, -inf
    %v4417 = vrot.slane %v4416, 4
    %v4418 = vmax.f32 %v4416, %v4417
    %v4419 = vrot.slane %v4418, 2
    %v4420 = vmax.f32 %v4418, %v4419
    %v4421 = vrot.slane %v4420, 1
    %v4422 = vmax.f32 %v4420, %v4421
    %v4423 = vsel %vm4226, %v3623, -inf
    %v4424 = vrot.slane %v4423, 4
    %v4425 = vmax.f32 %v4423, %v4424
    %v4426 = vrot.slane %v4425, 2
    %v4427 = vmax.f32 %v4425, %v4426
    %v4428 = vrot.slane %v4427, 1
    %v4429 = vmax.f32 %v4427, %v4428
    %v4430 = vsel %vm3351, %v3625, -inf
    %v4431 = vrot.slane %v4430, 4
    %v4432 = vmax.f32 %v4430, %v4431
    %v4433 = vrot.slane %v4432, 2
    %v4434 = vmax.f32 %v4432, %v4433
    %v4435 = vrot.slane %v4434, 1
    %v4436 = vmax.f32 %v4434, %v4435
    %v4437 = vsel %vm4226, %v3626, -inf
    %v4438 = vrot.slane %v4437, 4
    %v4439 = vmax.f32 %v4437, %v4438
    %v4440 = vrot.slane %v4439, 2
    %v4441 = vmax.f32 %v4439, %v4440
    %v4442 = vrot.slane %v4441, 1
    %v4443 = vmax.f32 %v4441, %v4442
    %v4444 = vsel %vm3351, %v3628, -inf
    %v4445 = vrot.slane %v4444, 4
    %v4446 = vmax.f32 %v4444, %v4445
    %v4447 = vrot.slane %v4446, 2
    %v4448 = vmax.f32 %v4446, %v4447
    %v4449 = vrot.slane %v4448, 1
    %v4450 = vmax.f32 %v4448, %v4449
    %v4451 = vsel %vm4226, %v3629, -inf
    %v4452 = vrot.slane %v4451, 4
    %v4453 = vmax.f32 %v4451, %v4452
    %v4454 = vrot.slane %v4453, 2
    %v4455 = vmax.f32 %v4453, %v4454
    %v4456 = vrot.slane %v4455, 1
    %v4457 = vmax.f32 %v4455, %v4456
    %v4458 = vsel %vm3351, %v3631, -inf
    %v4459 = vrot.slane %v4458, 4
    %v4460 = vmax.f32 %v4458, %v4459
    %v4461 = vrot.slane %v4460, 2
    %v4462 = vmax.f32 %v4460, %v4461
    %v4463 = vrot.slane %v4462, 1
    %v4464 = vmax.f32 %v4462, %v4463
    %v4465 = vsel %vm4226, %v3632, -inf
    %v4466 = vrot.slane %v4465, 4
    %v4467 = vmax.f32 %v4465, %v4466
    %v4468 = vrot.slane %v4467, 2
    %v4469 = vmax.f32 %v4467, %v4468
    %v4470 = vrot.slane %v4469, 1
    %v4471 = vmax.f32 %v4469, %v4470
    %v4472 = vsel %vm3351, %v3634, -inf
    %v4473 = vrot.slane %v4472, 4
    %v4474 = vmax.f32 %v4472, %v4473
    %v4475 = vrot.slane %v4474, 2
    %v4476 = vmax.f32 %v4474, %v4475
    %v4477 = vrot.slane %v4476, 1
    %v4478 = vmax.f32 %v4476, %v4477
    %v4479 = vsel %vm4226, %v3635, -inf
    %v4480 = vrot.slane %v4479, 4
    %v4481 = vmax.f32 %v4479, %v4480
    %v4482 = vrot.slane %v4481, 2
    %v4483 = vmax.f32 %v4481, %v4482
    %v4484 = vrot.slane %v4483, 1
    %v4485 = vmax.f32 %v4483, %v4484
    %v4486 = vsel %vm3351, %v3637, -inf
    %v4487 = vrot.slane %v4486, 4
    %v4488 = vmax.f32 %v4486, %v4487
    %v4489 = vrot.slane %v4488, 2
    %v4490 = vmax.f32 %v4488, %v4489
    %v4491 = vrot.slane %v4490, 1
    %v4492 = vmax.f32 %v4490, %v4491
    %v4493 = vsel %vm4226, %v3638, -inf
    %v4494 = vrot.slane %v4493, 4
    %v4495 = vmax.f32 %v4493, %v4494
    %v4496 = vrot.slane %v4495, 2
    %v4497 = vmax.f32 %v4495, %v4496
    %v4498 = vrot.slane %v4497, 1
    %v4499 = vmax.f32 %v4497, %v4498
    %v4500 = vsel %vm3351, %v3640, -inf
    %v4501 = vrot.slane %v4500, 4
    %v4502 = vmax.f32 %v4500, %v4501
    %v4503 = vrot.slane %v4502, 2
    %v4504 = vmax.f32 %v4502, %v4503
    %v4505 = vrot.slane %v4504, 1
    %v4506 = vmax.f32 %v4504, %v4505
    %v4507 = vsel %vm4226, %v3641, -inf
    %v4508 = vrot.slane %v4507, 4
    %v4509 = vmax.f32 %v4507, %v4508
    %v4510 = vrot.slane %v4509, 2
    %v4511 = vmax.f32 %v4509, %v4510
    %v4512 = vrot.slane %v4511, 1
    %v4513 = vmax.f32 %v4511, %v4512
    %v4514 = vsel %vm3351, %v3643, -inf
    %v4515 = vrot.slane %v4514, 4
    %v4516 = vmax.f32 %v4514, %v4515
    %v4517 = vrot.slane %v4516, 2
    %v4518 = vmax.f32 %v4516, %v4517
    %v4519 = vrot.slane %v4518, 1
    %v4520 = vmax.f32 %v4518, %v4519
    %v4521 = vsel %vm4226, %v3644, -inf
    %v4522 = vrot.slane %v4521, 4
    %v4523 = vmax.f32 %v4521, %v4522
    %v4524 = vrot.slane %v4523, 2
    %v4525 = vmax.f32 %v4523, %v4524
    %v4526 = vrot.slane %v4525, 1
    %v4527 = vmax.f32 %v4525, %v4526
    %v4528 = vsel %vm3351, %v3646, -inf
    %v4529 = vrot.slane %v4528, 4
    %v4530 = vmax.f32 %v4528, %v4529
    %v4531 = vrot.slane %v4530, 2
    %v4532 = vmax.f32 %v4530, %v4531
    %v4533 = vrot.slane %v4532, 1
    %v4534 = vmax.f32 %v4532, %v4533
    %v4535 = vsel %vm4226, %v3647, -inf
    %v4536 = vrot.slane %v4535, 4
    %v4537 = vmax.f32 %v4535, %v4536
    %v4538 = vrot.slane %v4537, 2
    %v4539 = vmax.f32 %v4537, %v4538
    %v4540 = vrot.slane %v4539, 1
    %v4541 = vmax.f32 %v4539, %v4540
    %v4542 = vsel %vm3351, %v3649, -inf
    %v4543 = vrot.slane %v4542, 4
    %v4544 = vmax.f32 %v4542, %v4543
    %v4545 = vrot.slane %v4544, 2
    %v4546 = vmax.f32 %v4544, %v4545
    %v4547 = vrot.slane %v4546, 1
    %v4548 = vmax.f32 %v4546, %v4547
    %v4549 = vsel %vm4226, %v3650, -inf
    %v4550 = vrot.slane %v4549, 4
    %v4551 = vmax.f32 %v4549, %v4550
    %v4552 = vrot.slane %v4551, 2
    %v4553 = vmax.f32 %v4551, %v4552
    %v4554 = vrot.slane %v4553, 1
    %v4555 = vmax.f32 %v4553, %v4554
    %v4556 = vsel %vm3351, %v3652, -inf
    %v4557 = vrot.slane %v4556, 4
    %v4558 = vmax.f32 %v4556, %v4557
    %v4559 = vrot.slane %v4558, 2
    %v4560 = vmax.f32 %v4558, %v4559
    %v4561 = vrot.slane %v4560, 1
    %v4562 = vmax.f32 %v4560, %v4561
    %v4563 = vsel %vm4226, %v3653, -inf
    %v4564 = vrot.slane %v4563, 4
    %v4565 = vmax.f32 %v4563, %v4564
    %v4566 = vrot.slane %v4565, 2
    %v4567 = vmax.f32 %v4565, %v4566
    %v4568 = vrot.slane %v4567, 1
    %v4569 = vmax.f32 %v4567, %v4568
    %v4570 = vsel %vm3351, %v3655, -inf
    %v4571 = vrot.slane %v4570, 4
    %v4572 = vmax.f32 %v4570, %v4571
    %v4573 = vrot.slane %v4572, 2
    %v4574 = vmax.f32 %v4572, %v4573
    %v4575 = vrot.slane %v4574, 1
    %v4576 = vmax.f32 %v4574, %v4575
    %v4577 = vsel %vm4226, %v3656, -inf
    %v4578 = vrot.slane %v4577, 4
    %v4579 = vmax.f32 %v4577, %v4578
    %v4580 = vrot.slane %v4579, 2
    %v4581 = vmax.f32 %v4579, %v4580
    %v4582 = vrot.slane %v4581, 1
    %v4583 = vmax.f32 %v4581, %v4582
    %v4584 = vsel %vm3351, %v3658, -inf
    %v4585 = vrot.slane %v4584, 4
    %v4586 = vmax.f32 %v4584, %v4585
    %v4587 = vrot.slane %v4586, 2
    %v4588 = vmax.f32 %v4586, %v4587
    %v4589 = vrot.slane %v4588, 1
    %v4590 = vmax.f32 %v4588, %v4589
    %v4591 = vsel %vm4226, %v3659, -inf
    %v4592 = vrot.slane %v4591, 4
    %v4593 = vmax.f32 %v4591, %v4592
    %v4594 = vrot.slane %v4593, 2
    %v4595 = vmax.f32 %v4593, %v4594
    %v4596 = vrot.slane %v4595, 1
    %v4597 = vmax.f32 %v4595, %v4596
    %v4598 = vsel %vm3351, %v3661, -inf
    %v4599 = vrot.slane %v4598, 4
    %v4600 = vmax.f32 %v4598, %v4599
    %v4601 = vrot.slane %v4600, 2
    %v4602 = vmax.f32 %v4600, %v4601
    %v4603 = vrot.slane %v4602, 1
    %v4604 = vmax.f32 %v4602, %v4603
    %v4605 = vsel %vm4226, %v3662, -inf
    %v4606 = vrot.slane %v4605, 4
    %v4607 = vmax.f32 %v4605, %v4606
    %v4608 = vrot.slane %v4607, 2
    %v4609 = vmax.f32 %v4607, %v4608
    %v4610 = vrot.slane %v4609, 1
    %v4611 = vmax.f32 %v4609, %v4610
    %v4612 = vsel %vm3351, %v3664, -inf
    %v4613 = vrot.slane %v4612, 4
    %v4614 = vmax.f32 %v4612, %v4613
    %v4615 = vrot.slane %v4614, 2
    %v4616 = vmax.f32 %v4614, %v4615
    %v4617 = vrot.slane %v4616, 1
    %v4618 = vmax.f32 %v4616, %v4617
    %v4619 = vsel %vm4226, %v3665, -inf
    %v4620 = vrot.slane %v4619, 4
    %v4621 = vmax.f32 %v4619, %v4620
    %v4622 = vrot.slane %v4621, 2
    %v4623 = vmax.f32 %v4621, %v4622
    %v4624 = vrot.slane %v4623, 1
    %v4625 = vmax.f32 %v4623, %v4624
    %v4626 = vsel %vm3351, %v3667, -inf
    %v4627 = vrot.slane %v4626, 4
    %v4628 = vmax.f32 %v4626, %v4627
    %v4629 = vrot.slane %v4628, 2
    %v4630 = vmax.f32 %v4628, %v4629
    %v4631 = vrot.slane %v4630, 1
    %v4632 = vmax.f32 %v4630, %v4631
    %v4633 = vsel %vm4226, %v3668, -inf
    %v4634 = vrot.slane %v4633, 4
    %v4635 = vmax.f32 %v4633, %v4634
    %v4636 = vrot.slane %v4635, 2
    %v4637 = vmax.f32 %v4635, %v4636
    %v4638 = vrot.slane %v4637, 1
    %v4639 = vmax.f32 %v4637, %v4638
    %v4640 = vsel %vm3351, %v3670, -inf
    %v4641 = vrot.slane %v4640, 4
    %v4642 = vmax.f32 %v4640, %v4641
    %v4643 = vrot.slane %v4642, 2
    %v4644 = vmax.f32 %v4642, %v4643
    %v4645 = vrot.slane %v4644, 1
    %v4646 = vmax.f32 %v4644, %v4645
    %v4647 = vsel %vm4226, %v3671, -inf
    %v4648 = vrot.slane %v4647, 4
    %v4649 = vmax.f32 %v4647, %v4648
    %v4650 = vrot.slane %v4649, 2
    %v4651 = vmax.f32 %v4649, %v4650
    %v4652 = vrot.slane %v4651, 1
    %v4653 = vmax.f32 %v4651, %v4652
    %v4654 = vsel %vm3351, %v3673, -inf
    %v4655 = vrot.slane %v4654, 4
    %v4656 = vmax.f32 %v4654, %v4655
    %v4657 = vrot.slane %v4656, 2
    %v4658 = vmax.f32 %v4656, %v4657
    %v4659 = vrot.slane %v4658, 1
    %v4660 = vmax.f32 %v4658, %v4659
    %v4661 = vsel %vm4226, %v3674, -inf
    %v4662 = vrot.slane %v4661, 4
    %v4663 = vmax.f32 %v4661, %v4662
    %v4664 = vrot.slane %v4663, 2
    %v4665 = vmax.f32 %v4663, %v4664
    %v4666 = vrot.slane %v4665, 1
    %v4667 = vmax.f32 %v4665, %v4666
    %v4668 = vsel %vm3351, %v3676, -inf
    %v4669 = vrot.slane %v4668, 4
    %v4670 = vmax.f32 %v4668, %v4669
    %v4671 = vrot.slane %v4670, 2
    %v4672 = vmax.f32 %v4670, %v4671
    %v4673 = vrot.slane %v4672, 1
    %v4674 = vmax.f32 %v4672, %v4673
    %v4675 = vsel %vm4226, %v3677, -inf
    %v4676 = vrot.slane %v4675, 4
    %v4677 = vmax.f32 %v4675, %v4676
    %v4678 = vrot.slane %v4677, 2
    %v4679 = vmax.f32 %v4677, %v4678
    %v4680 = vrot.slane %v4679, 1
    %v4681 = vmax.f32 %v4679, %v4680
    %v4682 = vsel %vm3351, %v3679, -inf
    %v4683 = vrot.slane %v4682, 4
    %v4684 = vmax.f32 %v4682, %v4683
    %v4685 = vrot.slane %v4684, 2
    %v4686 = vmax.f32 %v4684, %v4685
    %v4687 = vrot.slane %v4686, 1
    %v4688 = vmax.f32 %v4686, %v4687
    %v4689 = vsel %vm4226, %v3680, -inf
    %v4690 = vrot.slane %v4689, 4
    %v4691 = vmax.f32 %v4689, %v4690
    %v4692 = vrot.slane %v4691, 2
    %v4693 = vmax.f32 %v4691, %v4692
    %v4694 = vrot.slane %v4693, 1
    %v4695 = vmax.f32 %v4693, %v4694
    %v4696 = vsel %vm3351, %v3682, -inf
    %v4697 = vrot.slane %v4696, 4
    %v4698 = vmax.f32 %v4696, %v4697
    %v4699 = vrot.slane %v4698, 2
    %v4700 = vmax.f32 %v4698, %v4699
    %v4701 = vrot.slane %v4700, 1
    %v4702 = vmax.f32 %v4700, %v4701
    %v4703 = vsel %vm4226, %v3683, -inf
    %v4704 = vrot.slane %v4703, 4
    %v4705 = vmax.f32 %v4703, %v4704
    %v4706 = vrot.slane %v4705, 2
    %v4707 = vmax.f32 %v4705, %v4706
    %v4708 = vrot.slane %v4707, 1
    %v4709 = vmax.f32 %v4707, %v4708
    %v4710 = vsel %vm3351, %v3685, -inf
    %v4711 = vrot.slane %v4710, 4
    %v4712 = vmax.f32 %v4710, %v4711
    %v4713 = vrot.slane %v4712, 2
    %v4714 = vmax.f32 %v4712, %v4713
    %v4715 = vrot.slane %v4714, 1
    %v4716 = vmax.f32 %v4714, %v4715
    %v4717 = vsel %vm4226, %v3686, -inf
    %v4718 = vrot.slane %v4717, 4
    %v4719 = vmax.f32 %v4717, %v4718
    %v4720 = vrot.slane %v4719, 2
    %v4721 = vmax.f32 %v4719, %v4720
    %v4722 = vrot.slane %v4721, 1
    %v4723 = vmax.f32 %v4721, %v4722
    %v4724 = vsel %vm3351, %v3688, -inf
    %v4725 = vrot.slane %v4724, 4
    %v4726 = vmax.f32 %v4724, %v4725
    %v4727 = vrot.slane %v4726, 2
    %v4728 = vmax.f32 %v4726, %v4727
    %v4729 = vrot.slane %v4728, 1
    %v4730 = vmax.f32 %v4728, %v4729
    %v4731 = vsel %vm4226, %v3689, -inf
    %v4732 = vrot.slane %v4731, 4
    %v4733 = vmax.f32 %v4731, %v4732
    %v4734 = vrot.slane %v4733, 2
    %v4735 = vmax.f32 %v4733, %v4734
    %v4736 = vrot.slane %v4735, 1
    %v4737 = vmax.f32 %v4735, %v4736
    %v4738 = vsel %vm3351, %v3691, -inf
    %v4739 = vrot.slane %v4738, 4
    %v4740 = vmax.f32 %v4738, %v4739
    %v4741 = vrot.slane %v4740, 2
    %v4742 = vmax.f32 %v4740, %v4741
    %v4743 = vrot.slane %v4742, 1
    %v4744 = vmax.f32 %v4742, %v4743
    %v4745 = vsel %vm4226, %v3692, -inf
    %v4746 = vrot.slane %v4745, 4
    %v4747 = vmax.f32 %v4745, %v4746
    %v4748 = vrot.slane %v4747, 2
    %v4749 = vmax.f32 %v4747, %v4748
    %v4750 = vrot.slane %v4749, 1
    %v4751 = vmax.f32 %v4749, %v4750
    %v4752 = vsel %vm3351, %v3694, -inf
    %v4753 = vrot.slane %v4752, 4
    %v4754 = vmax.f32 %v4752, %v4753
    %v4755 = vrot.slane %v4754, 2
    %v4756 = vmax.f32 %v4754, %v4755
    %v4757 = vrot.slane %v4756, 1
    %v4758 = vmax.f32 %v4756, %v4757
    %v4759 = vsel %vm4226, %v3695, -inf
    %v4760 = vrot.slane %v4759, 4
    %v4761 = vmax.f32 %v4759, %v4760
    %v4762 = vrot.slane %v4761, 2
    %v4763 = vmax.f32 %v4761, %v4762
    %v4764 = vrot.slane %v4763, 1
    %v4765 = vmax.f32 %v4763, %v4764
    %v4766 = vsel %vm3351, %v3697, -inf
    %v4767 = vrot.slane %v4766, 4
    %v4768 = vmax.f32 %v4766, %v4767
    %v4769 = vrot.slane %v4768, 2
    %v4770 = vmax.f32 %v4768, %v4769
    %v4771 = vrot.slane %v4770, 1
    %v4772 = vmax.f32 %v4770, %v4771
    %v4773 = vsel %vm4226, %v3698, -inf
    %v4774 = vrot.slane %v4773, 4
    %v4775 = vmax.f32 %v4773, %v4774
    %v4776 = vrot.slane %v4775, 2
    %v4777 = vmax.f32 %v4775, %v4776
    %v4778 = vrot.slane %v4777, 1
    %v4779 = vmax.f32 %v4777, %v4778
    %v4780 = vsel %vm3351, %v3700, -inf
    %v4781 = vrot.slane %v4780, 4
    %v4782 = vmax.f32 %v4780, %v4781
    %v4783 = vrot.slane %v4782, 2
    %v4784 = vmax.f32 %v4782, %v4783
    %v4785 = vrot.slane %v4784, 1
    %v4786 = vmax.f32 %v4784, %v4785
    %v4787 = vsel %vm4226, %v3701, -inf
    %v4788 = vrot.slane %v4787, 4
    %v4789 = vmax.f32 %v4787, %v4788
    %v4790 = vrot.slane %v4789, 2
    %v4791 = vmax.f32 %v4789, %v4790
    %v4792 = vrot.slane %v4791, 1
    %v4793 = vmax.f32 %v4791, %v4792
    %v4794 = vsel %vm3351, %v3703, -inf
    %v4795 = vrot.slane %v4794, 4
    %v4796 = vmax.f32 %v4794, %v4795
    %v4797 = vrot.slane %v4796, 2
    %v4798 = vmax.f32 %v4796, %v4797
    %v4799 = vrot.slane %v4798, 1
    %v4800 = vmax.f32 %v4798, %v4799
    %v4801 = vsel %vm4226, %v3704, -inf
    %v4802 = vrot.slane %v4801, 4
    %v4803 = vmax.f32 %v4801, %v4802
    %v4804 = vrot.slane %v4803, 2
    %v4805 = vmax.f32 %v4803, %v4804
    %v4806 = vrot.slane %v4805, 1
    %v4807 = vmax.f32 %v4805, %v4806
    %v4808 = vsel %vm3351, %v3706, -inf
    %v4809 = vrot.slane %v4808, 4
    %v4810 = vmax.f32 %v4808, %v4809
    %v4811 = vrot.slane %v4810, 2
    %v4812 = vmax.f32 %v4810, %v4811
    %v4813 = vrot.slane %v4812, 1
    %v4814 = vmax.f32 %v4812, %v4813
    %v4815 = vsel %vm4226, %v3707, -inf
    %v4816 = vrot.slane %v4815, 4
    %v4817 = vmax.f32 %v4815, %v4816
    %v4818 = vrot.slane %v4817, 2
    %v4819 = vmax.f32 %v4817, %v4818
    %v4820 = vrot.slane %v4819, 1
    %v4821 = vmax.f32 %v4819, %v4820
    %v4822 = vsel %vm3351, %v3709, -inf
    %v4823 = vrot.slane %v4822, 4
    %v4824 = vmax.f32 %v4822, %v4823
    %v4825 = vrot.slane %v4824, 2
    %v4826 = vmax.f32 %v4824, %v4825
    %v4827 = vrot.slane %v4826, 1
    %v4828 = vmax.f32 %v4826, %v4827
    %v4829 = vsel %vm4226, %v3710, -inf
    %v4830 = vrot.slane %v4829, 4
    %v4831 = vmax.f32 %v4829, %v4830
    %v4832 = vrot.slane %v4831, 2
    %v4833 = vmax.f32 %v4831, %v4832
    %v4834 = vrot.slane %v4833, 1
    %v4835 = vmax.f32 %v4833, %v4834
    %v4836 = vsel %vm3351, %v3712, -inf
    %v4837 = vrot.slane %v4836, 4
    %v4838 = vmax.f32 %v4836, %v4837
    %v4839 = vrot.slane %v4838, 2
    %v4840 = vmax.f32 %v4838, %v4839
    %v4841 = vrot.slane %v4840, 1
    %v4842 = vmax.f32 %v4840, %v4841
    %v4843 = vsel %vm4226, %v3713, -inf
    %v4844 = vrot.slane %v4843, 4
    %v4845 = vmax.f32 %v4843, %v4844
    %v4846 = vrot.slane %v4845, 2
    %v4847 = vmax.f32 %v4845, %v4846
    %v4848 = vrot.slane %v4847, 1
    %v4849 = vmax.f32 %v4847, %v4848
    %v4850 = vsel %vm3351, %v3715, -inf
    %v4851 = vrot.slane %v4850, 4
    %v4852 = vmax.f32 %v4850, %v4851
    %v4853 = vrot.slane %v4852, 2
    %v4854 = vmax.f32 %v4852, %v4853
    %v4855 = vrot.slane %v4854, 1
    %v4856 = vmax.f32 %v4854, %v4855
    %v4857 = vsel %vm4226, %v3716, -inf
    %v4858 = vrot.slane %v4857, 4
    %v4859 = vmax.f32 %v4857, %v4858
    %v4860 = vrot.slane %v4859, 2
    %v4861 = vmax.f32 %v4859, %v4860
    %v4862 = vrot.slane %v4861, 1
    %v4863 = vmax.f32 %v4861, %v4862
    %v4864 = vsel %vm3351, %v3718, -inf
    %v4865 = vrot.slane %v4864, 4
    %v4866 = vmax.f32 %v4864, %v4865
    %v4867 = vrot.slane %v4866, 2
    %v4868 = vmax.f32 %v4866, %v4867
    %v4869 = vrot.slane %v4868, 1
    %v4870 = vmax.f32 %v4868, %v4869
    %v4871 = vsel %vm4226, %v3719, -inf
    %v4872 = vrot.slane %v4871, 4
    %v4873 = vmax.f32 %v4871, %v4872
    %v4874 = vrot.slane %v4873, 2
    %v4875 = vmax.f32 %v4873, %v4874
    %v4876 = vrot.slane %v4875, 1
    %v4877 = vmax.f32 %v4875, %v4876
    %v4878 = vsel %vm3351, %v3721, -inf
    %v4879 = vrot.slane %v4878, 4
    %v4880 = vmax.f32 %v4878, %v4879
    %v4881 = vrot.slane %v4880, 2
    %v4882 = vmax.f32 %v4880, %v4881
    %v4883 = vrot.slane %v4882, 1
    %v4884 = vmax.f32 %v4882, %v4883
    %v4885 = vsel %vm4226, %v3722, -inf
    %v4886 = vrot.slane %v4885, 4
    %v4887 = vmax.f32 %v4885, %v4886
    %v4888 = vrot.slane %v4887, 2
    %v4889 = vmax.f32 %v4887, %v4888
    %v4890 = vrot.slane %v4889, 1
    %v4891 = vmax.f32 %v4889, %v4890
    %v4892 = vsel %vm3351, %v3724, -inf
    %v4893 = vrot.slane %v4892, 4
    %v4894 = vmax.f32 %v4892, %v4893
    %v4895 = vrot.slane %v4894, 2
    %v4896 = vmax.f32 %v4894, %v4895
    %v4897 = vrot.slane %v4896, 1
    %v4898 = vmax.f32 %v4896, %v4897
    %v4899 = vsel %vm4226, %v3725, -inf
    %v4900 = vrot.slane %v4899, 4
    %v4901 = vmax.f32 %v4899, %v4900
    %v4902 = vrot.slane %v4901, 2
    %v4903 = vmax.f32 %v4901, %v4902
    %v4904 = vrot.slane %v4903, 1
    %v4905 = vmax.f32 %v4903, %v4904
    %v4906 = vsel %vm3351, %v3727, -inf
    %v4907 = vrot.slane %v4906, 4
    %v4908 = vmax.f32 %v4906, %v4907
    %v4909 = vrot.slane %v4908, 2
    %v4910 = vmax.f32 %v4908, %v4909
    %v4911 = vrot.slane %v4910, 1
    %v4912 = vmax.f32 %v4910, %v4911
    %v4913 = vsel %vm4226, %v3728, -inf
    %v4914 = vrot.slane %v4913, 4
    %v4915 = vmax.f32 %v4913, %v4914
    %v4916 = vrot.slane %v4915, 2
    %v4917 = vmax.f32 %v4915, %v4916
    %v4918 = vrot.slane %v4917, 1
    %v4919 = vmax.f32 %v4917, %v4918
    %v4920 = vsel %vm3351, %v3730, -inf
    %v4921 = vrot.slane %v4920, 4
    %v4922 = vmax.f32 %v4920, %v4921
    %v4923 = vrot.slane %v4922, 2
    %v4924 = vmax.f32 %v4922, %v4923
    %v4925 = vrot.slane %v4924, 1
    %v4926 = vmax.f32 %v4924, %v4925
    %v4927 = vsel %vm4226, %v3731, -inf
    %v4928 = vrot.slane %v4927, 4
    %v4929 = vmax.f32 %v4927, %v4928
    %v4930 = vrot.slane %v4929, 2
    %v4931 = vmax.f32 %v4929, %v4930
    %v4932 = vrot.slane %v4931, 1
    %v4933 = vmax.f32 %v4931, %v4932
    %v4934 = vsel %vm3351, %v3733, -inf
    %v4935 = vrot.slane %v4934, 4
    %v4936 = vmax.f32 %v4934, %v4935
    %v4937 = vrot.slane %v4936, 2
    %v4938 = vmax.f32 %v4936, %v4937
    %v4939 = vrot.slane %v4938, 1
    %v4940 = vmax.f32 %v4938, %v4939
    %v4941 = vsel %vm4226, %v3734, -inf
    %v4942 = vrot.slane %v4941, 4
    %v4943 = vmax.f32 %v4941, %v4942
    %v4944 = vrot.slane %v4943, 2
    %v4945 = vmax.f32 %v4943, %v4944
    %v4946 = vrot.slane %v4945, 1
    %v4947 = vmax.f32 %v4945, %v4946
    %v4948 = vsel %vm3351, %v3736, -inf
    %v4949 = vrot.slane %v4948, 4
    %v4950 = vmax.f32 %v4948, %v4949
    %v4951 = vrot.slane %v4950, 2
    %v4952 = vmax.f32 %v4950, %v4951
    %v4953 = vrot.slane %v4952, 1
    %v4954 = vmax.f32 %v4952, %v4953
    %v4955 = vsel %vm4226, %v3737, -inf
    %v4956 = vrot.slane %v4955, 4
    %v4957 = vmax.f32 %v4955, %v4956
    %v4958 = vrot.slane %v4957, 2
    %v4959 = vmax.f32 %v4957, %v4958
    %v4960 = vrot.slane %v4959, 1
    %v4961 = vmax.f32 %v4959, %v4960
    %v4962 = vsel %vm3351, %v3739, -inf
    %v4963 = vrot.slane %v4962, 4
    %v4964 = vmax.f32 %v4962, %v4963
    %v4965 = vrot.slane %v4964, 2
    %v4966 = vmax.f32 %v4964, %v4965
    %v4967 = vrot.slane %v4966, 1
    %v4968 = vmax.f32 %v4966, %v4967
    %v4969 = vsel %vm4226, %v3740, -inf
    %v4970 = vrot.slane %v4969, 4
    %v4971 = vmax.f32 %v4969, %v4970
    %v4972 = vrot.slane %v4971, 2
    %v4973 = vmax.f32 %v4971, %v4972
    %v4974 = vrot.slane %v4973, 1
    %v4975 = vmax.f32 %v4973, %v4974
    %v4976 = vsel %vm3351, %v3742, -inf
    %v4977 = vrot.slane %v4976, 4
    %v4978 = vmax.f32 %v4976, %v4977
    %v4979 = vrot.slane %v4978, 2
    %v4980 = vmax.f32 %v4978, %v4979
    %v4981 = vrot.slane %v4980, 1
    %v4982 = vmax.f32 %v4980, %v4981
    %v4983 = vsel %vm4226, %v3743, -inf
    %v4984 = vrot.slane %v4983, 4
    %v4985 = vmax.f32 %v4983, %v4984
    %v4986 = vrot.slane %v4985, 2
    %v4987 = vmax.f32 %v4985, %v4986
    %v4988 = vrot.slane %v4987, 1
    %v4989 = vmax.f32 %v4987, %v4988
    %v4990 = vsel %vm3351, %v3745, -inf
    %v4991 = vrot.slane %v4990, 4
    %v4992 = vmax.f32 %v4990, %v4991
    %v4993 = vrot.slane %v4992, 2
    %v4994 = vmax.f32 %v4992, %v4993
    %v4995 = vrot.slane %v4994, 1
    %v4996 = vmax.f32 %v4994, %v4995
    %v4997 = vsel %vm4226, %v3746, -inf
    %v4998 = vrot.slane %v4997, 4
    %v4999 = vmax.f32 %v4997, %v4998
    %v5000 = vrot.slane %v4999, 2
    %v5001 = vmax.f32 %v4999, %v5000
    %v5002 = vrot.slane %v5001, 1
    %v5003 = vmax.f32 %v5001, %v5002
    %v5004 = vsel %vm3351, %v3748, -inf
    %v5005 = vrot.slane %v5004, 4
    %v5006 = vmax.f32 %v5004, %v5005
    %v5007 = vrot.slane %v5006, 2
    %v5008 = vmax.f32 %v5006, %v5007
    %v5009 = vrot.slane %v5008, 1
    %v5010 = vmax.f32 %v5008, %v5009
    %v5011 = vsel %vm4226, %v3749, -inf
    %v5012 = vrot.slane %v5011, 4
    %v5013 = vmax.f32 %v5011, %v5012
    %v5014 = vrot.slane %v5013, 2
    %v5015 = vmax.f32 %v5013, %v5014
    %v5016 = vrot.slane %v5015, 1
    %v5017 = vmax.f32 %v5015, %v5016
    %v5018 = vsel %vm3351, %v3751, -inf
    %v5019 = vrot.slane %v5018, 4
    %v5020 = vmax.f32 %v5018, %v5019
    %v5021 = vrot.slane %v5020, 2
    %v5022 = vmax.f32 %v5020, %v5021
    %v5023 = vrot.slane %v5022, 1
    %v5024 = vmax.f32 %v5022, %v5023
    %v5025 = vsel %vm4226, %v3752, -inf
    %v5026 = vrot.slane %v5025, 4
    %v5027 = vmax.f32 %v5025, %v5026
    %v5028 = vrot.slane %v5027, 2
    %v5029 = vmax.f32 %v5027, %v5028
    %v5030 = vrot.slane %v5029, 1
    %v5031 = vmax.f32 %v5029, %v5030
    %v5032 = vsel %vm3351, %v3754, -inf
    %v5033 = vrot.slane %v5032, 4
    %v5034 = vmax.f32 %v5032, %v5033
    %v5035 = vrot.slane %v5034, 2
    %v5036 = vmax.f32 %v5034, %v5035
    %v5037 = vrot.slane %v5036, 1
    %v5038 = vmax.f32 %v5036, %v5037
    %v5039 = vsel %vm4226, %v3755, -inf
    %v5040 = vrot.slane %v5039, 4
    %v5041 = vmax.f32 %v5039, %v5040
    %v5042 = vrot.slane %v5041, 2
    %v5043 = vmax.f32 %v5041, %v5042
    %v5044 = vrot.slane %v5043, 1
    %v5045 = vmax.f32 %v5043, %v5044
    %v5046 = vsel %vm3351, %v3757, -inf
    %v5047 = vrot.slane %v5046, 4
    %v5048 = vmax.f32 %v5046, %v5047
    %v5049 = vrot.slane %v5048, 2
    %v5050 = vmax.f32 %v5048, %v5049
    %v5051 = vrot.slane %v5050, 1
    %v5052 = vmax.f32 %v5050, %v5051
    %v5053 = vsel %vm4226, %v3758, -inf
    %v5054 = vrot.slane %v5053, 4
    %v5055 = vmax.f32 %v5053, %v5054
    %v5056 = vrot.slane %v5055, 2
    %v5057 = vmax.f32 %v5055, %v5056
    %v5058 = vrot.slane %v5057, 1
    %v5059 = vmax.f32 %v5057, %v5058
    %v5060 = vsel %vm3351, %v3760, -inf
    %v5061 = vrot.slane %v5060, 4
    %v5062 = vmax.f32 %v5060, %v5061
    %v5063 = vrot.slane %v5062, 2
    %v5064 = vmax.f32 %v5062, %v5063
    %v5065 = vrot.slane %v5064, 1
    %v5066 = vmax.f32 %v5064, %v5065
    %v5067 = vsel %vm4226, %v3761, -inf
    %v5068 = vrot.slane %v5067, 4
    %v5069 = vmax.f32 %v5067, %v5068
    %v5070 = vrot.slane %v5069, 2
    %v5071 = vmax.f32 %v5069, %v5070
    %v5072 = vrot.slane %v5071, 1
    %v5073 = vmax.f32 %v5071, %v5072
    %v5074 = vsel %vm3351, %v3763, -inf
    %v5075 = vrot.slane %v5074, 4
    %v5076 = vmax.f32 %v5074, %v5075
    %v5077 = vrot.slane %v5076, 2
    %v5078 = vmax.f32 %v5076, %v5077
    %v5079 = vrot.slane %v5078, 1
    %v5080 = vmax.f32 %v5078, %v5079
    %v5081 = vsel %vm4226, %v3764, -inf
    %v5082 = vrot.slane %v5081, 4
    %v5083 = vmax.f32 %v5081, %v5082
    %v5084 = vrot.slane %v5083, 2
    %v5085 = vmax.f32 %v5083, %v5084
    %v5086 = vrot.slane %v5085, 1
    %v5087 = vmax.f32 %v5085, %v5086
    %v5088 = vsel %vm3351, %v3766, -inf
    %v5089 = vrot.slane %v5088, 4
    %v5090 = vmax.f32 %v5088, %v5089
    %v5091 = vrot.slane %v5090, 2
    %v5092 = vmax.f32 %v5090, %v5091
    %v5093 = vrot.slane %v5092, 1
    %v5094 = vmax.f32 %v5092, %v5093
    %v5095 = vsel %vm4226, %v3767, -inf
    %v5096 = vrot.slane %v5095, 4
    %v5097 = vmax.f32 %v5095, %v5096
    %v5098 = vrot.slane %v5097, 2
    %v5099 = vmax.f32 %v5097, %v5098
    %v5100 = vrot.slane %v5099, 1
    %v5101 = vmax.f32 %v5099, %v5100
    %v5102 = vsel %vm3351, %v3769, -inf
    %v5103 = vrot.slane %v5102, 4
    %v5104 = vmax.f32 %v5102, %v5103
    %v5105 = vrot.slane %v5104, 2
    %v5106 = vmax.f32 %v5104, %v5105
    %v5107 = vrot.slane %v5106, 1
    %v5108 = vmax.f32 %v5106, %v5107
    %v5109 = vsel %vm4226, %v3770, -inf
    %v5110 = vrot.slane %v5109, 4
    %v5111 = vmax.f32 %v5109, %v5110
    %v5112 = vrot.slane %v5111, 2
    %v5113 = vmax.f32 %v5111, %v5112
    %v5114 = vrot.slane %v5113, 1
    %v5115 = vmax.f32 %v5113, %v5114
    %v5116 = vsel %vm3351, %v3772, -inf
    %v5117 = vrot.slane %v5116, 4
    %v5118 = vmax.f32 %v5116, %v5117
    %v5119 = vrot.slane %v5118, 2
    %v5120 = vmax.f32 %v5118, %v5119
    %v5121 = vrot.slane %v5120, 1
    %v5122 = vmax.f32 %v5120, %v5121
    %v5123 = vsel %vm4226, %v3773, -inf
    %v5124 = vrot.slane %v5123, 4
    %v5125 = vmax.f32 %v5123, %v5124
    %v5126 = vrot.slane %v5125, 2
    %v5127 = vmax.f32 %v5125, %v5126
    %v5128 = vrot.slane %v5127, 1
    %v5129 = vmax.f32 %v5127, %v5128
    %v5130 = vsel %vm3351, %v3775, -inf
    %v5131 = vrot.slane %v5130, 4
    %v5132 = vmax.f32 %v5130, %v5131
    %v5133 = vrot.slane %v5132, 2
    %v5134 = vmax.f32 %v5132, %v5133
    %v5135 = vrot.slane %v5134, 1
    %v5136 = vmax.f32 %v5134, %v5135
    %v5137 = vsel %vm4226, %v3776, -inf
    %v5138 = vrot.slane %v5137, 4
    %v5139 = vmax.f32 %v5137, %v5138
    %v5140 = vrot.slane %v5139, 2
    %v5141 = vmax.f32 %v5139, %v5140
    %v5142 = vrot.slane %v5141, 1
    %v5143 = vmax.f32 %v5141, %v5142
    %v5144 = vsel %vm3351, %v3778, -inf
    %v5145 = vrot.slane %v5144, 4
    %v5146 = vmax.f32 %v5144, %v5145
    %v5147 = vrot.slane %v5146, 2
    %v5148 = vmax.f32 %v5146, %v5147
    %v5149 = vrot.slane %v5148, 1
    %v5150 = vmax.f32 %v5148, %v5149
    %v5151 = vsel %vm4226, %v3779, -inf
    %v5152 = vrot.slane %v5151, 4
    %v5153 = vmax.f32 %v5151, %v5152
    %v5154 = vrot.slane %v5153, 2
    %v5155 = vmax.f32 %v5153, %v5154
    %v5156 = vrot.slane %v5155, 1
    %v5157 = vmax.f32 %v5155, %v5156
    %v5158 = vsel %vm3351, %v3781, -inf
    %v5159 = vrot.slane %v5158, 4
    %v5160 = vmax.f32 %v5158, %v5159
    %v5161 = vrot.slane %v5160, 2
    %v5162 = vmax.f32 %v5160, %v5161
    %v5163 = vrot.slane %v5162, 1
    %v5164 = vmax.f32 %v5162, %v5163
    %v5165 = vsel %vm4226, %v3782, -inf
    %v5166 = vrot.slane %v5165, 4
    %v5167 = vmax.f32 %v5165, %v5166
    %v5168 = vrot.slane %v5167, 2
    %v5169 = vmax.f32 %v5167, %v5168
    %v5170 = vrot.slane %v5169, 1
    %v5171 = vmax.f32 %v5169, %v5170
    %v5172 = vsel %vm3351, %v3784, -inf
    %v5173 = vrot.slane %v5172, 4
    %v5174 = vmax.f32 %v5172, %v5173
    %v5175 = vrot.slane %v5174, 2
    %v5176 = vmax.f32 %v5174, %v5175
    %v5177 = vrot.slane %v5176, 1
    %v5178 = vmax.f32 %v5176, %v5177
    %v5179 = vsel %vm4226, %v3785, -inf
    %v5180 = vrot.slane %v5179, 4
    %v5181 = vmax.f32 %v5179, %v5180
    %v5182 = vrot.slane %v5181, 2
    %v5183 = vmax.f32 %v5181, %v5182
    %v5184 = vrot.slane %v5183, 1
    %v5185 = vmax.f32 %v5183, %v5184
    %v5186 = vsel %vm3351, %v3787, -inf
    %v5187 = vrot.slane %v5186, 4
    %v5188 = vmax.f32 %v5186, %v5187
    %v5189 = vrot.slane %v5188, 2
    %v5190 = vmax.f32 %v5188, %v5189
    %v5191 = vrot.slane %v5190, 1
    %v5192 = vmax.f32 %v5190, %v5191
    %v5193 = vsel %vm4226, %v3788, -inf
    %v5194 = vrot.slane %v5193, 4
    %v5195 = vmax.f32 %v5193, %v5194
    %v5196 = vrot.slane %v5195, 2
    %v5197 = vmax.f32 %v5195, %v5196
    %v5198 = vrot.slane %v5197, 1
    %v5199 = vmax.f32 %v5197, %v5198
    %v5200 = vsel %vm3351, %v3790, -inf
    %v5201 = vrot.slane %v5200, 4
    %v5202 = vmax.f32 %v5200, %v5201
    %v5203 = vrot.slane %v5202, 2
    %v5204 = vmax.f32 %v5202, %v5203
    %v5205 = vrot.slane %v5204, 1
    %v5206 = vmax.f32 %v5204, %v5205
    %v5207 = vsel %vm4226, %v3791, -inf
    %v5208 = vrot.slane %v5207, 4
    %v5209 = vmax.f32 %v5207, %v5208
    %v5210 = vrot.slane %v5209, 2
    %v5211 = vmax.f32 %v5209, %v5210
    %v5212 = vrot.slane %v5211, 1
    %v5213 = vmax.f32 %v5211, %v5212
    %v5214 = vsel %vm3351, %v3793, -inf
    %v5215 = vrot.slane %v5214, 4
    %v5216 = vmax.f32 %v5214, %v5215
    %v5217 = vrot.slane %v5216, 2
    %v5218 = vmax.f32 %v5216, %v5217
    %v5219 = vrot.slane %v5218, 1
    %v5220 = vmax.f32 %v5218, %v5219
    %v5221 = vsel %vm4226, %v3794, -inf
    %v5222 = vrot.slane %v5221, 4
    %v5223 = vmax.f32 %v5221, %v5222
    %v5224 = vrot.slane %v5223, 2
    %v5225 = vmax.f32 %v5223, %v5224
    %v5226 = vrot.slane %v5225, 1
    %v5227 = vmax.f32 %v5225, %v5226
    %v5228 = vsel %vm3351, %v3796, -inf
    %v5229 = vrot.slane %v5228, 4
    %v5230 = vmax.f32 %v5228, %v5229
    %v5231 = vrot.slane %v5230, 2
    %v5232 = vmax.f32 %v5230, %v5231
    %v5233 = vrot.slane %v5232, 1
    %v5234 = vmax.f32 %v5232, %v5233
    %v5235 = vsel %vm4226, %v3797, -inf
    %v5236 = vrot.slane %v5235, 4
    %v5237 = vmax.f32 %v5235, %v5236
    %v5238 = vrot.slane %v5237, 2
    %v5239 = vmax.f32 %v5237, %v5238
    %v5240 = vrot.slane %v5239, 1
    %v5241 = vmax.f32 %v5239, %v5240
    %v5242 = vsel %vm3351, %v3799, -inf
    %v5243 = vrot.slane %v5242, 4
    %v5244 = vmax.f32 %v5242, %v5243
    %v5245 = vrot.slane %v5244, 2
    %v5246 = vmax.f32 %v5244, %v5245
    %v5247 = vrot.slane %v5246, 1
    %v5248 = vmax.f32 %v5246, %v5247
    %v5249 = vsel %vm4226, %v3800, -inf
    %v5250 = vrot.slane %v5249, 4
    %v5251 = vmax.f32 %v5249, %v5250
    %v5252 = vrot.slane %v5251, 2
    %v5253 = vmax.f32 %v5251, %v5252
    %v5254 = vrot.slane %v5253, 1
    %v5255 = vmax.f32 %v5253, %v5254
    %v5256 = vsel %vm3351, %v3802, -inf
    %v5257 = vrot.slane %v5256, 4
    %v5258 = vmax.f32 %v5256, %v5257
    %v5259 = vrot.slane %v5258, 2
    %v5260 = vmax.f32 %v5258, %v5259
    %v5261 = vrot.slane %v5260, 1
    %v5262 = vmax.f32 %v5260, %v5261
    %v5263 = vsel %vm4226, %v3803, -inf
    %v5264 = vrot.slane %v5263, 4
    %v5265 = vmax.f32 %v5263, %v5264
    %v5266 = vrot.slane %v5265, 2
    %v5267 = vmax.f32 %v5265, %v5266
    %v5268 = vrot.slane %v5267, 1
    %v5269 = vmax.f32 %v5267, %v5268
    %v5270 = vsel %vm3351, %v3805, -inf
    %v5271 = vrot.slane %v5270, 4
    %v5272 = vmax.f32 %v5270, %v5271
    %v5273 = vrot.slane %v5272, 2
    %v5274 = vmax.f32 %v5272, %v5273
    %v5275 = vrot.slane %v5274, 1
    %v5276 = vmax.f32 %v5274, %v5275
    %v5277 = vsel %vm4226, %v3806, -inf
    %v5278 = vrot.slane %v5277, 4
    %v5279 = vmax.f32 %v5277, %v5278
    %v5280 = vrot.slane %v5279, 2
    %v5281 = vmax.f32 %v5279, %v5280
    %v5282 = vrot.slane %v5281, 1
    %v5283 = vmax.f32 %v5281, %v5282
    %v5284 = vsel %vm3351, %v3808, -inf
    %v5285 = vrot.slane %v5284, 4
    %v5286 = vmax.f32 %v5284, %v5285
    %v5287 = vrot.slane %v5286, 2
    %v5288 = vmax.f32 %v5286, %v5287
    %v5289 = vrot.slane %v5288, 1
    %v5290 = vmax.f32 %v5288, %v5289
    %v5291 = vsel %vm4226, %v3809, -inf
    %v5292 = vrot.slane %v5291, 4
    %v5293 = vmax.f32 %v5291, %v5292
    %v5294 = vrot.slane %v5293, 2
    %v5295 = vmax.f32 %v5293, %v5294
    %v5296 = vrot.slane %v5295, 1
    %v5297 = vmax.f32 %v5295, %v5296
    %v5298 = vsel %vm3351, %v3811, -inf
    %v5299 = vrot.slane %v5298, 4
    %v5300 = vmax.f32 %v5298, %v5299
    %v5301 = vrot.slane %v5300, 2
    %v5302 = vmax.f32 %v5300, %v5301
    %v5303 = vrot.slane %v5302, 1
    %v5304 = vmax.f32 %v5302, %v5303
    %v5305 = vsel %vm4226, %v3812, -inf
    %v5306 = vrot.slane %v5305, 4
    %v5307 = vmax.f32 %v5305, %v5306
    %v5308 = vrot.slane %v5307, 2
    %v5309 = vmax.f32 %v5307, %v5308
    %v5310 = vrot.slane %v5309, 1
    %v5311 = vmax.f32 %v5309, %v5310
    %v5312 = vsel %vm3351, %v3814, -inf
    %v5313 = vrot.slane %v5312, 4
    %v5314 = vmax.f32 %v5312, %v5313
    %v5315 = vrot.slane %v5314, 2
    %v5316 = vmax.f32 %v5314, %v5315
    %v5317 = vrot.slane %v5316, 1
    %v5318 = vmax.f32 %v5316, %v5317
    %v5319 = vsel %vm4226, %v3815, -inf
    %v5320 = vrot.slane %v5319, 4
    %v5321 = vmax.f32 %v5319, %v5320
    %v5322 = vrot.slane %v5321, 2
    %v5323 = vmax.f32 %v5321, %v5322
    %v5324 = vrot.slane %v5323, 1
    %v5325 = vmax.f32 %v5323, %v5324
    %v5326 = vsel %vm3351, %v3817, -inf
    %v5327 = vrot.slane %v5326, 4
    %v5328 = vmax.f32 %v5326, %v5327
    %v5329 = vrot.slane %v5328, 2
    %v5330 = vmax.f32 %v5328, %v5329
    %v5331 = vrot.slane %v5330, 1
    %v5332 = vmax.f32 %v5330, %v5331
    %v5333 = vsel %vm4226, %v3818, -inf
    %v5334 = vrot.slane %v5333, 4
    %v5335 = vmax.f32 %v5333, %v5334
    %v5336 = vrot.slane %v5335, 2
    %v5337 = vmax.f32 %v5335, %v5336
    %v5338 = vrot.slane %v5337, 1
    %v5339 = vmax.f32 %v5337, %v5338
    %v5340 = vsel %vm3351, %v3820, -inf
    %v5341 = vrot.slane %v5340, 4
    %v5342 = vmax.f32 %v5340, %v5341
    %v5343 = vrot.slane %v5342, 2
    %v5344 = vmax.f32 %v5342, %v5343
    %v5345 = vrot.slane %v5344, 1
    %v5346 = vmax.f32 %v5344, %v5345
    %v5347 = vsel %vm4226, %v3821, -inf
    %v5348 = vrot.slane %v5347, 4
    %v5349 = vmax.f32 %v5347, %v5348
    %v5350 = vrot.slane %v5349, 2
    %v5351 = vmax.f32 %v5349, %v5350
    %v5352 = vrot.slane %v5351, 1
    %v5353 = vmax.f32 %v5351, %v5352
    %v5354 = vsel %vm3351, %v3823, -inf
    %v5355 = vrot.slane %v5354, 4
    %v5356 = vmax.f32 %v5354, %v5355
    %v5357 = vrot.slane %v5356, 2
    %v5358 = vmax.f32 %v5356, %v5357
    %v5359 = vrot.slane %v5358, 1
    %v5360 = vmax.f32 %v5358, %v5359
    %v5361 = vsel %vm4226, %v3824, -inf
    %v5362 = vrot.slane %v5361, 4
    %v5363 = vmax.f32 %v5361, %v5362
    %v5364 = vrot.slane %v5363, 2
    %v5365 = vmax.f32 %v5363, %v5364
    %v5366 = vrot.slane %v5365, 1
    %v5367 = vmax.f32 %v5365, %v5366
    %v5368 = vsel %vm3351, %v3826, -inf
    %v5369 = vrot.slane %v5368, 4
    %v5370 = vmax.f32 %v5368, %v5369
    %v5371 = vrot.slane %v5370, 2
    %v5372 = vmax.f32 %v5370, %v5371
    %v5373 = vrot.slane %v5372, 1
    %v5374 = vmax.f32 %v5372, %v5373
    %v5375 = vsel %vm4226, %v3827, -inf
    %v5376 = vrot.slane %v5375, 4
    %v5377 = vmax.f32 %v5375, %v5376
    %v5378 = vrot.slane %v5377, 2
    %v5379 = vmax.f32 %v5377, %v5378
    %v5380 = vrot.slane %v5379, 1
    %v5381 = vmax.f32 %v5379, %v5380
    %v5382 = vsel %vm3351, %v3829, -inf
    %v5383 = vrot.slane %v5382, 4
    %v5384 = vmax.f32 %v5382, %v5383
    %v5385 = vrot.slane %v5384, 2
    %v5386 = vmax.f32 %v5384, %v5385
    %v5387 = vrot.slane %v5386, 1
    %v5388 = vmax.f32 %v5386, %v5387
    %v5389 = vsel %vm4226, %v3830, -inf
    %v5390 = vrot.slane %v5389, 4
    %v5391 = vmax.f32 %v5389, %v5390
    %v5392 = vrot.slane %v5391, 2
    %v5393 = vmax.f32 %v5391, %v5392
    %v5394 = vrot.slane %v5393, 1
    %v5395 = vmax.f32 %v5393, %v5394
    %v5396 = vsel %vm3351, %v3832, -inf
    %v5397 = vrot.slane %v5396, 4
    %v5398 = vmax.f32 %v5396, %v5397
    %v5399 = vrot.slane %v5398, 2
    %v5400 = vmax.f32 %v5398, %v5399
    %v5401 = vrot.slane %v5400, 1
    %v5402 = vmax.f32 %v5400, %v5401
    %v5403 = vsel %vm4226, %v3833, -inf
    %v5404 = vrot.slane %v5403, 4
    %v5405 = vmax.f32 %v5403, %v5404
    %v5406 = vrot.slane %v5405, 2
    %v5407 = vmax.f32 %v5405, %v5406
    %v5408 = vrot.slane %v5407, 1
    %v5409 = vmax.f32 %v5407, %v5408
    %v5410 = vsel %vm3351, %v3835, -inf
    %v5411 = vrot.slane %v5410, 4
    %v5412 = vmax.f32 %v5410, %v5411
    %v5413 = vrot.slane %v5412, 2
    %v5414 = vmax.f32 %v5412, %v5413
    %v5415 = vrot.slane %v5414, 1
    %v5416 = vmax.f32 %v5414, %v5415
    %v5417 = vsel %vm4226, %v3836, -inf
    %v5418 = vrot.slane %v5417, 4
    %v5419 = vmax.f32 %v5417, %v5418
    %v5420 = vrot.slane %v5419, 2
    %v5421 = vmax.f32 %v5419, %v5420
    %v5422 = vrot.slane %v5421, 1
    %v5423 = vmax.f32 %v5421, %v5422
    %v5424 = vsel %vm3351, %v3838, -inf
    %v5425 = vrot.slane %v5424, 4
    %v5426 = vmax.f32 %v5424, %v5425
    %v5427 = vrot.slane %v5426, 2
    %v5428 = vmax.f32 %v5426, %v5427
    %v5429 = vrot.slane %v5428, 1
    %v5430 = vmax.f32 %v5428, %v5429
    %v5431 = vsel %vm4226, %v3839, -inf
    %v5432 = vrot.slane %v5431, 4
    %v5433 = vmax.f32 %v5431, %v5432
    %v5434 = vrot.slane %v5433, 2
    %v5435 = vmax.f32 %v5433, %v5434
    %v5436 = vrot.slane %v5435, 1
    %v5437 = vmax.f32 %v5435, %v5436
    %v5438 = vsel %vm3351, %v3841, -inf
    %v5439 = vrot.slane %v5438, 4
    %v5440 = vmax.f32 %v5438, %v5439
    %v5441 = vrot.slane %v5440, 2
    %v5442 = vmax.f32 %v5440, %v5441
    %v5443 = vrot.slane %v5442, 1
    %v5444 = vmax.f32 %v5442, %v5443
    %v5445 = vsel %vm4226, %v3842, -inf
    %v5446 = vrot.slane %v5445, 4
    %v5447 = vmax.f32 %v5445, %v5446
    %v5448 = vrot.slane %v5447, 2
    %v5449 = vmax.f32 %v5447, %v5448
    %v5450 = vrot.slane %v5449, 1
    %v5451 = vmax.f32 %v5449, %v5450
    %v5452 = vsel %vm3351, %v3844, -inf
    %v5453 = vrot.slane %v5452, 4
    %v5454 = vmax.f32 %v5452, %v5453
    %v5455 = vrot.slane %v5454, 2
    %v5456 = vmax.f32 %v5454, %v5455
    %v5457 = vrot.slane %v5456, 1
    %v5458 = vmax.f32 %v5456, %v5457
    %v5459 = vsel %vm4226, %v3845, -inf
    %v5460 = vrot.slane %v5459, 4
    %v5461 = vmax.f32 %v5459, %v5460
    %v5462 = vrot.slane %v5461, 2
    %v5463 = vmax.f32 %v5461, %v5462
    %v5464 = vrot.slane %v5463, 1
    %v5465 = vmax.f32 %v5463, %v5464
    %v5466 = vsel %vm3351, %v3847, -inf
    %v5467 = vrot.slane %v5466, 4
    %v5468 = vmax.f32 %v5466, %v5467
    %v5469 = vrot.slane %v5468, 2
    %v5470 = vmax.f32 %v5468, %v5469
    %v5471 = vrot.slane %v5470, 1
    %v5472 = vmax.f32 %v5470, %v5471
    %v5473 = vsel %vm4226, %v3848, -inf
    %v5474 = vrot.slane %v5473, 4
    %v5475 = vmax.f32 %v5473, %v5474
    %v5476 = vrot.slane %v5475, 2
    %v5477 = vmax.f32 %v5475, %v5476
    %v5478 = vrot.slane %v5477, 1
    %v5479 = vmax.f32 %v5477, %v5478
    %v5480 = vsel %vm3351, %v3850, -inf
    %v5481 = vrot.slane %v5480, 4
    %v5482 = vmax.f32 %v5480, %v5481
    %v5483 = vrot.slane %v5482, 2
    %v5484 = vmax.f32 %v5482, %v5483
    %v5485 = vrot.slane %v5484, 1
    %v5486 = vmax.f32 %v5484, %v5485
    %v5487 = vsel %vm4226, %v3851, -inf
    %v5488 = vrot.slane %v5487, 4
    %v5489 = vmax.f32 %v5487, %v5488
    %v5490 = vrot.slane %v5489, 2
    %v5491 = vmax.f32 %v5489, %v5490
    %v5492 = vrot.slane %v5491, 1
    %v5493 = vmax.f32 %v5491, %v5492
    %v5494 = vsel %vm3351, %v3853, -inf
    %v5495 = vrot.slane %v5494, 4
    %v5496 = vmax.f32 %v5494, %v5495
    %v5497 = vrot.slane %v5496, 2
    %v5498 = vmax.f32 %v5496, %v5497
    %v5499 = vrot.slane %v5498, 1
    %v5500 = vmax.f32 %v5498, %v5499
    %v5501 = vsel %vm4226, %v3854, -inf
    %v5502 = vrot.slane %v5501, 4
    %v5503 = vmax.f32 %v5501, %v5502
    %v5504 = vrot.slane %v5503, 2
    %v5505 = vmax.f32 %v5503, %v5504
    %v5506 = vrot.slane %v5505, 1
    %v5507 = vmax.f32 %v5505, %v5506
    %v5508 = vsel %vm3351, %v3856, -inf
    %v5509 = vrot.slane %v5508, 4
    %v5510 = vmax.f32 %v5508, %v5509
    %v5511 = vrot.slane %v5510, 2
    %v5512 = vmax.f32 %v5510, %v5511
    %v5513 = vrot.slane %v5512, 1
    %v5514 = vmax.f32 %v5512, %v5513
    %v5515 = vsel %vm4226, %v3857, -inf
    %v5516 = vrot.slane %v5515, 4
    %v5517 = vmax.f32 %v5515, %v5516
    %v5518 = vrot.slane %v5517, 2
    %v5519 = vmax.f32 %v5517, %v5518
    %v5520 = vrot.slane %v5519, 1
    %v5521 = vmax.f32 %v5519, %v5520
    %v5522 = vsel %vm3351, %v3859, -inf
    %v5523 = vrot.slane %v5522, 4
    %v5524 = vmax.f32 %v5522, %v5523
    %v5525 = vrot.slane %v5524, 2
    %v5526 = vmax.f32 %v5524, %v5525
    %v5527 = vrot.slane %v5526, 1
    %v5528 = vmax.f32 %v5526, %v5527
    %v5529 = vsel %vm4226, %v3860, -inf
    %v5530 = vrot.slane %v5529, 4
    %v5531 = vmax.f32 %v5529, %v5530
    %v5532 = vrot.slane %v5531, 2
    %v5533 = vmax.f32 %v5531, %v5532
    %v5534 = vrot.slane %v5533, 1
    %v5535 = vmax.f32 %v5533, %v5534
    %v5536 = vsel %vm3351, %v3862, -inf
    %v5537 = vrot.slane %v5536, 4
    %v5538 = vmax.f32 %v5536, %v5537
    %v5539 = vrot.slane %v5538, 2
    %v5540 = vmax.f32 %v5538, %v5539
    %v5541 = vrot.slane %v5540, 1
    %v5542 = vmax.f32 %v5540, %v5541
    %v5543 = vsel %vm4226, %v3863, -inf
    %v5544 = vrot.slane %v5543, 4
    %v5545 = vmax.f32 %v5543, %v5544
    %v5546 = vrot.slane %v5545, 2
    %v5547 = vmax.f32 %v5545, %v5546
    %v5548 = vrot.slane %v5547, 1
    %v5549 = vmax.f32 %v5547, %v5548
    %v5550 = vsel %vm3351, %v3865, -inf
    %v5551 = vrot.slane %v5550, 4
    %v5552 = vmax.f32 %v5550, %v5551
    %v5553 = vrot.slane %v5552, 2
    %v5554 = vmax.f32 %v5552, %v5553
    %v5555 = vrot.slane %v5554, 1
    %v5556 = vmax.f32 %v5554, %v5555
    %v5557 = vsel %vm4226, %v3866, -inf
    %v5558 = vrot.slane %v5557, 4
    %v5559 = vmax.f32 %v5557, %v5558
    %v5560 = vrot.slane %v5559, 2
    %v5561 = vmax.f32 %v5559, %v5560
    %v5562 = vrot.slane %v5561, 1
    %v5563 = vmax.f32 %v5561, %v5562
    %v5564 = vsel %vm3351, %v3868, -inf
    %v5565 = vrot.slane %v5564, 4
    %v5566 = vmax.f32 %v5564, %v5565
    %v5567 = vrot.slane %v5566, 2
    %v5568 = vmax.f32 %v5566, %v5567
    %v5569 = vrot.slane %v5568, 1
    %v5570 = vmax.f32 %v5568, %v5569
    %v5571 = vsel %vm4226, %v3869, -inf
    %v5572 = vrot.slane %v5571, 4
    %v5573 = vmax.f32 %v5571, %v5572
    %v5574 = vrot.slane %v5573, 2
    %v5575 = vmax.f32 %v5573, %v5574
    %v5576 = vrot.slane %v5575, 1
    %v5577 = vmax.f32 %v5575, %v5576
    %v5578 = vsel %vm3351, %v3871, -inf
    %v5579 = vrot.slane %v5578, 4
    %v5580 = vmax.f32 %v5578, %v5579
    %v5581 = vrot.slane %v5580, 2
    %v5582 = vmax.f32 %v5580, %v5581
    %v5583 = vrot.slane %v5582, 1
    %v5584 = vmax.f32 %v5582, %v5583
    %v5585 = vsel %vm4226, %v3872, -inf
    %v5586 = vrot.slane %v5585, 4
    %v5587 = vmax.f32 %v5585, %v5586
    %v5588 = vrot.slane %v5587, 2
    %v5589 = vmax.f32 %v5587, %v5588
    %v5590 = vrot.slane %v5589, 1
    %v5591 = vmax.f32 %v5589, %v5590
    %v5592 = vsel %vm3351, %v3874, -inf
    %v5593 = vrot.slane %v5592, 4
    %v5594 = vmax.f32 %v5592, %v5593
    %v5595 = vrot.slane %v5594, 2
    %v5596 = vmax.f32 %v5594, %v5595
    %v5597 = vrot.slane %v5596, 1
    %v5598 = vmax.f32 %v5596, %v5597
    %v5599 = vsel %vm4226, %v3875, -inf
    %v5600 = vrot.slane %v5599, 4
    %v5601 = vmax.f32 %v5599, %v5600
    %v5602 = vrot.slane %v5601, 2
    %v5603 = vmax.f32 %v5601, %v5602
    %v5604 = vrot.slane %v5603, 1
    %v5605 = vmax.f32 %v5603, %v5604
    %v5606 = vsel %vm3351, %v3877, -inf
    %v5607 = vrot.slane %v5606, 4
    %v5608 = vmax.f32 %v5606, %v5607
    %v5609 = vrot.slane %v5608, 2
    %v5610 = vmax.f32 %v5608, %v5609
    %v5611 = vrot.slane %v5610, 1
    %v5612 = vmax.f32 %v5610, %v5611
    %v5613 = vsel %vm4226, %v3878, -inf
    %v5614 = vrot.slane %v5613, 4
    %v5615 = vmax.f32 %v5613, %v5614
    %v5616 = vrot.slane %v5615, 2
    %v5617 = vmax.f32 %v5615, %v5616
    %v5618 = vrot.slane %v5617, 1
    %v5619 = vmax.f32 %v5617, %v5618
    %v5620 = vsel %vm3351, %v3880, -inf
    %v5621 = vrot.slane %v5620, 4
    %v5622 = vmax.f32 %v5620, %v5621
    %v5623 = vrot.slane %v5622, 2
    %v5624 = vmax.f32 %v5622, %v5623
    %v5625 = vrot.slane %v5624, 1
    %v5626 = vmax.f32 %v5624, %v5625
    %v5627 = vsel %vm4226, %v3881, -inf
    %v5628 = vrot.slane %v5627, 4
    %v5629 = vmax.f32 %v5627, %v5628
    %v5630 = vrot.slane %v5629, 2
    %v5631 = vmax.f32 %v5629, %v5630
    %v5632 = vrot.slane %v5631, 1
    %v5633 = vmax.f32 %v5631, %v5632
    %v5634 = vsel %vm3351, %v3883, -inf
    %v5635 = vrot.slane %v5634, 4
    %v5636 = vmax.f32 %v5634, %v5635
    %v5637 = vrot.slane %v5636, 2
    %v5638 = vmax.f32 %v5636, %v5637
    %v5639 = vrot.slane %v5638, 1
    %v5640 = vmax.f32 %v5638, %v5639
    %v5641 = vsel %vm4226, %v3884, -inf
    %v5642 = vrot.slane %v5641, 4
    %v5643 = vmax.f32 %v5641, %v5642
    %v5644 = vrot.slane %v5643, 2
    %v5645 = vmax.f32 %v5643, %v5644
    %v5646 = vrot.slane %v5645, 1
    %v5647 = vmax.f32 %v5645, %v5646
    %v5648 = vsel %vm3351, %v3886, -inf
    %v5649 = vrot.slane %v5648, 4
    %v5650 = vmax.f32 %v5648, %v5649
    %v5651 = vrot.slane %v5650, 2
    %v5652 = vmax.f32 %v5650, %v5651
    %v5653 = vrot.slane %v5652, 1
    %v5654 = vmax.f32 %v5652, %v5653
    %v5655 = vsel %vm4226, %v3887, -inf
    %v5656 = vrot.slane %v5655, 4
    %v5657 = vmax.f32 %v5655, %v5656
    %v5658 = vrot.slane %v5657, 2
    %v5659 = vmax.f32 %v5657, %v5658
    %v5660 = vrot.slane %v5659, 1
    %v5661 = vmax.f32 %v5659, %v5660
    %v5662 = vsel %vm3351, %v3889, -inf
    %v5663 = vrot.slane %v5662, 4
    %v5664 = vmax.f32 %v5662, %v5663
    %v5665 = vrot.slane %v5664, 2
    %v5666 = vmax.f32 %v5664, %v5665
    %v5667 = vrot.slane %v5666, 1
    %v5668 = vmax.f32 %v5666, %v5667
    %v5669 = vsel %vm4226, %v3890, -inf
    %v5670 = vrot.slane %v5669, 4
    %v5671 = vmax.f32 %v5669, %v5670
    %v5672 = vrot.slane %v5671, 2
    %v5673 = vmax.f32 %v5671, %v5672
    %v5674 = vrot.slane %v5673, 1
    %v5675 = vmax.f32 %v5673, %v5674
    %v5676 = vsel %vm3351, %v3892, -inf
    %v5677 = vrot.slane %v5676, 4
    %v5678 = vmax.f32 %v5676, %v5677
    %v5679 = vrot.slane %v5678, 2
    %v5680 = vmax.f32 %v5678, %v5679
    %v5681 = vrot.slane %v5680, 1
    %v5682 = vmax.f32 %v5680, %v5681
    %v5683 = vsel %vm4226, %v3893, -inf
    %v5684 = vrot.slane %v5683, 4
    %v5685 = vmax.f32 %v5683, %v5684
    %v5686 = vrot.slane %v5685, 2
    %v5687 = vmax.f32 %v5685, %v5686
    %v5688 = vrot.slane %v5687, 1
    %v5689 = vmax.f32 %v5687, %v5688
    %v5690 = vsel %vm3351, %v3895, -inf
    %v5691 = vrot.slane %v5690, 4
    %v5692 = vmax.f32 %v5690, %v5691
    %v5693 = vrot.slane %v5692, 2
    %v5694 = vmax.f32 %v5692, %v5693
    %v5695 = vrot.slane %v5694, 1
    %v5696 = vmax.f32 %v5694, %v5695
    %v5697 = vsel %vm4226, %v3896, -inf
    %v5698 = vrot.slane %v5697, 4
    %v5699 = vmax.f32 %v5697, %v5698
    %v5700 = vrot.slane %v5699, 2
    %v5701 = vmax.f32 %v5699, %v5700
    %v5702 = vrot.slane %v5701, 1
    %v5703 = vmax.f32 %v5701, %v5702
    %v5704 = vsel %vm3351, %v3898, -inf
    %v5705 = vrot.slane %v5704, 4
    %v5706 = vmax.f32 %v5704, %v5705
    %v5707 = vrot.slane %v5706, 2
    %v5708 = vmax.f32 %v5706, %v5707
    %v5709 = vrot.slane %v5708, 1
    %v5710 = vmax.f32 %v5708, %v5709
    %v5711 = vsel %vm4226, %v3899, -inf
    %v5712 = vrot.slane %v5711, 4
    %v5713 = vmax.f32 %v5711, %v5712
    %v5714 = vrot.slane %v5713, 2
    %v5715 = vmax.f32 %v5713, %v5714
    %v5716 = vrot.slane %v5715, 1
    %v5717 = vmax.f32 %v5715, %v5716
    %v5718 = vsel %vm3351, %v3901, -inf
    %v5719 = vrot.slane %v5718, 4
    %v5720 = vmax.f32 %v5718, %v5719
    %v5721 = vrot.slane %v5720, 2
    %v5722 = vmax.f32 %v5720, %v5721
    %v5723 = vrot.slane %v5722, 1
    %v5724 = vmax.f32 %v5722, %v5723
    %v5725 = vsel %vm4226, %v3902, -inf
    %v5726 = vrot.slane %v5725, 4
    %v5727 = vmax.f32 %v5725, %v5726
    %v5728 = vrot.slane %v5727, 2
    %v5729 = vmax.f32 %v5727, %v5728
    %v5730 = vrot.slane %v5729, 1
    %v5731 = vmax.f32 %v5729, %v5730
    %v5732 = vsel %vm3351, %v3904, -inf
    %v5733 = vrot.slane %v5732, 4
    %v5734 = vmax.f32 %v5732, %v5733
    %v5735 = vrot.slane %v5734, 2
    %v5736 = vmax.f32 %v5734, %v5735
    %v5737 = vrot.slane %v5736, 1
    %v5738 = vmax.f32 %v5736, %v5737
    %v5739 = vsel %vm4226, %v3905, -inf
    %v5740 = vrot.slane %v5739, 4
    %v5741 = vmax.f32 %v5739, %v5740
    %v5742 = vrot.slane %v5741, 2
    %v5743 = vmax.f32 %v5741, %v5742
    %v5744 = vrot.slane %v5743, 1
    %v5745 = vmax.f32 %v5743, %v5744
    %v5746 = vsel %vm3351, %v3907, -inf
    %v5747 = vrot.slane %v5746, 4
    %v5748 = vmax.f32 %v5746, %v5747
    %v5749 = vrot.slane %v5748, 2
    %v5750 = vmax.f32 %v5748, %v5749
    %v5751 = vrot.slane %v5750, 1
    %v5752 = vmax.f32 %v5750, %v5751
    %v5753 = vsel %vm4226, %v3908, -inf
    %v5754 = vrot.slane %v5753, 4
    %v5755 = vmax.f32 %v5753, %v5754
    %v5756 = vrot.slane %v5755, 2
    %v5757 = vmax.f32 %v5755, %v5756
    %v5758 = vrot.slane %v5757, 1
    %v5759 = vmax.f32 %v5757, %v5758
    %v5760 = vsel %vm3351, %v3910, -inf
    %v5761 = vrot.slane %v5760, 4
    %v5762 = vmax.f32 %v5760, %v5761
    %v5763 = vrot.slane %v5762, 2
    %v5764 = vmax.f32 %v5762, %v5763
    %v5765 = vrot.slane %v5764, 1
    %v5766 = vmax.f32 %v5764, %v5765
    %v5767 = vsel %vm4226, %v3911, -inf
    %v5768 = vrot.slane %v5767, 4
    %v5769 = vmax.f32 %v5767, %v5768
    %v5770 = vrot.slane %v5769, 2
    %v5771 = vmax.f32 %v5769, %v5770
    %v5772 = vrot.slane %v5771, 1
    %v5773 = vmax.f32 %v5771, %v5772
    %v5774 = vsel %vm3351, %v3913, -inf
    %v5775 = vrot.slane %v5774, 4
    %v5776 = vmax.f32 %v5774, %v5775
    %v5777 = vrot.slane %v5776, 2
    %v5778 = vmax.f32 %v5776, %v5777
    %v5779 = vrot.slane %v5778, 1
    %v5780 = vmax.f32 %v5778, %v5779
    %v5781 = vsel %vm4226, %v3914, -inf
    %v5782 = vrot.slane %v5781, 4
    %v5783 = vmax.f32 %v5781, %v5782
    %v5784 = vrot.slane %v5783, 2
    %v5785 = vmax.f32 %v5783, %v5784
    %v5786 = vrot.slane %v5785, 1
    %v5787 = vmax.f32 %v5785, %v5786
    %v5788 = vsel %vm3351, %v3916, -inf
    %v5789 = vrot.slane %v5788, 4
    %v5790 = vmax.f32 %v5788, %v5789
    %v5791 = vrot.slane %v5790, 2
    %v5792 = vmax.f32 %v5790, %v5791
    %v5793 = vrot.slane %v5792, 1
    %v5794 = vmax.f32 %v5792, %v5793
    %v5795 = vsel %vm4226, %v3917, -inf
    %v5796 = vrot.slane %v5795, 4
    %v5797 = vmax.f32 %v5795, %v5796
    %v5798 = vrot.slane %v5797, 2
    %v5799 = vmax.f32 %v5797, %v5798
    %v5800 = vrot.slane %v5799, 1
    %v5801 = vmax.f32 %v5799, %v5800
    %v5802 = vsel %vm3351, %v3919, -inf
    %v5803 = vrot.slane %v5802, 4
    %v5804 = vmax.f32 %v5802, %v5803
    %v5805 = vrot.slane %v5804, 2
    %v5806 = vmax.f32 %v5804, %v5805
    %v5807 = vrot.slane %v5806, 1
    %v5808 = vmax.f32 %v5806, %v5807
    %v5809 = vsel %vm4226, %v3920, -inf
    %v5810 = vrot.slane %v5809, 4
    %v5811 = vmax.f32 %v5809, %v5810
    %v5812 = vrot.slane %v5811, 2
    %v5813 = vmax.f32 %v5811, %v5812
    %v5814 = vrot.slane %v5813, 1
    %v5815 = vmax.f32 %v5813, %v5814
    %v5816 = vsel %vm3351, %v3922, -inf
    %v5817 = vrot.slane %v5816, 4
    %v5818 = vmax.f32 %v5816, %v5817
    %v5819 = vrot.slane %v5818, 2
    %v5820 = vmax.f32 %v5818, %v5819
    %v5821 = vrot.slane %v5820, 1
    %v5822 = vmax.f32 %v5820, %v5821
    %v5823 = vsel %vm4226, %v3923, -inf
    %v5824 = vrot.slane %v5823, 4
    %v5825 = vmax.f32 %v5823, %v5824
    %v5826 = vrot.slane %v5825, 2
    %v5827 = vmax.f32 %v5825, %v5826
    %v5828 = vrot.slane %v5827, 1
    %v5829 = vmax.f32 %v5827, %v5828
    %v5830 = vsel %vm3351, %v3925, -inf
    %v5831 = vrot.slane %v5830, 4
    %v5832 = vmax.f32 %v5830, %v5831
    %v5833 = vrot.slane %v5832, 2
    %v5834 = vmax.f32 %v5832, %v5833
    %v5835 = vrot.slane %v5834, 1
    %v5836 = vmax.f32 %v5834, %v5835
    %v5837 = vsel %vm4226, %v3926, -inf
    %v5838 = vrot.slane %v5837, 4
    %v5839 = vmax.f32 %v5837, %v5838
    %v5840 = vrot.slane %v5839, 2
    %v5841 = vmax.f32 %v5839, %v5840
    %v5842 = vrot.slane %v5841, 1
    %v5843 = vmax.f32 %v5841, %v5842
    %v5844 = vsel %vm3351, %v3928, -inf
    %v5845 = vrot.slane %v5844, 4
    %v5846 = vmax.f32 %v5844, %v5845
    %v5847 = vrot.slane %v5846, 2
    %v5848 = vmax.f32 %v5846, %v5847
    %v5849 = vrot.slane %v5848, 1
    %v5850 = vmax.f32 %v5848, %v5849
    %v5851 = vsel %vm4226, %v3929, -inf
    %v5852 = vrot.slane %v5851, 4
    %v5853 = vmax.f32 %v5851, %v5852
    %v5854 = vrot.slane %v5853, 2
    %v5855 = vmax.f32 %v5853, %v5854
    %v5856 = vrot.slane %v5855, 1
    %v5857 = vmax.f32 %v5855, %v5856
    %v5858 = vsel %vm3351, %v3931, -inf
    %v5859 = vrot.slane %v5858, 4
    %v5860 = vmax.f32 %v5858, %v5859
    %v5861 = vrot.slane %v5860, 2
    %v5862 = vmax.f32 %v5860, %v5861
    %v5863 = vrot.slane %v5862, 1
    %v5864 = vmax.f32 %v5862, %v5863
    %v5865 = vsel %vm4226, %v3932, -inf
    %v5866 = vrot.slane %v5865, 4
    %v5867 = vmax.f32 %v5865, %v5866
    %v5868 = vrot.slane %v5867, 2
    %v5869 = vmax.f32 %v5867, %v5868
    %v5870 = vrot.slane %v5869, 1
    %v5871 = vmax.f32 %v5869, %v5870
    %v5872 = vsel %vm3351, %v3934, -inf
    %v5873 = vrot.slane %v5872, 4
    %v5874 = vmax.f32 %v5872, %v5873
    %v5875 = vrot.slane %v5874, 2
    %v5876 = vmax.f32 %v5874, %v5875
    %v5877 = vrot.slane %v5876, 1
    %v5878 = vmax.f32 %v5876, %v5877
    %v5879 = vsel %vm4226, %v3935, -inf
    %v5880 = vrot.slane %v5879, 4
    %v5881 = vmax.f32 %v5879, %v5880
    %v5882 = vrot.slane %v5881, 2
    %v5883 = vmax.f32 %v5881, %v5882
    %v5884 = vrot.slane %v5883, 1
    %v5885 = vmax.f32 %v5883, %v5884
    %v5886 = vsel %vm3351, %v3937, -inf
    %v5887 = vrot.slane %v5886, 4
    %v5888 = vmax.f32 %v5886, %v5887
    %v5889 = vrot.slane %v5888, 2
    %v5890 = vmax.f32 %v5888, %v5889
    %v5891 = vrot.slane %v5890, 1
    %v5892 = vmax.f32 %v5890, %v5891
    %v5893 = vsel %vm4226, %v3938, -inf
    %v5894 = vrot.slane %v5893, 4
    %v5895 = vmax.f32 %v5893, %v5894
    %v5896 = vrot.slane %v5895, 2
    %v5897 = vmax.f32 %v5895, %v5896
    %v5898 = vrot.slane %v5897, 1
    %v5899 = vmax.f32 %v5897, %v5898
    %v5900 = vsel %vm3351, %v3940, -inf
    %v5901 = vrot.slane %v5900, 4
    %v5902 = vmax.f32 %v5900, %v5901
    %v5903 = vrot.slane %v5902, 2
    %v5904 = vmax.f32 %v5902, %v5903
    %v5905 = vrot.slane %v5904, 1
    %v5906 = vmax.f32 %v5904, %v5905
    %v5907 = vsel %vm4226, %v3941, -inf
    %v5908 = vrot.slane %v5907, 4
    %v5909 = vmax.f32 %v5907, %v5908
    %v5910 = vrot.slane %v5909, 2
    %v5911 = vmax.f32 %v5909, %v5910
    %v5912 = vrot.slane %v5911, 1
    %v5913 = vmax.f32 %v5911, %v5912
    %v5914 = vsel %vm3351, %v3943, -inf
    %v5915 = vrot.slane %v5914, 4
    %v5916 = vmax.f32 %v5914, %v5915
    %v5917 = vrot.slane %v5916, 2
    %v5918 = vmax.f32 %v5916, %v5917
    %v5919 = vrot.slane %v5918, 1
    %v5920 = vmax.f32 %v5918, %v5919
    %v5921 = vsel %vm4226, %v3944, -inf
    %v5922 = vrot.slane %v5921, 4
    %v5923 = vmax.f32 %v5921, %v5922
    %v5924 = vrot.slane %v5923, 2
    %v5925 = vmax.f32 %v5923, %v5924
    %v5926 = vrot.slane %v5925, 1
    %v5927 = vmax.f32 %v5925, %v5926
    %v5928 = vsel %vm3351, %v3946, -inf
    %v5929 = vrot.slane %v5928, 4
    %v5930 = vmax.f32 %v5928, %v5929
    %v5931 = vrot.slane %v5930, 2
    %v5932 = vmax.f32 %v5930, %v5931
    %v5933 = vrot.slane %v5932, 1
    %v5934 = vmax.f32 %v5932, %v5933
    %v5935 = vsel %vm4226, %v3947, -inf
    %v5936 = vrot.slane %v5935, 4
    %v5937 = vmax.f32 %v5935, %v5936
    %v5938 = vrot.slane %v5937, 2
    %v5939 = vmax.f32 %v5937, %v5938
    %v5940 = vrot.slane %v5939, 1
    %v5941 = vmax.f32 %v5939, %v5940
    %v5942 = vsel %vm3351, %v3949, -inf
    %v5943 = vrot.slane %v5942, 4
    %v5944 = vmax.f32 %v5942, %v5943
    %v5945 = vrot.slane %v5944, 2
    %v5946 = vmax.f32 %v5944, %v5945
    %v5947 = vrot.slane %v5946, 1
    %v5948 = vmax.f32 %v5946, %v5947
    %v5949 = vsel %vm4226, %v3950, -inf
    %v5950 = vrot.slane %v5949, 4
    %v5951 = vmax.f32 %v5949, %v5950
    %v5952 = vrot.slane %v5951, 2
    %v5953 = vmax.f32 %v5951, %v5952
    %v5954 = vrot.slane %v5953, 1
    %v5955 = vmax.f32 %v5953, %v5954
    %v5956 = vsel %vm3351, %v3952, -inf
    %v5957 = vrot.slane %v5956, 4
    %v5958 = vmax.f32 %v5956, %v5957
    %v5959 = vrot.slane %v5958, 2
    %v5960 = vmax.f32 %v5958, %v5959
    %v5961 = vrot.slane %v5960, 1
    %v5962 = vmax.f32 %v5960, %v5961
    %v5963 = vsel %vm4226, %v3953, -inf
    %v5964 = vrot.slane %v5963, 4
    %v5965 = vmax.f32 %v5963, %v5964
    %v5966 = vrot.slane %v5965, 2
    %v5967 = vmax.f32 %v5965, %v5966
    %v5968 = vrot.slane %v5967, 1
    %v5969 = vmax.f32 %v5967, %v5968
    %v5970 = vsel %vm3351, %v3955, -inf
    %v5971 = vrot.slane %v5970, 4
    %v5972 = vmax.f32 %v5970, %v5971
    %v5973 = vrot.slane %v5972, 2
    %v5974 = vmax.f32 %v5972, %v5973
    %v5975 = vrot.slane %v5974, 1
    %v5976 = vmax.f32 %v5974, %v5975
    %v5977 = vsel %vm4226, %v3956, -inf
    %v5978 = vrot.slane %v5977, 4
    %v5979 = vmax.f32 %v5977, %v5978
    %v5980 = vrot.slane %v5979, 2
    %v5981 = vmax.f32 %v5979, %v5980
    %v5982 = vrot.slane %v5981, 1
    %v5983 = vmax.f32 %v5981, %v5982
    %v5984 = vsel %vm3351, %v3958, -inf
    %v5985 = vrot.slane %v5984, 4
    %v5986 = vmax.f32 %v5984, %v5985
    %v5987 = vrot.slane %v5986, 2
    %v5988 = vmax.f32 %v5986, %v5987
    %v5989 = vrot.slane %v5988, 1
    %v5990 = vmax.f32 %v5988, %v5989
    %v5991 = vsel %vm4226, %v3959, -inf
    %v5992 = vrot.slane %v5991, 4
    %v5993 = vmax.f32 %v5991, %v5992
    %v5994 = vrot.slane %v5993, 2
    %v5995 = vmax.f32 %v5993, %v5994
    %v5996 = vrot.slane %v5995, 1
    %v5997 = vmax.f32 %v5995, %v5996
    %v5998 = vsel %vm3351, %v3961, -inf
    %v5999 = vrot.slane %v5998, 4
    %v6000 = vmax.f32 %v5998, %v5999
    %v6001 = vrot.slane %v6000, 2
    %v6002 = vmax.f32 %v6000, %v6001
    %v6003 = vrot.slane %v6002, 1
    %v6004 = vmax.f32 %v6002, %v6003
    %v6005 = vsel %vm4226, %v3962, -inf
    %v6006 = vrot.slane %v6005, 4
    %v6007 = vmax.f32 %v6005, %v6006
    %v6008 = vrot.slane %v6007, 2
    %v6009 = vmax.f32 %v6007, %v6008
    %v6010 = vrot.slane %v6009, 1
    %v6011 = vmax.f32 %v6009, %v6010
    %vm6266 = vcmask 1042434
    %v6267 = vsel %vm6266, %v4240, %v4225
    %vm6268 = vcmask 1043459
    %v6269 = vsel %vm6268, %v4254, %v6267
    %vm6270 = vcmask 1044484
    %v6271 = vsel %vm6270, %v4268, %v6269
    %vm6272 = vcmask 1045509
    %v6273 = vsel %vm6272, %v4282, %v6271
    %vm6274 = vcmask 1046534
    %v6275 = vsel %vm6274, %v4296, %v6273
    %vm6276 = vcmask 1047559
    %v6277 = vsel %vm6276, %v4310, %v6275
    %v6278 = vsel %vm6266, %v4247, %v4233
    %v6279 = vsel %vm6268, %v4261, %v6278
    %v6280 = vsel %vm6270, %v4275, %v6279
    %v6281 = vsel %vm6272, %v4289, %v6280
    %v6282 = vsel %vm6274, %v4303, %v6281
    %v6283 = vsel %vm6276, %v4317, %v6282
    %vm6284 = vcmask 1041409
    %v6285 = vsel %vm6284, %v4338, %v4324
    %v6286 = vsel %vm6266, %v4352, %v6285
    %v6287 = vsel %vm6268, %v4366, %v6286
    %v6288 = vsel %vm6270, %v4380, %v6287
    %v6289 = vsel %vm6272, %v4394, %v6288
    %v6290 = vsel %vm6274, %v4408, %v6289
    %v6291 = vsel %vm6276, %v4422, %v6290
    %v6292 = vsel %vm6284, %v4345, %v4331
    %v6293 = vsel %vm6266, %v4359, %v6292
    %v6294 = vsel %vm6268, %v4373, %v6293
    %v6295 = vsel %vm6270, %v4387, %v6294
    %v6296 = vsel %vm6272, %v4401, %v6295
    %v6297 = vsel %vm6274, %v4415, %v6296
    %v6298 = vsel %vm6276, %v4429, %v6297
    %v6299 = vsel %vm6284, %v4450, %v4436
    %v6300 = vsel %vm6266, %v4464, %v6299
    %v6301 = vsel %vm6268, %v4478, %v6300
    %v6302 = vsel %vm6270, %v4492, %v6301
    %v6303 = vsel %vm6272, %v4506, %v6302
    %v6304 = vsel %vm6274, %v4520, %v6303
    %v6305 = vsel %vm6276, %v4534, %v6304
    %v6306 = vsel %vm6284, %v4457, %v4443
    %v6307 = vsel %vm6266, %v4471, %v6306
    %v6308 = vsel %vm6268, %v4485, %v6307
    %v6309 = vsel %vm6270, %v4499, %v6308
    %v6310 = vsel %vm6272, %v4513, %v6309
    %v6311 = vsel %vm6274, %v4527, %v6310
    %v6312 = vsel %vm6276, %v4541, %v6311
    %v6313 = vsel %vm6284, %v4562, %v4548
    %v6314 = vsel %vm6266, %v4576, %v6313
    %v6315 = vsel %vm6268, %v4590, %v6314
    %v6316 = vsel %vm6270, %v4604, %v6315
    %v6317 = vsel %vm6272, %v4618, %v6316
    %v6318 = vsel %vm6274, %v4632, %v6317
    %v6319 = vsel %vm6276, %v4646, %v6318
    %v6320 = vsel %vm6284, %v4569, %v4555
    %v6321 = vsel %vm6266, %v4583, %v6320
    %v6322 = vsel %vm6268, %v4597, %v6321
    %v6323 = vsel %vm6270, %v4611, %v6322
    %v6324 = vsel %vm6272, %v4625, %v6323
    %v6325 = vsel %vm6274, %v4639, %v6324
    %v6326 = vsel %vm6276, %v4653, %v6325
    %v6327 = vsel %vm6284, %v4674, %v4660
    %v6328 = vsel %vm6266, %v4688, %v6327
    %v6329 = vsel %vm6268, %v4702, %v6328
    %v6330 = vsel %vm6270, %v4716, %v6329
    %v6331 = vsel %vm6272, %v4730, %v6330
    %v6332 = vsel %vm6274, %v4744, %v6331
    %v6333 = vsel %vm6276, %v4758, %v6332
    %v6334 = vsel %vm6284, %v4681, %v4667
    %v6335 = vsel %vm6266, %v4695, %v6334
    %v6336 = vsel %vm6268, %v4709, %v6335
    %v6337 = vsel %vm6270, %v4723, %v6336
    %v6338 = vsel %vm6272, %v4737, %v6337
    %v6339 = vsel %vm6274, %v4751, %v6338
    %v6340 = vsel %vm6276, %v4765, %v6339
    %v6341 = vsel %vm6284, %v4786, %v4772
    %v6342 = vsel %vm6266, %v4800, %v6341
    %v6343 = vsel %vm6268, %v4814, %v6342
    %v6344 = vsel %vm6270, %v4828, %v6343
    %v6345 = vsel %vm6272, %v4842, %v6344
    %v6346 = vsel %vm6274, %v4856, %v6345
    %v6347 = vsel %vm6276, %v4870, %v6346
    %v6348 = vsel %vm6284, %v4793, %v4779
    %v6349 = vsel %vm6266, %v4807, %v6348
    %v6350 = vsel %vm6268, %v4821, %v6349
    %v6351 = vsel %vm6270, %v4835, %v6350
    %v6352 = vsel %vm6272, %v4849, %v6351
    %v6353 = vsel %vm6274, %v4863, %v6352
    %v6354 = vsel %vm6276, %v4877, %v6353
    %v6355 = vsel %vm6284, %v4898, %v4884
    %v6356 = vsel %vm6266, %v4912, %v6355
    %v6357 = vsel %vm6268, %v4926, %v6356
    %v6358 = vsel %vm6270, %v4940, %v6357
    %v6359 = vsel %vm6272, %v4954, %v6358
    %v6360 = vsel %vm6274, %v4968, %v6359
    %v6361 = vsel %vm6276, %v4982, %v6360
    %v6362 = vsel %vm6284, %v4905, %v4891
    %v6363 = vsel %vm6266, %v4919, %v6362
    %v6364 = vsel %vm6268, %v4933, %v6363
    %v6365 = vsel %vm6270, %v4947, %v6364
    %v6366 = vsel %vm6272, %v4961, %v6365
    %v6367 = vsel %vm6274, %v4975, %v6366
    %v6368 = vsel %vm6276, %v4989, %v6367
    %v6369 = vsel %vm6284, %v5010, %v4996
    %v6370 = vsel %vm6266, %v5024, %v6369
    %v6371 = vsel %vm6268, %v5038, %v6370
    %v6372 = vsel %vm6270, %v5052, %v6371
    %v6373 = vsel %vm6272, %v5066, %v6372
    %v6374 = vsel %vm6274, %v5080, %v6373
    %v6375 = vsel %vm6276, %v5094, %v6374
    %v6376 = vsel %vm6284, %v5017, %v5003
    %v6377 = vsel %vm6266, %v5031, %v6376
    %v6378 = vsel %vm6268, %v5045, %v6377
    %v6379 = vsel %vm6270, %v5059, %v6378
    %v6380 = vsel %vm6272, %v5073, %v6379
    %v6381 = vsel %vm6274, %v5087, %v6380
    %v6382 = vsel %vm6276, %v5101, %v6381
    %v6383 = vsel %vm6284, %v5122, %v5108
    %v6384 = vsel %vm6266, %v5136, %v6383
    %v6385 = vsel %vm6268, %v5150, %v6384
    %v6386 = vsel %vm6270, %v5164, %v6385
    %v6387 = vsel %vm6272, %v5178, %v6386
    %v6388 = vsel %vm6274, %v5192, %v6387
    %v6389 = vsel %vm6276, %v5206, %v6388
    %v6390 = vsel %vm6284, %v5129, %v5115
    %v6391 = vsel %vm6266, %v5143, %v6390
    %v6392 = vsel %vm6268, %v5157, %v6391
    %v6393 = vsel %vm6270, %v5171, %v6392
    %v6394 = vsel %vm6272, %v5185, %v6393
    %v6395 = vsel %vm6274, %v5199, %v6394
    %v6396 = vsel %vm6276, %v5213, %v6395
    %v6397 = vsel %vm6284, %v5234, %v5220
    %v6398 = vsel %vm6266, %v5248, %v6397
    %v6399 = vsel %vm6268, %v5262, %v6398
    %v6400 = vsel %vm6270, %v5276, %v6399
    %v6401 = vsel %vm6272, %v5290, %v6400
    %v6402 = vsel %vm6274, %v5304, %v6401
    %v6403 = vsel %vm6276, %v5318, %v6402
    %v6404 = vsel %vm6284, %v5241, %v5227
    %v6405 = vsel %vm6266, %v5255, %v6404
    %v6406 = vsel %vm6268, %v5269, %v6405
    %v6407 = vsel %vm6270, %v5283, %v6406
    %v6408 = vsel %vm6272, %v5297, %v6407
    %v6409 = vsel %vm6274, %v5311, %v6408
    %v6410 = vsel %vm6276, %v5325, %v6409
    %v6411 = vsel %vm6284, %v5346, %v5332
    %v6412 = vsel %vm6266, %v5360, %v6411
    %v6413 = vsel %vm6268, %v5374, %v6412
    %v6414 = vsel %vm6270, %v5388, %v6413
    %v6415 = vsel %vm6272, %v5402, %v6414
    %v6416 = vsel %vm6274, %v5416, %v6415
    %v6417 = vsel %vm6276, %v5430, %v6416
    %v6418 = vsel %vm6284, %v5353, %v5339
    %v6419 = vsel %vm6266, %v5367, %v6418
    %v6420 = vsel %vm6268, %v5381, %v6419
    %v6421 = vsel %vm6270, %v5395, %v6420
    %v6422 = vsel %vm6272, %v5409, %v6421
    %v6423 = vsel %vm6274, %v5423, %v6422
    %v6424 = vsel %vm6276, %v5437, %v6423
    %v6425 = vsel %vm6284, %v5458, %v5444
    %v6426 = vsel %vm6266, %v5472, %v6425
    %v6427 = vsel %vm6268, %v5486, %v6426
    %v6428 = vsel %vm6270, %v5500, %v6427
    %v6429 = vsel %vm6272, %v5514, %v6428
    %v6430 = vsel %vm6274, %v5528, %v6429
    %v6431 = vsel %vm6276, %v5542, %v6430
    %v6432 = vsel %vm6284, %v5465, %v5451
    %v6433 = vsel %vm6266, %v5479, %v6432
    %v6434 = vsel %vm6268, %v5493, %v6433
    %v6435 = vsel %vm6270, %v5507, %v6434
    %v6436 = vsel %vm6272, %v5521, %v6435
    %v6437 = vsel %vm6274, %v5535, %v6436
    %v6438 = vsel %vm6276, %v5549, %v6437
    %v6439 = vsel %vm6284, %v5570, %v5556
    %v6440 = vsel %vm6266, %v5584, %v6439
    %v6441 = vsel %vm6268, %v5598, %v6440
    %v6442 = vsel %vm6270, %v5612, %v6441
    %v6443 = vsel %vm6272, %v5626, %v6442
    %v6444 = vsel %vm6274, %v5640, %v6443
    %v6445 = vsel %vm6276, %v5654, %v6444
    %v6446 = vsel %vm6284, %v5577, %v5563
    %v6447 = vsel %vm6266, %v5591, %v6446
    %v6448 = vsel %vm6268, %v5605, %v6447
    %v6449 = vsel %vm6270, %v5619, %v6448
    %v6450 = vsel %vm6272, %v5633, %v6449
    %v6451 = vsel %vm6274, %v5647, %v6450
    %v6452 = vsel %vm6276, %v5661, %v6451
    %v6453 = vsel %vm6284, %v5682, %v5668
    %v6454 = vsel %vm6266, %v5696, %v6453
    %v6455 = vsel %vm6268, %v5710, %v6454
    %v6456 = vsel %vm6270, %v5724, %v6455
    %v6457 = vsel %vm6272, %v5738, %v6456
    %v6458 = vsel %vm6274, %v5752, %v6457
    %v6459 = vsel %vm6276, %v5766, %v6458
    %v6460 = vsel %vm6284, %v5689, %v5675
    %v6461 = vsel %vm6266, %v5703, %v6460
    %v6462 = vsel %vm6268, %v5717, %v6461
    %v6463 = vsel %vm6270, %v5731, %v6462
    %v6464 = vsel %vm6272, %v5745, %v6463
    %v6465 = vsel %vm6274, %v5759, %v6464
    %v6466 = vsel %vm6276, %v5773, %v6465
    %v6467 = vsel %vm6284, %v5794, %v5780
    %v6468 = vsel %vm6266, %v5808, %v6467
    %v6469 = vsel %vm6268, %v5822, %v6468
    %v6470 = vsel %vm6270, %v5836, %v6469
    %v6471 = vsel %vm6272, %v5850, %v6470
    %v6472 = vsel %vm6274, %v5864, %v6471
    %v6473 = vsel %vm6276, %v5878, %v6472
    %v6474 = vsel %vm6284, %v5801, %v5787
    %v6475 = vsel %vm6266, %v5815, %v6474
    %v6476 = vsel %vm6268, %v5829, %v6475
    %v6477 = vsel %vm6270, %v5843, %v6476
    %v6478 = vsel %vm6272, %v5857, %v6477
    %v6479 = vsel %vm6274, %v5871, %v6478
    %v6480 = vsel %vm6276, %v5885, %v6479
    %v6481 = vsel %vm6284, %v5906, %v5892
    %v6482 = vsel %vm6266, %v5920, %v6481
    %v6483 = vsel %vm6268, %v5934, %v6482
    %v6484 = vsel %vm6270, %v5948, %v6483
    %v6485 = vsel %vm6272, %v5962, %v6484
    %v6486 = vsel %vm6274, %v5976, %v6485
    %v6487 = vsel %vm6276, %v5990, %v6486
    %v6488 = vsel %vm6284, %v5913, %v5899
    %v6489 = vsel %vm6266, %v5927, %v6488
    %v6490 = vsel %vm6268, %v5941, %v6489
    %v6491 = vsel %vm6270, %v5955, %v6490
    %v6492 = vsel %vm6272, %v5969, %v6491
    %v6493 = vsel %vm6274, %v5983, %v6492
    %v6494 = vsel %vm6276, %v5997, %v6493
    %vm6527 = vcmask 1040384
    %v6528 = vsel %vm6527, 0.0, %v6277
    %v6529 = vsel %vm6527, 0.0, %v6283
    %v6532 = vsel %vm6284, %v4254, %v4240
    %v6533 = vsel %vm6266, %v4268, %v6532
    %v6534 = vsel %vm6268, %v4282, %v6533
    %v6535 = vsel %vm6270, %v4296, %v6534
    %v6536 = vsel %vm6272, %v4310, %v6535
    %v6537 = vsel %vm6274, %v4324, %v6536
    %v6538 = vsel %vm6276, %v4338, %v6537
    %v6539 = vsel %vm6284, %v4261, %v4247
    %v6540 = vsel %vm6266, %v4275, %v6539
    %v6541 = vsel %vm6268, %v4289, %v6540
    %v6542 = vsel %vm6270, %v4303, %v6541
    %v6543 = vsel %vm6272, %v4317, %v6542
    %v6544 = vsel %vm6274, %v4331, %v6543
    %v6545 = vsel %vm6276, %v4345, %v6544
    %v6546 = vsel %vm6284, %v4366, %v4352
    %v6547 = vsel %vm6266, %v4380, %v6546
    %v6548 = vsel %vm6268, %v4394, %v6547
    %v6549 = vsel %vm6270, %v4408, %v6548
    %v6550 = vsel %vm6272, %v4422, %v6549
    %v6551 = vsel %vm6274, %v4436, %v6550
    %v6552 = vsel %vm6276, %v4450, %v6551
    %v6553 = vsel %vm6284, %v4373, %v4359
    %v6554 = vsel %vm6266, %v4387, %v6553
    %v6555 = vsel %vm6268, %v4401, %v6554
    %v6556 = vsel %vm6270, %v4415, %v6555
    %v6557 = vsel %vm6272, %v4429, %v6556
    %v6558 = vsel %vm6274, %v4443, %v6557
    %v6559 = vsel %vm6276, %v4457, %v6558
    %v6560 = vsel %vm6284, %v4478, %v4464
    %v6561 = vsel %vm6266, %v4492, %v6560
    %v6562 = vsel %vm6268, %v4506, %v6561
    %v6563 = vsel %vm6270, %v4520, %v6562
    %v6564 = vsel %vm6272, %v4534, %v6563
    %v6565 = vsel %vm6274, %v4548, %v6564
    %v6566 = vsel %vm6276, %v4562, %v6565
    %v6567 = vsel %vm6284, %v4485, %v4471
    %v6568 = vsel %vm6266, %v4499, %v6567
    %v6569 = vsel %vm6268, %v4513, %v6568
    %v6570 = vsel %vm6270, %v4527, %v6569
    %v6571 = vsel %vm6272, %v4541, %v6570
    %v6572 = vsel %vm6274, %v4555, %v6571
    %v6573 = vsel %vm6276, %v4569, %v6572
    %v6574 = vsel %vm6284, %v4590, %v4576
    %v6575 = vsel %vm6266, %v4604, %v6574
    %v6576 = vsel %vm6268, %v4618, %v6575
    %v6577 = vsel %vm6270, %v4632, %v6576
    %v6578 = vsel %vm6272, %v4646, %v6577
    %v6579 = vsel %vm6274, %v4660, %v6578
    %v6580 = vsel %vm6276, %v4674, %v6579
    %v6581 = vsel %vm6284, %v4597, %v4583
    %v6582 = vsel %vm6266, %v4611, %v6581
    %v6583 = vsel %vm6268, %v4625, %v6582
    %v6584 = vsel %vm6270, %v4639, %v6583
    %v6585 = vsel %vm6272, %v4653, %v6584
    %v6586 = vsel %vm6274, %v4667, %v6585
    %v6587 = vsel %vm6276, %v4681, %v6586
    %v6588 = vsel %vm6284, %v4702, %v4688
    %v6589 = vsel %vm6266, %v4716, %v6588
    %v6590 = vsel %vm6268, %v4730, %v6589
    %v6591 = vsel %vm6270, %v4744, %v6590
    %v6592 = vsel %vm6272, %v4758, %v6591
    %v6593 = vsel %vm6274, %v4772, %v6592
    %v6594 = vsel %vm6276, %v4786, %v6593
    %v6595 = vsel %vm6284, %v4709, %v4695
    %v6596 = vsel %vm6266, %v4723, %v6595
    %v6597 = vsel %vm6268, %v4737, %v6596
    %v6598 = vsel %vm6270, %v4751, %v6597
    %v6599 = vsel %vm6272, %v4765, %v6598
    %v6600 = vsel %vm6274, %v4779, %v6599
    %v6601 = vsel %vm6276, %v4793, %v6600
    %v6602 = vsel %vm6284, %v4814, %v4800
    %v6603 = vsel %vm6266, %v4828, %v6602
    %v6604 = vsel %vm6268, %v4842, %v6603
    %v6605 = vsel %vm6270, %v4856, %v6604
    %v6606 = vsel %vm6272, %v4870, %v6605
    %v6607 = vsel %vm6274, %v4884, %v6606
    %v6608 = vsel %vm6276, %v4898, %v6607
    %v6609 = vsel %vm6284, %v4821, %v4807
    %v6610 = vsel %vm6266, %v4835, %v6609
    %v6611 = vsel %vm6268, %v4849, %v6610
    %v6612 = vsel %vm6270, %v4863, %v6611
    %v6613 = vsel %vm6272, %v4877, %v6612
    %v6614 = vsel %vm6274, %v4891, %v6613
    %v6615 = vsel %vm6276, %v4905, %v6614
    %v6616 = vsel %vm6284, %v4926, %v4912
    %v6617 = vsel %vm6266, %v4940, %v6616
    %v6618 = vsel %vm6268, %v4954, %v6617
    %v6619 = vsel %vm6270, %v4968, %v6618
    %v6620 = vsel %vm6272, %v4982, %v6619
    %v6621 = vsel %vm6274, %v4996, %v6620
    %v6622 = vsel %vm6276, %v5010, %v6621
    %v6623 = vsel %vm6284, %v4933, %v4919
    %v6624 = vsel %vm6266, %v4947, %v6623
    %v6625 = vsel %vm6268, %v4961, %v6624
    %v6626 = vsel %vm6270, %v4975, %v6625
    %v6627 = vsel %vm6272, %v4989, %v6626
    %v6628 = vsel %vm6274, %v5003, %v6627
    %v6629 = vsel %vm6276, %v5017, %v6628
    %v6630 = vsel %vm6284, %v5038, %v5024
    %v6631 = vsel %vm6266, %v5052, %v6630
    %v6632 = vsel %vm6268, %v5066, %v6631
    %v6633 = vsel %vm6270, %v5080, %v6632
    %v6634 = vsel %vm6272, %v5094, %v6633
    %v6635 = vsel %vm6274, %v5108, %v6634
    %v6636 = vsel %vm6276, %v5122, %v6635
    %v6637 = vsel %vm6284, %v5045, %v5031
    %v6638 = vsel %vm6266, %v5059, %v6637
    %v6639 = vsel %vm6268, %v5073, %v6638
    %v6640 = vsel %vm6270, %v5087, %v6639
    %v6641 = vsel %vm6272, %v5101, %v6640
    %v6642 = vsel %vm6274, %v5115, %v6641
    %v6643 = vsel %vm6276, %v5129, %v6642
    %v6644 = vsel %vm6284, %v5150, %v5136
    %v6645 = vsel %vm6266, %v5164, %v6644
    %v6646 = vsel %vm6268, %v5178, %v6645
    %v6647 = vsel %vm6270, %v5192, %v6646
    %v6648 = vsel %vm6272, %v5206, %v6647
    %v6649 = vsel %vm6274, %v5220, %v6648
    %v6650 = vsel %vm6276, %v5234, %v6649
    %v6651 = vsel %vm6284, %v5157, %v5143
    %v6652 = vsel %vm6266, %v5171, %v6651
    %v6653 = vsel %vm6268, %v5185, %v6652
    %v6654 = vsel %vm6270, %v5199, %v6653
    %v6655 = vsel %vm6272, %v5213, %v6654
    %v6656 = vsel %vm6274, %v5227, %v6655
    %v6657 = vsel %vm6276, %v5241, %v6656
    %v6658 = vsel %vm6284, %v5262, %v5248
    %v6659 = vsel %vm6266, %v5276, %v6658
    %v6660 = vsel %vm6268, %v5290, %v6659
    %v6661 = vsel %vm6270, %v5304, %v6660
    %v6662 = vsel %vm6272, %v5318, %v6661
    %v6663 = vsel %vm6274, %v5332, %v6662
    %v6664 = vsel %vm6276, %v5346, %v6663
    %v6665 = vsel %vm6284, %v5269, %v5255
    %v6666 = vsel %vm6266, %v5283, %v6665
    %v6667 = vsel %vm6268, %v5297, %v6666
    %v6668 = vsel %vm6270, %v5311, %v6667
    %v6669 = vsel %vm6272, %v5325, %v6668
    %v6670 = vsel %vm6274, %v5339, %v6669
    %v6671 = vsel %vm6276, %v5353, %v6670
    %v6672 = vsel %vm6284, %v5374, %v5360
    %v6673 = vsel %vm6266, %v5388, %v6672
    %v6674 = vsel %vm6268, %v5402, %v6673
    %v6675 = vsel %vm6270, %v5416, %v6674
    %v6676 = vsel %vm6272, %v5430, %v6675
    %v6677 = vsel %vm6274, %v5444, %v6676
    %v6678 = vsel %vm6276, %v5458, %v6677
    %v6679 = vsel %vm6284, %v5381, %v5367
    %v6680 = vsel %vm6266, %v5395, %v6679
    %v6681 = vsel %vm6268, %v5409, %v6680
    %v6682 = vsel %vm6270, %v5423, %v6681
    %v6683 = vsel %vm6272, %v5437, %v6682
    %v6684 = vsel %vm6274, %v5451, %v6683
    %v6685 = vsel %vm6276, %v5465, %v6684
    %v6686 = vsel %vm6284, %v5486, %v5472
    %v6687 = vsel %vm6266, %v5500, %v6686
    %v6688 = vsel %vm6268, %v5514, %v6687
    %v6689 = vsel %vm6270, %v5528, %v6688
    %v6690 = vsel %vm6272, %v5542, %v6689
    %v6691 = vsel %vm6274, %v5556, %v6690
    %v6692 = vsel %vm6276, %v5570, %v6691
    %v6693 = vsel %vm6284, %v5493, %v5479
    %v6694 = vsel %vm6266, %v5507, %v6693
    %v6695 = vsel %vm6268, %v5521, %v6694
    %v6696 = vsel %vm6270, %v5535, %v6695
    %v6697 = vsel %vm6272, %v5549, %v6696
    %v6698 = vsel %vm6274, %v5563, %v6697
    %v6699 = vsel %vm6276, %v5577, %v6698
    %v6700 = vsel %vm6284, %v5598, %v5584
    %v6701 = vsel %vm6266, %v5612, %v6700
    %v6702 = vsel %vm6268, %v5626, %v6701
    %v6703 = vsel %vm6270, %v5640, %v6702
    %v6704 = vsel %vm6272, %v5654, %v6703
    %v6705 = vsel %vm6274, %v5668, %v6704
    %v6706 = vsel %vm6276, %v5682, %v6705
    %v6707 = vsel %vm6284, %v5605, %v5591
    %v6708 = vsel %vm6266, %v5619, %v6707
    %v6709 = vsel %vm6268, %v5633, %v6708
    %v6710 = vsel %vm6270, %v5647, %v6709
    %v6711 = vsel %vm6272, %v5661, %v6710
    %v6712 = vsel %vm6274, %v5675, %v6711
    %v6713 = vsel %vm6276, %v5689, %v6712
    %v6714 = vsel %vm6284, %v5710, %v5696
    %v6715 = vsel %vm6266, %v5724, %v6714
    %v6716 = vsel %vm6268, %v5738, %v6715
    %v6717 = vsel %vm6270, %v5752, %v6716
    %v6718 = vsel %vm6272, %v5766, %v6717
    %v6719 = vsel %vm6274, %v5780, %v6718
    %v6720 = vsel %vm6276, %v5794, %v6719
    %v6721 = vsel %vm6284, %v5717, %v5703
    %v6722 = vsel %vm6266, %v5731, %v6721
    %v6723 = vsel %vm6268, %v5745, %v6722
    %v6724 = vsel %vm6270, %v5759, %v6723
    %v6725 = vsel %vm6272, %v5773, %v6724
    %v6726 = vsel %vm6274, %v5787, %v6725
    %v6727 = vsel %vm6276, %v5801, %v6726
    %v6728 = vsel %vm6284, %v5822, %v5808
    %v6729 = vsel %vm6266, %v5836, %v6728
    %v6730 = vsel %vm6268, %v5850, %v6729
    %v6731 = vsel %vm6270, %v5864, %v6730
    %v6732 = vsel %vm6272, %v5878, %v6731
    %v6733 = vsel %vm6274, %v5892, %v6732
    %v6734 = vsel %vm6276, %v5906, %v6733
    %v6735 = vsel %vm6284, %v5829, %v5815
    %v6736 = vsel %vm6266, %v5843, %v6735
    %v6737 = vsel %vm6268, %v5857, %v6736
    %v6738 = vsel %vm6270, %v5871, %v6737
    %v6739 = vsel %vm6272, %v5885, %v6738
    %v6740 = vsel %vm6274, %v5899, %v6739
    %v6741 = vsel %vm6276, %v5913, %v6740
    %v6742 = vsel %vm6284, %v5934, %v5920
    %v6743 = vsel %vm6266, %v5948, %v6742
    %v6744 = vsel %vm6268, %v5962, %v6743
    %v6745 = vsel %vm6270, %v5976, %v6744
    %v6746 = vsel %vm6272, %v5990, %v6745
    %v6747 = vsel %vm6274, %v6004, %v6746
    %v6748 = vsel %vm6284, %v5941, %v5927
    %v6749 = vsel %vm6266, %v5955, %v6748
    %v6750 = vsel %vm6268, %v5969, %v6749
    %v6751 = vsel %vm6270, %v5983, %v6750
    %v6752 = vsel %vm6272, %v5997, %v6751
    %v6753 = vsel %vm6274, %v6011, %v6752
    %vm6756 = vcmask 1046528
    %v6757 = vsel %vm6756, %v6747, 0.0
    %v6758 = vsel %vm6756, %v6753, 0.0
    %v6759 = vsel %vm6284, %v4240, %v4225
    %v6760 = vsel %vm6266, %v4254, %v6759
    %v6761 = vsel %vm6268, %v4268, %v6760
    %v6762 = vsel %vm6270, %v4282, %v6761
    %v6763 = vsel %vm6272, %v4296, %v6762
    %v6764 = vsel %vm6274, %v4310, %v6763
    %v6765 = vsel %vm6276, %v4324, %v6764
    %v6766 = vsel %vm6284, %v4247, %v4233
    %v6767 = vsel %vm6266, %v4261, %v6766
    %v6768 = vsel %vm6268, %v4275, %v6767
    %v6769 = vsel %vm6270, %v4289, %v6768
    %v6770 = vsel %vm6272, %v4303, %v6769
    %v6771 = vsel %vm6274, %v4317, %v6770
    %v6772 = vsel %vm6276, %v4331, %v6771
    %v6773 = vsel %vm6284, %v4352, %v4338
    %v6774 = vsel %vm6266, %v4366, %v6773
    %v6775 = vsel %vm6268, %v4380, %v6774
    %v6776 = vsel %vm6270, %v4394, %v6775
    %v6777 = vsel %vm6272, %v4408, %v6776
    %v6778 = vsel %vm6274, %v4422, %v6777
    %v6779 = vsel %vm6276, %v4436, %v6778
    %v6780 = vsel %vm6284, %v4359, %v4345
    %v6781 = vsel %vm6266, %v4373, %v6780
    %v6782 = vsel %vm6268, %v4387, %v6781
    %v6783 = vsel %vm6270, %v4401, %v6782
    %v6784 = vsel %vm6272, %v4415, %v6783
    %v6785 = vsel %vm6274, %v4429, %v6784
    %v6786 = vsel %vm6276, %v4443, %v6785
    %v6787 = vsel %vm6284, %v4464, %v4450
    %v6788 = vsel %vm6266, %v4478, %v6787
    %v6789 = vsel %vm6268, %v4492, %v6788
    %v6790 = vsel %vm6270, %v4506, %v6789
    %v6791 = vsel %vm6272, %v4520, %v6790
    %v6792 = vsel %vm6274, %v4534, %v6791
    %v6793 = vsel %vm6276, %v4548, %v6792
    %v6794 = vsel %vm6284, %v4471, %v4457
    %v6795 = vsel %vm6266, %v4485, %v6794
    %v6796 = vsel %vm6268, %v4499, %v6795
    %v6797 = vsel %vm6270, %v4513, %v6796
    %v6798 = vsel %vm6272, %v4527, %v6797
    %v6799 = vsel %vm6274, %v4541, %v6798
    %v6800 = vsel %vm6276, %v4555, %v6799
    %v6801 = vsel %vm6284, %v4576, %v4562
    %v6802 = vsel %vm6266, %v4590, %v6801
    %v6803 = vsel %vm6268, %v4604, %v6802
    %v6804 = vsel %vm6270, %v4618, %v6803
    %v6805 = vsel %vm6272, %v4632, %v6804
    %v6806 = vsel %vm6274, %v4646, %v6805
    %v6807 = vsel %vm6276, %v4660, %v6806
    %v6808 = vsel %vm6284, %v4583, %v4569
    %v6809 = vsel %vm6266, %v4597, %v6808
    %v6810 = vsel %vm6268, %v4611, %v6809
    %v6811 = vsel %vm6270, %v4625, %v6810
    %v6812 = vsel %vm6272, %v4639, %v6811
    %v6813 = vsel %vm6274, %v4653, %v6812
    %v6814 = vsel %vm6276, %v4667, %v6813
    %v6815 = vsel %vm6284, %v4688, %v4674
    %v6816 = vsel %vm6266, %v4702, %v6815
    %v6817 = vsel %vm6268, %v4716, %v6816
    %v6818 = vsel %vm6270, %v4730, %v6817
    %v6819 = vsel %vm6272, %v4744, %v6818
    %v6820 = vsel %vm6274, %v4758, %v6819
    %v6821 = vsel %vm6276, %v4772, %v6820
    %v6822 = vsel %vm6284, %v4695, %v4681
    %v6823 = vsel %vm6266, %v4709, %v6822
    %v6824 = vsel %vm6268, %v4723, %v6823
    %v6825 = vsel %vm6270, %v4737, %v6824
    %v6826 = vsel %vm6272, %v4751, %v6825
    %v6827 = vsel %vm6274, %v4765, %v6826
    %v6828 = vsel %vm6276, %v4779, %v6827
    %v6829 = vsel %vm6284, %v4800, %v4786
    %v6830 = vsel %vm6266, %v4814, %v6829
    %v6831 = vsel %vm6268, %v4828, %v6830
    %v6832 = vsel %vm6270, %v4842, %v6831
    %v6833 = vsel %vm6272, %v4856, %v6832
    %v6834 = vsel %vm6274, %v4870, %v6833
    %v6835 = vsel %vm6276, %v4884, %v6834
    %v6836 = vsel %vm6284, %v4807, %v4793
    %v6837 = vsel %vm6266, %v4821, %v6836
    %v6838 = vsel %vm6268, %v4835, %v6837
    %v6839 = vsel %vm6270, %v4849, %v6838
    %v6840 = vsel %vm6272, %v4863, %v6839
    %v6841 = vsel %vm6274, %v4877, %v6840
    %v6842 = vsel %vm6276, %v4891, %v6841
    %v6843 = vsel %vm6284, %v4912, %v4898
    %v6844 = vsel %vm6266, %v4926, %v6843
    %v6845 = vsel %vm6268, %v4940, %v6844
    %v6846 = vsel %vm6270, %v4954, %v6845
    %v6847 = vsel %vm6272, %v4968, %v6846
    %v6848 = vsel %vm6274, %v4982, %v6847
    %v6849 = vsel %vm6276, %v4996, %v6848
    %v6850 = vsel %vm6284, %v4919, %v4905
    %v6851 = vsel %vm6266, %v4933, %v6850
    %v6852 = vsel %vm6268, %v4947, %v6851
    %v6853 = vsel %vm6270, %v4961, %v6852
    %v6854 = vsel %vm6272, %v4975, %v6853
    %v6855 = vsel %vm6274, %v4989, %v6854
    %v6856 = vsel %vm6276, %v5003, %v6855
    %v6857 = vsel %vm6284, %v5024, %v5010
    %v6858 = vsel %vm6266, %v5038, %v6857
    %v6859 = vsel %vm6268, %v5052, %v6858
    %v6860 = vsel %vm6270, %v5066, %v6859
    %v6861 = vsel %vm6272, %v5080, %v6860
    %v6862 = vsel %vm6274, %v5094, %v6861
    %v6863 = vsel %vm6276, %v5108, %v6862
    %v6864 = vsel %vm6284, %v5031, %v5017
    %v6865 = vsel %vm6266, %v5045, %v6864
    %v6866 = vsel %vm6268, %v5059, %v6865
    %v6867 = vsel %vm6270, %v5073, %v6866
    %v6868 = vsel %vm6272, %v5087, %v6867
    %v6869 = vsel %vm6274, %v5101, %v6868
    %v6870 = vsel %vm6276, %v5115, %v6869
    %v6871 = vsel %vm6284, %v5136, %v5122
    %v6872 = vsel %vm6266, %v5150, %v6871
    %v6873 = vsel %vm6268, %v5164, %v6872
    %v6874 = vsel %vm6270, %v5178, %v6873
    %v6875 = vsel %vm6272, %v5192, %v6874
    %v6876 = vsel %vm6274, %v5206, %v6875
    %v6877 = vsel %vm6276, %v5220, %v6876
    %v6878 = vsel %vm6284, %v5143, %v5129
    %v6879 = vsel %vm6266, %v5157, %v6878
    %v6880 = vsel %vm6268, %v5171, %v6879
    %v6881 = vsel %vm6270, %v5185, %v6880
    %v6882 = vsel %vm6272, %v5199, %v6881
    %v6883 = vsel %vm6274, %v5213, %v6882
    %v6884 = vsel %vm6276, %v5227, %v6883
    %v6885 = vsel %vm6284, %v5248, %v5234
    %v6886 = vsel %vm6266, %v5262, %v6885
    %v6887 = vsel %vm6268, %v5276, %v6886
    %v6888 = vsel %vm6270, %v5290, %v6887
    %v6889 = vsel %vm6272, %v5304, %v6888
    %v6890 = vsel %vm6274, %v5318, %v6889
    %v6891 = vsel %vm6276, %v5332, %v6890
    %v6892 = vsel %vm6284, %v5255, %v5241
    %v6893 = vsel %vm6266, %v5269, %v6892
    %v6894 = vsel %vm6268, %v5283, %v6893
    %v6895 = vsel %vm6270, %v5297, %v6894
    %v6896 = vsel %vm6272, %v5311, %v6895
    %v6897 = vsel %vm6274, %v5325, %v6896
    %v6898 = vsel %vm6276, %v5339, %v6897
    %v6899 = vsel %vm6284, %v5360, %v5346
    %v6900 = vsel %vm6266, %v5374, %v6899
    %v6901 = vsel %vm6268, %v5388, %v6900
    %v6902 = vsel %vm6270, %v5402, %v6901
    %v6903 = vsel %vm6272, %v5416, %v6902
    %v6904 = vsel %vm6274, %v5430, %v6903
    %v6905 = vsel %vm6276, %v5444, %v6904
    %v6906 = vsel %vm6284, %v5367, %v5353
    %v6907 = vsel %vm6266, %v5381, %v6906
    %v6908 = vsel %vm6268, %v5395, %v6907
    %v6909 = vsel %vm6270, %v5409, %v6908
    %v6910 = vsel %vm6272, %v5423, %v6909
    %v6911 = vsel %vm6274, %v5437, %v6910
    %v6912 = vsel %vm6276, %v5451, %v6911
    %v6913 = vsel %vm6284, %v5472, %v5458
    %v6914 = vsel %vm6266, %v5486, %v6913
    %v6915 = vsel %vm6268, %v5500, %v6914
    %v6916 = vsel %vm6270, %v5514, %v6915
    %v6917 = vsel %vm6272, %v5528, %v6916
    %v6918 = vsel %vm6274, %v5542, %v6917
    %v6919 = vsel %vm6276, %v5556, %v6918
    %v6920 = vsel %vm6284, %v5479, %v5465
    %v6921 = vsel %vm6266, %v5493, %v6920
    %v6922 = vsel %vm6268, %v5507, %v6921
    %v6923 = vsel %vm6270, %v5521, %v6922
    %v6924 = vsel %vm6272, %v5535, %v6923
    %v6925 = vsel %vm6274, %v5549, %v6924
    %v6926 = vsel %vm6276, %v5563, %v6925
    %v6927 = vsel %vm6284, %v5584, %v5570
    %v6928 = vsel %vm6266, %v5598, %v6927
    %v6929 = vsel %vm6268, %v5612, %v6928
    %v6930 = vsel %vm6270, %v5626, %v6929
    %v6931 = vsel %vm6272, %v5640, %v6930
    %v6932 = vsel %vm6274, %v5654, %v6931
    %v6933 = vsel %vm6276, %v5668, %v6932
    %v6934 = vsel %vm6284, %v5591, %v5577
    %v6935 = vsel %vm6266, %v5605, %v6934
    %v6936 = vsel %vm6268, %v5619, %v6935
    %v6937 = vsel %vm6270, %v5633, %v6936
    %v6938 = vsel %vm6272, %v5647, %v6937
    %v6939 = vsel %vm6274, %v5661, %v6938
    %v6940 = vsel %vm6276, %v5675, %v6939
    %v6941 = vsel %vm6284, %v5696, %v5682
    %v6942 = vsel %vm6266, %v5710, %v6941
    %v6943 = vsel %vm6268, %v5724, %v6942
    %v6944 = vsel %vm6270, %v5738, %v6943
    %v6945 = vsel %vm6272, %v5752, %v6944
    %v6946 = vsel %vm6274, %v5766, %v6945
    %v6947 = vsel %vm6276, %v5780, %v6946
    %v6948 = vsel %vm6284, %v5703, %v5689
    %v6949 = vsel %vm6266, %v5717, %v6948
    %v6950 = vsel %vm6268, %v5731, %v6949
    %v6951 = vsel %vm6270, %v5745, %v6950
    %v6952 = vsel %vm6272, %v5759, %v6951
    %v6953 = vsel %vm6274, %v5773, %v6952
    %v6954 = vsel %vm6276, %v5787, %v6953
    %v6955 = vsel %vm6284, %v5808, %v5794
    %v6956 = vsel %vm6266, %v5822, %v6955
    %v6957 = vsel %vm6268, %v5836, %v6956
    %v6958 = vsel %vm6270, %v5850, %v6957
    %v6959 = vsel %vm6272, %v5864, %v6958
    %v6960 = vsel %vm6274, %v5878, %v6959
    %v6961 = vsel %vm6276, %v5892, %v6960
    %v6962 = vsel %vm6284, %v5815, %v5801
    %v6963 = vsel %vm6266, %v5829, %v6962
    %v6964 = vsel %vm6268, %v5843, %v6963
    %v6965 = vsel %vm6270, %v5857, %v6964
    %v6966 = vsel %vm6272, %v5871, %v6965
    %v6967 = vsel %vm6274, %v5885, %v6966
    %v6968 = vsel %vm6276, %v5899, %v6967
    %v6969 = vsel %vm6284, %v5920, %v5906
    %v6970 = vsel %vm6266, %v5934, %v6969
    %v6971 = vsel %vm6268, %v5948, %v6970
    %v6972 = vsel %vm6270, %v5962, %v6971
    %v6973 = vsel %vm6272, %v5976, %v6972
    %v6974 = vsel %vm6274, %v5990, %v6973
    %v6975 = vsel %vm6276, %v6004, %v6974
    %v6976 = vsel %vm6284, %v5927, %v5913
    %v6977 = vsel %vm6266, %v5941, %v6976
    %v6978 = vsel %vm6268, %v5955, %v6977
    %v6979 = vsel %vm6270, %v5969, %v6978
    %v6980 = vsel %vm6272, %v5983, %v6979
    %v6981 = vsel %vm6274, %v5997, %v6980
    %v6982 = vsel %vm6276, %v6011, %v6981
    %6983 = vrot.lane.b32.xlu0 %v6765, 96
    %v6984 = vpop.permute.xlu0 %6983
    %6985 = vrot.lane.b32.xlu0 %v6772, 96
    %v6986 = vpop.permute.xlu0 %6985
    %6987 = vrot.lane.b32.xlu0 %v6779, 96
    %v6988 = vpop.permute.xlu0 %6987
    %6989 = vrot.lane.b32.xlu0 %v6786, 96
    %v6990 = vpop.permute.xlu0 %6989
    %6991 = vrot.lane.b32.xlu0 %v6793, 96
    %v6992 = vpop.permute.xlu0 %6991
    %6993 = vrot.lane.b32.xlu0 %v6800, 96
    %v6994 = vpop.permute.xlu0 %6993
    %6995 = vrot.lane.b32.xlu0 %v6807, 96
    %v6996 = vpop.permute.xlu0 %6995
    %6997 = vrot.lane.b32.xlu0 %v6814, 96
    %v6998 = vpop.permute.xlu0 %6997
    %6999 = vrot.lane.b32.xlu0 %v6821, 96
    %v7000 = vpop.permute.xlu0 %6999
    %7001 = vrot.lane.b32.xlu0 %v6828, 96
    %v7002 = vpop.permute.xlu0 %7001
    %7003 = vrot.lane.b32.xlu0 %v6835, 96
    %v7004 = vpop.permute.xlu0 %7003
    %7005 = vrot.lane.b32.xlu0 %v6842, 96
    %v7006 = vpop.permute.xlu0 %7005
    %7007 = vrot.lane.b32.xlu0 %v6849, 96
    %v7008 = vpop.permute.xlu0 %7007
    %7009 = vrot.lane.b32.xlu0 %v6856, 96
    %v7010 = vpop.permute.xlu0 %7009
    %7011 = vrot.lane.b32.xlu0 %v6863, 96
    %v7012 = vpop.permute.xlu0 %7011
    %7013 = vrot.lane.b32.xlu0 %v6870, 96
    %v7014 = vpop.permute.xlu0 %7013
    %7015 = vrot.lane.b32.xlu0 %v6877, 96
    %v7016 = vpop.permute.xlu0 %7015
    %7017 = vrot.lane.b32.xlu0 %v6884, 96
    %v7018 = vpop.permute.xlu0 %7017
    %7019 = vrot.lane.b32.xlu0 %v6891, 96
    %v7020 = vpop.permute.xlu0 %7019
    %7021 = vrot.lane.b32.xlu0 %v6898, 96
    %v7022 = vpop.permute.xlu0 %7021
    %7023 = vrot.lane.b32.xlu0 %v6905, 96
    %v7024 = vpop.permute.xlu0 %7023
    %7025 = vrot.lane.b32.xlu0 %v6912, 96
    %v7026 = vpop.permute.xlu0 %7025
    %7027 = vrot.lane.b32.xlu0 %v6919, 96
    %v7028 = vpop.permute.xlu0 %7027
    %7029 = vrot.lane.b32.xlu0 %v6926, 96
    %v7030 = vpop.permute.xlu0 %7029
    %7031 = vrot.lane.b32.xlu0 %v6933, 96
    %v7032 = vpop.permute.xlu0 %7031
    %7033 = vrot.lane.b32.xlu0 %v6940, 96
    %v7034 = vpop.permute.xlu0 %7033
    %7035 = vrot.lane.b32.xlu0 %v6947, 96
    %v7036 = vpop.permute.xlu0 %7035
    %7037 = vrot.lane.b32.xlu0 %v6954, 96
    %v7038 = vpop.permute.xlu0 %7037
    %7039 = vrot.lane.b32.xlu0 %v6961, 96
    %v7040 = vpop.permute.xlu0 %7039
    %7041 = vrot.lane.b32.xlu0 %v6968, 96
    %v7042 = vpop.permute.xlu0 %7041
    %7043 = vrot.lane.b32.xlu0 %v6975, 96
    %v7044 = vpop.permute.xlu0 %7043
    %7045 = vrot.lane.b32.xlu0 %v6982, 96
    %v7046 = vpop.permute.xlu0 %7045
    %v7047 = vsel %vm3030, %v6984, %v6986
    %v7048 = vsel %vm3030, %v6988, %v6990
    %v7049 = vsel %vm3030, %v6992, %v6994
    %v7050 = vsel %vm3030, %v6996, %v6998
    %v7051 = vsel %vm3030, %v7000, %v7002
    %v7052 = vsel %vm3030, %v7004, %v7006
    %v7053 = vsel %vm3030, %v7008, %v7010
    %v7054 = vsel %vm3030, %v7012, %v7014
    %v7055 = vsel %vm3030, %v7016, %v7018
    %v7056 = vsel %vm3030, %v7020, %v7022
    %v7057 = vsel %vm3030, %v7024, %v7026
    %v7058 = vsel %vm3030, %v7028, %v7030
    %v7059 = vsel %vm3030, %v7032, %v7034
    %v7060 = vsel %vm3030, %v7036, %v7038
    %v7061 = vsel %vm3030, %v7040, %v7042
    %v7062 = vsel %vm3030, %v7044, %v7046
    %7113 = vrot.lane.b32.xlu0 %v6538, 64
    %v7114 = vpop.permute.xlu0 %7113
    %7115 = vrot.lane.b32.xlu0 %v6545, 64
    %v7116 = vpop.permute.xlu0 %7115
    %7117 = vrot.lane.b32.xlu0 %v6552, 64
    %v7118 = vpop.permute.xlu0 %7117
    %7119 = vrot.lane.b32.xlu0 %v6559, 64
    %v7120 = vpop.permute.xlu0 %7119
    %7121 = vrot.lane.b32.xlu0 %v6566, 64
    %v7122 = vpop.permute.xlu0 %7121
    %7123 = vrot.lane.b32.xlu0 %v6573, 64
    %v7124 = vpop.permute.xlu0 %7123
    %7125 = vrot.lane.b32.xlu0 %v6580, 64
    %v7126 = vpop.permute.xlu0 %7125
    %7127 = vrot.lane.b32.xlu0 %v6587, 64
    %v7128 = vpop.permute.xlu0 %7127
    %7129 = vrot.lane.b32.xlu0 %v6594, 64
    %v7130 = vpop.permute.xlu0 %7129
    %7131 = vrot.lane.b32.xlu0 %v6601, 64
    %v7132 = vpop.permute.xlu0 %7131
    %7133 = vrot.lane.b32.xlu0 %v6608, 64
    %v7134 = vpop.permute.xlu0 %7133
    %7135 = vrot.lane.b32.xlu0 %v6615, 64
    %v7136 = vpop.permute.xlu0 %7135
    %7137 = vrot.lane.b32.xlu0 %v6622, 64
    %v7138 = vpop.permute.xlu0 %7137
    %7139 = vrot.lane.b32.xlu0 %v6629, 64
    %v7140 = vpop.permute.xlu0 %7139
    %7141 = vrot.lane.b32.xlu0 %v6636, 64
    %v7142 = vpop.permute.xlu0 %7141
    %7143 = vrot.lane.b32.xlu0 %v6643, 64
    %v7144 = vpop.permute.xlu0 %7143
    %7145 = vrot.lane.b32.xlu0 %v6650, 64
    %v7146 = vpop.permute.xlu0 %7145
    %7147 = vrot.lane.b32.xlu0 %v6657, 64
    %v7148 = vpop.permute.xlu0 %7147
    %7149 = vrot.lane.b32.xlu0 %v6664, 64
    %v7150 = vpop.permute.xlu0 %7149
    %7151 = vrot.lane.b32.xlu0 %v6671, 64
    %v7152 = vpop.permute.xlu0 %7151
    %7153 = vrot.lane.b32.xlu0 %v6678, 64
    %v7154 = vpop.permute.xlu0 %7153
    %7155 = vrot.lane.b32.xlu0 %v6685, 64
    %v7156 = vpop.permute.xlu0 %7155
    %7157 = vrot.lane.b32.xlu0 %v6692, 64
    %v7158 = vpop.permute.xlu0 %7157
    %7159 = vrot.lane.b32.xlu0 %v6699, 64
    %v7160 = vpop.permute.xlu0 %7159
    %7161 = vrot.lane.b32.xlu0 %v6706, 64
    %v7162 = vpop.permute.xlu0 %7161
    %7163 = vrot.lane.b32.xlu0 %v6713, 64
    %v7164 = vpop.permute.xlu0 %7163
    %7165 = vrot.lane.b32.xlu0 %v6720, 64
    %v7166 = vpop.permute.xlu0 %7165
    %7167 = vrot.lane.b32.xlu0 %v6727, 64
    %v7168 = vpop.permute.xlu0 %7167
    %7169 = vrot.lane.b32.xlu0 %v6734, 64
    %v7170 = vpop.permute.xlu0 %7169
    %7171 = vrot.lane.b32.xlu0 %v6741, 64
    %v7172 = vpop.permute.xlu0 %7171
    %7173 = vrot.lane.b32.xlu0 %v6757, 64
    %v7174 = vpop.permute.xlu0 %7173
    %7175 = vrot.lane.b32.xlu0 %v6758, 64
    %v7176 = vpop.permute.xlu0 %7175
    %v7177 = vsel %vm2964, %v7114, %v7116
    %v7178 = vsel %vm2964, %v7118, %v7120
    %v7179 = vsel %vm2964, %v7122, %v7124
    %v7180 = vsel %vm2964, %v7126, %v7128
    %v7181 = vsel %vm2964, %v7130, %v7132
    %v7182 = vsel %vm2964, %v7134, %v7136
    %v7183 = vsel %vm2964, %v7138, %v7140
    %v7184 = vsel %vm2964, %v7142, %v7144
    %v7185 = vsel %vm2964, %v7146, %v7148
    %v7186 = vsel %vm2964, %v7150, %v7152
    %v7187 = vsel %vm2964, %v7154, %v7156
    %v7188 = vsel %vm2964, %v7158, %v7160
    %v7189 = vsel %vm2964, %v7162, %v7164
    %v7190 = vsel %vm2964, %v7166, %v7168
    %v7191 = vsel %vm2964, %v7170, %v7172
    %v7192 = vsel %vm2964, %v7174, %v7176
    %v7241 = vsel %vm3030, %v6529, %v6984
    %v7242 = vsel %vm3030, %v6298, %v6988
    %v7243 = vsel %vm3030, %v6312, %v6992
    %v7244 = vsel %vm3030, %v6326, %v6996
    %v7245 = vsel %vm3030, %v6340, %v7000
    %v7246 = vsel %vm3030, %v6354, %v7004
    %v7247 = vsel %vm3030, %v6368, %v7008
    %v7248 = vsel %vm3030, %v6382, %v7012
    %v7249 = vsel %vm3030, %v6396, %v7016
    %v7250 = vsel %vm3030, %v6410, %v7020
    %v7251 = vsel %vm3030, %v6424, %v7024
    %v7252 = vsel %vm3030, %v6438, %v7028
    %v7253 = vsel %vm3030, %v6452, %v7032
    %v7254 = vsel %vm3030, %v6466, %v7036
    %v7255 = vsel %vm3030, %v6480, %v7040
    %v7256 = vsel %vm3030, %v6494, %v7044
    %v7257 = vsel %vm2964, %v6986, %v7114
    %v7258 = vsel %vm2964, %v6990, %v7118
    %v7259 = vsel %vm2964, %v6994, %v7122
    %v7260 = vsel %vm2964, %v6998, %v7126
    %v7261 = vsel %vm2964, %v7002, %v7130
    %v7262 = vsel %vm2964, %v7006, %v7134
    %v7263 = vsel %vm2964, %v7010, %v7138
    %v7264 = vsel %vm2964, %v7014, %v7142
    %v7265 = vsel %vm2964, %v7018, %v7146
    %v7266 = vsel %vm2964, %v7022, %v7150
    %v7267 = vsel %vm2964, %v7026, %v7154
    %v7268 = vsel %vm2964, %v7030, %v7158
    %v7269 = vsel %vm2964, %v7034, %v7162
    %v7270 = vsel %vm2964, %v7038, %v7166
    %v7271 = vsel %vm2964, %v7042, %v7170
    %v7272 = vsel %vm2964, %v7046, %v7174
    %v7273 = vpack.c.bf16 %v6291, %v6528
    %v7274 = vpack.c.bf16 %v7242, %v7241
    %v7275 = vpack.c.bf16 %v7048, %v7047
    %v7276 = vpack.c.bf16 %v7258, %v7257
    %v7277 = vpack.c.bf16 %v7178, %v7177
    %v7278 = vpack.c.bf16 %v7120, %v7116
    %v7279 = vpack.c.bf16 %v6319, %v6305
    %v7280 = vpack.c.bf16 %v7244, %v7243
    %v7281 = vpack.c.bf16 %v7050, %v7049
    %v7282 = vpack.c.bf16 %v7260, %v7259
    %v7283 = vpack.c.bf16 %v7180, %v7179
    %v7284 = vpack.c.bf16 %v7128, %v7124
    %v7285 = vpack.c.bf16 %v6347, %v6333
    %v7286 = vpack.c.bf16 %v7246, %v7245
    %v7287 = vpack.c.bf16 %v7052, %v7051
    %v7288 = vpack.c.bf16 %v7262, %v7261
    %v7289 = vpack.c.bf16 %v7182, %v7181
    %v7290 = vpack.c.bf16 %v7136, %v7132
    %v7291 = vpack.c.bf16 %v6375, %v6361
    %v7292 = vpack.c.bf16 %v7248, %v7247
    %v7293 = vpack.c.bf16 %v7054, %v7053
    %v7294 = vpack.c.bf16 %v7264, %v7263
    %v7295 = vpack.c.bf16 %v7184, %v7183
    %v7296 = vpack.c.bf16 %v7144, %v7140
    %v7297 = vpack.c.bf16 %v6403, %v6389
    %v7298 = vpack.c.bf16 %v7250, %v7249
    %v7299 = vpack.c.bf16 %v7056, %v7055
    %v7300 = vpack.c.bf16 %v7266, %v7265
    %v7301 = vpack.c.bf16 %v7186, %v7185
    %v7302 = vpack.c.bf16 %v7152, %v7148
    %v7303 = vpack.c.bf16 %v6431, %v6417
    %v7304 = vpack.c.bf16 %v7252, %v7251
    %v7305 = vpack.c.bf16 %v7058, %v7057
    %v7306 = vpack.c.bf16 %v7268, %v7267
    %v7307 = vpack.c.bf16 %v7188, %v7187
    %v7308 = vpack.c.bf16 %v7160, %v7156
    %v7309 = vpack.c.bf16 %v6459, %v6445
    %v7310 = vpack.c.bf16 %v7254, %v7253
    %v7311 = vpack.c.bf16 %v7060, %v7059
    %v7312 = vpack.c.bf16 %v7270, %v7269
    %v7313 = vpack.c.bf16 %v7190, %v7189
    %v7314 = vpack.c.bf16 %v7168, %v7164
    %v7315 = vpack.c.bf16 %v6487, %v6473
    %v7316 = vpack.c.bf16 %v7256, %v7255
    %v7317 = vpack.c.bf16 %v7062, %v7061
    %v7318 = vpack.c.bf16 %v7272, %v7271
    %v7319 = vpack.c.bf16 %v7192, %v7191
    %v7320 = vpack.c.bf16 %v7176, %v7172
    %v7321 = vld [vmem:[%s2] sm:$0xff]
    %v7322 = vld [vmem:[%s2 + $0x8] sm:$0xff]
    %v7323 = vld [vmem:[%s2 + $0x10] sm:$0xff]
    %v7324 = vld [vmem:[%s2 + $0x18] sm:$0xff]
    %v7325 = vld [vmem:[%s2 + $0x20] sm:$0xff]
    %v7326 = vld [vmem:[%s2 + $0x28] sm:$0xff]
    %v7327 = vld [vmem:[%s2 + $0x30] sm:$0xff]
    %v7328 = vld [vmem:[%s2 + $0x38] sm:$0xff]
    %v7329 = vld [vmem:[%s2 + $0x40] sm:$0xff]
    %v7330 = vld [vmem:[%s2 + $0x48] sm:$0xff]
    %v7331 = vld [vmem:[%s2 + $0x50] sm:$0xff]
    %v7332 = vld [vmem:[%s2 + $0x58] sm:$0xff]
    %v7333 = vld [vmem:[%s2 + $0x60] sm:$0xff]
    %v7334 = vld [vmem:[%s2 + $0x68] sm:$0xff]
    %v7335 = vld [vmem:[%s2 + $0x70] sm:$0xff]
    %v7336 = vld [vmem:[%s2 + $0x78] sm:$0xff]
    %v7337 = vld [vmem:[%s2 + $0x80] sm:$0xff]
    %v7338 = vld [vmem:[%s2 + $0x88] sm:$0xff]
    %v7339 = vld [vmem:[%s2 + $0x90] sm:$0xff]
    %v7340 = vld [vmem:[%s2 + $0x98] sm:$0xff]
    %v7341 = vld [vmem:[%s2 + $0xa0] sm:$0xff]
    %v7342 = vld [vmem:[%s2 + $0xa8] sm:$0xff]
    %v7343 = vld [vmem:[%s2 + $0xb0] sm:$0xff]
    %v7344 = vld [vmem:[%s2 + $0xb8] sm:$0xff]
    %v7345 = vld [vmem:[%s2 + $0xc0] sm:$0xff]
    %v7346 = vld [vmem:[%s2 + $0xc8] sm:$0xff]
    %v7347 = vld [vmem:[%s2 + $0xd0] sm:$0xff]
    %v7348 = vld [vmem:[%s2 + $0xd8] sm:$0xff]
    %v7349 = vld [vmem:[%s2 + $0xe0] sm:$0xff]
    %v7350 = vld [vmem:[%s2 + $0xe8] sm:$0xff]
    %v7351 = vld [vmem:[%s2 + $0xf0] sm:$0xff]
    %v7352 = vld [vmem:[%s2 + $0xf8] sm:$0xff]
    %v7353 = vld [vmem:[%s2 + $0x100] sm:$0xff]
    %v7354 = vld [vmem:[%s2 + $0x108] sm:$0xff]
    %v7355 = vld [vmem:[%s2 + $0x110] sm:$0xff]
    %v7356 = vld [vmem:[%s2 + $0x118] sm:$0xff]
    %v7357 = vld [vmem:[%s2 + $0x120] sm:$0xff]
    %v7358 = vld [vmem:[%s2 + $0x128] sm:$0xff]
    %v7359 = vld [vmem:[%s2 + $0x130] sm:$0xff]
    %v7360 = vld [vmem:[%s2 + $0x138] sm:$0xff]
    %v7361 = vld [vmem:[%s2 + $0x140] sm:$0xff]
    %v7362 = vld [vmem:[%s2 + $0x148] sm:$0xff]
    %v7363 = vld [vmem:[%s2 + $0x150] sm:$0xff]
    %v7364 = vld [vmem:[%s2 + $0x158] sm:$0xff]
    %v7365 = vld [vmem:[%s2 + $0x160] sm:$0xff]
    %v7366 = vld [vmem:[%s2 + $0x168] sm:$0xff]
    %v7367 = vld [vmem:[%s2 + $0x170] sm:$0xff]
    %v7368 = vld [vmem:[%s2 + $0x178] sm:$0xff]
    %v7369 = vld [vmem:[%s2 + $0x180] sm:$0xff]
    %v7370 = vld [vmem:[%s2 + $0x188] sm:$0xff]
    %v7371 = vld [vmem:[%s2 + $0x190] sm:$0xff]
    %v7372 = vld [vmem:[%s2 + $0x198] sm:$0xff]
    %v7373 = vld [vmem:[%s2 + $0x1a0] sm:$0xff]
    %v7374 = vld [vmem:[%s2 + $0x1a8] sm:$0xff]
    %v7375 = vld [vmem:[%s2 + $0x1b0] sm:$0xff]
    %v7376 = vld [vmem:[%s2 + $0x1b8] sm:$0xff]
    %v7377 = vld [vmem:[%s2 + $0x1c0] sm:$0xff]
    %v7378 = vld [vmem:[%s2 + $0x1c8] sm:$0xff]
    %v7379 = vld [vmem:[%s2 + $0x1d0] sm:$0xff]
    %v7380 = vld [vmem:[%s2 + $0x1d8] sm:$0xff]
    %v7381 = vld [vmem:[%s2 + $0x1e0] sm:$0xff]
    %v7382 = vld [vmem:[%s2 + $0x1e8] sm:$0xff]
    %v7383 = vld [vmem:[%s2 + $0x1f0] sm:$0xff]
    %v7384 = vld [vmem:[%s2 + $0x1f8] sm:$0xff]
    %v7385 = vld [vmem:[%s2 + $0x200] sm:$0xff]
    %v7386 = vld [vmem:[%s2 + $0x208] sm:$0xff]
    %v7387 = vld [vmem:[%s2 + $0x210] sm:$0xff]
    %v7388 = vld [vmem:[%s2 + $0x218] sm:$0xff]
    %v7389 = vld [vmem:[%s2 + $0x220] sm:$0xff]
    %v7390 = vld [vmem:[%s2 + $0x228] sm:$0xff]
    %v7391 = vld [vmem:[%s2 + $0x230] sm:$0xff]
    %v7392 = vld [vmem:[%s2 + $0x238] sm:$0xff]
    %v7393 = vld [vmem:[%s2 + $0x240] sm:$0xff]
    %v7394 = vld [vmem:[%s2 + $0x248] sm:$0xff]
    %v7395 = vld [vmem:[%s2 + $0x250] sm:$0xff]
    %v7396 = vld [vmem:[%s2 + $0x258] sm:$0xff]
    %v7397 = vld [vmem:[%s2 + $0x260] sm:$0xff]
    %v7398 = vld [vmem:[%s2 + $0x268] sm:$0xff]
    %v7399 = vld [vmem:[%s2 + $0x270] sm:$0xff]
    %v7400 = vld [vmem:[%s2 + $0x278] sm:$0xff]
    %v7401 = vld [vmem:[%s2 + $0x280] sm:$0xff]
    %v7402 = vld [vmem:[%s2 + $0x288] sm:$0xff]
    %v7403 = vld [vmem:[%s2 + $0x290] sm:$0xff]
    %v7404 = vld [vmem:[%s2 + $0x298] sm:$0xff]
    %v7405 = vld [vmem:[%s2 + $0x2a0] sm:$0xff]
    %v7406 = vld [vmem:[%s2 + $0x2a8] sm:$0xff]
    %v7407 = vld [vmem:[%s2 + $0x2b0] sm:$0xff]
    %v7408 = vld [vmem:[%s2 + $0x2b8] sm:$0xff]
    %v7409 = vld [vmem:[%s2 + $0x2c0] sm:$0xff]
    %v7410 = vld [vmem:[%s2 + $0x2c8] sm:$0xff]
    %v7411 = vld [vmem:[%s2 + $0x2d0] sm:$0xff]
    %v7412 = vld [vmem:[%s2 + $0x2d8] sm:$0xff]
    %v7413 = vld [vmem:[%s2 + $0x2e0] sm:$0xff]
    %v7414 = vld [vmem:[%s2 + $0x2e8] sm:$0xff]
    %v7415 = vld [vmem:[%s2 + $0x2f0] sm:$0xff]
    %v7416 = vld [vmem:[%s2 + $0x2f8] sm:$0xff]
    %v7417 = vld [vmem:[%s2 + $0x300] sm:$0xff]
    %v7418 = vld [vmem:[%s2 + $0x308] sm:$0xff]
    %v7419 = vld [vmem:[%s2 + $0x310] sm:$0xff]
    %v7420 = vld [vmem:[%s2 + $0x318] sm:$0xff]
    %v7421 = vld [vmem:[%s2 + $0x320] sm:$0xff]
    %v7422 = vld [vmem:[%s2 + $0x328] sm:$0xff]
    %v7423 = vld [vmem:[%s2 + $0x330] sm:$0xff]
    %v7424 = vld [vmem:[%s2 + $0x338] sm:$0xff]
    %v7425 = vld [vmem:[%s2 + $0x340] sm:$0xff]
    %v7426 = vld [vmem:[%s2 + $0x348] sm:$0xff]
    %v7427 = vld [vmem:[%s2 + $0x350] sm:$0xff]
    %v7428 = vld [vmem:[%s2 + $0x358] sm:$0xff]
    %v7429 = vld [vmem:[%s2 + $0x360] sm:$0xff]
    %v7430 = vld [vmem:[%s2 + $0x368] sm:$0xff]
    %v7431 = vld [vmem:[%s2 + $0x370] sm:$0xff]
    %v7432 = vld [vmem:[%s2 + $0x378] sm:$0xff]
    %v7433 = vld [vmem:[%s2 + $0x380] sm:$0xff]
    %v7434 = vld [vmem:[%s2 + $0x388] sm:$0xff]
    %v7435 = vld [vmem:[%s2 + $0x390] sm:$0xff]
    %v7436 = vld [vmem:[%s2 + $0x398] sm:$0xff]
    %v7437 = vld [vmem:[%s2 + $0x3a0] sm:$0xff]
    %v7438 = vld [vmem:[%s2 + $0x3a8] sm:$0xff]
    %v7439 = vld [vmem:[%s2 + $0x3b0] sm:$0xff]
    %v7440 = vld [vmem:[%s2 + $0x3b8] sm:$0xff]
    %v7441 = vld [vmem:[%s2 + $0x3c0] sm:$0xff]
    %v7442 = vld [vmem:[%s2 + $0x3c8] sm:$0xff]
    %v7443 = vld [vmem:[%s2 + $0x3d0] sm:$0xff]
    %v7444 = vld [vmem:[%s2 + $0x3d8] sm:$0xff]
    %v7445 = vld [vmem:[%s2 + $0x3e0] sm:$0xff]
    %v7446 = vld [vmem:[%s2 + $0x3e8] sm:$0xff]
    %v7447 = vld [vmem:[%s2 + $0x3f0] sm:$0xff]
    %v7448 = vld [vmem:[%s2 + $0x3f8] sm:$0xff]
    %v7449 = vld [vmem:[%s2 + $0x400] sm:$0xff]
    %v7450 = vld [vmem:[%s2 + $0x408] sm:$0xff]
    %v7451 = vld [vmem:[%s2 + $0x410] sm:$0xff]
    %v7452 = vld [vmem:[%s2 + $0x418] sm:$0xff]
    %v7453 = vld [vmem:[%s2 + $0x420] sm:$0xff]
    %v7454 = vld [vmem:[%s2 + $0x428] sm:$0xff]
    %v7455 = vld [vmem:[%s2 + $0x430] sm:$0xff]
    %v7456 = vld [vmem:[%s2 + $0x438] sm:$0xff]
    %v7457 = vld [vmem:[%s2 + $0x440] sm:$0xff]
    %v7458 = vld [vmem:[%s2 + $0x448] sm:$0xff]
    %v7459 = vld [vmem:[%s2 + $0x450] sm:$0xff]
    %v7460 = vld [vmem:[%s2 + $0x458] sm:$0xff]
    %v7461 = vld [vmem:[%s2 + $0x460] sm:$0xff]
    %v7462 = vld [vmem:[%s2 + $0x468] sm:$0xff]
    %v7463 = vld [vmem:[%s2 + $0x470] sm:$0xff]
    %v7464 = vld [vmem:[%s2 + $0x478] sm:$0xff]
    %v7465 = vld [vmem:[%s2 + $0x480] sm:$0xff]
    %v7466 = vld [vmem:[%s2 + $0x488] sm:$0xff]
    %v7467 = vld [vmem:[%s2 + $0x490] sm:$0xff]
    %v7468 = vld [vmem:[%s2 + $0x498] sm:$0xff]
    %v7469 = vld [vmem:[%s2 + $0x4a0] sm:$0xff]
    %v7470 = vld [vmem:[%s2 + $0x4a8] sm:$0xff]
    %v7471 = vld [vmem:[%s2 + $0x4b0] sm:$0xff]
    %v7472 = vld [vmem:[%s2 + $0x4b8] sm:$0xff]
    %v7473 = vld [vmem:[%s2 + $0x4c0] sm:$0xff]
    %v7474 = vld [vmem:[%s2 + $0x4c8] sm:$0xff]
    %v7475 = vld [vmem:[%s2 + $0x4d0] sm:$0xff]
    %v7476 = vld [vmem:[%s2 + $0x4d8] sm:$0xff]
    %v7477 = vld [vmem:[%s2 + $0x4e0] sm:$0xff]
    %v7478 = vld [vmem:[%s2 + $0x4e8] sm:$0xff]
    %v7479 = vld [vmem:[%s2 + $0x4f0] sm:$0xff]
    %v7480 = vld [vmem:[%s2 + $0x4f8] sm:$0xff]
    %v7481 = vld [vmem:[%s2 + $0x500] sm:$0xff]
    %v7482 = vld [vmem:[%s2 + $0x508] sm:$0xff]
    %v7483 = vld [vmem:[%s2 + $0x510] sm:$0xff]
    %v7484 = vld [vmem:[%s2 + $0x518] sm:$0xff]
    %v7485 = vld [vmem:[%s2 + $0x520] sm:$0xff]
    %v7486 = vld [vmem:[%s2 + $0x528] sm:$0xff]
    %v7487 = vld [vmem:[%s2 + $0x530] sm:$0xff]
    %v7488 = vld [vmem:[%s2 + $0x538] sm:$0xff]
    %v7489 = vld [vmem:[%s3] sm:$0xf]
    %v7491 = vperm.slane %v7489, 0
    %v7492 = vperm.slane %v7489, 1
    %v7493 = vperm.slane %v7489, 2
    %v7494 = vperm.slane %v7489, 3
    %v7667 = vunpack.c.l.b16 %v7321
    %v7668 = vunpack.c.h.b16 %v7321
    %v7669 = vunpack.c.l.b16 %v7322
    %v7670 = vunpack.c.h.b16 %v7322
    %v7671 = vunpack.c.l.b16 %v7323
    %v7672 = vunpack.c.h.b16 %v7323
    %v7673 = vunpack.c.l.b16 %v7324
    %v7674 = vunpack.c.h.b16 %v7324
    %v7675 = vunpack.c.l.b16 %v7325
    %v7676 = vunpack.c.h.b16 %v7325
    %v7677 = vunpack.c.l.b16 %v7326
    %v7678 = vunpack.c.h.b16 %v7326
    %v7679 = vunpack.c.l.b16 %v7327
    %v7680 = vunpack.c.h.b16 %v7327
    %v7681 = vunpack.c.l.b16 %v7328
    %v7682 = vunpack.c.h.b16 %v7328
    %v7683 = vunpack.c.l.b16 %v7329
    %v7684 = vunpack.c.h.b16 %v7329
    %v7685 = vunpack.c.l.b16 %v7330
    %v7686 = vunpack.c.h.b16 %v7330
    %v7687 = vunpack.c.l.b16 %v7331
    %v7688 = vunpack.c.h.b16 %v7331
    %v7689 = vunpack.c.l.b16 %v7332
    %v7690 = vunpack.c.h.b16 %v7332
    %v7691 = vunpack.c.l.b16 %v7333
    %v7692 = vunpack.c.h.b16 %v7333
    %v7693 = vunpack.c.l.b16 %v7334
    %v7694 = vunpack.c.h.b16 %v7334
    %v7695 = vunpack.c.l.b16 %v7335
    %v7696 = vunpack.c.h.b16 %v7335
    %v7697 = vunpack.c.l.b16 %v7336
    %v7698 = vunpack.c.h.b16 %v7336
    %v7699 = vunpack.c.l.b16 %v7337
    %v7700 = vunpack.c.h.b16 %v7337
    %v7701 = vunpack.c.l.b16 %v7338
    %v7702 = vunpack.c.h.b16 %v7338
    %v7703 = vunpack.c.l.b16 %v7339
    %v7704 = vunpack.c.h.b16 %v7339
    %v7705 = vunpack.c.l.b16 %v7340
    %v7706 = vunpack.c.h.b16 %v7340
    %v7707 = vunpack.c.l.b16 %v7341
    %v7708 = vunpack.c.h.b16 %v7341
    %v7709 = vunpack.c.l.b16 %v7342
    %v7710 = vunpack.c.h.b16 %v7342
    %v7711 = vunpack.c.l.b16 %v7343
    %v7712 = vunpack.c.h.b16 %v7343
    %v7713 = vunpack.c.l.b16 %v7344
    %v7714 = vunpack.c.h.b16 %v7344
    %v7715 = vunpack.c.l.b16 %v7345
    %v7716 = vunpack.c.h.b16 %v7345
    %v7717 = vunpack.c.l.b16 %v7346
    %v7718 = vunpack.c.h.b16 %v7346
    %v7719 = vunpack.c.l.b16 %v7347
    %v7720 = vunpack.c.h.b16 %v7347
    %v7721 = vunpack.c.l.b16 %v7348
    %v7722 = vunpack.c.h.b16 %v7348
    %v7723 = vunpack.c.l.b16 %v7349
    %v7724 = vunpack.c.h.b16 %v7349
    %v7725 = vunpack.c.l.b16 %v7350
    %v7726 = vunpack.c.h.b16 %v7350
    %v7727 = vunpack.c.l.b16 %v7351
    %v7728 = vunpack.c.h.b16 %v7351
    %v7729 = vunpack.c.l.b16 %v7352
    %v7730 = vunpack.c.h.b16 %v7352
    %v7731 = vunpack.c.l.b16 %v7353
    %v7732 = vunpack.c.h.b16 %v7353
    %v7733 = vunpack.c.l.b16 %v7354
    %v7734 = vunpack.c.h.b16 %v7354
    %v7735 = vunpack.c.l.b16 %v7355
    %v7736 = vunpack.c.h.b16 %v7355
    %v7737 = vunpack.c.l.b16 %v7356
    %v7738 = vunpack.c.h.b16 %v7356
    %v7739 = vunpack.c.l.b16 %v7357
    %v7740 = vunpack.c.h.b16 %v7357
    %v7741 = vunpack.c.l.b16 %v7358
    %v7742 = vunpack.c.h.b16 %v7358
    %v7743 = vunpack.c.l.b16 %v7359
    %v7744 = vunpack.c.h.b16 %v7359
    %v7745 = vunpack.c.l.b16 %v7360
    %v7746 = vunpack.c.h.b16 %v7360
    %v7747 = vunpack.c.l.b16 %v7361
    %v7748 = vunpack.c.h.b16 %v7361
    %v7749 = vunpack.c.l.b16 %v7362
    %v7750 = vunpack.c.h.b16 %v7362
    %v7751 = vunpack.c.l.b16 %v7363
    %v7752 = vunpack.c.h.b16 %v7363
    %v7753 = vunpack.c.l.b16 %v7364
    %v7754 = vunpack.c.h.b16 %v7364
    %v7755 = vunpack.c.l.b16 %v7365
    %v7756 = vunpack.c.h.b16 %v7365
    %v7757 = vunpack.c.l.b16 %v7366
    %v7758 = vunpack.c.h.b16 %v7366
    %v7759 = vunpack.c.l.b16 %v7367
    %v7760 = vunpack.c.h.b16 %v7367
    %v7761 = vunpack.c.l.b16 %v7368
    %v7762 = vunpack.c.h.b16 %v7368
    %v7763 = vunpack.c.l.b16 %v7369
    %v7764 = vunpack.c.h.b16 %v7369
    %v7765 = vunpack.c.l.b16 %v7370
    %v7766 = vunpack.c.h.b16 %v7370
    %v7767 = vunpack.c.l.b16 %v7371
    %v7768 = vunpack.c.h.b16 %v7371
    %v7769 = vunpack.c.l.b16 %v7372
    %v7770 = vunpack.c.h.b16 %v7372
    %v7771 = vunpack.c.l.b16 %v7373
    %v7772 = vunpack.c.h.b16 %v7373
    %v7773 = vunpack.c.l.b16 %v7374
    %v7774 = vunpack.c.h.b16 %v7374
    %v7775 = vunpack.c.l.b16 %v7375
    %v7776 = vunpack.c.h.b16 %v7375
    %v7777 = vunpack.c.l.b16 %v7376
    %v7778 = vunpack.c.h.b16 %v7376
    %v7779 = vunpack.c.l.b16 %v7377
    %v7780 = vunpack.c.h.b16 %v7377
    %v7781 = vunpack.c.l.b16 %v7378
    %v7782 = vunpack.c.h.b16 %v7378
    %v7783 = vunpack.c.l.b16 %v7379
    %v7784 = vunpack.c.h.b16 %v7379
    %v7785 = vunpack.c.l.b16 %v7380
    %v7786 = vunpack.c.h.b16 %v7380
    %v7787 = vunpack.c.l.b16 %v7381
    %v7788 = vunpack.c.h.b16 %v7381
    %v7789 = vunpack.c.l.b16 %v7382
    %v7790 = vunpack.c.h.b16 %v7382
    %v7791 = vunpack.c.l.b16 %v7383
    %v7792 = vunpack.c.h.b16 %v7383
    %v7793 = vunpack.c.l.b16 %v7384
    %v7794 = vunpack.c.h.b16 %v7384
    %v7795 = vunpack.c.l.b16 %v7385
    %v7796 = vunpack.c.h.b16 %v7385
    %v7797 = vunpack.c.l.b16 %v7386
    %v7798 = vunpack.c.h.b16 %v7386
    %v7799 = vunpack.c.l.b16 %v7387
    %v7800 = vunpack.c.h.b16 %v7387
    %v7801 = vunpack.c.l.b16 %v7388
    %v7802 = vunpack.c.h.b16 %v7388
    %v7803 = vunpack.c.l.b16 %v7389
    %v7804 = vunpack.c.h.b16 %v7389
    %v7805 = vunpack.c.l.b16 %v7390
    %v7806 = vunpack.c.h.b16 %v7390
    %v7807 = vunpack.c.l.b16 %v7391
    %v7808 = vunpack.c.h.b16 %v7391
    %v7809 = vunpack.c.l.b16 %v7392
    %v7810 = vunpack.c.h.b16 %v7392
    %v7811 = vunpack.c.l.b16 %v7393
    %v7812 = vunpack.c.h.b16 %v7393
    %v7813 = vunpack.c.l.b16 %v7394
    %v7814 = vunpack.c.h.b16 %v7394
    %v7815 = vunpack.c.l.b16 %v7395
    %v7816 = vunpack.c.h.b16 %v7395
    %v7817 = vunpack.c.l.b16 %v7396
    %v7818 = vunpack.c.h.b16 %v7396
    %v7819 = vunpack.c.l.b16 %v7397
    %v7820 = vunpack.c.h.b16 %v7397
    %v7821 = vunpack.c.l.b16 %v7398
    %v7822 = vunpack.c.h.b16 %v7398
    %v7823 = vunpack.c.l.b16 %v7399
    %v7824 = vunpack.c.h.b16 %v7399
    %v7825 = vunpack.c.l.b16 %v7400
    %v7826 = vunpack.c.h.b16 %v7400
    %v7827 = vunpack.c.l.b16 %v7401
    %v7828 = vunpack.c.h.b16 %v7401
    %v7829 = vunpack.c.l.b16 %v7402
    %v7830 = vunpack.c.h.b16 %v7402
    %v7831 = vunpack.c.l.b16 %v7403
    %v7832 = vunpack.c.h.b16 %v7403
    %v7833 = vunpack.c.l.b16 %v7404
    %v7834 = vunpack.c.h.b16 %v7404
    %v7835 = vunpack.c.l.b16 %v7405
    %v7836 = vunpack.c.h.b16 %v7405
    %v7837 = vunpack.c.l.b16 %v7406
    %v7838 = vunpack.c.h.b16 %v7406
    %v7839 = vunpack.c.l.b16 %v7407
    %v7840 = vunpack.c.h.b16 %v7407
    %v7841 = vunpack.c.l.b16 %v7408
    %v7842 = vunpack.c.h.b16 %v7408
    %v7843 = vunpack.c.l.b16 %v7409
    %v7844 = vunpack.c.h.b16 %v7409
    %v7845 = vunpack.c.l.b16 %v7410
    %v7846 = vunpack.c.h.b16 %v7410
    %v7847 = vunpack.c.l.b16 %v7411
    %v7848 = vunpack.c.h.b16 %v7411
    %v7849 = vunpack.c.l.b16 %v7412
    %v7850 = vunpack.c.h.b16 %v7412
    %v7851 = vunpack.c.l.b16 %v7413
    %v7852 = vunpack.c.h.b16 %v7413
    %v7853 = vunpack.c.l.b16 %v7414
    %v7854 = vunpack.c.h.b16 %v7414
    %v7855 = vunpack.c.l.b16 %v7415
    %v7856 = vunpack.c.h.b16 %v7415
    %v7857 = vunpack.c.l.b16 %v7416
    %v7858 = vunpack.c.h.b16 %v7416
    %v7859 = vunpack.c.l.b16 %v7417
    %v7860 = vunpack.c.h.b16 %v7417
    %v7861 = vunpack.c.l.b16 %v7418
    %v7862 = vunpack.c.h.b16 %v7418
    %v7863 = vunpack.c.l.b16 %v7419
    %v7864 = vunpack.c.h.b16 %v7419
    %v7865 = vunpack.c.l.b16 %v7420
    %v7866 = vunpack.c.h.b16 %v7420
    %v7867 = vunpack.c.l.b16 %v7421
    %v7868 = vunpack.c.h.b16 %v7421
    %v7869 = vunpack.c.l.b16 %v7422
    %v7870 = vunpack.c.h.b16 %v7422
    %v7871 = vunpack.c.l.b16 %v7423
    %v7872 = vunpack.c.h.b16 %v7423
    %v7873 = vunpack.c.l.b16 %v7424
    %v7874 = vunpack.c.h.b16 %v7424
    %v7875 = vunpack.c.l.b16 %v7425
    %v7876 = vunpack.c.h.b16 %v7425
    %v7877 = vunpack.c.l.b16 %v7426
    %v7878 = vunpack.c.h.b16 %v7426
    %v7879 = vunpack.c.l.b16 %v7427
    %v7880 = vunpack.c.h.b16 %v7427
    %v7881 = vunpack.c.l.b16 %v7428
    %v7882 = vunpack.c.h.b16 %v7428
    %v7883 = vunpack.c.l.b16 %v7429
    %v7884 = vunpack.c.h.b16 %v7429
    %v7885 = vunpack.c.l.b16 %v7430
    %v7886 = vunpack.c.h.b16 %v7430
    %v7887 = vunpack.c.l.b16 %v7431
    %v7888 = vunpack.c.h.b16 %v7431
    %v7889 = vunpack.c.l.b16 %v7432
    %v7890 = vunpack.c.h.b16 %v7432
    %v7891 = vunpack.c.l.b16 %v7433
    %v7892 = vunpack.c.h.b16 %v7433
    %v7893 = vunpack.c.l.b16 %v7434
    %v7894 = vunpack.c.h.b16 %v7434
    %v7895 = vunpack.c.l.b16 %v7435
    %v7896 = vunpack.c.h.b16 %v7435
    %v7897 = vunpack.c.l.b16 %v7436
    %v7898 = vunpack.c.h.b16 %v7436
    %v7899 = vunpack.c.l.b16 %v7437
    %v7900 = vunpack.c.h.b16 %v7437
    %v7901 = vunpack.c.l.b16 %v7438
    %v7902 = vunpack.c.h.b16 %v7438
    %v7903 = vunpack.c.l.b16 %v7439
    %v7904 = vunpack.c.h.b16 %v7439
    %v7905 = vunpack.c.l.b16 %v7440
    %v7906 = vunpack.c.h.b16 %v7440
    %v7907 = vunpack.c.l.b16 %v7441
    %v7908 = vunpack.c.h.b16 %v7441
    %v7909 = vunpack.c.l.b16 %v7442
    %v7910 = vunpack.c.h.b16 %v7442
    %v7911 = vunpack.c.l.b16 %v7443
    %v7912 = vunpack.c.h.b16 %v7443
    %v7913 = vunpack.c.l.b16 %v7444
    %v7914 = vunpack.c.h.b16 %v7444
    %v7915 = vunpack.c.l.b16 %v7445
    %v7916 = vunpack.c.h.b16 %v7445
    %v7917 = vunpack.c.l.b16 %v7446
    %v7918 = vunpack.c.h.b16 %v7446
    %v7919 = vunpack.c.l.b16 %v7447
    %v7920 = vunpack.c.h.b16 %v7447
    %v7921 = vunpack.c.l.b16 %v7448
    %v7922 = vunpack.c.h.b16 %v7448
    %v7923 = vunpack.c.l.b16 %v7449
    %v7924 = vunpack.c.h.b16 %v7449
    %v7925 = vunpack.c.l.b16 %v7450
    %v7926 = vunpack.c.h.b16 %v7450
    %v7927 = vunpack.c.l.b16 %v7451
    %v7928 = vunpack.c.h.b16 %v7451
    %v7929 = vunpack.c.l.b16 %v7452
    %v7930 = vunpack.c.h.b16 %v7452
    %v7931 = vunpack.c.l.b16 %v7453
    %v7932 = vunpack.c.h.b16 %v7453
    %v7933 = vunpack.c.l.b16 %v7454
    %v7934 = vunpack.c.h.b16 %v7454
    %v7935 = vunpack.c.l.b16 %v7455
    %v7936 = vunpack.c.h.b16 %v7455
    %v7937 = vunpack.c.l.b16 %v7456
    %v7938 = vunpack.c.h.b16 %v7456
    %v7939 = vunpack.c.l.b16 %v7457
    %v7940 = vunpack.c.h.b16 %v7457
    %v7941 = vunpack.c.l.b16 %v7458
    %v7942 = vunpack.c.h.b16 %v7458
    %v7943 = vunpack.c.l.b16 %v7459
    %v7944 = vunpack.c.h.b16 %v7459
    %v7945 = vunpack.c.l.b16 %v7460
    %v7946 = vunpack.c.h.b16 %v7460
    %v7947 = vunpack.c.l.b16 %v7461
    %v7948 = vunpack.c.h.b16 %v7461
    %v7949 = vunpack.c.l.b16 %v7462
    %v7950 = vunpack.c.h.b16 %v7462
    %v7951 = vunpack.c.l.b16 %v7463
    %v7952 = vunpack.c.h.b16 %v7463
    %v7953 = vunpack.c.l.b16 %v7464
    %v7954 = vunpack.c.h.b16 %v7464
    %v7955 = vunpack.c.l.b16 %v7465
    %v7956 = vunpack.c.h.b16 %v7465
    %v7957 = vunpack.c.l.b16 %v7466
    %v7958 = vunpack.c.h.b16 %v7466
    %v7959 = vunpack.c.l.b16 %v7467
    %v7960 = vunpack.c.h.b16 %v7467
    %v7961 = vunpack.c.l.b16 %v7468
    %v7962 = vunpack.c.h.b16 %v7468
    %v7963 = vunpack.c.l.b16 %v7469
    %v7964 = vunpack.c.h.b16 %v7469
    %v7965 = vunpack.c.l.b16 %v7470
    %v7966 = vunpack.c.h.b16 %v7470
    %v7967 = vunpack.c.l.b16 %v7471
    %v7968 = vunpack.c.h.b16 %v7471
    %v7969 = vunpack.c.l.b16 %v7472
    %v7970 = vunpack.c.h.b16 %v7472
    %v7971 = vunpack.c.l.b16 %v7473
    %v7972 = vunpack.c.h.b16 %v7473
    %v7973 = vunpack.c.l.b16 %v7474
    %v7974 = vunpack.c.h.b16 %v7474
    %v7975 = vunpack.c.l.b16 %v7475
    %v7976 = vunpack.c.h.b16 %v7475
    %v7977 = vunpack.c.l.b16 %v7476
    %v7978 = vunpack.c.h.b16 %v7476
    %v7979 = vunpack.c.l.b16 %v7477
    %v7980 = vunpack.c.h.b16 %v7477
    %v7981 = vunpack.c.l.b16 %v7478
    %v7982 = vunpack.c.h.b16 %v7478
    %v7983 = vunpack.c.l.b16 %v7479
    %v7984 = vunpack.c.h.b16 %v7479
    %v7985 = vunpack.c.l.b16 %v7480
    %v7986 = vunpack.c.h.b16 %v7480
    %v7987 = vunpack.c.l.b16 %v7481
    %v7988 = vunpack.c.h.b16 %v7481
    %v7989 = vunpack.c.l.b16 %v7482
    %v7990 = vunpack.c.h.b16 %v7482
    %v7991 = vunpack.c.l.b16 %v7483
    %v7992 = vunpack.c.h.b16 %v7483
    %v7993 = vunpack.c.l.b16 %v7484
    %v7994 = vunpack.c.h.b16 %v7484
    %v7995 = vunpack.c.l.b16 %v7485
    %v7996 = vunpack.c.h.b16 %v7485
    %v7997 = vunpack.c.l.b16 %v7486
    %v7998 = vunpack.c.h.b16 %v7486
    %v7999 = vunpack.c.l.b16 %v7487
    %v8000 = vunpack.c.h.b16 %v7487
    %v8001 = vunpack.c.l.b16 %v7488
    %v8002 = vunpack.c.h.b16 %v7488
    %v8003 = vpack.c.b16 %v7671, %v7667
    %v8004 = vpack.c.b16 %v7672, %v7668
    %v8005 = vpack.c.b16 %v7673, %v7669
    %v8006 = vpack.c.b16 %v7674, %v7670
    %v8007 = vpack.c.b16 %v7679, %v7675
    %v8008 = vpack.c.b16 %v7680, %v7676
    %v8009 = vpack.c.b16 %v7681, %v7677
    %v8010 = vpack.c.b16 %v7682, %v7678
    %v8011 = vpack.c.b16 %v7687, %v7683
    %v8012 = vpack.c.b16 %v7688, %v7684
    %v8013 = vpack.c.b16 %v7689, %v7685
    %v8014 = vpack.c.b16 %v7690, %v7686
    %v8015 = vpack.c.b16 %v7695, %v7691
    %v8016 = vpack.c.b16 %v7696, %v7692
    %v8017 = vpack.c.b16 %v7697, %v7693
    %v8018 = vpack.c.b16 %v7698, %v7694
    %v8019 = vpack.c.b16 %v7703, %v7699
    %v8020 = vpack.c.b16 %v7704, %v7700
    %v8021 = vpack.c.b16 %v7705, %v7701
    %v8022 = vpack.c.b16 %v7706, %v7702
    %v8023 = vpack.c.b16 %v7711, %v7707
    %v8024 = vpack.c.b16 %v7712, %v7708
    %v8025 = vpack.c.b16 %v7713, %v7709
    %v8026 = vpack.c.b16 %v7714, %v7710
    %v8027 = vpack.c.b16 %v7719, %v7715
    %v8028 = vpack.c.b16 %v7720, %v7716
    %v8029 = vpack.c.b16 %v7721, %v7717
    %v8030 = vpack.c.b16 %v7722, %v7718
    %v8031 = vpack.c.b16 %v7727, %v7723
    %v8032 = vpack.c.b16 %v7728, %v7724
    %v8033 = vpack.c.b16 %v7729, %v7725
    %v8034 = vpack.c.b16 %v7730, %v7726
    %v8035 = vpack.c.b16 %v7735, %v7731
    %v8036 = vpack.c.b16 %v7736, %v7732
    %v8037 = vpack.c.b16 %v7737, %v7733
    %v8038 = vpack.c.b16 %v7738, %v7734
    %v8039 = vpack.c.b16 %v7743, %v7739
    %v8040 = vpack.c.b16 %v7744, %v7740
    %v8041 = vpack.c.b16 %v7745, %v7741
    %v8042 = vpack.c.b16 %v7746, %v7742
    %v8043 = vpack.c.b16 %v7751, %v7747
    %v8044 = vpack.c.b16 %v7752, %v7748
    %v8045 = vpack.c.b16 %v7753, %v7749
    %v8046 = vpack.c.b16 %v7754, %v7750
    %v8047 = vpack.c.b16 %v7759, %v7755
    %v8048 = vpack.c.b16 %v7760, %v7756
    %v8049 = vpack.c.b16 %v7761, %v7757
    %v8050 = vpack.c.b16 %v7762, %v7758
    %v8051 = vpack.c.b16 %v7767, %v7763
    %v8052 = vpack.c.b16 %v7768, %v7764
    %v8053 = vpack.c.b16 %v7769, %v7765
    %v8054 = vpack.c.b16 %v7770, %v7766
    %v8055 = vpack.c.b16 %v7775, %v7771
    %v8056 = vpack.c.b16 %v7776, %v7772
    %v8057 = vpack.c.b16 %v7777, %v7773
    %v8058 = vpack.c.b16 %v7778, %v7774
    %v8059 = vpack.c.b16 %v7783, %v7779
    %v8060 = vpack.c.b16 %v7784, %v7780
    %v8061 = vpack.c.b16 %v7785, %v7781
    %v8062 = vpack.c.b16 %v7786, %v7782
    %v8063 = vpack.c.b16 %v7791, %v7787
    %v8064 = vpack.c.b16 %v7792, %v7788
    %v8065 = vpack.c.b16 %v7793, %v7789
    %v8066 = vpack.c.b16 %v7794, %v7790
    %v8067 = vpack.c.b16 %v7799, %v7795
    %v8068 = vpack.c.b16 %v7800, %v7796
    %v8069 = vpack.c.b16 %v7801, %v7797
    %v8070 = vpack.c.b16 %v7802, %v7798
    %v8071 = vpack.c.b16 %v7807, %v7803
    %v8072 = vpack.c.b16 %v7808, %v7804
    %v8073 = vpack.c.b16 %v7809, %v7805
    %v8074 = vpack.c.b16 %v7810, %v7806
    %v8075 = vpack.c.b16 %v7815, %v7811
    %v8076 = vpack.c.b16 %v7816, %v7812
    %v8077 = vpack.c.b16 %v7817, %v7813
    %v8078 = vpack.c.b16 %v7818, %v7814
    %v8079 = vpack.c.b16 %v7823, %v7819
    %v8080 = vpack.c.b16 %v7824, %v7820
    %v8081 = vpack.c.b16 %v7825, %v7821
    %v8082 = vpack.c.b16 %v7826, %v7822
    %v8083 = vpack.c.b16 %v7831, %v7827
    %v8084 = vpack.c.b16 %v7832, %v7828
    %v8085 = vpack.c.b16 %v7833, %v7829
    %v8086 = vpack.c.b16 %v7834, %v7830
    %v8087 = vpack.c.b16 %v7839, %v7835
    %v8088 = vpack.c.b16 %v7840, %v7836
    %v8089 = vpack.c.b16 %v7841, %v7837
    %v8090 = vpack.c.b16 %v7842, %v7838
    %v8091 = vpack.c.b16 %v7847, %v7843
    %v8092 = vpack.c.b16 %v7848, %v7844
    %v8093 = vpack.c.b16 %v7849, %v7845
    %v8094 = vpack.c.b16 %v7850, %v7846
    %v8095 = vpack.c.b16 %v7855, %v7851
    %v8096 = vpack.c.b16 %v7856, %v7852
    %v8097 = vpack.c.b16 %v7857, %v7853
    %v8098 = vpack.c.b16 %v7858, %v7854
    %v8099 = vpack.c.b16 %v7863, %v7859
    %v8100 = vpack.c.b16 %v7864, %v7860
    %v8101 = vpack.c.b16 %v7865, %v7861
    %v8102 = vpack.c.b16 %v7866, %v7862
    %v8103 = vpack.c.b16 %v7871, %v7867
    %v8104 = vpack.c.b16 %v7872, %v7868
    %v8105 = vpack.c.b16 %v7873, %v7869
    %v8106 = vpack.c.b16 %v7874, %v7870
    %v8107 = vpack.c.b16 %v7879, %v7875
    %v8108 = vpack.c.b16 %v7880, %v7876
    %v8109 = vpack.c.b16 %v7881, %v7877
    %v8110 = vpack.c.b16 %v7882, %v7878
    %v8111 = vpack.c.b16 %v7887, %v7883
    %v8112 = vpack.c.b16 %v7888, %v7884
    %v8113 = vpack.c.b16 %v7889, %v7885
    %v8114 = vpack.c.b16 %v7890, %v7886
    %v8115 = vpack.c.b16 %v7895, %v7891
    %v8116 = vpack.c.b16 %v7896, %v7892
    %v8117 = vpack.c.b16 %v7897, %v7893
    %v8118 = vpack.c.b16 %v7898, %v7894
    %v8119 = vpack.c.b16 %v7903, %v7899
    %v8120 = vpack.c.b16 %v7904, %v7900
    %v8121 = vpack.c.b16 %v7905, %v7901
    %v8122 = vpack.c.b16 %v7906, %v7902
    %v8123 = vpack.c.b16 %v7911, %v7907
    %v8124 = vpack.c.b16 %v7912, %v7908
    %v8125 = vpack.c.b16 %v7913, %v7909
    %v8126 = vpack.c.b16 %v7914, %v7910
    %v8127 = vpack.c.b16 %v7919, %v7915
    %v8128 = vpack.c.b16 %v7920, %v7916
    %v8129 = vpack.c.b16 %v7921, %v7917
    %v8130 = vpack.c.b16 %v7922, %v7918
    %v8131 = vpack.c.b16 %v7927, %v7923
    %v8132 = vpack.c.b16 %v7928, %v7924
    %v8133 = vpack.c.b16 %v7929, %v7925
    %v8134 = vpack.c.b16 %v7930, %v7926
    %v8135 = vpack.c.b16 %v7935, %v7931
    %v8136 = vpack.c.b16 %v7936, %v7932
    %v8137 = vpack.c.b16 %v7937, %v7933
    %v8138 = vpack.c.b16 %v7938, %v7934
    %v8139 = vpack.c.b16 %v7943, %v7939
    %v8140 = vpack.c.b16 %v7944, %v7940
    %v8141 = vpack.c.b16 %v7945, %v7941
    %v8142 = vpack.c.b16 %v7946, %v7942
    %v8143 = vpack.c.b16 %v7951, %v7947
    %v8144 = vpack.c.b16 %v7952, %v7948
    %v8145 = vpack.c.b16 %v7953, %v7949
    %v8146 = vpack.c.b16 %v7954, %v7950
    %v8147 = vpack.c.b16 %v7959, %v7955
    %v8148 = vpack.c.b16 %v7960, %v7956
    %v8149 = vpack.c.b16 %v7961, %v7957
    %v8150 = vpack.c.b16 %v7962, %v7958
    %v8151 = vpack.c.b16 %v7967, %v7963
    %v8152 = vpack.c.b16 %v7968, %v7964
    %v8153 = vpack.c.b16 %v7969, %v7965
    %v8154 = vpack.c.b16 %v7970, %v7966
    %v8155 = vpack.c.b16 %v7975, %v7971
    %v8156 = vpack.c.b16 %v7976, %v7972
    %v8157 = vpack.c.b16 %v7977, %v7973
    %v8158 = vpack.c.b16 %v7978, %v7974
    %v8159 = vpack.c.b16 %v7983, %v7979
    %v8160 = vpack.c.b16 %v7984, %v7980
    %v8161 = vpack.c.b16 %v7985, %v7981
    %v8162 = vpack.c.b16 %v7986, %v7982
    %v8163 = vpack.c.b16 %v7991, %v7987
    %v8164 = vpack.c.b16 %v7992, %v7988
    %v8165 = vpack.c.b16 %v7993, %v7989
    %v8166 = vpack.c.b16 %v7994, %v7990
    %v8167 = vpack.c.b16 %v7999, %v7995
    %v8168 = vpack.c.b16 %v8000, %v7996
    %v8169 = vpack.c.b16 %v8001, %v7997
    %v8170 = vpack.c.b16 %v8002, %v7998
    %v8340 = vsel %vm2898, %v7278, 0
    %v8343 = vsel %vm2898, %v7284, 0
    %v8346 = vsel %vm2898, %v7290, 0
    %v8349 = vsel %vm2898, %v7296, 0
    %v8352 = vsel %vm2898, %v7302, 0
    %v8355 = vsel %vm2898, %v7308, 0
    %v8358 = vsel %vm2898, %v7314, 0
    %v8361 = vsel %vm2898, %v7320, 0
    %8363 = vmatpush.bf16.msra.mxu0 %v8031
    %8364 = vmatpush.bf16.msra.mxu0 %v8027
    %8365 = vmatpush.bf16.msra.mxu0 %v8023
    %8366 = vmatpush.bf16.msra.mxu0 %v8019
    %8367 = vmatpush.bf16.msra.mxu0 %v8015
    %8368 = vmatpush.bf16.msra.mxu0 %v8011
    %8369 = vmatpush.bf16.msra.mxu0 %v8007
    %8370 = vmatpush.bf16.msra.mxu0 %v8003
    %8371 = vmatmul.bf16.gmra.mxu0 %v7273
    %v8372 = vpop.f32.mrf.mxu0
    %v8373 = vadd.f32 %v7491, %v8372
    %v8374 = vpop.f32.mrf.mxu0
    %v8375 = vadd.f32 %v7491, %v8374
    %8376 = vmatmul.bf16.gmra.mxu0 %v7279
    %v8377 = vpop.f32.mrf.mxu0
    %v8378 = vadd.f32 %v7491, %v8377
    %v8379 = vpop.f32.mrf.mxu0
    %v8380 = vadd.f32 %v7491, %v8379
    %8381 = vmatmul.bf16.gmra.mxu0 %v7285
    %v8382 = vpop.f32.mrf.mxu0
    %v8383 = vadd.f32 %v7491, %v8382
    %v8384 = vpop.f32.mrf.mxu0
    %v8385 = vadd.f32 %v7491, %v8384
    %8386 = vmatmul.bf16.gmra.mxu0 %v7291
    %v8387 = vpop.f32.mrf.mxu0
    %v8388 = vadd.f32 %v7491, %v8387
    %v8389 = vpop.f32.mrf.mxu0
    %v8390 = vadd.f32 %v7491, %v8389
    %8391 = vmatmul.bf16.gmra.mxu0 %v7297
    %v8392 = vpop.f32.mrf.mxu0
    %v8393 = vadd.f32 %v7491, %v8392
    %v8394 = vpop.f32.mrf.mxu0
    %v8395 = vadd.f32 %v7491, %v8394
    %8396 = vmatmul.bf16.gmra.mxu0 %v7303
    %v8397 = vpop.f32.mrf.mxu0
    %v8398 = vadd.f32 %v7491, %v8397
    %v8399 = vpop.f32.mrf.mxu0
    %v8400 = vadd.f32 %v7491, %v8399
    %8401 = vmatmul.bf16.gmra.mxu0 %v7309
    %v8402 = vpop.f32.mrf.mxu0
    %v8403 = vadd.f32 %v7491, %v8402
    %v8404 = vpop.f32.mrf.mxu0
    %v8405 = vadd.f32 %v7491, %v8404
    %8406 = vmatmul.bf16.gmra.mxu0 %v7315
    %v8407 = vpop.f32.mrf.mxu0
    %v8408 = vadd.f32 %v7491, %v8407
    %v8409 = vpop.f32.mrf.mxu0
    %v8410 = vadd.f32 %v7491, %v8409
    %8411 = vdwg.mxu0
    %8412 = vmatpush.bf16.msra.mxu0 %v8063
    %8413 = vmatpush.bf16.msra.mxu0 %v8059
    %8414 = vmatpush.bf16.msra.mxu0 %v8055
    %8415 = vmatpush.bf16.msra.mxu0 %v8051
    %8416 = vmatpush.bf16.msra.mxu0 %v8047
    %8417 = vmatpush.bf16.msra.mxu0 %v8043
    %8418 = vmatpush.bf16.msra.mxu0 %v8039
    %8419 = vmatpush.bf16.msra.mxu0 %v8035
    %8420 = vmatmul.bf16.gmra.mxu0 %v7274
    %v8421 = vpop.f32.mrf.mxu0
    %v8422 = vadd.f32 %v8373, %v8421
    %v8423 = vpop.f32.mrf.mxu0
    %v8424 = vadd.f32 %v8375, %v8423
    %8425 = vmatmul.bf16.gmra.mxu0 %v7280
    %v8426 = vpop.f32.mrf.mxu0
    %v8427 = vadd.f32 %v8378, %v8426
    %v8428 = vpop.f32.mrf.mxu0
    %v8429 = vadd.f32 %v8380, %v8428
    %8430 = vmatmul.bf16.gmra.mxu0 %v7286
    %v8431 = vpop.f32.mrf.mxu0
    %v8432 = vadd.f32 %v8383, %v8431
    %v8433 = vpop.f32.mrf.mxu0
    %v8434 = vadd.f32 %v8385, %v8433
    %8435 = vmatmul.bf16.gmra.mxu0 %v7292
    %v8436 = vpop.f32.mrf.mxu0
    %v8437 = vadd.f32 %v8388, %v8436
    %v8438 = vpop.f32.mrf.mxu0
    %v8439 = vadd.f32 %v8390, %v8438
    %8440 = vmatmul.bf16.gmra.mxu0 %v7298
    %v8441 = vpop.f32.mrf.mxu0
    %v8442 = vadd.f32 %v8393, %v8441
    %v8443 = vpop.f32.mrf.mxu0
    %v8444 = vadd.f32 %v8395, %v8443
    %8445 = vmatmul.bf16.gmra.mxu0 %v7304
    %v8446 = vpop.f32.mrf.mxu0
    %v8447 = vadd.f32 %v8398, %v8446
    %v8448 = vpop.f32.mrf.mxu0
    %v8449 = vadd.f32 %v8400, %v8448
    %8450 = vmatmul.bf16.gmra.mxu0 %v7310
    %v8451 = vpop.f32.mrf.mxu0
    %v8452 = vadd.f32 %v8403, %v8451
    %v8453 = vpop.f32.mrf.mxu0
    %v8454 = vadd.f32 %v8405, %v8453
    %8455 = vmatmul.bf16.gmra.mxu0 %v7316
    %v8456 = vpop.f32.mrf.mxu0
    %v8457 = vadd.f32 %v8408, %v8456
    %v8458 = vpop.f32.mrf.mxu0
    %v8459 = vadd.f32 %v8410, %v8458
    %8460 = vdwg.mxu0
    %8461 = vmatpush.bf16.msra.mxu0 %v8095
    %8462 = vmatpush.bf16.msra.mxu0 %v8091
    %8463 = vmatpush.bf16.msra.mxu0 %v8087
    %8464 = vmatpush.bf16.msra.mxu0 %v8083
    %8465 = vmatpush.bf16.msra.mxu0 %v8079
    %8466 = vmatpush.bf16.msra.mxu0 %v8075
    %8467 = vmatpush.bf16.msra.mxu0 %v8071
    %8468 = vmatpush.bf16.msra.mxu0 %v8067
    %8469 = vmatmul.bf16.gmra.mxu0 %v7275
    %v8470 = vpop.f32.mrf.mxu0
    %v8471 = vadd.f32 %v8422, %v8470
    %v8472 = vpop.f32.mrf.mxu0
    %v8473 = vadd.f32 %v8424, %v8472
    %8474 = vmatmul.bf16.gmra.mxu0 %v7281
    %v8475 = vpop.f32.mrf.mxu0
    %v8476 = vadd.f32 %v8427, %v8475
    %v8477 = vpop.f32.mrf.mxu0
    %v8478 = vadd.f32 %v8429, %v8477
    %8479 = vmatmul.bf16.gmra.mxu0 %v7287
    %v8480 = vpop.f32.mrf.mxu0
    %v8481 = vadd.f32 %v8432, %v8480
    %v8482 = vpop.f32.mrf.mxu0
    %v8483 = vadd.f32 %v8434, %v8482
    %8484 = vmatmul.bf16.gmra.mxu0 %v7293
    %v8485 = vpop.f32.mrf.mxu0
    %v8486 = vadd.f32 %v8437, %v8485
    %v8487 = vpop.f32.mrf.mxu0
    %v8488 = vadd.f32 %v8439, %v8487
    %8489 = vmatmul.bf16.gmra.mxu0 %v7299
    %v8490 = vpop.f32.mrf.mxu0
    %v8491 = vadd.f32 %v8442, %v8490
    %v8492 = vpop.f32.mrf.mxu0
    %v8493 = vadd.f32 %v8444, %v8492
    %8494 = vmatmul.bf16.gmra.mxu0 %v7305
    %v8495 = vpop.f32.mrf.mxu0
    %v8496 = vadd.f32 %v8447, %v8495
    %v8497 = vpop.f32.mrf.mxu0
    %v8498 = vadd.f32 %v8449, %v8497
    %8499 = vmatmul.bf16.gmra.mxu0 %v7311
    %v8500 = vpop.f32.mrf.mxu0
    %v8501 = vadd.f32 %v8452, %v8500
    %v8502 = vpop.f32.mrf.mxu0
    %v8503 = vadd.f32 %v8454, %v8502
    %8504 = vmatmul.bf16.gmra.mxu0 %v7317
    %v8505 = vpop.f32.mrf.mxu0
    %v8506 = vadd.f32 %v8457, %v8505
    %v8507 = vpop.f32.mrf.mxu0
    %v8508 = vadd.f32 %v8459, %v8507
    %8509 = vdwg.mxu0
    %8510 = vmatpush.bf16.msra.mxu0 %v8127
    %8511 = vmatpush.bf16.msra.mxu0 %v8123
    %8512 = vmatpush.bf16.msra.mxu0 %v8119
    %8513 = vmatpush.bf16.msra.mxu0 %v8115
    %8514 = vmatpush.bf16.msra.mxu0 %v8111
    %8515 = vmatpush.bf16.msra.mxu0 %v8107
    %8516 = vmatpush.bf16.msra.mxu0 %v8103
    %8517 = vmatpush.bf16.msra.mxu0 %v8099
    %8518 = vmatmul.bf16.gmra.mxu0 %v7276
    %v8519 = vpop.f32.mrf.mxu0
    %v8520 = vadd.f32 %v8471, %v8519
    %v8521 = vpop.f32.mrf.mxu0
    %v8522 = vadd.f32 %v8473, %v8521
    %8523 = vmatmul.bf16.gmra.mxu0 %v7282
    %v8524 = vpop.f32.mrf.mxu0
    %v8525 = vadd.f32 %v8476, %v8524
    %v8526 = vpop.f32.mrf.mxu0
    %v8527 = vadd.f32 %v8478, %v8526
    %8528 = vmatmul.bf16.gmra.mxu0 %v7288
    %v8529 = vpop.f32.mrf.mxu0
    %v8530 = vadd.f32 %v8481, %v8529
    %v8531 = vpop.f32.mrf.mxu0
    %v8532 = vadd.f32 %v8483, %v8531
    %8533 = vmatmul.bf16.gmra.mxu0 %v7294
    %v8534 = vpop.f32.mrf.mxu0
    %v8535 = vadd.f32 %v8486, %v8534
    %v8536 = vpop.f32.mrf.mxu0
    %v8537 = vadd.f32 %v8488, %v8536
    %8538 = vmatmul.bf16.gmra.mxu0 %v7300
    %v8539 = vpop.f32.mrf.mxu0
    %v8540 = vadd.f32 %v8491, %v8539
    %v8541 = vpop.f32.mrf.mxu0
    %v8542 = vadd.f32 %v8493, %v8541
    %8543 = vmatmul.bf16.gmra.mxu0 %v7306
    %v8544 = vpop.f32.mrf.mxu0
    %v8545 = vadd.f32 %v8496, %v8544
    %v8546 = vpop.f32.mrf.mxu0
    %v8547 = vadd.f32 %v8498, %v8546
    %8548 = vmatmul.bf16.gmra.mxu0 %v7312
    %v8549 = vpop.f32.mrf.mxu0
    %v8550 = vadd.f32 %v8501, %v8549
    %v8551 = vpop.f32.mrf.mxu0
    %v8552 = vadd.f32 %v8503, %v8551
    %8553 = vmatmul.bf16.gmra.mxu0 %v7318
    %v8554 = vpop.f32.mrf.mxu0
    %v8555 = vadd.f32 %v8506, %v8554
    %v8556 = vpop.f32.mrf.mxu0
    %v8557 = vadd.f32 %v8508, %v8556
    %8558 = vdwg.mxu0
    %8559 = vmatpush.bf16.msra.mxu0 %v8159
    %8560 = vmatpush.bf16.msra.mxu0 %v8155
    %8561 = vmatpush.bf16.msra.mxu0 %v8151
    %8562 = vmatpush.bf16.msra.mxu0 %v8147
    %8563 = vmatpush.bf16.msra.mxu0 %v8143
    %8564 = vmatpush.bf16.msra.mxu0 %v8139
    %8565 = vmatpush.bf16.msra.mxu0 %v8135
    %8566 = vmatpush.bf16.msra.mxu0 %v8131
    %8567 = vmatmul.bf16.gmra.mxu0 %v7277
    %v8568 = vpop.f32.mrf.mxu0
    %v8569 = vadd.f32 %v8520, %v8568
    %v8570 = vpop.f32.mrf.mxu0
    %v8571 = vadd.f32 %v8522, %v8570
    %8572 = vmatmul.bf16.gmra.mxu0 %v7283
    %v8573 = vpop.f32.mrf.mxu0
    %v8574 = vadd.f32 %v8525, %v8573
    %v8575 = vpop.f32.mrf.mxu0
    %v8576 = vadd.f32 %v8527, %v8575
    %8577 = vmatmul.bf16.gmra.mxu0 %v7289
    %v8578 = vpop.f32.mrf.mxu0
    %v8579 = vadd.f32 %v8530, %v8578
    %v8580 = vpop.f32.mrf.mxu0
    %v8581 = vadd.f32 %v8532, %v8580
    %8582 = vmatmul.bf16.gmra.mxu0 %v7295
    %v8583 = vpop.f32.mrf.mxu0
    %v8584 = vadd.f32 %v8535, %v8583
    %v8585 = vpop.f32.mrf.mxu0
    %v8586 = vadd.f32 %v8537, %v8585
    %8587 = vmatmul.bf16.gmra.mxu0 %v7301
    %v8588 = vpop.f32.mrf.mxu0
    %v8589 = vadd.f32 %v8540, %v8588
    %v8590 = vpop.f32.mrf.mxu0
    %v8591 = vadd.f32 %v8542, %v8590
    %8592 = vmatmul.bf16.gmra.mxu0 %v7307
    %v8593 = vpop.f32.mrf.mxu0
    %v8594 = vadd.f32 %v8545, %v8593
    %v8595 = vpop.f32.mrf.mxu0
    %v8596 = vadd.f32 %v8547, %v8595
    %8597 = vmatmul.bf16.gmra.mxu0 %v7313
    %v8598 = vpop.f32.mrf.mxu0
    %v8599 = vadd.f32 %v8550, %v8598
    %v8600 = vpop.f32.mrf.mxu0
    %v8601 = vadd.f32 %v8552, %v8600
    %8602 = vmatmul.bf16.gmra.mxu0 %v7319
    %v8603 = vpop.f32.mrf.mxu0
    %v8604 = vadd.f32 %v8555, %v8603
    %v8605 = vpop.f32.mrf.mxu0
    %v8606 = vadd.f32 %v8557, %v8605
    %8607 = vdwg.mxu0
    %8608 = vmatpush.bf16.msra.mxu0 0
    %8609 = vmatpush.bf16.msra.mxu0 0
    %8610 = vmatpush.bf16.msra.mxu0 0
    %8611 = vmatpush.bf16.msra.mxu0 0
    %8612 = vmatpush.bf16.msra.mxu0 0
    %8613 = vmatpush.bf16.msra.mxu0 0
    %8614 = vmatpush.bf16.msra.mxu0 %v8167
    %8615 = vmatpush.bf16.msra.mxu0 %v8163
    %8616 = vmatmul.bf16.gmra.mxu0 %v8340
    %v8617 = vpop.f32.mrf.mxu0
    %v8618 = vadd.f32 %v8569, %v8617
    %v8619 = vpop.f32.mrf.mxu0
    %v8620 = vadd.f32 %v8571, %v8619
    %8621 = vmatmul.bf16.gmra.mxu0 %v8343
    %v8622 = vpop.f32.mrf.mxu0
    %v8623 = vadd.f32 %v8574, %v8622
    %v8624 = vpop.f32.mrf.mxu0
    %v8625 = vadd.f32 %v8576, %v8624
    %8626 = vmatmul.bf16.gmra.mxu0 %v8346
    %v8627 = vpop.f32.mrf.mxu0
    %v8628 = vadd.f32 %v8579, %v8627
    %v8629 = vpop.f32.mrf.mxu0
    %v8630 = vadd.f32 %v8581, %v8629
    %8631 = vmatmul.bf16.gmra.mxu0 %v8349
    %v8632 = vpop.f32.mrf.mxu0
    %v8633 = vadd.f32 %v8584, %v8632
    %v8634 = vpop.f32.mrf.mxu0
    %v8635 = vadd.f32 %v8586, %v8634
    %8636 = vmatmul.bf16.gmra.mxu0 %v8352
    %v8637 = vpop.f32.mrf.mxu0
    %v8638 = vadd.f32 %v8589, %v8637
    %v8639 = vpop.f32.mrf.mxu0
    %v8640 = vadd.f32 %v8591, %v8639
    %8641 = vmatmul.bf16.gmra.mxu0 %v8355
    %v8642 = vpop.f32.mrf.mxu0
    %v8643 = vadd.f32 %v8594, %v8642
    %v8644 = vpop.f32.mrf.mxu0
    %v8645 = vadd.f32 %v8596, %v8644
    %8646 = vmatmul.bf16.gmra.mxu0 %v8358
    %v8647 = vpop.f32.mrf.mxu0
    %v8648 = vadd.f32 %v8599, %v8647
    %v8649 = vpop.f32.mrf.mxu0
    %v8650 = vadd.f32 %v8601, %v8649
    %8651 = vmatmul.bf16.gmra.mxu0 %v8361
    %v8652 = vpop.f32.mrf.mxu0
    %v8653 = vadd.f32 %v8604, %v8652
    %v8654 = vpop.f32.mrf.mxu0
    %v8655 = vadd.f32 %v8606, %v8654
    %8656 = vdwg.mxu0
    %8657 = vmatpush.bf16.msra.mxu0 %v8032
    %8658 = vmatpush.bf16.msra.mxu0 %v8028
    %8659 = vmatpush.bf16.msra.mxu0 %v8024
    %8660 = vmatpush.bf16.msra.mxu0 %v8020
    %8661 = vmatpush.bf16.msra.mxu0 %v8016
    %8662 = vmatpush.bf16.msra.mxu0 %v8012
    %8663 = vmatpush.bf16.msra.mxu0 %v8008
    %8664 = vmatpush.bf16.msra.mxu0 %v8004
    %8665 = vmatmul.bf16.gmra.mxu0 %v7273
    %v8666 = vpop.f32.mrf.mxu0
    %v8667 = vadd.f32 %v7492, %v8666
    %v8668 = vpop.f32.mrf.mxu0
    %v8669 = vadd.f32 %v7492, %v8668
    %8670 = vmatmul.bf16.gmra.mxu0 %v7279
    %v8671 = vpop.f32.mrf.mxu0
    %v8672 = vadd.f32 %v7492, %v8671
    %v8673 = vpop.f32.mrf.mxu0
    %v8674 = vadd.f32 %v7492, %v8673
    %8675 = vmatmul.bf16.gmra.mxu0 %v7285
    %v8676 = vpop.f32.mrf.mxu0
    %v8677 = vadd.f32 %v7492, %v8676
    %v8678 = vpop.f32.mrf.mxu0
    %v8679 = vadd.f32 %v7492, %v8678
    %8680 = vmatmul.bf16.gmra.mxu0 %v7291
    %v8681 = vpop.f32.mrf.mxu0
    %v8682 = vadd.f32 %v7492, %v8681
    %v8683 = vpop.f32.mrf.mxu0
    %v8684 = vadd.f32 %v7492, %v8683
    %8685 = vmatmul.bf16.gmra.mxu0 %v7297
    %v8686 = vpop.f32.mrf.mxu0
    %v8687 = vadd.f32 %v7492, %v8686
    %v8688 = vpop.f32.mrf.mxu0
    %v8689 = vadd.f32 %v7492, %v8688
    %8690 = vmatmul.bf16.gmra.mxu0 %v7303
    %v8691 = vpop.f32.mrf.mxu0
    %v8692 = vadd.f32 %v7492, %v8691
    %v8693 = vpop.f32.mrf.mxu0
    %v8694 = vadd.f32 %v7492, %v8693
    %8695 = vmatmul.bf16.gmra.mxu0 %v7309
    %v8696 = vpop.f32.mrf.mxu0
    %v8697 = vadd.f32 %v7492, %v8696
    %v8698 = vpop.f32.mrf.mxu0
    %v8699 = vadd.f32 %v7492, %v8698
    %8700 = vmatmul.bf16.gmra.mxu0 %v7315
    %v8701 = vpop.f32.mrf.mxu0
    %v8702 = vadd.f32 %v7492, %v8701
    %v8703 = vpop.f32.mrf.mxu0
    %v8704 = vadd.f32 %v7492, %v8703
    %8705 = vdwg.mxu0
    %8706 = vmatpush.bf16.msra.mxu0 %v8064
    %8707 = vmatpush.bf16.msra.mxu0 %v8060
    %8708 = vmatpush.bf16.msra.mxu0 %v8056
    %8709 = vmatpush.bf16.msra.mxu0 %v8052
    %8710 = vmatpush.bf16.msra.mxu0 %v8048
    %8711 = vmatpush.bf16.msra.mxu0 %v8044
    %8712 = vmatpush.bf16.msra.mxu0 %v8040
    %8713 = vmatpush.bf16.msra.mxu0 %v8036
    %8714 = vmatmul.bf16.gmra.mxu0 %v7274
    %v8715 = vpop.f32.mrf.mxu0
    %v8716 = vadd.f32 %v8667, %v8715
    %v8717 = vpop.f32.mrf.mxu0
    %v8718 = vadd.f32 %v8669, %v8717
    %8719 = vmatmul.bf16.gmra.mxu0 %v7280
    %v8720 = vpop.f32.mrf.mxu0
    %v8721 = vadd.f32 %v8672, %v8720
    %v8722 = vpop.f32.mrf.mxu0
    %v8723 = vadd.f32 %v8674, %v8722
    %8724 = vmatmul.bf16.gmra.mxu0 %v7286
    %v8725 = vpop.f32.mrf.mxu0
    %v8726 = vadd.f32 %v8677, %v8725
    %v8727 = vpop.f32.mrf.mxu0
    %v8728 = vadd.f32 %v8679, %v8727
    %8729 = vmatmul.bf16.gmra.mxu0 %v7292
    %v8730 = vpop.f32.mrf.mxu0
    %v8731 = vadd.f32 %v8682, %v8730
    %v8732 = vpop.f32.mrf.mxu0
    %v8733 = vadd.f32 %v8684, %v8732
    %8734 = vmatmul.bf16.gmra.mxu0 %v7298
    %v8735 = vpop.f32.mrf.mxu0
    %v8736 = vadd.f32 %v8687, %v8735
    %v8737 = vpop.f32.mrf.mxu0
    %v8738 = vadd.f32 %v8689, %v8737
    %8739 = vmatmul.bf16.gmra.mxu0 %v7304
    %v8740 = vpop.f32.mrf.mxu0
    %v8741 = vadd.f32 %v8692, %v8740
    %v8742 = vpop.f32.mrf.mxu0
    %v8743 = vadd.f32 %v8694, %v8742
    %8744 = vmatmul.bf16.gmra.mxu0 %v7310
    %v8745 = vpop.f32.mrf.mxu0
    %v8746 = vadd.f32 %v8697, %v8745
    %v8747 = vpop.f32.mrf.mxu0
    %v8748 = vadd.f32 %v8699, %v8747
    %8749 = vmatmul.bf16.gmra.mxu0 %v7316
    %v8750 = vpop.f32.mrf.mxu0
    %v8751 = vadd.f32 %v8702, %v8750
    %v8752 = vpop.f32.mrf.mxu0
    %v8753 = vadd.f32 %v8704, %v8752
    %8754 = vdwg.mxu0
    %8755 = vmatpush.bf16.msra.mxu0 %v8096
    %8756 = vmatpush.bf16.msra.mxu0 %v8092
    %8757 = vmatpush.bf16.msra.mxu0 %v8088
    %8758 = vmatpush.bf16.msra.mxu0 %v8084
    %8759 = vmatpush.bf16.msra.mxu0 %v8080
    %8760 = vmatpush.bf16.msra.mxu0 %v8076
    %8761 = vmatpush.bf16.msra.mxu0 %v8072
    %8762 = vmatpush.bf16.msra.mxu0 %v8068
    %8763 = vmatmul.bf16.gmra.mxu0 %v7275
    %v8764 = vpop.f32.mrf.mxu0
    %v8765 = vadd.f32 %v8716, %v8764
    %v8766 = vpop.f32.mrf.mxu0
    %v8767 = vadd.f32 %v8718, %v8766
    %8768 = vmatmul.bf16.gmra.mxu0 %v7281
    %v8769 = vpop.f32.mrf.mxu0
    %v8770 = vadd.f32 %v8721, %v8769
    %v8771 = vpop.f32.mrf.mxu0
    %v8772 = vadd.f32 %v8723, %v8771
    %8773 = vmatmul.bf16.gmra.mxu0 %v7287
    %v8774 = vpop.f32.mrf.mxu0
    %v8775 = vadd.f32 %v8726, %v8774
    %v8776 = vpop.f32.mrf.mxu0
    %v8777 = vadd.f32 %v8728, %v8776
    %8778 = vmatmul.bf16.gmra.mxu0 %v7293
    %v8779 = vpop.f32.mrf.mxu0
    %v8780 = vadd.f32 %v8731, %v8779
    %v8781 = vpop.f32.mrf.mxu0
    %v8782 = vadd.f32 %v8733, %v8781
    %8783 = vmatmul.bf16.gmra.mxu0 %v7299
    %v8784 = vpop.f32.mrf.mxu0
    %v8785 = vadd.f32 %v8736, %v8784
    %v8786 = vpop.f32.mrf.mxu0
    %v8787 = vadd.f32 %v8738, %v8786
    %8788 = vmatmul.bf16.gmra.mxu0 %v7305
    %v8789 = vpop.f32.mrf.mxu0
    %v8790 = vadd.f32 %v8741, %v8789
    %v8791 = vpop.f32.mrf.mxu0
    %v8792 = vadd.f32 %v8743, %v8791
    %8793 = vmatmul.bf16.gmra.mxu0 %v7311
    %v8794 = vpop.f32.mrf.mxu0
    %v8795 = vadd.f32 %v8746, %v8794
    %v8796 = vpop.f32.mrf.mxu0
    %v8797 = vadd.f32 %v8748, %v8796
    %8798 = vmatmul.bf16.gmra.mxu0 %v7317
    %v8799 = vpop.f32.mrf.mxu0
    %v8800 = vadd.f32 %v8751, %v8799
    %v8801 = vpop.f32.mrf.mxu0
    %v8802 = vadd.f32 %v8753, %v8801
    %8803 = vdwg.mxu0
    %8804 = vmatpush.bf16.msra.mxu0 %v8128
    %8805 = vmatpush.bf16.msra.mxu0 %v8124
    %8806 = vmatpush.bf16.msra.mxu0 %v8120
    %8807 = vmatpush.bf16.msra.mxu0 %v8116
    %8808 = vmatpush.bf16.msra.mxu0 %v8112
    %8809 = vmatpush.bf16.msra.mxu0 %v8108
    %8810 = vmatpush.bf16.msra.mxu0 %v8104
    %8811 = vmatpush.bf16.msra.mxu0 %v8100
    %8812 = vmatmul.bf16.gmra.mxu0 %v7276
    %v8813 = vpop.f32.mrf.mxu0
    %v8814 = vadd.f32 %v8765, %v8813
    %v8815 = vpop.f32.mrf.mxu0
    %v8816 = vadd.f32 %v8767, %v8815
    %8817 = vmatmul.bf16.gmra.mxu0 %v7282
    %v8818 = vpop.f32.mrf.mxu0
    %v8819 = vadd.f32 %v8770, %v8818
    %v8820 = vpop.f32.mrf.mxu0
    %v8821 = vadd.f32 %v8772, %v8820
    %8822 = vmatmul.bf16.gmra.mxu0 %v7288
    %v8823 = vpop.f32.mrf.mxu0
    %v8824 = vadd.f32 %v8775, %v8823
    %v8825 = vpop.f32.mrf.mxu0
    %v8826 = vadd.f32 %v8777, %v8825
    %8827 = vmatmul.bf16.gmra.mxu0 %v7294
    %v8828 = vpop.f32.mrf.mxu0
    %v8829 = vadd.f32 %v8780, %v8828
    %v8830 = vpop.f32.mrf.mxu0
    %v8831 = vadd.f32 %v8782, %v8830
    %8832 = vmatmul.bf16.gmra.mxu0 %v7300
    %v8833 = vpop.f32.mrf.mxu0
    %v8834 = vadd.f32 %v8785, %v8833
    %v8835 = vpop.f32.mrf.mxu0
    %v8836 = vadd.f32 %v8787, %v8835
    %8837 = vmatmul.bf16.gmra.mxu0 %v7306
    %v8838 = vpop.f32.mrf.mxu0
    %v8839 = vadd.f32 %v8790, %v8838
    %v8840 = vpop.f32.mrf.mxu0
    %v8841 = vadd.f32 %v8792, %v8840
    %8842 = vmatmul.bf16.gmra.mxu0 %v7312
    %v8843 = vpop.f32.mrf.mxu0
    %v8844 = vadd.f32 %v8795, %v8843
    %v8845 = vpop.f32.mrf.mxu0
    %v8846 = vadd.f32 %v8797, %v8845
    %8847 = vmatmul.bf16.gmra.mxu0 %v7318
    %v8848 = vpop.f32.mrf.mxu0
    %v8849 = vadd.f32 %v8800, %v8848
    %v8850 = vpop.f32.mrf.mxu0
    %v8851 = vadd.f32 %v8802, %v8850
    %8852 = vdwg.mxu0
    %8853 = vmatpush.bf16.msra.mxu0 %v8160
    %8854 = vmatpush.bf16.msra.mxu0 %v8156
    %8855 = vmatpush.bf16.msra.mxu0 %v8152
    %8856 = vmatpush.bf16.msra.mxu0 %v8148
    %8857 = vmatpush.bf16.msra.mxu0 %v8144
    %8858 = vmatpush.bf16.msra.mxu0 %v8140
    %8859 = vmatpush.bf16.msra.mxu0 %v8136
    %8860 = vmatpush.bf16.msra.mxu0 %v8132
    %8861 = vmatmul.bf16.gmra.mxu0 %v7277
    %v8862 = vpop.f32.mrf.mxu0
    %v8863 = vadd.f32 %v8814, %v8862
    %v8864 = vpop.f32.mrf.mxu0
    %v8865 = vadd.f32 %v8816, %v8864
    %8866 = vmatmul.bf16.gmra.mxu0 %v7283
    %v8867 = vpop.f32.mrf.mxu0
    %v8868 = vadd.f32 %v8819, %v8867
    %v8869 = vpop.f32.mrf.mxu0
    %v8870 = vadd.f32 %v8821, %v8869
    %8871 = vmatmul.bf16.gmra.mxu0 %v7289
    %v8872 = vpop.f32.mrf.mxu0
    %v8873 = vadd.f32 %v8824, %v8872
    %v8874 = vpop.f32.mrf.mxu0
    %v8875 = vadd.f32 %v8826, %v8874
    %8876 = vmatmul.bf16.gmra.mxu0 %v7295
    %v8877 = vpop.f32.mrf.mxu0
    %v8878 = vadd.f32 %v8829, %v8877
    %v8879 = vpop.f32.mrf.mxu0
    %v8880 = vadd.f32 %v8831, %v8879
    %8881 = vmatmul.bf16.gmra.mxu0 %v7301
    %v8882 = vpop.f32.mrf.mxu0
    %v8883 = vadd.f32 %v8834, %v8882
    %v8884 = vpop.f32.mrf.mxu0
    %v8885 = vadd.f32 %v8836, %v8884
    %8886 = vmatmul.bf16.gmra.mxu0 %v7307
    %v8887 = vpop.f32.mrf.mxu0
    %v8888 = vadd.f32 %v8839, %v8887
    %v8889 = vpop.f32.mrf.mxu0
    %v8890 = vadd.f32 %v8841, %v8889
    %8891 = vmatmul.bf16.gmra.mxu0 %v7313
    %v8892 = vpop.f32.mrf.mxu0
    %v8893 = vadd.f32 %v8844, %v8892
    %v8894 = vpop.f32.mrf.mxu0
    %v8895 = vadd.f32 %v8846, %v8894
    %8896 = vmatmul.bf16.gmra.mxu0 %v7319
    %v8897 = vpop.f32.mrf.mxu0
    %v8898 = vadd.f32 %v8849, %v8897
    %v8899 = vpop.f32.mrf.mxu0
    %v8900 = vadd.f32 %v8851, %v8899
    %8901 = vdwg.mxu0
    %8902 = vmatpush.bf16.msra.mxu0 0
    %8903 = vmatpush.bf16.msra.mxu0 0
    %8904 = vmatpush.bf16.msra.mxu0 0
    %8905 = vmatpush.bf16.msra.mxu0 0
    %8906 = vmatpush.bf16.msra.mxu0 0
    %8907 = vmatpush.bf16.msra.mxu0 0
    %8908 = vmatpush.bf16.msra.mxu0 %v8168
    %8909 = vmatpush.bf16.msra.mxu0 %v8164
    %8910 = vmatmul.bf16.gmra.mxu0 %v8340
    %v8911 = vpop.f32.mrf.mxu0
    %v8912 = vadd.f32 %v8863, %v8911
    %v8913 = vpop.f32.mrf.mxu0
    %v8914 = vadd.f32 %v8865, %v8913
    %8915 = vmatmul.bf16.gmra.mxu0 %v8343
    %v8916 = vpop.f32.mrf.mxu0
    %v8917 = vadd.f32 %v8868, %v8916
    %v8918 = vpop.f32.mrf.mxu0
    %v8919 = vadd.f32 %v8870, %v8918
    %8920 = vmatmul.bf16.gmra.mxu0 %v8346
    %v8921 = vpop.f32.mrf.mxu0
    %v8922 = vadd.f32 %v8873, %v8921
    %v8923 = vpop.f32.mrf.mxu0
    %v8924 = vadd.f32 %v8875, %v8923
    %8925 = vmatmul.bf16.gmra.mxu0 %v8349
    %v8926 = vpop.f32.mrf.mxu0
    %v8927 = vadd.f32 %v8878, %v8926
    %v8928 = vpop.f32.mrf.mxu0
    %v8929 = vadd.f32 %v8880, %v8928
    %8930 = vmatmul.bf16.gmra.mxu0 %v8352
    %v8931 = vpop.f32.mrf.mxu0
    %v8932 = vadd.f32 %v8883, %v8931
    %v8933 = vpop.f32.mrf.mxu0
    %v8934 = vadd.f32 %v8885, %v8933
    %8935 = vmatmul.bf16.gmra.mxu0 %v8355
    %v8936 = vpop.f32.mrf.mxu0
    %v8937 = vadd.f32 %v8888, %v8936
    %v8938 = vpop.f32.mrf.mxu0
    %v8939 = vadd.f32 %v8890, %v8938
    %8940 = vmatmul.bf16.gmra.mxu0 %v8358
    %v8941 = vpop.f32.mrf.mxu0
    %v8942 = vadd.f32 %v8893, %v8941
    %v8943 = vpop.f32.mrf.mxu0
    %v8944 = vadd.f32 %v8895, %v8943
    %8945 = vmatmul.bf16.gmra.mxu0 %v8361
    %v8946 = vpop.f32.mrf.mxu0
    %v8947 = vadd.f32 %v8898, %v8946
    %v8948 = vpop.f32.mrf.mxu0
    %v8949 = vadd.f32 %v8900, %v8948
    %8950 = vdwg.mxu0
    %8951 = vmatpush.bf16.msra.mxu0 %v8033
    %8952 = vmatpush.bf16.msra.mxu0 %v8029
    %8953 = vmatpush.bf16.msra.mxu0 %v8025
    %8954 = vmatpush.bf16.msra.mxu0 %v8021
    %8955 = vmatpush.bf16.msra.mxu0 %v8017
    %8956 = vmatpush.bf16.msra.mxu0 %v8013
    %8957 = vmatpush.bf16.msra.mxu0 %v8009
    %8958 = vmatpush.bf16.msra.mxu0 %v8005
    %8959 = vmatmul.bf16.gmra.mxu0 %v7273
    %v8960 = vpop.f32.mrf.mxu0
    %v8961 = vadd.f32 %v7493, %v8960
    %v8962 = vpop.f32.mrf.mxu0
    %v8963 = vadd.f32 %v7493, %v8962
    %8964 = vmatmul.bf16.gmra.mxu0 %v7279
    %v8965 = vpop.f32.mrf.mxu0
    %v8966 = vadd.f32 %v7493, %v8965
    %v8967 = vpop.f32.mrf.mxu0
    %v8968 = vadd.f32 %v7493, %v8967
    %8969 = vmatmul.bf16.gmra.mxu0 %v7285
    %v8970 = vpop.f32.mrf.mxu0
    %v8971 = vadd.f32 %v7493, %v8970
    %v8972 = vpop.f32.mrf.mxu0
    %v8973 = vadd.f32 %v7493, %v8972
    %8974 = vmatmul.bf16.gmra.mxu0 %v7291
    %v8975 = vpop.f32.mrf.mxu0
    %v8976 = vadd.f32 %v7493, %v8975
    %v8977 = vpop.f32.mrf.mxu0
    %v8978 = vadd.f32 %v7493, %v8977
    %8979 = vmatmul.bf16.gmra.mxu0 %v7297
    %v8980 = vpop.f32.mrf.mxu0
    %v8981 = vadd.f32 %v7493, %v8980
    %v8982 = vpop.f32.mrf.mxu0
    %v8983 = vadd.f32 %v7493, %v8982
    %8984 = vmatmul.bf16.gmra.mxu0 %v7303
    %v8985 = vpop.f32.mrf.mxu0
    %v8986 = vadd.f32 %v7493, %v8985
    %v8987 = vpop.f32.mrf.mxu0
    %v8988 = vadd.f32 %v7493, %v8987
    %8989 = vmatmul.bf16.gmra.mxu0 %v7309
    %v8990 = vpop.f32.mrf.mxu0
    %v8991 = vadd.f32 %v7493, %v8990
    %v8992 = vpop.f32.mrf.mxu0
    %v8993 = vadd.f32 %v7493, %v8992
    %8994 = vmatmul.bf16.gmra.mxu0 %v7315
    %v8995 = vpop.f32.mrf.mxu0
    %v8996 = vadd.f32 %v7493, %v8995
    %v8997 = vpop.f32.mrf.mxu0
    %v8998 = vadd.f32 %v7493, %v8997
    %8999 = vdwg.mxu0
    %9000 = vmatpush.bf16.msra.mxu0 %v8065
    %9001 = vmatpush.bf16.msra.mxu0 %v8061
    %9002 = vmatpush.bf16.msra.mxu0 %v8057
    %9003 = vmatpush.bf16.msra.mxu0 %v8053
    %9004 = vmatpush.bf16.msra.mxu0 %v8049
    %9005 = vmatpush.bf16.msra.mxu0 %v8045
    %9006 = vmatpush.bf16.msra.mxu0 %v8041
    %9007 = vmatpush.bf16.msra.mxu0 %v8037
    %9008 = vmatmul.bf16.gmra.mxu0 %v7274
    %v9009 = vpop.f32.mrf.mxu0
    %v9010 = vadd.f32 %v8961, %v9009
    %v9011 = vpop.f32.mrf.mxu0
    %v9012 = vadd.f32 %v8963, %v9011
    %9013 = vmatmul.bf16.gmra.mxu0 %v7280
    %v9014 = vpop.f32.mrf.mxu0
    %v9015 = vadd.f32 %v8966, %v9014
    %v9016 = vpop.f32.mrf.mxu0
    %v9017 = vadd.f32 %v8968, %v9016
    %9018 = vmatmul.bf16.gmra.mxu0 %v7286
    %v9019 = vpop.f32.mrf.mxu0
    %v9020 = vadd.f32 %v8971, %v9019
    %v9021 = vpop.f32.mrf.mxu0
    %v9022 = vadd.f32 %v8973, %v9021
    %9023 = vmatmul.bf16.gmra.mxu0 %v7292
    %v9024 = vpop.f32.mrf.mxu0
    %v9025 = vadd.f32 %v8976, %v9024
    %v9026 = vpop.f32.mrf.mxu0
    %v9027 = vadd.f32 %v8978, %v9026
    %9028 = vmatmul.bf16.gmra.mxu0 %v7298
    %v9029 = vpop.f32.mrf.mxu0
    %v9030 = vadd.f32 %v8981, %v9029
    %v9031 = vpop.f32.mrf.mxu0
    %v9032 = vadd.f32 %v8983, %v9031
    %9033 = vmatmul.bf16.gmra.mxu0 %v7304
    %v9034 = vpop.f32.mrf.mxu0
    %v9035 = vadd.f32 %v8986, %v9034
    %v9036 = vpop.f32.mrf.mxu0
    %v9037 = vadd.f32 %v8988, %v9036
    %9038 = vmatmul.bf16.gmra.mxu0 %v7310
    %v9039 = vpop.f32.mrf.mxu0
    %v9040 = vadd.f32 %v8991, %v9039
    %v9041 = vpop.f32.mrf.mxu0
    %v9042 = vadd.f32 %v8993, %v9041
    %9043 = vmatmul.bf16.gmra.mxu0 %v7316
    %v9044 = vpop.f32.mrf.mxu0
    %v9045 = vadd.f32 %v8996, %v9044
    %v9046 = vpop.f32.mrf.mxu0
    %v9047 = vadd.f32 %v8998, %v9046
    %9048 = vdwg.mxu0
    %9049 = vmatpush.bf16.msra.mxu0 %v8097
    %9050 = vmatpush.bf16.msra.mxu0 %v8093
    %9051 = vmatpush.bf16.msra.mxu0 %v8089
    %9052 = vmatpush.bf16.msra.mxu0 %v8085
    %9053 = vmatpush.bf16.msra.mxu0 %v8081
    %9054 = vmatpush.bf16.msra.mxu0 %v8077
    %9055 = vmatpush.bf16.msra.mxu0 %v8073
    %9056 = vmatpush.bf16.msra.mxu0 %v8069
    %9057 = vmatmul.bf16.gmra.mxu0 %v7275
    %v9058 = vpop.f32.mrf.mxu0
    %v9059 = vadd.f32 %v9010, %v9058
    %v9060 = vpop.f32.mrf.mxu0
    %v9061 = vadd.f32 %v9012, %v9060
    %9062 = vmatmul.bf16.gmra.mxu0 %v7281
    %v9063 = vpop.f32.mrf.mxu0
    %v9064 = vadd.f32 %v9015, %v9063
    %v9065 = vpop.f32.mrf.mxu0
    %v9066 = vadd.f32 %v9017, %v9065
    %9067 = vmatmul.bf16.gmra.mxu0 %v7287
    %v9068 = vpop.f32.mrf.mxu0
    %v9069 = vadd.f32 %v9020, %v9068
    %v9070 = vpop.f32.mrf.mxu0
    %v9071 = vadd.f32 %v9022, %v9070
    %9072 = vmatmul.bf16.gmra.mxu0 %v7293
    %v9073 = vpop.f32.mrf.mxu0
    %v9074 = vadd.f32 %v9025, %v9073
    %v9075 = vpop.f32.mrf.mxu0
    %v9076 = vadd.f32 %v9027, %v9075
    %9077 = vmatmul.bf16.gmra.mxu0 %v7299
    %v9078 = vpop.f32.mrf.mxu0
    %v9079 = vadd.f32 %v9030, %v9078
    %v9080 = vpop.f32.mrf.mxu0
    %v9081 = vadd.f32 %v9032, %v9080
    %9082 = vmatmul.bf16.gmra.mxu0 %v7305
    %v9083 = vpop.f32.mrf.mxu0
    %v9084 = vadd.f32 %v9035, %v9083
    %v9085 = vpop.f32.mrf.mxu0
    %v9086 = vadd.f32 %v9037, %v9085
    %9087 = vmatmul.bf16.gmra.mxu0 %v7311
    %v9088 = vpop.f32.mrf.mxu0
    %v9089 = vadd.f32 %v9040, %v9088
    %v9090 = vpop.f32.mrf.mxu0
    %v9091 = vadd.f32 %v9042, %v9090
    %9092 = vmatmul.bf16.gmra.mxu0 %v7317
    %v9093 = vpop.f32.mrf.mxu0
    %v9094 = vadd.f32 %v9045, %v9093
    %v9095 = vpop.f32.mrf.mxu0
    %v9096 = vadd.f32 %v9047, %v9095
    %9097 = vdwg.mxu0
    %9098 = vmatpush.bf16.msra.mxu0 %v8129
    %9099 = vmatpush.bf16.msra.mxu0 %v8125
    %9100 = vmatpush.bf16.msra.mxu0 %v8121
    %9101 = vmatpush.bf16.msra.mxu0 %v8117
    %9102 = vmatpush.bf16.msra.mxu0 %v8113
    %9103 = vmatpush.bf16.msra.mxu0 %v8109
    %9104 = vmatpush.bf16.msra.mxu0 %v8105
    %9105 = vmatpush.bf16.msra.mxu0 %v8101
    %9106 = vmatmul.bf16.gmra.mxu0 %v7276
    %v9107 = vpop.f32.mrf.mxu0
    %v9108 = vadd.f32 %v9059, %v9107
    %v9109 = vpop.f32.mrf.mxu0
    %v9110 = vadd.f32 %v9061, %v9109
    %9111 = vmatmul.bf16.gmra.mxu0 %v7282
    %v9112 = vpop.f32.mrf.mxu0
    %v9113 = vadd.f32 %v9064, %v9112
    %v9114 = vpop.f32.mrf.mxu0
    %v9115 = vadd.f32 %v9066, %v9114
    %9116 = vmatmul.bf16.gmra.mxu0 %v7288
    %v9117 = vpop.f32.mrf.mxu0
    %v9118 = vadd.f32 %v9069, %v9117
    %v9119 = vpop.f32.mrf.mxu0
    %v9120 = vadd.f32 %v9071, %v9119
    %9121 = vmatmul.bf16.gmra.mxu0 %v7294
    %v9122 = vpop.f32.mrf.mxu0
    %v9123 = vadd.f32 %v9074, %v9122
    %v9124 = vpop.f32.mrf.mxu0
    %v9125 = vadd.f32 %v9076, %v9124
    %9126 = vmatmul.bf16.gmra.mxu0 %v7300
    %v9127 = vpop.f32.mrf.mxu0
    %v9128 = vadd.f32 %v9079, %v9127
    %v9129 = vpop.f32.mrf.mxu0
    %v9130 = vadd.f32 %v9081, %v9129
    %9131 = vmatmul.bf16.gmra.mxu0 %v7306
    %v9132 = vpop.f32.mrf.mxu0
    %v9133 = vadd.f32 %v9084, %v9132
    %v9134 = vpop.f32.mrf.mxu0
    %v9135 = vadd.f32 %v9086, %v9134
    %9136 = vmatmul.bf16.gmra.mxu0 %v7312
    %v9137 = vpop.f32.mrf.mxu0
    %v9138 = vadd.f32 %v9089, %v9137
    %v9139 = vpop.f32.mrf.mxu0
    %v9140 = vadd.f32 %v9091, %v9139
    %9141 = vmatmul.bf16.gmra.mxu0 %v7318
    %v9142 = vpop.f32.mrf.mxu0
    %v9143 = vadd.f32 %v9094, %v9142
    %v9144 = vpop.f32.mrf.mxu0
    %v9145 = vadd.f32 %v9096, %v9144
    %9146 = vdwg.mxu0
    %9147 = vmatpush.bf16.msra.mxu0 %v8161
    %9148 = vmatpush.bf16.msra.mxu0 %v8157
    %9149 = vmatpush.bf16.msra.mxu0 %v8153
    %9150 = vmatpush.bf16.msra.mxu0 %v8149
    %9151 = vmatpush.bf16.msra.mxu0 %v8145
    %9152 = vmatpush.bf16.msra.mxu0 %v8141
    %9153 = vmatpush.bf16.msra.mxu0 %v8137
    %9154 = vmatpush.bf16.msra.mxu0 %v8133
    %9155 = vmatmul.bf16.gmra.mxu0 %v7277
    %v9156 = vpop.f32.mrf.mxu0
    %v9157 = vadd.f32 %v9108, %v9156
    %v9158 = vpop.f32.mrf.mxu0
    %v9159 = vadd.f32 %v9110, %v9158
    %9160 = vmatmul.bf16.gmra.mxu0 %v7283
    %v9161 = vpop.f32.mrf.mxu0
    %v9162 = vadd.f32 %v9113, %v9161
    %v9163 = vpop.f32.mrf.mxu0
    %v9164 = vadd.f32 %v9115, %v9163
    %9165 = vmatmul.bf16.gmra.mxu0 %v7289
    %v9166 = vpop.f32.mrf.mxu0
    %v9167 = vadd.f32 %v9118, %v9166
    %v9168 = vpop.f32.mrf.mxu0
    %v9169 = vadd.f32 %v9120, %v9168
    %9170 = vmatmul.bf16.gmra.mxu0 %v7295
    %v9171 = vpop.f32.mrf.mxu0
    %v9172 = vadd.f32 %v9123, %v9171
    %v9173 = vpop.f32.mrf.mxu0
    %v9174 = vadd.f32 %v9125, %v9173
    %9175 = vmatmul.bf16.gmra.mxu0 %v7301
    %v9176 = vpop.f32.mrf.mxu0
    %v9177 = vadd.f32 %v9128, %v9176
    %v9178 = vpop.f32.mrf.mxu0
    %v9179 = vadd.f32 %v9130, %v9178
    %9180 = vmatmul.bf16.gmra.mxu0 %v7307
    %v9181 = vpop.f32.mrf.mxu0
    %v9182 = vadd.f32 %v9133, %v9181
    %v9183 = vpop.f32.mrf.mxu0
    %v9184 = vadd.f32 %v9135, %v9183
    %9185 = vmatmul.bf16.gmra.mxu0 %v7313
    %v9186 = vpop.f32.mrf.mxu0
    %v9187 = vadd.f32 %v9138, %v9186
    %v9188 = vpop.f32.mrf.mxu0
    %v9189 = vadd.f32 %v9140, %v9188
    %9190 = vmatmul.bf16.gmra.mxu0 %v7319
    %v9191 = vpop.f32.mrf.mxu0
    %v9192 = vadd.f32 %v9143, %v9191
    %v9193 = vpop.f32.mrf.mxu0
    %v9194 = vadd.f32 %v9145, %v9193
    %9195 = vdwg.mxu0
    %9196 = vmatpush.bf16.msra.mxu0 0
    %9197 = vmatpush.bf16.msra.mxu0 0
    %9198 = vmatpush.bf16.msra.mxu0 0
    %9199 = vmatpush.bf16.msra.mxu0 0
    %9200 = vmatpush.bf16.msra.mxu0 0
    %9201 = vmatpush.bf16.msra.mxu0 0
    %9202 = vmatpush.bf16.msra.mxu0 %v8169
    %9203 = vmatpush.bf16.msra.mxu0 %v8165
    %9204 = vmatmul.bf16.gmra.mxu0 %v8340
    %v9205 = vpop.f32.mrf.mxu0
    %v9206 = vadd.f32 %v9157, %v9205
    %v9207 = vpop.f32.mrf.mxu0
    %v9208 = vadd.f32 %v9159, %v9207
    %9209 = vmatmul.bf16.gmra.mxu0 %v8343
    %v9210 = vpop.f32.mrf.mxu0
    %v9211 = vadd.f32 %v9162, %v9210
    %v9212 = vpop.f32.mrf.mxu0
    %v9213 = vadd.f32 %v9164, %v9212
    %9214 = vmatmul.bf16.gmra.mxu0 %v8346
    %v9215 = vpop.f32.mrf.mxu0
    %v9216 = vadd.f32 %v9167, %v9215
    %v9217 = vpop.f32.mrf.mxu0
    %v9218 = vadd.f32 %v9169, %v9217
    %9219 = vmatmul.bf16.gmra.mxu0 %v8349
    %v9220 = vpop.f32.mrf.mxu0
    %v9221 = vadd.f32 %v9172, %v9220
    %v9222 = vpop.f32.mrf.mxu0
    %v9223 = vadd.f32 %v9174, %v9222
    %9224 = vmatmul.bf16.gmra.mxu0 %v8352
    %v9225 = vpop.f32.mrf.mxu0
    %v9226 = vadd.f32 %v9177, %v9225
    %v9227 = vpop.f32.mrf.mxu0
    %v9228 = vadd.f32 %v9179, %v9227
    %9229 = vmatmul.bf16.gmra.mxu0 %v8355
    %v9230 = vpop.f32.mrf.mxu0
    %v9231 = vadd.f32 %v9182, %v9230
    %v9232 = vpop.f32.mrf.mxu0
    %v9233 = vadd.f32 %v9184, %v9232
    %9234 = vmatmul.bf16.gmra.mxu0 %v8358
    %v9235 = vpop.f32.mrf.mxu0
    %v9236 = vadd.f32 %v9187, %v9235
    %v9237 = vpop.f32.mrf.mxu0
    %v9238 = vadd.f32 %v9189, %v9237
    %9239 = vmatmul.bf16.gmra.mxu0 %v8361
    %v9240 = vpop.f32.mrf.mxu0
    %v9241 = vadd.f32 %v9192, %v9240
    %v9242 = vpop.f32.mrf.mxu0
    %v9243 = vadd.f32 %v9194, %v9242
    %9244 = vdwg.mxu0
    %9245 = vmatpush.bf16.msra.mxu0 %v8034
    %9246 = vmatpush.bf16.msra.mxu0 %v8030
    %9247 = vmatpush.bf16.msra.mxu0 %v8026
    %9248 = vmatpush.bf16.msra.mxu0 %v8022
    %9249 = vmatpush.bf16.msra.mxu0 %v8018
    %9250 = vmatpush.bf16.msra.mxu0 %v8014
    %9251 = vmatpush.bf16.msra.mxu0 %v8010
    %9252 = vmatpush.bf16.msra.mxu0 %v8006
    %9253 = vmatmul.bf16.gmra.mxu0 %v7273
    %v9254 = vpop.f32.mrf.mxu0
    %v9255 = vadd.f32 %v7494, %v9254
    %v9256 = vpop.f32.mrf.mxu0
    %v9257 = vadd.f32 %v7494, %v9256
    %9258 = vmatmul.bf16.gmra.mxu0 %v7279
    %v9259 = vpop.f32.mrf.mxu0
    %v9260 = vadd.f32 %v7494, %v9259
    %v9261 = vpop.f32.mrf.mxu0
    %v9262 = vadd.f32 %v7494, %v9261
    %9263 = vmatmul.bf16.gmra.mxu0 %v7285
    %v9264 = vpop.f32.mrf.mxu0
    %v9265 = vadd.f32 %v7494, %v9264
    %v9266 = vpop.f32.mrf.mxu0
    %v9267 = vadd.f32 %v7494, %v9266
    %9268 = vmatmul.bf16.gmra.mxu0 %v7291
    %v9269 = vpop.f32.mrf.mxu0
    %v9270 = vadd.f32 %v7494, %v9269
    %v9271 = vpop.f32.mrf.mxu0
    %v9272 = vadd.f32 %v7494, %v9271
    %9273 = vmatmul.bf16.gmra.mxu0 %v7297
    %v9274 = vpop.f32.mrf.mxu0
    %v9275 = vadd.f32 %v7494, %v9274
    %v9276 = vpop.f32.mrf.mxu0
    %v9277 = vadd.f32 %v7494, %v9276
    %9278 = vmatmul.bf16.gmra.mxu0 %v7303
    %v9279 = vpop.f32.mrf.mxu0
    %v9280 = vadd.f32 %v7494, %v9279
    %v9281 = vpop.f32.mrf.mxu0
    %v9282 = vadd.f32 %v7494, %v9281
    %9283 = vmatmul.bf16.gmra.mxu0 %v7309
    %v9284 = vpop.f32.mrf.mxu0
    %v9285 = vadd.f32 %v7494, %v9284
    %v9286 = vpop.f32.mrf.mxu0
    %v9287 = vadd.f32 %v7494, %v9286
    %9288 = vmatmul.bf16.gmra.mxu0 %v7315
    %v9289 = vpop.f32.mrf.mxu0
    %v9290 = vadd.f32 %v7494, %v9289
    %v9291 = vpop.f32.mrf.mxu0
    %v9292 = vadd.f32 %v7494, %v9291
    %9293 = vdwg.mxu0
    %9294 = vmatpush.bf16.msra.mxu0 %v8066
    %9295 = vmatpush.bf16.msra.mxu0 %v8062
    %9296 = vmatpush.bf16.msra.mxu0 %v8058
    %9297 = vmatpush.bf16.msra.mxu0 %v8054
    %9298 = vmatpush.bf16.msra.mxu0 %v8050
    %9299 = vmatpush.bf16.msra.mxu0 %v8046
    %9300 = vmatpush.bf16.msra.mxu0 %v8042
    %9301 = vmatpush.bf16.msra.mxu0 %v8038
    %9302 = vmatmul.bf16.gmra.mxu0 %v7274
    %v9303 = vpop.f32.mrf.mxu0
    %v9304 = vadd.f32 %v9255, %v9303
    %v9305 = vpop.f32.mrf.mxu0
    %v9306 = vadd.f32 %v9257, %v9305
    %9307 = vmatmul.bf16.gmra.mxu0 %v7280
    %v9308 = vpop.f32.mrf.mxu0
    %v9309 = vadd.f32 %v9260, %v9308
    %v9310 = vpop.f32.mrf.mxu0
    %v9311 = vadd.f32 %v9262, %v9310
    %9312 = vmatmul.bf16.gmra.mxu0 %v7286
    %v9313 = vpop.f32.mrf.mxu0
    %v9314 = vadd.f32 %v9265, %v9313
    %v9315 = vpop.f32.mrf.mxu0
    %v9316 = vadd.f32 %v9267, %v9315
    %9317 = vmatmul.bf16.gmra.mxu0 %v7292
    %v9318 = vpop.f32.mrf.mxu0
    %v9319 = vadd.f32 %v9270, %v9318
    %v9320 = vpop.f32.mrf.mxu0
    %v9321 = vadd.f32 %v9272, %v9320
    %9322 = vmatmul.bf16.gmra.mxu0 %v7298
    %v9323 = vpop.f32.mrf.mxu0
    %v9324 = vadd.f32 %v9275, %v9323
    %v9325 = vpop.f32.mrf.mxu0
    %v9326 = vadd.f32 %v9277, %v9325
    %9327 = vmatmul.bf16.gmra.mxu0 %v7304
    %v9328 = vpop.f32.mrf.mxu0
    %v9329 = vadd.f32 %v9280, %v9328
    %v9330 = vpop.f32.mrf.mxu0
    %v9331 = vadd.f32 %v9282, %v9330
    %9332 = vmatmul.bf16.gmra.mxu0 %v7310
    %v9333 = vpop.f32.mrf.mxu0
    %v9334 = vadd.f32 %v9285, %v9333
    %v9335 = vpop.f32.mrf.mxu0
    %v9336 = vadd.f32 %v9287, %v9335
    %9337 = vmatmul.bf16.gmra.mxu0 %v7316
    %v9338 = vpop.f32.mrf.mxu0
    %v9339 = vadd.f32 %v9290, %v9338
    %v9340 = vpop.f32.mrf.mxu0
    %v9341 = vadd.f32 %v9292, %v9340
    %9342 = vdwg.mxu0
    %9343 = vmatpush.bf16.msra.mxu0 %v8098
    %9344 = vmatpush.bf16.msra.mxu0 %v8094
    %9345 = vmatpush.bf16.msra.mxu0 %v8090
    %9346 = vmatpush.bf16.msra.mxu0 %v8086
    %9347 = vmatpush.bf16.msra.mxu0 %v8082
    %9348 = vmatpush.bf16.msra.mxu0 %v8078
    %9349 = vmatpush.bf16.msra.mxu0 %v8074
    %9350 = vmatpush.bf16.msra.mxu0 %v8070
    %9351 = vmatmul.bf16.gmra.mxu0 %v7275
    %v9352 = vpop.f32.mrf.mxu0
    %v9353 = vadd.f32 %v9304, %v9352
    %v9354 = vpop.f32.mrf.mxu0
    %v9355 = vadd.f32 %v9306, %v9354
    %9356 = vmatmul.bf16.gmra.mxu0 %v7281
    %v9357 = vpop.f32.mrf.mxu0
    %v9358 = vadd.f32 %v9309, %v9357
    %v9359 = vpop.f32.mrf.mxu0
    %v9360 = vadd.f32 %v9311, %v9359
    %9361 = vmatmul.bf16.gmra.mxu0 %v7287
    %v9362 = vpop.f32.mrf.mxu0
    %v9363 = vadd.f32 %v9314, %v9362
    %v9364 = vpop.f32.mrf.mxu0
    %v9365 = vadd.f32 %v9316, %v9364
    %9366 = vmatmul.bf16.gmra.mxu0 %v7293
    %v9367 = vpop.f32.mrf.mxu0
    %v9368 = vadd.f32 %v9319, %v9367
    %v9369 = vpop.f32.mrf.mxu0
    %v9370 = vadd.f32 %v9321, %v9369
    %9371 = vmatmul.bf16.gmra.mxu0 %v7299
    %v9372 = vpop.f32.mrf.mxu0
    %v9373 = vadd.f32 %v9324, %v9372
    %v9374 = vpop.f32.mrf.mxu0
    %v9375 = vadd.f32 %v9326, %v9374
    %9376 = vmatmul.bf16.gmra.mxu0 %v7305
    %v9377 = vpop.f32.mrf.mxu0
    %v9378 = vadd.f32 %v9329, %v9377
    %v9379 = vpop.f32.mrf.mxu0
    %v9380 = vadd.f32 %v9331, %v9379
    %9381 = vmatmul.bf16.gmra.mxu0 %v7311
    %v9382 = vpop.f32.mrf.mxu0
    %v9383 = vadd.f32 %v9334, %v9382
    %v9384 = vpop.f32.mrf.mxu0
    %v9385 = vadd.f32 %v9336, %v9384
    %9386 = vmatmul.bf16.gmra.mxu0 %v7317
    %v9387 = vpop.f32.mrf.mxu0
    %v9388 = vadd.f32 %v9339, %v9387
    %v9389 = vpop.f32.mrf.mxu0
    %v9390 = vadd.f32 %v9341, %v9389
    %9391 = vdwg.mxu0
    %9392 = vmatpush.bf16.msra.mxu0 %v8130
    %9393 = vmatpush.bf16.msra.mxu0 %v8126
    %9394 = vmatpush.bf16.msra.mxu0 %v8122
    %9395 = vmatpush.bf16.msra.mxu0 %v8118
    %9396 = vmatpush.bf16.msra.mxu0 %v8114
    %9397 = vmatpush.bf16.msra.mxu0 %v8110
    %9398 = vmatpush.bf16.msra.mxu0 %v8106
    %9399 = vmatpush.bf16.msra.mxu0 %v8102
    %9400 = vmatmul.bf16.gmra.mxu0 %v7276
    %v9401 = vpop.f32.mrf.mxu0
    %v9402 = vadd.f32 %v9353, %v9401
    %v9403 = vpop.f32.mrf.mxu0
    %v9404 = vadd.f32 %v9355, %v9403
    %9405 = vmatmul.bf16.gmra.mxu0 %v7282
    %v9406 = vpop.f32.mrf.mxu0
    %v9407 = vadd.f32 %v9358, %v9406
    %v9408 = vpop.f32.mrf.mxu0
    %v9409 = vadd.f32 %v9360, %v9408
    %9410 = vmatmul.bf16.gmra.mxu0 %v7288
    %v9411 = vpop.f32.mrf.mxu0
    %v9412 = vadd.f32 %v9363, %v9411
    %v9413 = vpop.f32.mrf.mxu0
    %v9414 = vadd.f32 %v9365, %v9413
    %9415 = vmatmul.bf16.gmra.mxu0 %v7294
    %v9416 = vpop.f32.mrf.mxu0
    %v9417 = vadd.f32 %v9368, %v9416
    %v9418 = vpop.f32.mrf.mxu0
    %v9419 = vadd.f32 %v9370, %v9418
    %9420 = vmatmul.bf16.gmra.mxu0 %v7300
    %v9421 = vpop.f32.mrf.mxu0
    %v9422 = vadd.f32 %v9373, %v9421
    %v9423 = vpop.f32.mrf.mxu0
    %v9424 = vadd.f32 %v9375, %v9423
    %9425 = vmatmul.bf16.gmra.mxu0 %v7306
    %v9426 = vpop.f32.mrf.mxu0
    %v9427 = vadd.f32 %v9378, %v9426
    %v9428 = vpop.f32.mrf.mxu0
    %v9429 = vadd.f32 %v9380, %v9428
    %9430 = vmatmul.bf16.gmra.mxu0 %v7312
    %v9431 = vpop.f32.mrf.mxu0
    %v9432 = vadd.f32 %v9383, %v9431
    %v9433 = vpop.f32.mrf.mxu0
    %v9434 = vadd.f32 %v9385, %v9433
    %9435 = vmatmul.bf16.gmra.mxu0 %v7318
    %v9436 = vpop.f32.mrf.mxu0
    %v9437 = vadd.f32 %v9388, %v9436
    %v9438 = vpop.f32.mrf.mxu0
    %v9439 = vadd.f32 %v9390, %v9438
    %9440 = vdwg.mxu0
    %9441 = vmatpush.bf16.msra.mxu0 %v8162
    %9442 = vmatpush.bf16.msra.mxu0 %v8158
    %9443 = vmatpush.bf16.msra.mxu0 %v8154
    %9444 = vmatpush.bf16.msra.mxu0 %v8150
    %9445 = vmatpush.bf16.msra.mxu0 %v8146
    %9446 = vmatpush.bf16.msra.mxu0 %v8142
    %9447 = vmatpush.bf16.msra.mxu0 %v8138
    %9448 = vmatpush.bf16.msra.mxu0 %v8134
    %9449 = vmatmul.bf16.gmra.mxu0 %v7277
    %v9450 = vpop.f32.mrf.mxu0
    %v9451 = vadd.f32 %v9402, %v9450
    %v9452 = vpop.f32.mrf.mxu0
    %v9453 = vadd.f32 %v9404, %v9452
    %9454 = vmatmul.bf16.gmra.mxu0 %v7283
    %v9455 = vpop.f32.mrf.mxu0
    %v9456 = vadd.f32 %v9407, %v9455
    %v9457 = vpop.f32.mrf.mxu0
    %v9458 = vadd.f32 %v9409, %v9457
    %9459 = vmatmul.bf16.gmra.mxu0 %v7289
    %v9460 = vpop.f32.mrf.mxu0
    %v9461 = vadd.f32 %v9412, %v9460
    %v9462 = vpop.f32.mrf.mxu0
    %v9463 = vadd.f32 %v9414, %v9462
    %9464 = vmatmul.bf16.gmra.mxu0 %v7295
    %v9465 = vpop.f32.mrf.mxu0
    %v9466 = vadd.f32 %v9417, %v9465
    %v9467 = vpop.f32.mrf.mxu0
    %v9468 = vadd.f32 %v9419, %v9467
    %9469 = vmatmul.bf16.gmra.mxu0 %v7301
    %v9470 = vpop.f32.mrf.mxu0
    %v9471 = vadd.f32 %v9422, %v9470
    %v9472 = vpop.f32.mrf.mxu0
    %v9473 = vadd.f32 %v9424, %v9472
    %9474 = vmatmul.bf16.gmra.mxu0 %v7307
    %v9475 = vpop.f32.mrf.mxu0
    %v9476 = vadd.f32 %v9427, %v9475
    %v9477 = vpop.f32.mrf.mxu0
    %v9478 = vadd.f32 %v9429, %v9477
    %9479 = vmatmul.bf16.gmra.mxu0 %v7313
    %v9480 = vpop.f32.mrf.mxu0
    %v9481 = vadd.f32 %v9432, %v9480
    %v9482 = vpop.f32.mrf.mxu0
    %v9483 = vadd.f32 %v9434, %v9482
    %9484 = vmatmul.bf16.gmra.mxu0 %v7319
    %v9485 = vpop.f32.mrf.mxu0
    %v9486 = vadd.f32 %v9437, %v9485
    %v9487 = vpop.f32.mrf.mxu0
    %v9488 = vadd.f32 %v9439, %v9487
    %9489 = vdwg.mxu0
    %9490 = vmatpush.bf16.msra.mxu0 0
    %9491 = vmatpush.bf16.msra.mxu0 0
    %9492 = vmatpush.bf16.msra.mxu0 0
    %9493 = vmatpush.bf16.msra.mxu0 0
    %9494 = vmatpush.bf16.msra.mxu0 0
    %9495 = vmatpush.bf16.msra.mxu0 0
    %9496 = vmatpush.bf16.msra.mxu0 %v8170
    %9497 = vmatpush.bf16.msra.mxu0 %v8166
    %9498 = vmatmul.bf16.gmra.mxu0 %v8340
    %v9499 = vpop.f32.mrf.mxu0
    %v9500 = vadd.f32 %v9451, %v9499
    %v9501 = vpop.f32.mrf.mxu0
    %v9502 = vadd.f32 %v9453, %v9501
    %9503 = vmatmul.bf16.gmra.mxu0 %v8343
    %v9504 = vpop.f32.mrf.mxu0
    %v9505 = vadd.f32 %v9456, %v9504
    %v9506 = vpop.f32.mrf.mxu0
    %v9507 = vadd.f32 %v9458, %v9506
    %9508 = vmatmul.bf16.gmra.mxu0 %v8346
    %v9509 = vpop.f32.mrf.mxu0
    %v9510 = vadd.f32 %v9461, %v9509
    %v9511 = vpop.f32.mrf.mxu0
    %v9512 = vadd.f32 %v9463, %v9511
    %9513 = vmatmul.bf16.gmra.mxu0 %v8349
    %v9514 = vpop.f32.mrf.mxu0
    %v9515 = vadd.f32 %v9466, %v9514
    %v9516 = vpop.f32.mrf.mxu0
    %v9517 = vadd.f32 %v9468, %v9516
    %9518 = vmatmul.bf16.gmra.mxu0 %v8352
    %v9519 = vpop.f32.mrf.mxu0
    %v9520 = vadd.f32 %v9471, %v9519
    %v9521 = vpop.f32.mrf.mxu0
    %v9522 = vadd.f32 %v9473, %v9521
    %9523 = vmatmul.bf16.gmra.mxu0 %v8355
    %v9524 = vpop.f32.mrf.mxu0
    %v9525 = vadd.f32 %v9476, %v9524
    %v9526 = vpop.f32.mrf.mxu0
    %v9527 = vadd.f32 %v9478, %v9526
    %9528 = vmatmul.bf16.gmra.mxu0 %v8358
    %v9529 = vpop.f32.mrf.mxu0
    %v9530 = vadd.f32 %v9481, %v9529
    %v9531 = vpop.f32.mrf.mxu0
    %v9532 = vadd.f32 %v9483, %v9531
    %9533 = vmatmul.bf16.gmra.mxu0 %v8361
    %v9534 = vpop.f32.mrf.mxu0
    %v9535 = vadd.f32 %v9486, %v9534
    %v9536 = vpop.f32.mrf.mxu0
    %v9537 = vadd.f32 %v9488, %v9536
    %9538 = vdwg.mxu0
    %v9539 = vmax.f32 %v8618, 0.0
    %v9540 = vmax.f32 %v8912, 0.0
    %v9541 = vmax.f32 %v9206, 0.0
    %v9542 = vmax.f32 %v9500, 0.0
    %v9543 = vmax.f32 %v8620, 0.0
    %v9544 = vmax.f32 %v8914, 0.0
    %v9545 = vmax.f32 %v9208, 0.0
    %v9546 = vmax.f32 %v9502, 0.0
    %v9547 = vmax.f32 %v8623, 0.0
    %v9548 = vmax.f32 %v8917, 0.0
    %v9549 = vmax.f32 %v9211, 0.0
    %v9550 = vmax.f32 %v9505, 0.0
    %v9551 = vmax.f32 %v8625, 0.0
    %v9552 = vmax.f32 %v8919, 0.0
    %v9553 = vmax.f32 %v9213, 0.0
    %v9554 = vmax.f32 %v9507, 0.0
    %v9555 = vmax.f32 %v8628, 0.0
    %v9556 = vmax.f32 %v8922, 0.0
    %v9557 = vmax.f32 %v9216, 0.0
    %v9558 = vmax.f32 %v9510, 0.0
    %v9559 = vmax.f32 %v8630, 0.0
    %v9560 = vmax.f32 %v8924, 0.0
    %v9561 = vmax.f32 %v9218, 0.0
    %v9562 = vmax.f32 %v9512, 0.0
    %v9563 = vmax.f32 %v8633, 0.0
    %v9564 = vmax.f32 %v8927, 0.0
    %v9565 = vmax.f32 %v9221, 0.0
    %v9566 = vmax.f32 %v9515, 0.0
    %v9567 = vmax.f32 %v8635, 0.0
    %v9568 = vmax.f32 %v8929, 0.0
    %v9569 = vmax.f32 %v9223, 0.0
    %v9570 = vmax.f32 %v9517, 0.0
    %v9571 = vmax.f32 %v8638, 0.0
    %v9572 = vmax.f32 %v8932, 0.0
    %v9573 = vmax.f32 %v9226, 0.0
    %v9574 = vmax.f32 %v9520, 0.0
    %v9575 = vmax.f32 %v8640, 0.0
    %v9576 = vmax.f32 %v8934, 0.0
    %v9577 = vmax.f32 %v9228, 0.0
    %v9578 = vmax.f32 %v9522, 0.0
    %v9579 = vmax.f32 %v8643, 0.0
    %v9580 = vmax.f32 %v8937, 0.0
    %v9581 = vmax.f32 %v9231, 0.0
    %v9582 = vmax.f32 %v9525, 0.0
    %v9583 = vmax.f32 %v8645, 0.0
    %v9584 = vmax.f32 %v8939, 0.0
    %v9585 = vmax.f32 %v9233, 0.0
    %v9586 = vmax.f32 %v9527, 0.0
    %v9587 = vmax.f32 %v8648, 0.0
    %v9588 = vmax.f32 %v8942, 0.0
    %v9589 = vmax.f32 %v9236, 0.0
    %v9590 = vmax.f32 %v9530, 0.0
    %v9591 = vmax.f32 %v8650, 0.0
    %v9592 = vmax.f32 %v8944, 0.0
    %v9593 = vmax.f32 %v9238, 0.0
    %v9594 = vmax.f32 %v9532, 0.0
    %v9595 = vmax.f32 %v8653, 0.0
    %v9596 = vmax.f32 %v8947, 0.0
    %v9597 = vmax.f32 %v9241, 0.0
    %v9598 = vmax.f32 %v9535, 0.0
    %v9599 = vmax.f32 %v8655, 0.0
    %v9600 = vmax.f32 %v8949, 0.0
    %v9601 = vmax.f32 %v9243, 0.0
    %v9602 = vmax.f32 %v9537, 0.0
    %9667 = vrot.lane.b32.xlu0 %v9539, 96
    %v9668 = vpop.permute.xlu0 %9667
    %9669 = vrot.lane.b32.xlu0 %v9540, 96
    %v9670 = vpop.permute.xlu0 %9669
    %9671 = vrot.lane.b32.xlu0 %v9541, 96
    %v9672 = vpop.permute.xlu0 %9671
    %9673 = vrot.lane.b32.xlu0 %v9542, 96
    %v9674 = vpop.permute.xlu0 %9673
    %9675 = vrot.lane.b32.xlu0 %v9543, 96
    %v9676 = vpop.permute.xlu0 %9675
    %9677 = vrot.lane.b32.xlu0 %v9544, 96
    %v9678 = vpop.permute.xlu0 %9677
    %9679 = vrot.lane.b32.xlu0 %v9545, 96
    %v9680 = vpop.permute.xlu0 %9679
    %9681 = vrot.lane.b32.xlu0 %v9546, 96
    %v9682 = vpop.permute.xlu0 %9681
    %9683 = vrot.lane.b32.xlu0 %v9547, 96
    %v9684 = vpop.permute.xlu0 %9683
    %9685 = vrot.lane.b32.xlu0 %v9548, 96
    %v9686 = vpop.permute.xlu0 %9685
    %9687 = vrot.lane.b32.xlu0 %v9549, 96
    %v9688 = vpop.permute.xlu0 %9687
    %9689 = vrot.lane.b32.xlu0 %v9550, 96
    %v9690 = vpop.permute.xlu0 %9689
    %9691 = vrot.lane.b32.xlu0 %v9551, 96
    %v9692 = vpop.permute.xlu0 %9691
    %9693 = vrot.lane.b32.xlu0 %v9552, 96
    %v9694 = vpop.permute.xlu0 %9693
    %9695 = vrot.lane.b32.xlu0 %v9553, 96
    %v9696 = vpop.permute.xlu0 %9695
    %9697 = vrot.lane.b32.xlu0 %v9554, 96
    %v9698 = vpop.permute.xlu0 %9697
    %9699 = vrot.lane.b32.xlu0 %v9555, 96
    %v9700 = vpop.permute.xlu0 %9699
    %9701 = vrot.lane.b32.xlu0 %v9556, 96
    %v9702 = vpop.permute.xlu0 %9701
    %9703 = vrot.lane.b32.xlu0 %v9557, 96
    %v9704 = vpop.permute.xlu0 %9703
    %9705 = vrot.lane.b32.xlu0 %v9558, 96
    %v9706 = vpop.permute.xlu0 %9705
    %9707 = vrot.lane.b32.xlu0 %v9559, 96
    %v9708 = vpop.permute.xlu0 %9707
    %9709 = vrot.lane.b32.xlu0 %v9560, 96
    %v9710 = vpop.permute.xlu0 %9709
    %9711 = vrot.lane.b32.xlu0 %v9561, 96
    %v9712 = vpop.permute.xlu0 %9711
    %9713 = vrot.lane.b32.xlu0 %v9562, 96
    %v9714 = vpop.permute.xlu0 %9713
    %9715 = vrot.lane.b32.xlu0 %v9563, 96
    %v9716 = vpop.permute.xlu0 %9715
    %9717 = vrot.lane.b32.xlu0 %v9564, 96
    %v9718 = vpop.permute.xlu0 %9717
    %9719 = vrot.lane.b32.xlu0 %v9565, 96
    %v9720 = vpop.permute.xlu0 %9719
    %9721 = vrot.lane.b32.xlu0 %v9566, 96
    %v9722 = vpop.permute.xlu0 %9721
    %9723 = vrot.lane.b32.xlu0 %v9567, 96
    %v9724 = vpop.permute.xlu0 %9723
    %9725 = vrot.lane.b32.xlu0 %v9568, 96
    %v9726 = vpop.permute.xlu0 %9725
    %9727 = vrot.lane.b32.xlu0 %v9569, 96
    %v9728 = vpop.permute.xlu0 %9727
    %9729 = vrot.lane.b32.xlu0 %v9570, 96
    %v9730 = vpop.permute.xlu0 %9729
    %9731 = vrot.lane.b32.xlu0 %v9571, 96
    %v9732 = vpop.permute.xlu0 %9731
    %9733 = vrot.lane.b32.xlu0 %v9572, 96
    %v9734 = vpop.permute.xlu0 %9733
    %9735 = vrot.lane.b32.xlu0 %v9573, 96
    %v9736 = vpop.permute.xlu0 %9735
    %9737 = vrot.lane.b32.xlu0 %v9574, 96
    %v9738 = vpop.permute.xlu0 %9737
    %9739 = vrot.lane.b32.xlu0 %v9575, 96
    %v9740 = vpop.permute.xlu0 %9739
    %9741 = vrot.lane.b32.xlu0 %v9576, 96
    %v9742 = vpop.permute.xlu0 %9741
    %9743 = vrot.lane.b32.xlu0 %v9577, 96
    %v9744 = vpop.permute.xlu0 %9743
    %9745 = vrot.lane.b32.xlu0 %v9578, 96
    %v9746 = vpop.permute.xlu0 %9745
    %9747 = vrot.lane.b32.xlu0 %v9579, 96
    %v9748 = vpop.permute.xlu0 %9747
    %9749 = vrot.lane.b32.xlu0 %v9580, 96
    %v9750 = vpop.permute.xlu0 %9749
    %9751 = vrot.lane.b32.xlu0 %v9581, 96
    %v9752 = vpop.permute.xlu0 %9751
    %9753 = vrot.lane.b32.xlu0 %v9582, 96
    %v9754 = vpop.permute.xlu0 %9753
    %9755 = vrot.lane.b32.xlu0 %v9583, 96
    %v9756 = vpop.permute.xlu0 %9755
    %9757 = vrot.lane.b32.xlu0 %v9584, 96
    %v9758 = vpop.permute.xlu0 %9757
    %9759 = vrot.lane.b32.xlu0 %v9585, 96
    %v9760 = vpop.permute.xlu0 %9759
    %9761 = vrot.lane.b32.xlu0 %v9586, 96
    %v9762 = vpop.permute.xlu0 %9761
    %9763 = vrot.lane.b32.xlu0 %v9587, 96
    %v9764 = vpop.permute.xlu0 %9763
    %9765 = vrot.lane.b32.xlu0 %v9588, 96
    %v9766 = vpop.permute.xlu0 %9765
    %9767 = vrot.lane.b32.xlu0 %v9589, 96
    %v9768 = vpop.permute.xlu0 %9767
    %9769 = vrot.lane.b32.xlu0 %v9590, 96
    %v9770 = vpop.permute.xlu0 %9769
    %9771 = vrot.lane.b32.xlu0 %v9591, 96
    %v9772 = vpop.permute.xlu0 %9771
    %9773 = vrot.lane.b32.xlu0 %v9592, 96
    %v9774 = vpop.permute.xlu0 %9773
    %9775 = vrot.lane.b32.xlu0 %v9593, 96
    %v9776 = vpop.permute.xlu0 %9775
    %9777 = vrot.lane.b32.xlu0 %v9594, 96
    %v9778 = vpop.permute.xlu0 %9777
    %9779 = vrot.lane.b32.xlu0 %v9595, 96
    %v9780 = vpop.permute.xlu0 %9779
    %9781 = vrot.lane.b32.xlu0 %v9596, 96
    %v9782 = vpop.permute.xlu0 %9781
    %9783 = vrot.lane.b32.xlu0 %v9597, 96
    %v9784 = vpop.permute.xlu0 %9783
    %9785 = vrot.lane.b32.xlu0 %v9598, 96
    %v9786 = vpop.permute.xlu0 %9785
    %9787 = vrot.lane.b32.xlu0 %v9599, 96
    %v9788 = vpop.permute.xlu0 %9787
    %9789 = vrot.lane.b32.xlu0 %v9600, 96
    %v9790 = vpop.permute.xlu0 %9789
    %9791 = vrot.lane.b32.xlu0 %v9601, 96
    %v9792 = vpop.permute.xlu0 %9791
    %9793 = vrot.lane.b32.xlu0 %v9602, 96
    %v9794 = vpop.permute.xlu0 %9793
    %v9795 = vsel %vm3030, %v9668, %v9670
    %v9796 = vsel %vm3030, %v9670, %v9672
    %v9797 = vsel %vm3030, %v9672, %v9674
    %v9798 = vsel %vm3030, %v9676, %v9678
    %v9799 = vsel %vm3030, %v9678, %v9680
    %v9800 = vsel %vm3030, %v9680, %v9682
    %v9801 = vsel %vm3030, %v9684, %v9686
    %v9802 = vsel %vm3030, %v9686, %v9688
    %v9803 = vsel %vm3030, %v9688, %v9690
    %v9804 = vsel %vm3030, %v9692, %v9694
    %v9805 = vsel %vm3030, %v9694, %v9696
    %v9806 = vsel %vm3030, %v9696, %v9698
    %v9807 = vsel %vm3030, %v9700, %v9702
    %v9808 = vsel %vm3030, %v9702, %v9704
    %v9809 = vsel %vm3030, %v9704, %v9706
    %v9810 = vsel %vm3030, %v9708, %v9710
    %v9811 = vsel %vm3030, %v9710, %v9712
    %v9812 = vsel %vm3030, %v9712, %v9714
    %v9813 = vsel %vm3030, %v9716, %v9718
    %v9814 = vsel %vm3030, %v9718, %v9720
    %v9815 = vsel %vm3030, %v9720, %v9722
    %v9816 = vsel %vm3030, %v9724, %v9726
    %v9817 = vsel %vm3030, %v9726, %v9728
    %v9818 = vsel %vm3030, %v9728, %v9730
    %v9819 = vsel %vm3030, %v9732, %v9734
    %v9820 = vsel %vm3030, %v9734, %v9736
    %v9821 = vsel %vm3030, %v9736, %v9738
    %v9822 = vsel %vm3030, %v9740, %v9742
    %v9823 = vsel %vm3030, %v9742, %v9744
    %v9824 = vsel %vm3030, %v9744, %v9746
    %v9825 = vsel %vm3030, %v9748, %v9750
    %v9826 = vsel %vm3030, %v9750, %v9752
    %v9827 = vsel %vm3030, %v9752, %v9754
    %v9828 = vsel %vm3030, %v9756, %v9758
    %v9829 = vsel %vm3030, %v9758, %v9760
    %v9830 = vsel %vm3030, %v9760, %v9762
    %v9831 = vsel %vm3030, %v9764, %v9766
    %v9832 = vsel %vm3030, %v9766, %v9768
    %v9833 = vsel %vm3030, %v9768, %v9770
    %v9834 = vsel %vm3030, %v9772, %v9774
    %v9835 = vsel %vm3030, %v9774, %v9776
    %v9836 = vsel %vm3030, %v9776, %v9778
    %v9837 = vsel %vm3030, %v9780, %v9782
    %v9838 = vsel %vm3030, %v9782, %v9784
    %v9839 = vsel %vm3030, %v9784, %v9786
    %v9840 = vsel %vm3030, %v9788, %v9790
    %v9841 = vsel %vm3030, %v9790, %v9792
    %v9842 = vsel %vm3030, %v9792, %v9794
    %v9907 = vmax.f32 %v9539, %v9795
    %v9908 = vmax.f32 %v9540, %v9796
    %v9909 = vmax.f32 %v9541, %v9797
    %v9910 = vmax.f32 %v9542, %v9674
    %v9911 = vmax.f32 %v9543, %v9798
    %v9912 = vmax.f32 %v9544, %v9799
    %v9913 = vmax.f32 %v9545, %v9800
    %v9914 = vmax.f32 %v9546, %v9682
    %v9915 = vmax.f32 %v9547, %v9801
    %v9916 = vmax.f32 %v9548, %v9802
    %v9917 = vmax.f32 %v9549, %v9803
    %v9918 = vmax.f32 %v9550, %v9690
    %v9919 = vmax.f32 %v9551, %v9804
    %v9920 = vmax.f32 %v9552, %v9805
    %v9921 = vmax.f32 %v9553, %v9806
    %v9922 = vmax.f32 %v9554, %v9698
    %v9923 = vmax.f32 %v9555, %v9807
    %v9924 = vmax.f32 %v9556, %v9808
    %v9925 = vmax.f32 %v9557, %v9809
    %v9926 = vmax.f32 %v9558, %v9706
    %v9927 = vmax.f32 %v9559, %v9810
    %v9928 = vmax.f32 %v9560, %v9811
    %v9929 = vmax.f32 %v9561, %v9812
    %v9930 = vmax.f32 %v9562, %v9714
    %v9931 = vmax.f32 %v9563, %v9813
    %v9932 = vmax.f32 %v9564, %v9814
    %v9933 = vmax.f32 %v9565, %v9815
    %v9934 = vmax.f32 %v9566, %v9722
    %v9935 = vmax.f32 %v9567, %v9816
    %v9936 = vmax.f32 %v9568, %v9817
    %v9937 = vmax.f32 %v9569, %v9818
    %v9938 = vmax.f32 %v9570, %v9730
    %v9939 = vmax.f32 %v9571, %v9819
    %v9940 = vmax.f32 %v9572, %v9820
    %v9941 = vmax.f32 %v9573, %v9821
    %v9942 = vmax.f32 %v9574, %v9738
    %v9943 = vmax.f32 %v9575, %v9822
    %v9944 = vmax.f32 %v9576, %v9823
    %v9945 = vmax.f32 %v9577, %v9824
    %v9946 = vmax.f32 %v9578, %v9746
    %v9947 = vmax.f32 %v9579, %v9825
    %v9948 = vmax.f32 %v9580, %v9826
    %v9949 = vmax.f32 %v9581, %v9827
    %v9950 = vmax.f32 %v9582, %v9754
    %v9951 = vmax.f32 %v9583, %v9828
    %v9952 = vmax.f32 %v9584, %v9829
    %v9953 = vmax.f32 %v9585, %v9830
    %v9954 = vmax.f32 %v9586, %v9762
    %v9955 = vmax.f32 %v9587, %v9831
    %v9956 = vmax.f32 %v9588, %v9832
    %v9957 = vmax.f32 %v9589, %v9833
    %v9958 = vmax.f32 %v9590, %v9770
    %v9959 = vmax.f32 %v9591, %v9834
    %v9960 = vmax.f32 %v9592, %v9835
    %v9961 = vmax.f32 %v9593, %v9836
    %v9962 = vmax.f32 %v9594, %v9778
    %v9963 = vmax.f32 %v9595, %v9837
    %v9964 = vmax.f32 %v9596, %v9838
    %v9965 = vmax.f32 %v9597, %v9839
    %v9966 = vmax.f32 %v9598, %v9786
    %v9967 = vmax.f32 %v9599, %v9840
    %v9968 = vmax.f32 %v9600, %v9841
    %v9969 = vmax.f32 %v9601, %v9842
    %v9970 = vmax.f32 %v9602, %v9794
    %9987 = vrot.lane.b32.xlu0 %v9907, 96
    %v9988 = vpop.permute.xlu0 %9987
    %9989 = vrot.lane.b32.xlu0 %v9911, 96
    %v9990 = vpop.permute.xlu0 %9989
    %9991 = vrot.lane.b32.xlu0 %v9915, 96
    %v9992 = vpop.permute.xlu0 %9991
    %9993 = vrot.lane.b32.xlu0 %v9919, 96
    %v9994 = vpop.permute.xlu0 %9993
    %9995 = vrot.lane.b32.xlu0 %v9923, 96
    %v9996 = vpop.permute.xlu0 %9995
    %9997 = vrot.lane.b32.xlu0 %v9927, 96
    %v9998 = vpop.permute.xlu0 %9997
    %9999 = vrot.lane.b32.xlu0 %v9931, 96
    %v10000 = vpop.permute.xlu0 %9999
    %10001 = vrot.lane.b32.xlu0 %v9935, 96
    %v10002 = vpop.permute.xlu0 %10001
    %10003 = vrot.lane.b32.xlu0 %v9939, 96
    %v10004 = vpop.permute.xlu0 %10003
    %10005 = vrot.lane.b32.xlu0 %v9943, 96
    %v10006 = vpop.permute.xlu0 %10005
    %10007 = vrot.lane.b32.xlu0 %v9947, 96
    %v10008 = vpop.permute.xlu0 %10007
    %10009 = vrot.lane.b32.xlu0 %v9951, 96
    %v10010 = vpop.permute.xlu0 %10009
    %10011 = vrot.lane.b32.xlu0 %v9955, 96
    %v10012 = vpop.permute.xlu0 %10011
    %10013 = vrot.lane.b32.xlu0 %v9959, 96
    %v10014 = vpop.permute.xlu0 %10013
    %10015 = vrot.lane.b32.xlu0 %v9963, 96
    %v10016 = vpop.permute.xlu0 %10015
    %10017 = vrot.lane.b32.xlu0 %v9967, 96
    %v10018 = vpop.permute.xlu0 %10017
    %10051 = vrot.lane.b32.xlu0 %v9908, 64
    %v10052 = vpop.permute.xlu0 %10051
    %10053 = vrot.lane.b32.xlu0 %v9912, 64
    %v10054 = vpop.permute.xlu0 %10053
    %10055 = vrot.lane.b32.xlu0 %v9916, 64
    %v10056 = vpop.permute.xlu0 %10055
    %10057 = vrot.lane.b32.xlu0 %v9920, 64
    %v10058 = vpop.permute.xlu0 %10057
    %10059 = vrot.lane.b32.xlu0 %v9924, 64
    %v10060 = vpop.permute.xlu0 %10059
    %10061 = vrot.lane.b32.xlu0 %v9928, 64
    %v10062 = vpop.permute.xlu0 %10061
    %10063 = vrot.lane.b32.xlu0 %v9932, 64
    %v10064 = vpop.permute.xlu0 %10063
    %10065 = vrot.lane.b32.xlu0 %v9936, 64
    %v10066 = vpop.permute.xlu0 %10065
    %10067 = vrot.lane.b32.xlu0 %v9940, 64
    %v10068 = vpop.permute.xlu0 %10067
    %10069 = vrot.lane.b32.xlu0 %v9944, 64
    %v10070 = vpop.permute.xlu0 %10069
    %10071 = vrot.lane.b32.xlu0 %v9948, 64
    %v10072 = vpop.permute.xlu0 %10071
    %10073 = vrot.lane.b32.xlu0 %v9952, 64
    %v10074 = vpop.permute.xlu0 %10073
    %10075 = vrot.lane.b32.xlu0 %v9956, 64
    %v10076 = vpop.permute.xlu0 %10075
    %10077 = vrot.lane.b32.xlu0 %v9960, 64
    %v10078 = vpop.permute.xlu0 %10077
    %10079 = vrot.lane.b32.xlu0 %v9964, 64
    %v10080 = vpop.permute.xlu0 %10079
    %10081 = vrot.lane.b32.xlu0 %v9968, 64
    %v10082 = vpop.permute.xlu0 %10081
    %10099 = vrot.lane.b32.xlu0 %v9908, 32
    %v10100 = vpop.permute.xlu0 %10099
    %10101 = vrot.lane.b32.xlu0 %v9912, 32
    %v10102 = vpop.permute.xlu0 %10101
    %10103 = vrot.lane.b32.xlu0 %v9916, 32
    %v10104 = vpop.permute.xlu0 %10103
    %10105 = vrot.lane.b32.xlu0 %v9920, 32
    %v10106 = vpop.permute.xlu0 %10105
    %10107 = vrot.lane.b32.xlu0 %v9924, 32
    %v10108 = vpop.permute.xlu0 %10107
    %10109 = vrot.lane.b32.xlu0 %v9928, 32
    %v10110 = vpop.permute.xlu0 %10109
    %10111 = vrot.lane.b32.xlu0 %v9932, 32
    %v10112 = vpop.permute.xlu0 %10111
    %10113 = vrot.lane.b32.xlu0 %v9936, 32
    %v10114 = vpop.permute.xlu0 %10113
    %10115 = vrot.lane.b32.xlu0 %v9940, 32
    %v10116 = vpop.permute.xlu0 %10115
    %10117 = vrot.lane.b32.xlu0 %v9944, 32
    %v10118 = vpop.permute.xlu0 %10117
    %10119 = vrot.lane.b32.xlu0 %v9948, 32
    %v10120 = vpop.permute.xlu0 %10119
    %10121 = vrot.lane.b32.xlu0 %v9952, 32
    %v10122 = vpop.permute.xlu0 %10121
    %10123 = vrot.lane.b32.xlu0 %v9956, 32
    %v10124 = vpop.permute.xlu0 %10123
    %10125 = vrot.lane.b32.xlu0 %v9960, 32
    %v10126 = vpop.permute.xlu0 %10125
    %10127 = vrot.lane.b32.xlu0 %v9964, 32
    %v10128 = vpop.permute.xlu0 %10127
    %10129 = vrot.lane.b32.xlu0 %v9968, 32
    %v10130 = vpop.permute.xlu0 %10129
    %10163 = vrot.lane.b32.xlu0 %v9909, 96
    %v10164 = vpop.permute.xlu0 %10163
    %10165 = vrot.lane.b32.xlu0 %v9913, 96
    %v10166 = vpop.permute.xlu0 %10165
    %10167 = vrot.lane.b32.xlu0 %v9917, 96
    %v10168 = vpop.permute.xlu0 %10167
    %10169 = vrot.lane.b32.xlu0 %v9921, 96
    %v10170 = vpop.permute.xlu0 %10169
    %10171 = vrot.lane.b32.xlu0 %v9925, 96
    %v10172 = vpop.permute.xlu0 %10171
    %10173 = vrot.lane.b32.xlu0 %v9929, 96
    %v10174 = vpop.permute.xlu0 %10173
    %10175 = vrot.lane.b32.xlu0 %v9933, 96
    %v10176 = vpop.permute.xlu0 %10175
    %10177 = vrot.lane.b32.xlu0 %v9937, 96
    %v10178 = vpop.permute.xlu0 %10177
    %10179 = vrot.lane.b32.xlu0 %v9941, 96
    %v10180 = vpop.permute.xlu0 %10179
    %10181 = vrot.lane.b32.xlu0 %v9945, 96
    %v10182 = vpop.permute.xlu0 %10181
    %10183 = vrot.lane.b32.xlu0 %v9949, 96
    %v10184 = vpop.permute.xlu0 %10183
    %10185 = vrot.lane.b32.xlu0 %v9953, 96
    %v10186 = vpop.permute.xlu0 %10185
    %10187 = vrot.lane.b32.xlu0 %v9957, 96
    %v10188 = vpop.permute.xlu0 %10187
    %10189 = vrot.lane.b32.xlu0 %v9961, 96
    %v10190 = vpop.permute.xlu0 %10189
    %10191 = vrot.lane.b32.xlu0 %v9965, 96
    %v10192 = vpop.permute.xlu0 %10191
    %10193 = vrot.lane.b32.xlu0 %v9969, 96
    %v10194 = vpop.permute.xlu0 %10193
    %10227 = vrot.lane.b32.xlu0 %v9910, 64
    %v10228 = vpop.permute.xlu0 %10227
    %10229 = vrot.lane.b32.xlu0 %v9914, 64
    %v10230 = vpop.permute.xlu0 %10229
    %10231 = vrot.lane.b32.xlu0 %v9918, 64
    %v10232 = vpop.permute.xlu0 %10231
    %10233 = vrot.lane.b32.xlu0 %v9922, 64
    %v10234 = vpop.permute.xlu0 %10233
    %10235 = vrot.lane.b32.xlu0 %v9926, 64
    %v10236 = vpop.permute.xlu0 %10235
    %10237 = vrot.lane.b32.xlu0 %v9930, 64
    %v10238 = vpop.permute.xlu0 %10237
    %10239 = vrot.lane.b32.xlu0 %v9934, 64
    %v10240 = vpop.permute.xlu0 %10239
    %10241 = vrot.lane.b32.xlu0 %v9938, 64
    %v10242 = vpop.permute.xlu0 %10241
    %10243 = vrot.lane.b32.xlu0 %v9942, 64
    %v10244 = vpop.permute.xlu0 %10243
    %10245 = vrot.lane.b32.xlu0 %v9946, 64
    %v10246 = vpop.permute.xlu0 %10245
    %10247 = vrot.lane.b32.xlu0 %v9950, 64
    %v10248 = vpop.permute.xlu0 %10247
    %10249 = vrot.lane.b32.xlu0 %v9954, 64
    %v10250 = vpop.permute.xlu0 %10249
    %10251 = vrot.lane.b32.xlu0 %v9958, 64
    %v10252 = vpop.permute.xlu0 %10251
    %10253 = vrot.lane.b32.xlu0 %v9962, 64
    %v10254 = vpop.permute.xlu0 %10253
    %10255 = vrot.lane.b32.xlu0 %v9966, 64
    %v10256 = vpop.permute.xlu0 %10255
    %10257 = vrot.lane.b32.xlu0 %v9970, 64
    %v10258 = vpop.permute.xlu0 %10257
    %v10275 = vsel %vm2898, %v9907, %v9988
    %v10276 = vsel %vm2898, %v9911, %v9990
    %v10277 = vsel %vm2898, %v9915, %v9992
    %v10278 = vsel %vm2898, %v9919, %v9994
    %v10279 = vsel %vm2898, %v9923, %v9996
    %v10280 = vsel %vm2898, %v9927, %v9998
    %v10281 = vsel %vm2898, %v9931, %v10000
    %v10282 = vsel %vm2898, %v9935, %v10002
    %v10283 = vsel %vm2898, %v9939, %v10004
    %v10284 = vsel %vm2898, %v9943, %v10006
    %v10285 = vsel %vm2898, %v9947, %v10008
    %v10286 = vsel %vm2898, %v9951, %v10010
    %v10287 = vsel %vm2898, %v9955, %v10012
    %v10288 = vsel %vm2898, %v9959, %v10014
    %v10289 = vsel %vm2898, %v9963, %v10016
    %v10290 = vsel %vm2898, %v9967, %v10018
    %v10291 = vsel %vm2964, %v10275, %v10052
    %v10292 = vsel %vm2964, %v10276, %v10054
    %v10293 = vsel %vm2964, %v10277, %v10056
    %v10294 = vsel %vm2964, %v10278, %v10058
    %v10295 = vsel %vm2964, %v10279, %v10060
    %v10296 = vsel %vm2964, %v10280, %v10062
    %v10297 = vsel %vm2964, %v10281, %v10064
    %v10298 = vsel %vm2964, %v10282, %v10066
    %v10299 = vsel %vm2964, %v10283, %v10068
    %v10300 = vsel %vm2964, %v10284, %v10070
    %v10301 = vsel %vm2964, %v10285, %v10072
    %v10302 = vsel %vm2964, %v10286, %v10074
    %v10303 = vsel %vm2964, %v10287, %v10076
    %v10304 = vsel %vm2964, %v10288, %v10078
    %v10305 = vsel %vm2964, %v10289, %v10080
    %v10306 = vsel %vm2964, %v10290, %v10082
    %v10307 = vsel %vm3030, %v10291, %v10100
    %v10308 = vsel %vm3030, %v10292, %v10102
    %v10309 = vsel %vm3030, %v10293, %v10104
    %v10310 = vsel %vm3030, %v10294, %v10106
    %v10311 = vsel %vm3030, %v10295, %v10108
    %v10312 = vsel %vm3030, %v10296, %v10110
    %v10313 = vsel %vm3030, %v10297, %v10112
    %v10314 = vsel %vm3030, %v10298, %v10114
    %v10315 = vsel %vm3030, %v10299, %v10116
    %v10316 = vsel %vm3030, %v10300, %v10118
    %v10317 = vsel %vm3030, %v10301, %v10120
    %v10318 = vsel %vm3030, %v10302, %v10122
    %v10319 = vsel %vm3030, %v10303, %v10124
    %v10320 = vsel %vm3030, %v10304, %v10126
    %v10321 = vsel %vm3030, %v10305, %v10128
    %v10322 = vsel %vm3030, %v10306, %v10130
    %v10323 = vsel %vm2898, %v9909, %v10164
    %v10324 = vsel %vm2898, %v9913, %v10166
    %v10325 = vsel %vm2898, %v9917, %v10168
    %v10326 = vsel %vm2898, %v9921, %v10170
    %v10327 = vsel %vm2898, %v9925, %v10172
    %v10328 = vsel %vm2898, %v9929, %v10174
    %v10329 = vsel %vm2898, %v9933, %v10176
    %v10330 = vsel %vm2898, %v9937, %v10178
    %v10331 = vsel %vm2898, %v9941, %v10180
    %v10332 = vsel %vm2898, %v9945, %v10182
    %v10333 = vsel %vm2898, %v9949, %v10184
    %v10334 = vsel %vm2898, %v9953, %v10186
    %v10335 = vsel %vm2898, %v9957, %v10188
    %v10336 = vsel %vm2898, %v9961, %v10190
    %v10337 = vsel %vm2898, %v9965, %v10192
    %v10338 = vsel %vm2898, %v9969, %v10194
    %v10339 = vsel %vm2964, %v10323, %v10228
    %v10340 = vsel %vm2964, %v10324, %v10230
    %v10341 = vsel %vm2964, %v10325, %v10232
    %v10342 = vsel %vm2964, %v10326, %v10234
    %v10343 = vsel %vm2964, %v10327, %v10236
    %v10344 = vsel %vm2964, %v10328, %v10238
    %v10345 = vsel %vm2964, %v10329, %v10240
    %v10346 = vsel %vm2964, %v10330, %v10242
    %v10347 = vsel %vm2964, %v10331, %v10244
    %v10348 = vsel %vm2964, %v10332, %v10246
    %v10349 = vsel %vm2964, %v10333, %v10248
    %v10350 = vsel %vm2964, %v10334, %v10250
    %v10351 = vsel %vm2964, %v10335, %v10252
    %v10352 = vsel %vm2964, %v10336, %v10254
    %v10353 = vsel %vm2964, %v10337, %v10256
    %v10354 = vsel %vm2964, %v10338, %v10258
    %v10387 = vrot.slane %v10339, 6
    %v10388 = vrot.slane %v10340, 6
    %v10389 = vrot.slane %v10341, 6
    %v10390 = vrot.slane %v10342, 6
    %v10391 = vrot.slane %v10343, 6
    %v10392 = vrot.slane %v10344, 6
    %v10393 = vrot.slane %v10345, 6
    %v10394 = vrot.slane %v10346, 6
    %v10395 = vrot.slane %v10347, 6
    %v10396 = vrot.slane %v10348, 6
    %v10397 = vrot.slane %v10349, 6
    %v10398 = vrot.slane %v10350, 6
    %v10399 = vrot.slane %v10351, 6
    %v10400 = vrot.slane %v10352, 6
    %v10401 = vrot.slane %v10353, 6
    %v10402 = vrot.slane %v10354, 6
    %v10403 = vsel %vm3351, %v10307, %v10387
    %v10404 = vsel %vm3353, %v10307, %v10387
    %v10405 = vrot.slane %v10404, 2
    %v10406 = vsel %vm3356, %v10307, %v10387
    %v10407 = vrot.slane %v10406, 4
    %v10408 = vsel %vm349, %v10387, %v10307
    %v10409 = vrot.slane %v10408, 6
    %v10410 = vsel %vm3351, %v10308, %v10388
    %v10411 = vsel %vm3353, %v10308, %v10388
    %v10412 = vrot.slane %v10411, 2
    %v10413 = vsel %vm3356, %v10308, %v10388
    %v10414 = vrot.slane %v10413, 4
    %v10415 = vsel %vm349, %v10388, %v10308
    %v10416 = vrot.slane %v10415, 6
    %v10417 = vsel %vm3351, %v10309, %v10389
    %v10418 = vsel %vm3353, %v10309, %v10389
    %v10419 = vrot.slane %v10418, 2
    %v10420 = vsel %vm3356, %v10309, %v10389
    %v10421 = vrot.slane %v10420, 4
    %v10422 = vsel %vm349, %v10389, %v10309
    %v10423 = vrot.slane %v10422, 6
    %v10424 = vsel %vm3351, %v10310, %v10390
    %v10425 = vsel %vm3353, %v10310, %v10390
    %v10426 = vrot.slane %v10425, 2
    %v10427 = vsel %vm3356, %v10310, %v10390
    %v10428 = vrot.slane %v10427, 4
    %v10429 = vsel %vm349, %v10390, %v10310
    %v10430 = vrot.slane %v10429, 6
    %v10431 = vsel %vm3351, %v10311, %v10391
    %v10432 = vsel %vm3353, %v10311, %v10391
    %v10433 = vrot.slane %v10432, 2
    %v10434 = vsel %vm3356, %v10311, %v10391
    %v10435 = vrot.slane %v10434, 4
    %v10436 = vsel %vm349, %v10391, %v10311
    %v10437 = vrot.slane %v10436, 6
    %v10438 = vsel %vm3351, %v10312, %v10392
    %v10439 = vsel %vm3353, %v10312, %v10392
    %v10440 = vrot.slane %v10439, 2
    %v10441 = vsel %vm3356, %v10312, %v10392
    %v10442 = vrot.slane %v10441, 4
    %v10443 = vsel %vm349, %v10392, %v10312
    %v10444 = vrot.slane %v10443, 6
    %v10445 = vsel %vm3351, %v10313, %v10393
    %v10446 = vsel %vm3353, %v10313, %v10393
    %v10447 = vrot.slane %v10446, 2
    %v10448 = vsel %vm3356, %v10313, %v10393
    %v10449 = vrot.slane %v10448, 4
    %v10450 = vsel %vm349, %v10393, %v10313
    %v10451 = vrot.slane %v10450, 6
    %v10452 = vsel %vm3351, %v10314, %v10394
    %v10453 = vsel %vm3353, %v10314, %v10394
    %v10454 = vrot.slane %v10453, 2
    %v10455 = vsel %vm3356, %v10314, %v10394
    %v10456 = vrot.slane %v10455, 4
    %v10457 = vsel %vm349, %v10394, %v10314
    %v10458 = vrot.slane %v10457, 6
    %v10459 = vsel %vm3351, %v10315, %v10395
    %v10460 = vsel %vm3353, %v10315, %v10395
    %v10461 = vrot.slane %v10460, 2
    %v10462 = vsel %vm3356, %v10315, %v10395
    %v10463 = vrot.slane %v10462, 4
    %v10464 = vsel %vm349, %v10395, %v10315
    %v10465 = vrot.slane %v10464, 6
    %v10466 = vsel %vm3351, %v10316, %v10396
    %v10467 = vsel %vm3353, %v10316, %v10396
    %v10468 = vrot.slane %v10467, 2
    %v10469 = vsel %vm3356, %v10316, %v10396
    %v10470 = vrot.slane %v10469, 4
    %v10471 = vsel %vm349, %v10396, %v10316
    %v10472 = vrot.slane %v10471, 6
    %v10473 = vsel %vm3351, %v10317, %v10397
    %v10474 = vsel %vm3353, %v10317, %v10397
    %v10475 = vrot.slane %v10474, 2
    %v10476 = vsel %vm3356, %v10317, %v10397
    %v10477 = vrot.slane %v10476, 4
    %v10478 = vsel %vm349, %v10397, %v10317
    %v10479 = vrot.slane %v10478, 6
    %v10480 = vsel %vm3351, %v10318, %v10398
    %v10481 = vsel %vm3353, %v10318, %v10398
    %v10482 = vrot.slane %v10481, 2
    %v10483 = vsel %vm3356, %v10318, %v10398
    %v10484 = vrot.slane %v10483, 4
    %v10485 = vsel %vm349, %v10398, %v10318
    %v10486 = vrot.slane %v10485, 6
    %v10487 = vsel %vm3351, %v10319, %v10399
    %v10488 = vsel %vm3353, %v10319, %v10399
    %v10489 = vrot.slane %v10488, 2
    %v10490 = vsel %vm3356, %v10319, %v10399
    %v10491 = vrot.slane %v10490, 4
    %v10492 = vsel %vm349, %v10399, %v10319
    %v10493 = vrot.slane %v10492, 6
    %v10494 = vsel %vm3351, %v10320, %v10400
    %v10495 = vsel %vm3353, %v10320, %v10400
    %v10496 = vrot.slane %v10495, 2
    %v10497 = vsel %vm3356, %v10320, %v10400
    %v10498 = vrot.slane %v10497, 4
    %v10499 = vsel %vm349, %v10400, %v10320
    %v10500 = vrot.slane %v10499, 6
    %v10501 = vsel %vm3351, %v10321, %v10401
    %v10502 = vsel %vm3353, %v10321, %v10401
    %v10503 = vrot.slane %v10502, 2
    %v10504 = vsel %vm3356, %v10321, %v10401
    %v10505 = vrot.slane %v10504, 4
    %v10506 = vsel %vm349, %v10401, %v10321
    %v10507 = vrot.slane %v10506, 6
    %v10508 = vsel %vm3351, %v10322, %v10402
    %v10509 = vsel %vm3353, %v10322, %v10402
    %v10510 = vrot.slane %v10509, 2
    %v10511 = vsel %vm3356, %v10322, %v10402
    %v10512 = vrot.slane %v10511, 4
    %v10513 = vsel %vm349, %v10402, %v10322
    %v10514 = vrot.slane %v10513, 6
    %10515 = vst [vmem:[#allocation1] ss:$4 sm:$0xff] %v10403
    %v10516 = vld.sshfl [vmem:[#allocation1] sm:$0xff pattern:$0x73625140]
    %v10517 = vld.sshfl [vmem:[#allocation1 + $0x8] sm:$0xff pattern:$0x73625140]
    %s10518 = scalar_lea.vmem [#allocation1], 32
    %10519 = vst [vmem:[%s10518] ss:$4 sm:$0xff] %v10405
    %v10520 = vld.sshfl [vmem:[#allocation1 + $0x20] sm:$0xff pattern:$0x73625140]
    %v10521 = vld.sshfl [vmem:[#allocation1 + $0x28] sm:$0xff pattern:$0x73625140]
    %10522 = vst [vmem:[#allocation1] ss:$4 sm:$0xff] %v10407
    %v10523 = vld.sshfl [vmem:[#allocation1] sm:$0xff pattern:$0x73625140]
    %v10524 = vld.sshfl [vmem:[#allocation1 + $0x8] sm:$0xff pattern:$0x73625140]
    %10525 = vst [vmem:[%s10518] ss:$4 sm:$0xff] %v10409
    %v10526 = vld.sshfl [vmem:[#allocation1 + $0x20] sm:$0xff pattern:$0x73625140]
    %v10527 = vld.sshfl [vmem:[#allocation1 + $0x28] sm:$0xff pattern:$0x73625140]
    %10528 = vst [vmem:[#allocation1] ss:$4 sm:$0xff] %v10410
    %v10529 = vld.sshfl [vmem:[#allocation1] sm:$0xff pattern:$0x73625140]
    %v10530 = vld.sshfl [vmem:[#allocation1 + $0x8] sm:$0xff pattern:$0x73625140]
    %10531 = vst [vmem:[%s10518] ss:$4 sm:$0xff] %v10412
    %v10532 = vld.sshfl [vmem:[#allocation1 + $0x20] sm:$0xff pattern:$0x73625140]
    %v10533 = vld.sshfl [vmem:[#allocation1 + $0x28] sm:$0xff pattern:$0x73625140]
    %10534 = vst [vmem:[#allocation1] ss:$4 sm:$0xff] %v10414
    %v10535 = vld.sshfl [vmem:[#allocation1] sm:$0xff pattern:$0x73625140]
    %v10536 = vld.sshfl [vmem:[#allocation1 + $0x8] sm:$0xff pattern:$0x73625140]
    %10537 = vst [vmem:[%s10518] ss:$4 sm:$0xff] %v10416
    %v10538 = vld.sshfl [vmem:[#allocation1 + $0x20] sm:$0xff pattern:$0x73625140]
    %v10539 = vld.sshfl [vmem:[#allocation1 + $0x28] sm:$0xff pattern:$0x73625140]
    %10540 = vst [vmem:[#allocation1] ss:$4 sm:$0xff] %v10417
    %v10541 = vld.sshfl [vmem:[#allocation1] sm:$0xff pattern:$0x73625140]
    %v10542 = vld.sshfl [vmem:[#allocation1 + $0x8] sm:$0xff pattern:$0x73625140]
    %10543 = vst [vmem:[%s10518] ss:$4 sm:$0xff] %v10419
    %v10544 = vld.sshfl [vmem:[#allocation1 + $0x20] sm:$0xff pattern:$0x73625140]
    %v10545 = vld.sshfl [vmem:[#allocation1 + $0x28] sm:$0xff pattern:$0x73625140]
    %10546 = vst [vmem:[#allocation1] ss:$4 sm:$0xff] %v10421
    %v10547 = vld.sshfl [vmem:[#allocation1] sm:$0xff pattern:$0x73625140]
    %v10548 = vld.sshfl [vmem:[#allocation1 + $0x8] sm:$0xff pattern:$0x73625140]
    %10549 = vst [vmem:[%s10518] ss:$4 sm:$0xff] %v10423
    %v10550 = vld.sshfl [vmem:[#allocation1 + $0x20] sm:$0xff pattern:$0x73625140]
    %v10551 = vld.sshfl [vmem:[#allocation1 + $0x28] sm:$0xff pattern:$0x73625140]
    %10552 = vst [vmem:[#allocation1] ss:$4 sm:$0xff] %v10424
    %v10553 = vld.sshfl [vmem:[#allocation1] sm:$0xff pattern:$0x73625140]
    %v10554 = vld.sshfl [vmem:[#allocation1 + $0x8] sm:$0xff pattern:$0x73625140]
    %10555 = vst [vmem:[%s10518] ss:$4 sm:$0xff] %v10426
    %v10556 = vld.sshfl [vmem:[#allocation1 + $0x20] sm:$0xff pattern:$0x73625140]
    %v10557 = vld.sshfl [vmem:[#allocation1 + $0x28] sm:$0xff pattern:$0x73625140]
    %10558 = vst [vmem:[#allocation1] ss:$4 sm:$0xff] %v10428
    %v10559 = vld.sshfl [vmem:[#allocation1] sm:$0xff pattern:$0x73625140]
    %v10560 = vld.sshfl [vmem:[#allocation1 + $0x8] sm:$0xff pattern:$0x73625140]
    %10561 = vst [vmem:[%s10518] ss:$4 sm:$0xff] %v10430
    %v10562 = vld.sshfl [vmem:[#allocation1 + $0x20] sm:$0xff pattern:$0x73625140]
    %v10563 = vld.sshfl [vmem:[#allocation1 + $0x28] sm:$0xff pattern:$0x73625140]
    %10564 = vst [vmem:[#allocation1] ss:$4 sm:$0xff] %v10431
    %v10565 = vld.sshfl [vmem:[#allocation1] sm:$0xff pattern:$0x73625140]
    %v10566 = vld.sshfl [vmem:[#allocation1 + $0x8] sm:$0xff pattern:$0x73625140]
    %10567 = vst [vmem:[%s10518] ss:$4 sm:$0xff] %v10433
    %v10568 = vld.sshfl [vmem:[#allocation1 + $0x20] sm:$0xff pattern:$0x73625140]
    %v10569 = vld.sshfl [vmem:[#allocation1 + $0x28] sm:$0xff pattern:$0x73625140]
    %10570 = vst [vmem:[#allocation1] ss:$4 sm:$0xff] %v10435
    %v10571 = vld.sshfl [vmem:[#allocation1] sm:$0xff pattern:$0x73625140]
    %v10572 = vld.sshfl [vmem:[#allocation1 + $0x8] sm:$0xff pattern:$0x73625140]
    %10573 = vst [vmem:[%s10518] ss:$4 sm:$0xff] %v10437
    %v10574 = vld.sshfl [vmem:[#allocation1 + $0x20] sm:$0xff pattern:$0x73625140]
    %v10575 = vld.sshfl [vmem:[#allocation1 + $0x28] sm:$0xff pattern:$0x73625140]
    %10576 = vst [vmem:[#allocation1] ss:$4 sm:$0xff] %v10438
    %v10577 = vld.sshfl [vmem:[#allocation1] sm:$0xff pattern:$0x73625140]
    %v10578 = vld.sshfl [vmem:[#allocation1 + $0x8] sm:$0xff pattern:$0x73625140]
    %10579 = vst [vmem:[%s10518] ss:$4 sm:$0xff] %v10440
    %v10580 = vld.sshfl [vmem:[#allocation1 + $0x20] sm:$0xff pattern:$0x73625140]
    %v10581 = vld.sshfl [vmem:[#allocation1 + $0x28] sm:$0xff pattern:$0x73625140]
    %10582 = vst [vmem:[#allocation1] ss:$4 sm:$0xff] %v10442
    %v10583 = vld.sshfl [vmem:[#allocation1] sm:$0xff pattern:$0x73625140]
    %v10584 = vld.sshfl [vmem:[#allocation1 + $0x8] sm:$0xff pattern:$0x73625140]
    %10585 = vst [vmem:[%s10518] ss:$4 sm:$0xff] %v10444
    %v10586 = vld.sshfl [vmem:[#allocation1 + $0x20] sm:$0xff pattern:$0x73625140]
    %v10587 = vld.sshfl [vmem:[#allocation1 + $0x28] sm:$0xff pattern:$0x73625140]
    %10588 = vst [vmem:[#allocation1] ss:$4 sm:$0xff] %v10445
    %v10589 = vld.sshfl [vmem:[#allocation1] sm:$0xff pattern:$0x73625140]
    %v10590 = vld.sshfl [vmem:[#allocation1 + $0x8] sm:$0xff pattern:$0x73625140]
    %10591 = vst [vmem:[%s10518] ss:$4 sm:$0xff] %v10447
    %v10592 = vld.sshfl [vmem:[#allocation1 + $0x20] sm:$0xff pattern:$0x73625140]
    %v10593 = vld.sshfl [vmem:[#allocation1 + $0x28] sm:$0xff pattern:$0x73625140]
    %10594 = vst [vmem:[#allocation1] ss:$4 sm:$0xff] %v10449
    %v10595 = vld.sshfl [vmem:[#allocation1] sm:$0xff pattern:$0x73625140]
    %v10596 = vld.sshfl [vmem:[#allocation1 + $0x8] sm:$0xff pattern:$0x73625140]
    %10597 = vst [vmem:[%s10518] ss:$4 sm:$0xff] %v10451
    %v10598 = vld.sshfl [vmem:[#allocation1 + $0x20] sm:$0xff pattern:$0x73625140]
    %v10599 = vld.sshfl [vmem:[#allocation1 + $0x28] sm:$0xff pattern:$0x73625140]
    %10600 = vst [vmem:[#allocation1] ss:$4 sm:$0xff] %v10452
    %v10601 = vld.sshfl [vmem:[#allocation1] sm:$0xff pattern:$0x73625140]
    %v10602 = vld.sshfl [vmem:[#allocation1 + $0x8] sm:$0xff pattern:$0x73625140]
    %10603 = vst [vmem:[%s10518] ss:$4 sm:$0xff] %v10454
    %v10604 = vld.sshfl [vmem:[#allocation1 + $0x20] sm:$0xff pattern:$0x73625140]
    %v10605 = vld.sshfl [vmem:[#allocation1 + $0x28] sm:$0xff pattern:$0x73625140]
    %10606 = vst [vmem:[#allocation1] ss:$4 sm:$0xff] %v10456
    %v10607 = vld.sshfl [vmem:[#allocation1] sm:$0xff pattern:$0x73625140]
    %v10608 = vld.sshfl [vmem:[#allocation1 + $0x8] sm:$0xff pattern:$0x73625140]
    %10609 = vst [vmem:[%s10518] ss:$4 sm:$0xff] %v10458
    %v10610 = vld.sshfl [vmem:[#allocation1 + $0x20] sm:$0xff pattern:$0x73625140]
    %v10611 = vld.sshfl [vmem:[#allocation1 + $0x28] sm:$0xff pattern:$0x73625140]
    %10612 = vst [vmem:[#allocation1] ss:$4 sm:$0xff] %v10459
    %v10613 = vld.sshfl [vmem:[#allocation1] sm:$0xff pattern:$0x73625140]
    %v10614 = vld.sshfl [vmem:[#allocation1 + $0x8] sm:$0xff pattern:$0x73625140]
    %10615 = vst [vmem:[%s10518] ss:$4 sm:$0xff] %v10461
    %v10616 = vld.sshfl [vmem:[#allocation1 + $0x20] sm:$0xff pattern:$0x73625140]
    %v10617 = vld.sshfl [vmem:[#allocation1 + $0x28] sm:$0xff pattern:$0x73625140]
    %10618 = vst [vmem:[#allocation1] ss:$4 sm:$0xff] %v10463
    %v10619 = vld.sshfl [vmem:[#allocation1] sm:$0xff pattern:$0x73625140]
    %v10620 = vld.sshfl [vmem:[#allocation1 + $0x8] sm:$0xff pattern:$0x73625140]
    %10621 = vst [vmem:[%s10518] ss:$4 sm:$0xff] %v10465
    %v10622 = vld.sshfl [vmem:[#allocation1 + $0x20] sm:$0xff pattern:$0x73625140]
    %v10623 = vld.sshfl [vmem:[#allocation1 + $0x28] sm:$0xff pattern:$0x73625140]
    %10624 = vst [vmem:[#allocation1] ss:$4 sm:$0xff] %v10466
    %v10625 = vld.sshfl [vmem:[#allocation1] sm:$0xff pattern:$0x73625140]
    %v10626 = vld.sshfl [vmem:[#allocation1 + $0x8] sm:$0xff pattern:$0x73625140]
    %10627 = vst [vmem:[%s10518] ss:$4 sm:$0xff] %v10468
    %v10628 = vld.sshfl [vmem:[#allocation1 + $0x20] sm:$0xff pattern:$0x73625140]
    %v10629 = vld.sshfl [vmem:[#allocation1 + $0x28] sm:$0xff pattern:$0x73625140]
    %10630 = vst [vmem:[#allocation1] ss:$4 sm:$0xff] %v10470
    %v10631 = vld.sshfl [vmem:[#allocation1] sm:$0xff pattern:$0x73625140]
    %v10632 = vld.sshfl [vmem:[#allocation1 + $0x8] sm:$0xff pattern:$0x73625140]
    %10633 = vst [vmem:[%s10518] ss:$4 sm:$0xff] %v10472
    %v10634 = vld.sshfl [vmem:[#allocation1 + $0x20] sm:$0xff pattern:$0x73625140]
    %v10635 = vld.sshfl [vmem:[#allocation1 + $0x28] sm:$0xff pattern:$0x73625140]
    %10636 = vst [vmem:[#allocation1] ss:$4 sm:$0xff] %v10473
    %v10637 = vld.sshfl [vmem:[#allocation1] sm:$0xff pattern:$0x73625140]
    %v10638 = vld.sshfl [vmem:[#allocation1 + $0x8] sm:$0xff pattern:$0x73625140]
    %10639 = vst [vmem:[%s10518] ss:$4 sm:$0xff] %v10475
    %v10640 = vld.sshfl [vmem:[#allocation1 + $0x20] sm:$0xff pattern:$0x73625140]
    %v10641 = vld.sshfl [vmem:[#allocation1 + $0x28] sm:$0xff pattern:$0x73625140]
    %10642 = vst [vmem:[#allocation1] ss:$4 sm:$0xff] %v10477
    %v10643 = vld.sshfl [vmem:[#allocation1] sm:$0xff pattern:$0x73625140]
    %v10644 = vld.sshfl [vmem:[#allocation1 + $0x8] sm:$0xff pattern:$0x73625140]
    %10645 = vst [vmem:[%s10518] ss:$4 sm:$0xff] %v10479
    %v10646 = vld.sshfl [vmem:[#allocation1 + $0x20] sm:$0xff pattern:$0x73625140]
    %v10647 = vld.sshfl [vmem:[#allocation1 + $0x28] sm:$0xff pattern:$0x73625140]
    %10648 = vst [vmem:[#allocation1] ss:$4 sm:$0xff] %v10480
    %v10649 = vld.sshfl [vmem:[#allocation1] sm:$0xff pattern:$0x73625140]
    %v10650 = vld.sshfl [vmem:[#allocation1 + $0x8] sm:$0xff pattern:$0x73625140]
    %10651 = vst [vmem:[%s10518] ss:$4 sm:$0xff] %v10482
    %v10652 = vld.sshfl [vmem:[#allocation1 + $0x20] sm:$0xff pattern:$0x73625140]
    %v10653 = vld.sshfl [vmem:[#allocation1 + $0x28] sm:$0xff pattern:$0x73625140]
    %10654 = vst [vmem:[#allocation1] ss:$4 sm:$0xff] %v10484
    %v10655 = vld.sshfl [vmem:[#allocation1] sm:$0xff pattern:$0x73625140]
    %v10656 = vld.sshfl [vmem:[#allocation1 + $0x8] sm:$0xff pattern:$0x73625140]
    %10657 = vst [vmem:[%s10518] ss:$4 sm:$0xff] %v10486
    %v10658 = vld.sshfl [vmem:[#allocation1 + $0x20] sm:$0xff pattern:$0x73625140]
    %v10659 = vld.sshfl [vmem:[#allocation1 + $0x28] sm:$0xff pattern:$0x73625140]
    %10660 = vst [vmem:[#allocation1] ss:$4 sm:$0xff] %v10487
    %v10661 = vld.sshfl [vmem:[#allocation1] sm:$0xff pattern:$0x73625140]
    %v10662 = vld.sshfl [vmem:[#allocation1 + $0x8] sm:$0xff pattern:$0x73625140]
    %10663 = vst [vmem:[%s10518] ss:$4 sm:$0xff] %v10489
    %v10664 = vld.sshfl [vmem:[#allocation1 + $0x20] sm:$0xff pattern:$0x73625140]
    %v10665 = vld.sshfl [vmem:[#allocation1 + $0x28] sm:$0xff pattern:$0x73625140]
    %10666 = vst [vmem:[#allocation1] ss:$4 sm:$0xff] %v10491
    %v10667 = vld.sshfl [vmem:[#allocation1] sm:$0xff pattern:$0x73625140]
    %v10668 = vld.sshfl [vmem:[#allocation1 + $0x8] sm:$0xff pattern:$0x73625140]
    %10669 = vst [vmem:[%s10518] ss:$4 sm:$0xff] %v10493
    %v10670 = vld.sshfl [vmem:[#allocation1 + $0x20] sm:$0xff pattern:$0x73625140]
    %v10671 = vld.sshfl [vmem:[#allocation1 + $0x28] sm:$0xff pattern:$0x73625140]
    %10672 = vst [vmem:[#allocation1] ss:$4 sm:$0xff] %v10494
    %v10673 = vld.sshfl [vmem:[#allocation1] sm:$0xff pattern:$0x73625140]
    %v10674 = vld.sshfl [vmem:[#allocation1 + $0x8] sm:$0xff pattern:$0x73625140]
    %10675 = vst [vmem:[%s10518] ss:$4 sm:$0xff] %v10496
    %v10676 = vld.sshfl [vmem:[#allocation1 + $0x20] sm:$0xff pattern:$0x73625140]
    %v10677 = vld.sshfl [vmem:[#allocation1 + $0x28] sm:$0xff pattern:$0x73625140]
    %10678 = vst [vmem:[#allocation1] ss:$4 sm:$0xff] %v10498
    %v10679 = vld.sshfl [vmem:[#allocation1] sm:$0xff pattern:$0x73625140]
    %v10680 = vld.sshfl [vmem:[#allocation1 + $0x8] sm:$0xff pattern:$0x73625140]
    %10681 = vst [vmem:[%s10518] ss:$4 sm:$0xff] %v10500
    %v10682 = vld.sshfl [vmem:[#allocation1 + $0x20] sm:$0xff pattern:$0x73625140]
    %v10683 = vld.sshfl [vmem:[#allocation1 + $0x28] sm:$0xff pattern:$0x73625140]
    %10684 = vst [vmem:[#allocation1] ss:$4 sm:$0xff] %v10501
    %v10685 = vld.sshfl [vmem:[#allocation1] sm:$0xff pattern:$0x73625140]
    %v10686 = vld.sshfl [vmem:[#allocation1 + $0x8] sm:$0xff pattern:$0x73625140]
    %10687 = vst [vmem:[%s10518] ss:$4 sm:$0xff] %v10503
    %v10688 = vld.sshfl [vmem:[#allocation1 + $0x20] sm:$0xff pattern:$0x73625140]
    %v10689 = vld.sshfl [vmem:[#allocation1 + $0x28] sm:$0xff pattern:$0x73625140]
    %10690 = vst [vmem:[#allocation1] ss:$4 sm:$0xff] %v10505
    %v10691 = vld.sshfl [vmem:[#allocation1] sm:$0xff pattern:$0x73625140]
    %v10692 = vld.sshfl [vmem:[#allocation1 + $0x8] sm:$0xff pattern:$0x73625140]
    %10693 = vst [vmem:[%s10518] ss:$4 sm:$0xff] %v10507
    %v10694 = vld.sshfl [vmem:[#allocation1 + $0x20] sm:$0xff pattern:$0x73625140]
    %v10695 = vld.sshfl [vmem:[#allocation1 + $0x28] sm:$0xff pattern:$0x73625140]
    %10696 = vst [vmem:[#allocation1] ss:$4 sm:$0xff] %v10508
    %v10697 = vld.sshfl [vmem:[#allocation1] sm:$0xff pattern:$0x73625140]
    %v10698 = vld.sshfl [vmem:[#allocation1 + $0x8] sm:$0xff pattern:$0x73625140]
    %10699 = vst [vmem:[%s10518] ss:$4 sm:$0xff] %v10510
    %v10700 = vld.sshfl [vmem:[#allocation1 + $0x20] sm:$0xff pattern:$0x73625140]
    %v10701 = vld.sshfl [vmem:[#allocation1 + $0x28] sm:$0xff pattern:$0x73625140]
    %10702 = vst [vmem:[#allocation1] ss:$4 sm:$0xff] %v10512
    %v10703 = vld.sshfl [vmem:[#allocation1] sm:$0xff pattern:$0x73625140]
    %v10704 = vld.sshfl [vmem:[#allocation1 + $0x8] sm:$0xff pattern:$0x73625140]
    %10705 = vst [vmem:[%s10518] ss:$4 sm:$0xff] %v10514
    %v10706 = vld.sshfl [vmem:[#allocation1 + $0x20] sm:$0xff pattern:$0x73625140]
    %v10707 = vld.sshfl [vmem:[#allocation1 + $0x28] sm:$0xff pattern:$0x73625140]
    %v10836 = vsel %vm3351, %v10516, -inf
    %v10837 = vrot.slane %v10836, 4
    %v10838 = vmax.f32 %v10836, %v10837
    %v10839 = vrot.slane %v10838, 2
    %v10840 = vmax.f32 %v10838, %v10839
    %v10841 = vrot.slane %v10840, 1
    %v10842 = vmax.f32 %v10840, %v10841
    %v10843 = vsel %vm4226, %v10517, -inf
    %v10844 = vrot.slane %v10843, 4
    %v10845 = vmax.f32 %v10843, %v10844
    %v10846 = vrot.slane %v10845, 2
    %v10847 = vmax.f32 %v10845, %v10846
    %v10848 = vrot.slane %v10847, 1
    %v10849 = vmax.f32 %v10847, %v10848
    %v10850 = vsel %vm3351, %v10520, -inf
    %v10851 = vrot.slane %v10850, 4
    %v10852 = vmax.f32 %v10850, %v10851
    %v10853 = vrot.slane %v10852, 2
    %v10854 = vmax.f32 %v10852, %v10853
    %v10855 = vrot.slane %v10854, 1
    %v10856 = vmax.f32 %v10854, %v10855
    %v10857 = vsel %vm4226, %v10521, -inf
    %v10858 = vrot.slane %v10857, 4
    %v10859 = vmax.f32 %v10857, %v10858
    %v10860 = vrot.slane %v10859, 2
    %v10861 = vmax.f32 %v10859, %v10860
    %v10862 = vrot.slane %v10861, 1
    %v10863 = vmax.f32 %v10861, %v10862
    %v10864 = vsel %vm3351, %v10523, -inf
    %v10865 = vrot.slane %v10864, 4
    %v10866 = vmax.f32 %v10864, %v10865
    %v10867 = vrot.slane %v10866, 2
    %v10868 = vmax.f32 %v10866, %v10867
    %v10869 = vrot.slane %v10868, 1
    %v10870 = vmax.f32 %v10868, %v10869
    %v10871 = vsel %vm4226, %v10524, -inf
    %v10872 = vrot.slane %v10871, 4
    %v10873 = vmax.f32 %v10871, %v10872
    %v10874 = vrot.slane %v10873, 2
    %v10875 = vmax.f32 %v10873, %v10874
    %v10876 = vrot.slane %v10875, 1
    %v10877 = vmax.f32 %v10875, %v10876
    %v10878 = vsel %vm3351, %v10526, -inf
    %v10879 = vrot.slane %v10878, 4
    %v10880 = vmax.f32 %v10878, %v10879
    %v10881 = vrot.slane %v10880, 2
    %v10882 = vmax.f32 %v10880, %v10881
    %v10883 = vrot.slane %v10882, 1
    %v10884 = vmax.f32 %v10882, %v10883
    %v10885 = vsel %vm4226, %v10527, -inf
    %v10886 = vrot.slane %v10885, 4
    %v10887 = vmax.f32 %v10885, %v10886
    %v10888 = vrot.slane %v10887, 2
    %v10889 = vmax.f32 %v10887, %v10888
    %v10890 = vrot.slane %v10889, 1
    %v10891 = vmax.f32 %v10889, %v10890
    %v10892 = vsel %vm3351, %v10529, -inf
    %v10893 = vrot.slane %v10892, 4
    %v10894 = vmax.f32 %v10892, %v10893
    %v10895 = vrot.slane %v10894, 2
    %v10896 = vmax.f32 %v10894, %v10895
    %v10897 = vrot.slane %v10896, 1
    %v10898 = vmax.f32 %v10896, %v10897
    %v10899 = vsel %vm4226, %v10530, -inf
    %v10900 = vrot.slane %v10899, 4
    %v10901 = vmax.f32 %v10899, %v10900
    %v10902 = vrot.slane %v10901, 2
    %v10903 = vmax.f32 %v10901, %v10902
    %v10904 = vrot.slane %v10903, 1
    %v10905 = vmax.f32 %v10903, %v10904
    %v10906 = vsel %vm3351, %v10532, -inf
    %v10907 = vrot.slane %v10906, 4
    %v10908 = vmax.f32 %v10906, %v10907
    %v10909 = vrot.slane %v10908, 2
    %v10910 = vmax.f32 %v10908, %v10909
    %v10911 = vrot.slane %v10910, 1
    %v10912 = vmax.f32 %v10910, %v10911
    %v10913 = vsel %vm4226, %v10533, -inf
    %v10914 = vrot.slane %v10913, 4
    %v10915 = vmax.f32 %v10913, %v10914
    %v10916 = vrot.slane %v10915, 2
    %v10917 = vmax.f32 %v10915, %v10916
    %v10918 = vrot.slane %v10917, 1
    %v10919 = vmax.f32 %v10917, %v10918
    %v10920 = vsel %vm3351, %v10535, -inf
    %v10921 = vrot.slane %v10920, 4
    %v10922 = vmax.f32 %v10920, %v10921
    %v10923 = vrot.slane %v10922, 2
    %v10924 = vmax.f32 %v10922, %v10923
    %v10925 = vrot.slane %v10924, 1
    %v10926 = vmax.f32 %v10924, %v10925
    %v10927 = vsel %vm4226, %v10536, -inf
    %v10928 = vrot.slane %v10927, 4
    %v10929 = vmax.f32 %v10927, %v10928
    %v10930 = vrot.slane %v10929, 2
    %v10931 = vmax.f32 %v10929, %v10930
    %v10932 = vrot.slane %v10931, 1
    %v10933 = vmax.f32 %v10931, %v10932
    %v10934 = vsel %vm3351, %v10538, -inf
    %v10935 = vrot.slane %v10934, 4
    %v10936 = vmax.f32 %v10934, %v10935
    %v10937 = vrot.slane %v10936, 2
    %v10938 = vmax.f32 %v10936, %v10937
    %v10939 = vrot.slane %v10938, 1
    %v10940 = vmax.f32 %v10938, %v10939
    %v10941 = vsel %vm4226, %v10539, -inf
    %v10942 = vrot.slane %v10941, 4
    %v10943 = vmax.f32 %v10941, %v10942
    %v10944 = vrot.slane %v10943, 2
    %v10945 = vmax.f32 %v10943, %v10944
    %v10946 = vrot.slane %v10945, 1
    %v10947 = vmax.f32 %v10945, %v10946
    %v10948 = vsel %vm3351, %v10541, -inf
    %v10949 = vrot.slane %v10948, 4
    %v10950 = vmax.f32 %v10948, %v10949
    %v10951 = vrot.slane %v10950, 2
    %v10952 = vmax.f32 %v10950, %v10951
    %v10953 = vrot.slane %v10952, 1
    %v10954 = vmax.f32 %v10952, %v10953
    %v10955 = vsel %vm4226, %v10542, -inf
    %v10956 = vrot.slane %v10955, 4
    %v10957 = vmax.f32 %v10955, %v10956
    %v10958 = vrot.slane %v10957, 2
    %v10959 = vmax.f32 %v10957, %v10958
    %v10960 = vrot.slane %v10959, 1
    %v10961 = vmax.f32 %v10959, %v10960
    %v10962 = vsel %vm3351, %v10544, -inf
    %v10963 = vrot.slane %v10962, 4
    %v10964 = vmax.f32 %v10962, %v10963
    %v10965 = vrot.slane %v10964, 2
    %v10966 = vmax.f32 %v10964, %v10965
    %v10967 = vrot.slane %v10966, 1
    %v10968 = vmax.f32 %v10966, %v10967
    %v10969 = vsel %vm4226, %v10545, -inf
    %v10970 = vrot.slane %v10969, 4
    %v10971 = vmax.f32 %v10969, %v10970
    %v10972 = vrot.slane %v10971, 2
    %v10973 = vmax.f32 %v10971, %v10972
    %v10974 = vrot.slane %v10973, 1
    %v10975 = vmax.f32 %v10973, %v10974
    %v10976 = vsel %vm3351, %v10547, -inf
    %v10977 = vrot.slane %v10976, 4
    %v10978 = vmax.f32 %v10976, %v10977
    %v10979 = vrot.slane %v10978, 2
    %v10980 = vmax.f32 %v10978, %v10979
    %v10981 = vrot.slane %v10980, 1
    %v10982 = vmax.f32 %v10980, %v10981
    %v10983 = vsel %vm4226, %v10548, -inf
    %v10984 = vrot.slane %v10983, 4
    %v10985 = vmax.f32 %v10983, %v10984
    %v10986 = vrot.slane %v10985, 2
    %v10987 = vmax.f32 %v10985, %v10986
    %v10988 = vrot.slane %v10987, 1
    %v10989 = vmax.f32 %v10987, %v10988
    %v10990 = vsel %vm3351, %v10550, -inf
    %v10991 = vrot.slane %v10990, 4
    %v10992 = vmax.f32 %v10990, %v10991
    %v10993 = vrot.slane %v10992, 2
    %v10994 = vmax.f32 %v10992, %v10993
    %v10995 = vrot.slane %v10994, 1
    %v10996 = vmax.f32 %v10994, %v10995
    %v10997 = vsel %vm4226, %v10551, -inf
    %v10998 = vrot.slane %v10997, 4
    %v10999 = vmax.f32 %v10997, %v10998
    %v11000 = vrot.slane %v10999, 2
    %v11001 = vmax.f32 %v10999, %v11000
    %v11002 = vrot.slane %v11001, 1
    %v11003 = vmax.f32 %v11001, %v11002
    %v11004 = vsel %vm3351, %v10553, -inf
    %v11005 = vrot.slane %v11004, 4
    %v11006 = vmax.f32 %v11004, %v11005
    %v11007 = vrot.slane %v11006, 2
    %v11008 = vmax.f32 %v11006, %v11007
    %v11009 = vrot.slane %v11008, 1
    %v11010 = vmax.f32 %v11008, %v11009
    %v11011 = vsel %vm4226, %v10554, -inf
    %v11012 = vrot.slane %v11011, 4
    %v11013 = vmax.f32 %v11011, %v11012
    %v11014 = vrot.slane %v11013, 2
    %v11015 = vmax.f32 %v11013, %v11014
    %v11016 = vrot.slane %v11015, 1
    %v11017 = vmax.f32 %v11015, %v11016
    %v11018 = vsel %vm3351, %v10556, -inf
    %v11019 = vrot.slane %v11018, 4
    %v11020 = vmax.f32 %v11018, %v11019
    %v11021 = vrot.slane %v11020, 2
    %v11022 = vmax.f32 %v11020, %v11021
    %v11023 = vrot.slane %v11022, 1
    %v11024 = vmax.f32 %v11022, %v11023
    %v11025 = vsel %vm4226, %v10557, -inf
    %v11026 = vrot.slane %v11025, 4
    %v11027 = vmax.f32 %v11025, %v11026
    %v11028 = vrot.slane %v11027, 2
    %v11029 = vmax.f32 %v11027, %v11028
    %v11030 = vrot.slane %v11029, 1
    %v11031 = vmax.f32 %v11029, %v11030
    %v11032 = vsel %vm3351, %v10559, -inf
    %v11033 = vrot.slane %v11032, 4
    %v11034 = vmax.f32 %v11032, %v11033
    %v11035 = vrot.slane %v11034, 2
    %v11036 = vmax.f32 %v11034, %v11035
    %v11037 = vrot.slane %v11036, 1
    %v11038 = vmax.f32 %v11036, %v11037
    %v11039 = vsel %vm4226, %v10560, -inf
    %v11040 = vrot.slane %v11039, 4
    %v11041 = vmax.f32 %v11039, %v11040
    %v11042 = vrot.slane %v11041, 2
    %v11043 = vmax.f32 %v11041, %v11042
    %v11044 = vrot.slane %v11043, 1
    %v11045 = vmax.f32 %v11043, %v11044
    %v11046 = vsel %vm3351, %v10562, -inf
    %v11047 = vrot.slane %v11046, 4
    %v11048 = vmax.f32 %v11046, %v11047
    %v11049 = vrot.slane %v11048, 2
    %v11050 = vmax.f32 %v11048, %v11049
    %v11051 = vrot.slane %v11050, 1
    %v11052 = vmax.f32 %v11050, %v11051
    %v11053 = vsel %vm4226, %v10563, -inf
    %v11054 = vrot.slane %v11053, 4
    %v11055 = vmax.f32 %v11053, %v11054
    %v11056 = vrot.slane %v11055, 2
    %v11057 = vmax.f32 %v11055, %v11056
    %v11058 = vrot.slane %v11057, 1
    %v11059 = vmax.f32 %v11057, %v11058
    %v11060 = vsel %vm3351, %v10565, -inf
    %v11061 = vrot.slane %v11060, 4
    %v11062 = vmax.f32 %v11060, %v11061
    %v11063 = vrot.slane %v11062, 2
    %v11064 = vmax.f32 %v11062, %v11063
    %v11065 = vrot.slane %v11064, 1
    %v11066 = vmax.f32 %v11064, %v11065
    %v11067 = vsel %vm4226, %v10566, -inf
    %v11068 = vrot.slane %v11067, 4
    %v11069 = vmax.f32 %v11067, %v11068
    %v11070 = vrot.slane %v11069, 2
    %v11071 = vmax.f32 %v11069, %v11070
    %v11072 = vrot.slane %v11071, 1
    %v11073 = vmax.f32 %v11071, %v11072
    %v11074 = vsel %vm3351, %v10568, -inf
    %v11075 = vrot.slane %v11074, 4
    %v11076 = vmax.f32 %v11074, %v11075
    %v11077 = vrot.slane %v11076, 2
    %v11078 = vmax.f32 %v11076, %v11077
    %v11079 = vrot.slane %v11078, 1
    %v11080 = vmax.f32 %v11078, %v11079
    %v11081 = vsel %vm4226, %v10569, -inf
    %v11082 = vrot.slane %v11081, 4
    %v11083 = vmax.f32 %v11081, %v11082
    %v11084 = vrot.slane %v11083, 2
    %v11085 = vmax.f32 %v11083, %v11084
    %v11086 = vrot.slane %v11085, 1
    %v11087 = vmax.f32 %v11085, %v11086
    %v11088 = vsel %vm3351, %v10571, -inf
    %v11089 = vrot.slane %v11088, 4
    %v11090 = vmax.f32 %v11088, %v11089
    %v11091 = vrot.slane %v11090, 2
    %v11092 = vmax.f32 %v11090, %v11091
    %v11093 = vrot.slane %v11092, 1
    %v11094 = vmax.f32 %v11092, %v11093
    %v11095 = vsel %vm4226, %v10572, -inf
    %v11096 = vrot.slane %v11095, 4
    %v11097 = vmax.f32 %v11095, %v11096
    %v11098 = vrot.slane %v11097, 2
    %v11099 = vmax.f32 %v11097, %v11098
    %v11100 = vrot.slane %v11099, 1
    %v11101 = vmax.f32 %v11099, %v11100
    %v11102 = vsel %vm3351, %v10574, -inf
    %v11103 = vrot.slane %v11102, 4
    %v11104 = vmax.f32 %v11102, %v11103
    %v11105 = vrot.slane %v11104, 2
    %v11106 = vmax.f32 %v11104, %v11105
    %v11107 = vrot.slane %v11106, 1
    %v11108 = vmax.f32 %v11106, %v11107
    %v11109 = vsel %vm4226, %v10575, -inf
    %v11110 = vrot.slane %v11109, 4
    %v11111 = vmax.f32 %v11109, %v11110
    %v11112 = vrot.slane %v11111, 2
    %v11113 = vmax.f32 %v11111, %v11112
    %v11114 = vrot.slane %v11113, 1
    %v11115 = vmax.f32 %v11113, %v11114
    %v11116 = vsel %vm3351, %v10577, -inf
    %v11117 = vrot.slane %v11116, 4
    %v11118 = vmax.f32 %v11116, %v11117
    %v11119 = vrot.slane %v11118, 2
    %v11120 = vmax.f32 %v11118, %v11119
    %v11121 = vrot.slane %v11120, 1
    %v11122 = vmax.f32 %v11120, %v11121
    %v11123 = vsel %vm4226, %v10578, -inf
    %v11124 = vrot.slane %v11123, 4
    %v11125 = vmax.f32 %v11123, %v11124
    %v11126 = vrot.slane %v11125, 2
    %v11127 = vmax.f32 %v11125, %v11126
    %v11128 = vrot.slane %v11127, 1
    %v11129 = vmax.f32 %v11127, %v11128
    %v11130 = vsel %vm3351, %v10580, -inf
    %v11131 = vrot.slane %v11130, 4
    %v11132 = vmax.f32 %v11130, %v11131
    %v11133 = vrot.slane %v11132, 2
    %v11134 = vmax.f32 %v11132, %v11133
    %v11135 = vrot.slane %v11134, 1
    %v11136 = vmax.f32 %v11134, %v11135
    %v11137 = vsel %vm4226, %v10581, -inf
    %v11138 = vrot.slane %v11137, 4
    %v11139 = vmax.f32 %v11137, %v11138
    %v11140 = vrot.slane %v11139, 2
    %v11141 = vmax.f32 %v11139, %v11140
    %v11142 = vrot.slane %v11141, 1
    %v11143 = vmax.f32 %v11141, %v11142
    %v11144 = vsel %vm3351, %v10583, -inf
    %v11145 = vrot.slane %v11144, 4
    %v11146 = vmax.f32 %v11144, %v11145
    %v11147 = vrot.slane %v11146, 2
    %v11148 = vmax.f32 %v11146, %v11147
    %v11149 = vrot.slane %v11148, 1
    %v11150 = vmax.f32 %v11148, %v11149
    %v11151 = vsel %vm4226, %v10584, -inf
    %v11152 = vrot.slane %v11151, 4
    %v11153 = vmax.f32 %v11151, %v11152
    %v11154 = vrot.slane %v11153, 2
    %v11155 = vmax.f32 %v11153, %v11154
    %v11156 = vrot.slane %v11155, 1
    %v11157 = vmax.f32 %v11155, %v11156
    %v11158 = vsel %vm3351, %v10586, -inf
    %v11159 = vrot.slane %v11158, 4
    %v11160 = vmax.f32 %v11158, %v11159
    %v11161 = vrot.slane %v11160, 2
    %v11162 = vmax.f32 %v11160, %v11161
    %v11163 = vrot.slane %v11162, 1
    %v11164 = vmax.f32 %v11162, %v11163
    %v11165 = vsel %vm4226, %v10587, -inf
    %v11166 = vrot.slane %v11165, 4
    %v11167 = vmax.f32 %v11165, %v11166
    %v11168 = vrot.slane %v11167, 2
    %v11169 = vmax.f32 %v11167, %v11168
    %v11170 = vrot.slane %v11169, 1
    %v11171 = vmax.f32 %v11169, %v11170
    %v11172 = vsel %vm3351, %v10589, -inf
    %v11173 = vrot.slane %v11172, 4
    %v11174 = vmax.f32 %v11172, %v11173
    %v11175 = vrot.slane %v11174, 2
    %v11176 = vmax.f32 %v11174, %v11175
    %v11177 = vrot.slane %v11176, 1
    %v11178 = vmax.f32 %v11176, %v11177
    %v11179 = vsel %vm4226, %v10590, -inf
    %v11180 = vrot.slane %v11179, 4
    %v11181 = vmax.f32 %v11179, %v11180
    %v11182 = vrot.slane %v11181, 2
    %v11183 = vmax.f32 %v11181, %v11182
    %v11184 = vrot.slane %v11183, 1
    %v11185 = vmax.f32 %v11183, %v11184
    %v11186 = vsel %vm3351, %v10592, -inf
    %v11187 = vrot.slane %v11186, 4
    %v11188 = vmax.f32 %v11186, %v11187
    %v11189 = vrot.slane %v11188, 2
    %v11190 = vmax.f32 %v11188, %v11189
    %v11191 = vrot.slane %v11190, 1
    %v11192 = vmax.f32 %v11190, %v11191
    %v11193 = vsel %vm4226, %v10593, -inf
    %v11194 = vrot.slane %v11193, 4
    %v11195 = vmax.f32 %v11193, %v11194
    %v11196 = vrot.slane %v11195, 2
    %v11197 = vmax.f32 %v11195, %v11196
    %v11198 = vrot.slane %v11197, 1
    %v11199 = vmax.f32 %v11197, %v11198
    %v11200 = vsel %vm3351, %v10595, -inf
    %v11201 = vrot.slane %v11200, 4
    %v11202 = vmax.f32 %v11200, %v11201
    %v11203 = vrot.slane %v11202, 2
    %v11204 = vmax.f32 %v11202, %v11203
    %v11205 = vrot.slane %v11204, 1
    %v11206 = vmax.f32 %v11204, %v11205
    %v11207 = vsel %vm4226, %v10596, -inf
    %v11208 = vrot.slane %v11207, 4
    %v11209 = vmax.f32 %v11207, %v11208
    %v11210 = vrot.slane %v11209, 2
    %v11211 = vmax.f32 %v11209, %v11210
    %v11212 = vrot.slane %v11211, 1
    %v11213 = vmax.f32 %v11211, %v11212
    %v11214 = vsel %vm3351, %v10598, -inf
    %v11215 = vrot.slane %v11214, 4
    %v11216 = vmax.f32 %v11214, %v11215
    %v11217 = vrot.slane %v11216, 2
    %v11218 = vmax.f32 %v11216, %v11217
    %v11219 = vrot.slane %v11218, 1
    %v11220 = vmax.f32 %v11218, %v11219
    %v11221 = vsel %vm4226, %v10599, -inf
    %v11222 = vrot.slane %v11221, 4
    %v11223 = vmax.f32 %v11221, %v11222
    %v11224 = vrot.slane %v11223, 2
    %v11225 = vmax.f32 %v11223, %v11224
    %v11226 = vrot.slane %v11225, 1
    %v11227 = vmax.f32 %v11225, %v11226
    %v11228 = vsel %vm3351, %v10601, -inf
    %v11229 = vrot.slane %v11228, 4
    %v11230 = vmax.f32 %v11228, %v11229
    %v11231 = vrot.slane %v11230, 2
    %v11232 = vmax.f32 %v11230, %v11231
    %v11233 = vrot.slane %v11232, 1
    %v11234 = vmax.f32 %v11232, %v11233
    %v11235 = vsel %vm4226, %v10602, -inf
    %v11236 = vrot.slane %v11235, 4
    %v11237 = vmax.f32 %v11235, %v11236
    %v11238 = vrot.slane %v11237, 2
    %v11239 = vmax.f32 %v11237, %v11238
    %v11240 = vrot.slane %v11239, 1
    %v11241 = vmax.f32 %v11239, %v11240
    %v11242 = vsel %vm3351, %v10604, -inf
    %v11243 = vrot.slane %v11242, 4
    %v11244 = vmax.f32 %v11242, %v11243
    %v11245 = vrot.slane %v11244, 2
    %v11246 = vmax.f32 %v11244, %v11245
    %v11247 = vrot.slane %v11246, 1
    %v11248 = vmax.f32 %v11246, %v11247
    %v11249 = vsel %vm4226, %v10605, -inf
    %v11250 = vrot.slane %v11249, 4
    %v11251 = vmax.f32 %v11249, %v11250
    %v11252 = vrot.slane %v11251, 2
    %v11253 = vmax.f32 %v11251, %v11252
    %v11254 = vrot.slane %v11253, 1
    %v11255 = vmax.f32 %v11253, %v11254
    %v11256 = vsel %vm3351, %v10607, -inf
    %v11257 = vrot.slane %v11256, 4
    %v11258 = vmax.f32 %v11256, %v11257
    %v11259 = vrot.slane %v11258, 2
    %v11260 = vmax.f32 %v11258, %v11259
    %v11261 = vrot.slane %v11260, 1
    %v11262 = vmax.f32 %v11260, %v11261
    %v11263 = vsel %vm4226, %v10608, -inf
    %v11264 = vrot.slane %v11263, 4
    %v11265 = vmax.f32 %v11263, %v11264
    %v11266 = vrot.slane %v11265, 2
    %v11267 = vmax.f32 %v11265, %v11266
    %v11268 = vrot.slane %v11267, 1
    %v11269 = vmax.f32 %v11267, %v11268
    %v11270 = vsel %vm3351, %v10610, -inf
    %v11271 = vrot.slane %v11270, 4
    %v11272 = vmax.f32 %v11270, %v11271
    %v11273 = vrot.slane %v11272, 2
    %v11274 = vmax.f32 %v11272, %v11273
    %v11275 = vrot.slane %v11274, 1
    %v11276 = vmax.f32 %v11274, %v11275
    %v11277 = vsel %vm4226, %v10611, -inf
    %v11278 = vrot.slane %v11277, 4
    %v11279 = vmax.f32 %v11277, %v11278
    %v11280 = vrot.slane %v11279, 2
    %v11281 = vmax.f32 %v11279, %v11280
    %v11282 = vrot.slane %v11281, 1
    %v11283 = vmax.f32 %v11281, %v11282
    %v11284 = vsel %vm3351, %v10613, -inf
    %v11285 = vrot.slane %v11284, 4
    %v11286 = vmax.f32 %v11284, %v11285
    %v11287 = vrot.slane %v11286, 2
    %v11288 = vmax.f32 %v11286, %v11287
    %v11289 = vrot.slane %v11288, 1
    %v11290 = vmax.f32 %v11288, %v11289
    %v11291 = vsel %vm4226, %v10614, -inf
    %v11292 = vrot.slane %v11291, 4
    %v11293 = vmax.f32 %v11291, %v11292
    %v11294 = vrot.slane %v11293, 2
    %v11295 = vmax.f32 %v11293, %v11294
    %v11296 = vrot.slane %v11295, 1
    %v11297 = vmax.f32 %v11295, %v11296
    %v11298 = vsel %vm3351, %v10616, -inf
    %v11299 = vrot.slane %v11298, 4
    %v11300 = vmax.f32 %v11298, %v11299
    %v11301 = vrot.slane %v11300, 2
    %v11302 = vmax.f32 %v11300, %v11301
    %v11303 = vrot.slane %v11302, 1
    %v11304 = vmax.f32 %v11302, %v11303
    %v11305 = vsel %vm4226, %v10617, -inf
    %v11306 = vrot.slane %v11305, 4
    %v11307 = vmax.f32 %v11305, %v11306
    %v11308 = vrot.slane %v11307, 2
    %v11309 = vmax.f32 %v11307, %v11308
    %v11310 = vrot.slane %v11309, 1
    %v11311 = vmax.f32 %v11309, %v11310
    %v11312 = vsel %vm3351, %v10619, -inf
    %v11313 = vrot.slane %v11312, 4
    %v11314 = vmax.f32 %v11312, %v11313
    %v11315 = vrot.slane %v11314, 2
    %v11316 = vmax.f32 %v11314, %v11315
    %v11317 = vrot.slane %v11316, 1
    %v11318 = vmax.f32 %v11316, %v11317
    %v11319 = vsel %vm4226, %v10620, -inf
    %v11320 = vrot.slane %v11319, 4
    %v11321 = vmax.f32 %v11319, %v11320
    %v11322 = vrot.slane %v11321, 2
    %v11323 = vmax.f32 %v11321, %v11322
    %v11324 = vrot.slane %v11323, 1
    %v11325 = vmax.f32 %v11323, %v11324
    %v11326 = vsel %vm3351, %v10622, -inf
    %v11327 = vrot.slane %v11326, 4
    %v11328 = vmax.f32 %v11326, %v11327
    %v11329 = vrot.slane %v11328, 2
    %v11330 = vmax.f32 %v11328, %v11329
    %v11331 = vrot.slane %v11330, 1
    %v11332 = vmax.f32 %v11330, %v11331
    %v11333 = vsel %vm4226, %v10623, -inf
    %v11334 = vrot.slane %v11333, 4
    %v11335 = vmax.f32 %v11333, %v11334
    %v11336 = vrot.slane %v11335, 2
    %v11337 = vmax.f32 %v11335, %v11336
    %v11338 = vrot.slane %v11337, 1
    %v11339 = vmax.f32 %v11337, %v11338
    %v11340 = vsel %vm3351, %v10625, -inf
    %v11341 = vrot.slane %v11340, 4
    %v11342 = vmax.f32 %v11340, %v11341
    %v11343 = vrot.slane %v11342, 2
    %v11344 = vmax.f32 %v11342, %v11343
    %v11345 = vrot.slane %v11344, 1
    %v11346 = vmax.f32 %v11344, %v11345
    %v11347 = vsel %vm4226, %v10626, -inf
    %v11348 = vrot.slane %v11347, 4
    %v11349 = vmax.f32 %v11347, %v11348
    %v11350 = vrot.slane %v11349, 2
    %v11351 = vmax.f32 %v11349, %v11350
    %v11352 = vrot.slane %v11351, 1
    %v11353 = vmax.f32 %v11351, %v11352
    %v11354 = vsel %vm3351, %v10628, -inf
    %v11355 = vrot.slane %v11354, 4
    %v11356 = vmax.f32 %v11354, %v11355
    %v11357 = vrot.slane %v11356, 2
    %v11358 = vmax.f32 %v11356, %v11357
    %v11359 = vrot.slane %v11358, 1
    %v11360 = vmax.f32 %v11358, %v11359
    %v11361 = vsel %vm4226, %v10629, -inf
    %v11362 = vrot.slane %v11361, 4
    %v11363 = vmax.f32 %v11361, %v11362
    %v11364 = vrot.slane %v11363, 2
    %v11365 = vmax.f32 %v11363, %v11364
    %v11366 = vrot.slane %v11365, 1
    %v11367 = vmax.f32 %v11365, %v11366
    %v11368 = vsel %vm3351, %v10631, -inf
    %v11369 = vrot.slane %v11368, 4
    %v11370 = vmax.f32 %v11368, %v11369
    %v11371 = vrot.slane %v11370, 2
    %v11372 = vmax.f32 %v11370, %v11371
    %v11373 = vrot.slane %v11372, 1
    %v11374 = vmax.f32 %v11372, %v11373
    %v11375 = vsel %vm4226, %v10632, -inf
    %v11376 = vrot.slane %v11375, 4
    %v11377 = vmax.f32 %v11375, %v11376
    %v11378 = vrot.slane %v11377, 2
    %v11379 = vmax.f32 %v11377, %v11378
    %v11380 = vrot.slane %v11379, 1
    %v11381 = vmax.f32 %v11379, %v11380
    %v11382 = vsel %vm3351, %v10634, -inf
    %v11383 = vrot.slane %v11382, 4
    %v11384 = vmax.f32 %v11382, %v11383
    %v11385 = vrot.slane %v11384, 2
    %v11386 = vmax.f32 %v11384, %v11385
    %v11387 = vrot.slane %v11386, 1
    %v11388 = vmax.f32 %v11386, %v11387
    %v11389 = vsel %vm4226, %v10635, -inf
    %v11390 = vrot.slane %v11389, 4
    %v11391 = vmax.f32 %v11389, %v11390
    %v11392 = vrot.slane %v11391, 2
    %v11393 = vmax.f32 %v11391, %v11392
    %v11394 = vrot.slane %v11393, 1
    %v11395 = vmax.f32 %v11393, %v11394
    %v11396 = vsel %vm3351, %v10637, -inf
    %v11397 = vrot.slane %v11396, 4
    %v11398 = vmax.f32 %v11396, %v11397
    %v11399 = vrot.slane %v11398, 2
    %v11400 = vmax.f32 %v11398, %v11399
    %v11401 = vrot.slane %v11400, 1
    %v11402 = vmax.f32 %v11400, %v11401
    %v11403 = vsel %vm4226, %v10638, -inf
    %v11404 = vrot.slane %v11403, 4
    %v11405 = vmax.f32 %v11403, %v11404
    %v11406 = vrot.slane %v11405, 2
    %v11407 = vmax.f32 %v11405, %v11406
    %v11408 = vrot.slane %v11407, 1
    %v11409 = vmax.f32 %v11407, %v11408
    %v11410 = vsel %vm3351, %v10640, -inf
    %v11411 = vrot.slane %v11410, 4
    %v11412 = vmax.f32 %v11410, %v11411
    %v11413 = vrot.slane %v11412, 2
    %v11414 = vmax.f32 %v11412, %v11413
    %v11415 = vrot.slane %v11414, 1
    %v11416 = vmax.f32 %v11414, %v11415
    %v11417 = vsel %vm4226, %v10641, -inf
    %v11418 = vrot.slane %v11417, 4
    %v11419 = vmax.f32 %v11417, %v11418
    %v11420 = vrot.slane %v11419, 2
    %v11421 = vmax.f32 %v11419, %v11420
    %v11422 = vrot.slane %v11421, 1
    %v11423 = vmax.f32 %v11421, %v11422
    %v11424 = vsel %vm3351, %v10643, -inf
    %v11425 = vrot.slane %v11424, 4
    %v11426 = vmax.f32 %v11424, %v11425
    %v11427 = vrot.slane %v11426, 2
    %v11428 = vmax.f32 %v11426, %v11427
    %v11429 = vrot.slane %v11428, 1
    %v11430 = vmax.f32 %v11428, %v11429
    %v11431 = vsel %vm4226, %v10644, -inf
    %v11432 = vrot.slane %v11431, 4
    %v11433 = vmax.f32 %v11431, %v11432
    %v11434 = vrot.slane %v11433, 2
    %v11435 = vmax.f32 %v11433, %v11434
    %v11436 = vrot.slane %v11435, 1
    %v11437 = vmax.f32 %v11435, %v11436
    %v11438 = vsel %vm3351, %v10646, -inf
    %v11439 = vrot.slane %v11438, 4
    %v11440 = vmax.f32 %v11438, %v11439
    %v11441 = vrot.slane %v11440, 2
    %v11442 = vmax.f32 %v11440, %v11441
    %v11443 = vrot.slane %v11442, 1
    %v11444 = vmax.f32 %v11442, %v11443
    %v11445 = vsel %vm4226, %v10647, -inf
    %v11446 = vrot.slane %v11445, 4
    %v11447 = vmax.f32 %v11445, %v11446
    %v11448 = vrot.slane %v11447, 2
    %v11449 = vmax.f32 %v11447, %v11448
    %v11450 = vrot.slane %v11449, 1
    %v11451 = vmax.f32 %v11449, %v11450
    %v11452 = vsel %vm3351, %v10649, -inf
    %v11453 = vrot.slane %v11452, 4
    %v11454 = vmax.f32 %v11452, %v11453
    %v11455 = vrot.slane %v11454, 2
    %v11456 = vmax.f32 %v11454, %v11455
    %v11457 = vrot.slane %v11456, 1
    %v11458 = vmax.f32 %v11456, %v11457
    %v11459 = vsel %vm4226, %v10650, -inf
    %v11460 = vrot.slane %v11459, 4
    %v11461 = vmax.f32 %v11459, %v11460
    %v11462 = vrot.slane %v11461, 2
    %v11463 = vmax.f32 %v11461, %v11462
    %v11464 = vrot.slane %v11463, 1
    %v11465 = vmax.f32 %v11463, %v11464
    %v11466 = vsel %vm3351, %v10652, -inf
    %v11467 = vrot.slane %v11466, 4
    %v11468 = vmax.f32 %v11466, %v11467
    %v11469 = vrot.slane %v11468, 2
    %v11470 = vmax.f32 %v11468, %v11469
    %v11471 = vrot.slane %v11470, 1
    %v11472 = vmax.f32 %v11470, %v11471
    %v11473 = vsel %vm4226, %v10653, -inf
    %v11474 = vrot.slane %v11473, 4
    %v11475 = vmax.f32 %v11473, %v11474
    %v11476 = vrot.slane %v11475, 2
    %v11477 = vmax.f32 %v11475, %v11476
    %v11478 = vrot.slane %v11477, 1
    %v11479 = vmax.f32 %v11477, %v11478
    %v11480 = vsel %vm3351, %v10655, -inf
    %v11481 = vrot.slane %v11480, 4
    %v11482 = vmax.f32 %v11480, %v11481
    %v11483 = vrot.slane %v11482, 2
    %v11484 = vmax.f32 %v11482, %v11483
    %v11485 = vrot.slane %v11484, 1
    %v11486 = vmax.f32 %v11484, %v11485
    %v11487 = vsel %vm4226, %v10656, -inf
    %v11488 = vrot.slane %v11487, 4
    %v11489 = vmax.f32 %v11487, %v11488
    %v11490 = vrot.slane %v11489, 2
    %v11491 = vmax.f32 %v11489, %v11490
    %v11492 = vrot.slane %v11491, 1
    %v11493 = vmax.f32 %v11491, %v11492
    %v11494 = vsel %vm3351, %v10658, -inf
    %v11495 = vrot.slane %v11494, 4
    %v11496 = vmax.f32 %v11494, %v11495
    %v11497 = vrot.slane %v11496, 2
    %v11498 = vmax.f32 %v11496, %v11497
    %v11499 = vrot.slane %v11498, 1
    %v11500 = vmax.f32 %v11498, %v11499
    %v11501 = vsel %vm4226, %v10659, -inf
    %v11502 = vrot.slane %v11501, 4
    %v11503 = vmax.f32 %v11501, %v11502
    %v11504 = vrot.slane %v11503, 2
    %v11505 = vmax.f32 %v11503, %v11504
    %v11506 = vrot.slane %v11505, 1
    %v11507 = vmax.f32 %v11505, %v11506
    %v11508 = vsel %vm3351, %v10661, -inf
    %v11509 = vrot.slane %v11508, 4
    %v11510 = vmax.f32 %v11508, %v11509
    %v11511 = vrot.slane %v11510, 2
    %v11512 = vmax.f32 %v11510, %v11511
    %v11513 = vrot.slane %v11512, 1
    %v11514 = vmax.f32 %v11512, %v11513
    %v11515 = vsel %vm4226, %v10662, -inf
    %v11516 = vrot.slane %v11515, 4
    %v11517 = vmax.f32 %v11515, %v11516
    %v11518 = vrot.slane %v11517, 2
    %v11519 = vmax.f32 %v11517, %v11518
    %v11520 = vrot.slane %v11519, 1
    %v11521 = vmax.f32 %v11519, %v11520
    %v11522 = vsel %vm3351, %v10664, -inf
    %v11523 = vrot.slane %v11522, 4
    %v11524 = vmax.f32 %v11522, %v11523
    %v11525 = vrot.slane %v11524, 2
    %v11526 = vmax.f32 %v11524, %v11525
    %v11527 = vrot.slane %v11526, 1
    %v11528 = vmax.f32 %v11526, %v11527
    %v11529 = vsel %vm4226, %v10665, -inf
    %v11530 = vrot.slane %v11529, 4
    %v11531 = vmax.f32 %v11529, %v11530
    %v11532 = vrot.slane %v11531, 2
    %v11533 = vmax.f32 %v11531, %v11532
    %v11534 = vrot.slane %v11533, 1
    %v11535 = vmax.f32 %v11533, %v11534
    %v11536 = vsel %vm3351, %v10667, -inf
    %v11537 = vrot.slane %v11536, 4
    %v11538 = vmax.f32 %v11536, %v11537
    %v11539 = vrot.slane %v11538, 2
    %v11540 = vmax.f32 %v11538, %v11539
    %v11541 = vrot.slane %v11540, 1
    %v11542 = vmax.f32 %v11540, %v11541
    %v11543 = vsel %vm4226, %v10668, -inf
    %v11544 = vrot.slane %v11543, 4
    %v11545 = vmax.f32 %v11543, %v11544
    %v11546 = vrot.slane %v11545, 2
    %v11547 = vmax.f32 %v11545, %v11546
    %v11548 = vrot.slane %v11547, 1
    %v11549 = vmax.f32 %v11547, %v11548
    %v11550 = vsel %vm3351, %v10670, -inf
    %v11551 = vrot.slane %v11550, 4
    %v11552 = vmax.f32 %v11550, %v11551
    %v11553 = vrot.slane %v11552, 2
    %v11554 = vmax.f32 %v11552, %v11553
    %v11555 = vrot.slane %v11554, 1
    %v11556 = vmax.f32 %v11554, %v11555
    %v11557 = vsel %vm4226, %v10671, -inf
    %v11558 = vrot.slane %v11557, 4
    %v11559 = vmax.f32 %v11557, %v11558
    %v11560 = vrot.slane %v11559, 2
    %v11561 = vmax.f32 %v11559, %v11560
    %v11562 = vrot.slane %v11561, 1
    %v11563 = vmax.f32 %v11561, %v11562
    %v11564 = vsel %vm3351, %v10673, -inf
    %v11565 = vrot.slane %v11564, 4
    %v11566 = vmax.f32 %v11564, %v11565
    %v11567 = vrot.slane %v11566, 2
    %v11568 = vmax.f32 %v11566, %v11567
    %v11569 = vrot.slane %v11568, 1
    %v11570 = vmax.f32 %v11568, %v11569
    %v11571 = vsel %vm4226, %v10674, -inf
    %v11572 = vrot.slane %v11571, 4
    %v11573 = vmax.f32 %v11571, %v11572
    %v11574 = vrot.slane %v11573, 2
    %v11575 = vmax.f32 %v11573, %v11574
    %v11576 = vrot.slane %v11575, 1
    %v11577 = vmax.f32 %v11575, %v11576
    %v11578 = vsel %vm3351, %v10676, -inf
    %v11579 = vrot.slane %v11578, 4
    %v11580 = vmax.f32 %v11578, %v11579
    %v11581 = vrot.slane %v11580, 2
    %v11582 = vmax.f32 %v11580, %v11581
    %v11583 = vrot.slane %v11582, 1
    %v11584 = vmax.f32 %v11582, %v11583
    %v11585 = vsel %vm4226, %v10677, -inf
    %v11586 = vrot.slane %v11585, 4
    %v11587 = vmax.f32 %v11585, %v11586
    %v11588 = vrot.slane %v11587, 2
    %v11589 = vmax.f32 %v11587, %v11588
    %v11590 = vrot.slane %v11589, 1
    %v11591 = vmax.f32 %v11589, %v11590
    %v11592 = vsel %vm3351, %v10679, -inf
    %v11593 = vrot.slane %v11592, 4
    %v11594 = vmax.f32 %v11592, %v11593
    %v11595 = vrot.slane %v11594, 2
    %v11596 = vmax.f32 %v11594, %v11595
    %v11597 = vrot.slane %v11596, 1
    %v11598 = vmax.f32 %v11596, %v11597
    %v11599 = vsel %vm4226, %v10680, -inf
    %v11600 = vrot.slane %v11599, 4
    %v11601 = vmax.f32 %v11599, %v11600
    %v11602 = vrot.slane %v11601, 2
    %v11603 = vmax.f32 %v11601, %v11602
    %v11604 = vrot.slane %v11603, 1
    %v11605 = vmax.f32 %v11603, %v11604
    %v11606 = vsel %vm3351, %v10682, -inf
    %v11607 = vrot.slane %v11606, 4
    %v11608 = vmax.f32 %v11606, %v11607
    %v11609 = vrot.slane %v11608, 2
    %v11610 = vmax.f32 %v11608, %v11609
    %v11611 = vrot.slane %v11610, 1
    %v11612 = vmax.f32 %v11610, %v11611
    %v11613 = vsel %vm4226, %v10683, -inf
    %v11614 = vrot.slane %v11613, 4
    %v11615 = vmax.f32 %v11613, %v11614
    %v11616 = vrot.slane %v11615, 2
    %v11617 = vmax.f32 %v11615, %v11616
    %v11618 = vrot.slane %v11617, 1
    %v11619 = vmax.f32 %v11617, %v11618
    %v11620 = vsel %vm3351, %v10685, -inf
    %v11621 = vrot.slane %v11620, 4
    %v11622 = vmax.f32 %v11620, %v11621
    %v11623 = vrot.slane %v11622, 2
    %v11624 = vmax.f32 %v11622, %v11623
    %v11625 = vrot.slane %v11624, 1
    %v11626 = vmax.f32 %v11624, %v11625
    %v11627 = vsel %vm4226, %v10686, -inf
    %v11628 = vrot.slane %v11627, 4
    %v11629 = vmax.f32 %v11627, %v11628
    %v11630 = vrot.slane %v11629, 2
    %v11631 = vmax.f32 %v11629, %v11630
    %v11632 = vrot.slane %v11631, 1
    %v11633 = vmax.f32 %v11631, %v11632
    %v11634 = vsel %vm3351, %v10688, -inf
    %v11635 = vrot.slane %v11634, 4
    %v11636 = vmax.f32 %v11634, %v11635
    %v11637 = vrot.slane %v11636, 2
    %v11638 = vmax.f32 %v11636, %v11637
    %v11639 = vrot.slane %v11638, 1
    %v11640 = vmax.f32 %v11638, %v11639
    %v11641 = vsel %vm4226, %v10689, -inf
    %v11642 = vrot.slane %v11641, 4
    %v11643 = vmax.f32 %v11641, %v11642
    %v11644 = vrot.slane %v11643, 2
    %v11645 = vmax.f32 %v11643, %v11644
    %v11646 = vrot.slane %v11645, 1
    %v11647 = vmax.f32 %v11645, %v11646
    %v11648 = vsel %vm3351, %v10691, -inf
    %v11649 = vrot.slane %v11648, 4
    %v11650 = vmax.f32 %v11648, %v11649
    %v11651 = vrot.slane %v11650, 2
    %v11652 = vmax.f32 %v11650, %v11651
    %v11653 = vrot.slane %v11652, 1
    %v11654 = vmax.f32 %v11652, %v11653
    %v11655 = vsel %vm4226, %v10692, -inf
    %v11656 = vrot.slane %v11655, 4
    %v11657 = vmax.f32 %v11655, %v11656
    %v11658 = vrot.slane %v11657, 2
    %v11659 = vmax.f32 %v11657, %v11658
    %v11660 = vrot.slane %v11659, 1
    %v11661 = vmax.f32 %v11659, %v11660
    %v11662 = vsel %vm3351, %v10694, -inf
    %v11663 = vrot.slane %v11662, 4
    %v11664 = vmax.f32 %v11662, %v11663
    %v11665 = vrot.slane %v11664, 2
    %v11666 = vmax.f32 %v11664, %v11665
    %v11667 = vrot.slane %v11666, 1
    %v11668 = vmax.f32 %v11666, %v11667
    %v11669 = vsel %vm4226, %v10695, -inf
    %v11670 = vrot.slane %v11669, 4
    %v11671 = vmax.f32 %v11669, %v11670
    %v11672 = vrot.slane %v11671, 2
    %v11673 = vmax.f32 %v11671, %v11672
    %v11674 = vrot.slane %v11673, 1
    %v11675 = vmax.f32 %v11673, %v11674
    %v11676 = vsel %vm3351, %v10697, -inf
    %v11677 = vrot.slane %v11676, 4
    %v11678 = vmax.f32 %v11676, %v11677
    %v11679 = vrot.slane %v11678, 2
    %v11680 = vmax.f32 %v11678, %v11679
    %v11681 = vrot.slane %v11680, 1
    %v11682 = vmax.f32 %v11680, %v11681
    %v11683 = vsel %vm4226, %v10698, -inf
    %v11684 = vrot.slane %v11683, 4
    %v11685 = vmax.f32 %v11683, %v11684
    %v11686 = vrot.slane %v11685, 2
    %v11687 = vmax.f32 %v11685, %v11686
    %v11688 = vrot.slane %v11687, 1
    %v11689 = vmax.f32 %v11687, %v11688
    %v11690 = vsel %vm3351, %v10700, -inf
    %v11691 = vrot.slane %v11690, 4
    %v11692 = vmax.f32 %v11690, %v11691
    %v11693 = vrot.slane %v11692, 2
    %v11694 = vmax.f32 %v11692, %v11693
    %v11695 = vrot.slane %v11694, 1
    %v11696 = vmax.f32 %v11694, %v11695
    %v11697 = vsel %vm4226, %v10701, -inf
    %v11698 = vrot.slane %v11697, 4
    %v11699 = vmax.f32 %v11697, %v11698
    %v11700 = vrot.slane %v11699, 2
    %v11701 = vmax.f32 %v11699, %v11700
    %v11702 = vrot.slane %v11701, 1
    %v11703 = vmax.f32 %v11701, %v11702
    %v11704 = vsel %vm3351, %v10703, -inf
    %v11705 = vrot.slane %v11704, 4
    %v11706 = vmax.f32 %v11704, %v11705
    %v11707 = vrot.slane %v11706, 2
    %v11708 = vmax.f32 %v11706, %v11707
    %v11709 = vrot.slane %v11708, 1
    %v11710 = vmax.f32 %v11708, %v11709
    %v11711 = vsel %vm4226, %v10704, -inf
    %v11712 = vrot.slane %v11711, 4
    %v11713 = vmax.f32 %v11711, %v11712
    %v11714 = vrot.slane %v11713, 2
    %v11715 = vmax.f32 %v11713, %v11714
    %v11716 = vrot.slane %v11715, 1
    %v11717 = vmax.f32 %v11715, %v11716
    %v11718 = vsel %vm3351, %v10706, -inf
    %v11719 = vrot.slane %v11718, 4
    %v11720 = vmax.f32 %v11718, %v11719
    %v11721 = vrot.slane %v11720, 2
    %v11722 = vmax.f32 %v11720, %v11721
    %v11723 = vrot.slane %v11722, 1
    %v11724 = vmax.f32 %v11722, %v11723
    %v11725 = vsel %vm4226, %v10707, -inf
    %v11726 = vrot.slane %v11725, 4
    %v11727 = vmax.f32 %v11725, %v11726
    %v11728 = vrot.slane %v11727, 2
    %v11729 = vmax.f32 %v11727, %v11728
    %v11730 = vrot.slane %v11729, 1
    %v11731 = vmax.f32 %v11729, %v11730
    %v11748 = vsel %vm6284, %v10954, %v10842
    %v11749 = vsel %vm6266, %v11066, %v11748
    %v11750 = vsel %vm6268, %v11178, %v11749
    %v11751 = vsel %vm6270, %v11290, %v11750
    %v11752 = vsel %vm6272, %v11402, %v11751
    %v11753 = vsel %vm6274, %v11514, %v11752
    %v11754 = vsel %vm6276, %v11626, %v11753
    %v11755 = vsel %vm6284, %v10961, %v10849
    %v11756 = vsel %vm6266, %v11073, %v11755
    %v11757 = vsel %vm6268, %v11185, %v11756
    %v11758 = vsel %vm6270, %v11297, %v11757
    %v11759 = vsel %vm6272, %v11409, %v11758
    %v11760 = vsel %vm6274, %v11521, %v11759
    %v11761 = vsel %vm6276, %v11633, %v11760
    %v11780 = vsel %vm6284, %v10968, %v10856
    %v11781 = vsel %vm6266, %v11080, %v11780
    %v11782 = vsel %vm6268, %v11192, %v11781
    %v11783 = vsel %vm6270, %v11304, %v11782
    %v11784 = vsel %vm6272, %v11416, %v11783
    %v11785 = vsel %vm6274, %v11528, %v11784
    %v11786 = vsel %vm6276, %v11640, %v11785
    %v11787 = vsel %vm6284, %v10975, %v10863
    %v11788 = vsel %vm6266, %v11087, %v11787
    %v11789 = vsel %vm6268, %v11199, %v11788
    %v11790 = vsel %vm6270, %v11311, %v11789
    %v11791 = vsel %vm6272, %v11423, %v11790
    %v11792 = vsel %vm6274, %v11535, %v11791
    %v11793 = vsel %vm6276, %v11647, %v11792
    %11794 = vrot.lane.b32.xlu0 %v11786, 96
    %v11795 = vpop.permute.xlu0 %11794
    %11796 = vrot.lane.b32.xlu0 %v11793, 96
    %v11797 = vpop.permute.xlu0 %11796
    %v11798 = vsel %vm3030, %v11795, %v11797
    %v11818 = vsel %vm6284, %v10982, %v10870
    %v11819 = vsel %vm6266, %v11094, %v11818
    %v11820 = vsel %vm6268, %v11206, %v11819
    %v11821 = vsel %vm6270, %v11318, %v11820
    %v11822 = vsel %vm6272, %v11430, %v11821
    %v11823 = vsel %vm6274, %v11542, %v11822
    %v11824 = vsel %vm6276, %v11654, %v11823
    %v11825 = vsel %vm6284, %v10989, %v10877
    %v11826 = vsel %vm6266, %v11101, %v11825
    %v11827 = vsel %vm6268, %v11213, %v11826
    %v11828 = vsel %vm6270, %v11325, %v11827
    %v11829 = vsel %vm6272, %v11437, %v11828
    %v11830 = vsel %vm6274, %v11549, %v11829
    %v11831 = vsel %vm6276, %v11661, %v11830
    %11832 = vrot.lane.b32.xlu0 %v11824, 64
    %v11833 = vpop.permute.xlu0 %11832
    %11834 = vrot.lane.b32.xlu0 %v11831, 64
    %v11835 = vpop.permute.xlu0 %11834
    %v11836 = vsel %vm2964, %v11833, %v11835
    %v11856 = vsel %vm6284, %v10996, %v10884
    %v11857 = vsel %vm6266, %v11108, %v11856
    %v11858 = vsel %vm6268, %v11220, %v11857
    %v11859 = vsel %vm6270, %v11332, %v11858
    %v11860 = vsel %vm6272, %v11444, %v11859
    %v11861 = vsel %vm6274, %v11556, %v11860
    %v11862 = vsel %vm6276, %v11668, %v11861
    %v11863 = vsel %vm6284, %v11003, %v10891
    %v11864 = vsel %vm6266, %v11115, %v11863
    %v11865 = vsel %vm6268, %v11227, %v11864
    %v11866 = vsel %vm6270, %v11339, %v11865
    %v11867 = vsel %vm6272, %v11451, %v11866
    %v11868 = vsel %vm6274, %v11563, %v11867
    %v11869 = vsel %vm6276, %v11675, %v11868
    %11870 = vrot.lane.b32.xlu0 %v11862, 32
    %v11871 = vpop.permute.xlu0 %11870
    %11872 = vrot.lane.b32.xlu0 %v11869, 32
    %v11873 = vpop.permute.xlu0 %11872
    %v11874 = vsel %vm2898, %v11871, %v11873
    %v11893 = vsel %vm6284, %v11010, %v10898
    %v11894 = vsel %vm6266, %v11122, %v11893
    %v11895 = vsel %vm6268, %v11234, %v11894
    %v11896 = vsel %vm6270, %v11346, %v11895
    %v11897 = vsel %vm6272, %v11458, %v11896
    %v11898 = vsel %vm6274, %v11570, %v11897
    %v11899 = vsel %vm6276, %v11682, %v11898
    %v11900 = vsel %vm6284, %v11017, %v10905
    %v11901 = vsel %vm6266, %v11129, %v11900
    %v11902 = vsel %vm6268, %v11241, %v11901
    %v11903 = vsel %vm6270, %v11353, %v11902
    %v11904 = vsel %vm6272, %v11465, %v11903
    %v11905 = vsel %vm6274, %v11577, %v11904
    %v11906 = vsel %vm6276, %v11689, %v11905
    %v11925 = vsel %vm6284, %v11024, %v10912
    %v11926 = vsel %vm6266, %v11136, %v11925
    %v11927 = vsel %vm6268, %v11248, %v11926
    %v11928 = vsel %vm6270, %v11360, %v11927
    %v11929 = vsel %vm6272, %v11472, %v11928
    %v11930 = vsel %vm6274, %v11584, %v11929
    %v11931 = vsel %vm6276, %v11696, %v11930
    %v11932 = vsel %vm6284, %v11031, %v10919
    %v11933 = vsel %vm6266, %v11143, %v11932
    %v11934 = vsel %vm6268, %v11255, %v11933
    %v11935 = vsel %vm6270, %v11367, %v11934
    %v11936 = vsel %vm6272, %v11479, %v11935
    %v11937 = vsel %vm6274, %v11591, %v11936
    %v11938 = vsel %vm6276, %v11703, %v11937
    %11939 = vrot.lane.b32.xlu0 %v11931, 96
    %v11940 = vpop.permute.xlu0 %11939
    %11941 = vrot.lane.b32.xlu0 %v11938, 96
    %v11942 = vpop.permute.xlu0 %11941
    %v11943 = vsel %vm3030, %v11940, %v11942
    %v11963 = vsel %vm6284, %v11038, %v10926
    %v11964 = vsel %vm6266, %v11150, %v11963
    %v11965 = vsel %vm6268, %v11262, %v11964
    %v11966 = vsel %vm6270, %v11374, %v11965
    %v11967 = vsel %vm6272, %v11486, %v11966
    %v11968 = vsel %vm6274, %v11598, %v11967
    %v11969 = vsel %vm6276, %v11710, %v11968
    %v11970 = vsel %vm6284, %v11045, %v10933
    %v11971 = vsel %vm6266, %v11157, %v11970
    %v11972 = vsel %vm6268, %v11269, %v11971
    %v11973 = vsel %vm6270, %v11381, %v11972
    %v11974 = vsel %vm6272, %v11493, %v11973
    %v11975 = vsel %vm6274, %v11605, %v11974
    %v11976 = vsel %vm6276, %v11717, %v11975
    %11977 = vrot.lane.b32.xlu0 %v11969, 64
    %v11978 = vpop.permute.xlu0 %11977
    %11979 = vrot.lane.b32.xlu0 %v11976, 64
    %v11980 = vpop.permute.xlu0 %11979
    %v11981 = vsel %vm2964, %v11978, %v11980
    %v12001 = vsel %vm6284, %v11052, %v10940
    %v12002 = vsel %vm6266, %v11164, %v12001
    %v12003 = vsel %vm6268, %v11276, %v12002
    %v12004 = vsel %vm6270, %v11388, %v12003
    %v12005 = vsel %vm6272, %v11500, %v12004
    %v12006 = vsel %vm6274, %v11612, %v12005
    %v12007 = vsel %vm6276, %v11724, %v12006
    %v12008 = vsel %vm6284, %v11059, %v10947
    %v12009 = vsel %vm6266, %v11171, %v12008
    %v12010 = vsel %vm6268, %v11283, %v12009
    %v12011 = vsel %vm6270, %v11395, %v12010
    %v12012 = vsel %vm6272, %v11507, %v12011
    %v12013 = vsel %vm6274, %v11619, %v12012
    %v12014 = vsel %vm6276, %v11731, %v12013
    %12015 = vrot.lane.b32.xlu0 %v12007, 32
    %v12016 = vpop.permute.xlu0 %12015
    %12017 = vrot.lane.b32.xlu0 %v12014, 32
    %v12018 = vpop.permute.xlu0 %12017
    %v12019 = vsel %vm2898, %v12016, %v12018
    %v12022 = vsel %vm3030, %v11761, %v11795
    %v12023 = vsel %vm2964, %v11797, %v11833
    %v12024 = vsel %vm2898, %v11835, %v11871
    %v12025 = vsel %vm3030, %v11906, %v11940
    %v12026 = vsel %vm2964, %v11942, %v11978
    %v12027 = vsel %vm2898, %v11980, %v12016
    %v12028 = vpack.c.bf16 %v11754, %v11754
    %v12029 = vpack.c.bf16 %v12022, %v12022
    %v12030 = vpack.c.bf16 %v11798, %v11798
    %v12031 = vpack.c.bf16 %v12023, %v12023
    %v12032 = vpack.c.bf16 %v11836, %v11836
    %v12033 = vpack.c.bf16 %v12024, %v12024
    %v12034 = vpack.c.bf16 %v11874, %v11874
    %v12035 = vpack.c.bf16 %v11899, %v11899
    %v12036 = vpack.c.bf16 %v12025, %v12025
    %v12037 = vpack.c.bf16 %v11943, %v11943
    %v12038 = vpack.c.bf16 %v12026, %v12026
    %v12039 = vpack.c.bf16 %v11981, %v11981
    %v12040 = vpack.c.bf16 %v12027, %v12027
    %v12041 = vpack.c.bf16 %v12019, %v12019
    %v12042 = vld [vmem:[#allocation2] sm:$0xf]
    %v12043 = vld [vmem:[#allocation2 + $0x4] sm:$0xf]
    %v12044 = vld [vmem:[#allocation2 + $0x8] sm:$0xf]
    %v12045 = vld [vmem:[#allocation2 + $0xc] sm:$0xf]
    %v12046 = vld [vmem:[#allocation2 + $0x10] sm:$0xf]
    %v12047 = vld [vmem:[#allocation2 + $0x14] sm:$0xf]
    %v12048 = vld [vmem:[#allocation2 + $0x18] sm:$0xf]
    %v12049 = vld [vmem:[#allocation2 + $0x1c] sm:$0xf]
    %v12050 = vld [vmem:[#allocation2 + $0x20] sm:$0xf]
    %v12051 = vld [vmem:[#allocation2 + $0x24] sm:$0xf]
    %v12052 = vld [vmem:[#allocation2 + $0x28] sm:$0xf]
    %v12053 = vld [vmem:[#allocation2 + $0x2c] sm:$0xf]
    %v12054 = vld [vmem:[#allocation2 + $0x30] sm:$0xf]
    %v12055 = vld [vmem:[#allocation2 + $0x34] sm:$0xf]
    %v12056 = vld [vmem:[#allocation2 + $0x38] sm:$0xf]
    %v12057 = vld [vmem:[#allocation2 + $0x3c] sm:$0xf]
    %v12058 = vld [vmem:[#allocation2 + $0x40] sm:$0xf]
    %v12059 = vld [vmem:[#allocation2 + $0x44] sm:$0xf]
    %v12060 = vld [vmem:[#allocation2 + $0x48] sm:$0xf]
    %v12061 = vld [vmem:[#allocation2 + $0x4c] sm:$0xf]
    %v12062 = vld [vmem:[#allocation2 + $0x50] sm:$0xf]
    %v12063 = vld [vmem:[#allocation2 + $0x54] sm:$0xf]
    %v12064 = vld [vmem:[#allocation2 + $0x58] sm:$0xf]
    %v12065 = vld [vmem:[#allocation2 + $0x5c] sm:$0xf]
    %v12066 = vld [vmem:[#allocation2 + $0x60] sm:$0xf]
    %v12067 = vld [vmem:[#allocation2 + $0x64] sm:$0xf]
    %v12068 = vld [vmem:[#allocation2 + $0x68] sm:$0xf]
    %v12069 = vld [vmem:[#allocation2 + $0x6c] sm:$0xf]
    %v12070 = vld [vmem:[#allocation2 + $0x70] sm:$0xf]
    %v12071 = vld [vmem:[#allocation2 + $0x74] sm:$0xf]
    %v12072 = vld [vmem:[#allocation2 + $0x78] sm:$0xf]
    %v12073 = vld [vmem:[#allocation2 + $0x7c] sm:$0xf]
    %v12074 = vld [vmem:[#allocation2 + $0x80] sm:$0xf]
    %v12075 = vld [vmem:[#allocation2 + $0x84] sm:$0xf]
    %v12076 = vld [vmem:[#allocation2 + $0x88] sm:$0xf]
    %v12077 = vld [vmem:[#allocation2 + $0x8c] sm:$0xf]
    %v12078 = vld [vmem:[#allocation2 + $0x90] sm:$0xf]
    %v12079 = vld [vmem:[#allocation2 + $0x94] sm:$0xf]
    %v12080 = vld [vmem:[#allocation2 + $0x98] sm:$0xf]
    %v12081 = vld [vmem:[#allocation2 + $0x9c] sm:$0xf]
    %v12082 = vld [vmem:[#allocation2 + $0xa0] sm:$0xf]
    %v12083 = vld [vmem:[#allocation2 + $0xa4] sm:$0xf]
    %v12084 = vld [vmem:[#allocation2 + $0xa8] sm:$0xf]
    %v12085 = vld [vmem:[#allocation2 + $0xac] sm:$0xf]
    %v12086 = vld [vmem:[#allocation2 + $0xb0] sm:$0xf]
    %v12087 = vld [vmem:[#allocation2 + $0xb4] sm:$0xf]
    %v12088 = vld [vmem:[#allocation2 + $0xb8] sm:$0xf]
    %v12089 = vld [vmem:[#allocation2 + $0xbc] sm:$0xf]
    %v12090 = vld [vmem:[#allocation2 + $0xc0] sm:$0xf]
    %v12091 = vld [vmem:[#allocation2 + $0xc4] sm:$0xf]
    %v12092 = vld [vmem:[#allocation2 + $0xc8] sm:$0xf]
    %v12093 = vld [vmem:[#allocation2 + $0xcc] sm:$0xf]
    %v12094 = vld [vmem:[#allocation2 + $0xd0] sm:$0xf]
    %v12095 = vld [vmem:[#allocation2 + $0xd4] sm:$0xf]
    %v12096 = vld [vmem:[#allocation2 + $0xd8] sm:$0xf]
    %v12097 = vld [vmem:[#allocation2 + $0xdc] sm:$0xf]
    %v12098 = vld [vmem:[#allocation2 + $0xe0] sm:$0xf]
    %v12099 = vld [vmem:[#allocation2 + $0xe4] sm:$0xf]
    %v12100 = vld [vmem:[#allocation2 + $0xe8] sm:$0xf]
    %v12101 = vld [vmem:[#allocation2 + $0xec] sm:$0xf]
    %v12102 = vld [vmem:[#allocation2 + $0xf0] sm:$0xf]
    %v12103 = vld [vmem:[#allocation2 + $0xf4] sm:$0xf]
    %v12104 = vld [vmem:[#allocation2 + $0xf8] sm:$0xf]
    %v12105 = vld [vmem:[#allocation2 + $0xfc] sm:$0xf]
    %v12106 = vld [vmem:[#allocation2 + $0x100] sm:$0xf]
    %v12107 = vld [vmem:[#allocation2 + $0x104] sm:$0xf]
    %v12108 = vld [vmem:[#allocation2 + $0x108] sm:$0xf]
    %v12109 = vld [vmem:[#allocation2 + $0x10c] sm:$0xf]
    %v12110 = vld [vmem:[#allocation2 + $0x110] sm:$0xf]
    %v12111 = vld [vmem:[#allocation2 + $0x114] sm:$0xf]
    %v12112 = vld [vmem:[#allocation2 + $0x118] sm:$0xf]
    %v12113 = vld [vmem:[#allocation2 + $0x11c] sm:$0xf]
    %v12114 = vld [vmem:[#allocation2 + $0x120] sm:$0xf]
    %v12115 = vld [vmem:[#allocation2 + $0x124] sm:$0xf]
    %v12116 = vld [vmem:[#allocation2 + $0x128] sm:$0xf]
    %v12117 = vld [vmem:[#allocation2 + $0x12c] sm:$0xf]
    %v12118 = vld [vmem:[#allocation2 + $0x130] sm:$0xf]
    %v12119 = vld [vmem:[#allocation2 + $0x134] sm:$0xf]
    %v12120 = vld [vmem:[#allocation2 + $0x138] sm:$0xf]
    %v12121 = vld [vmem:[#allocation2 + $0x13c] sm:$0xf]
    %v12122 = vld [vmem:[#allocation2 + $0x140] sm:$0xf]
    %v12123 = vld [vmem:[#allocation2 + $0x144] sm:$0xf]
    %v12124 = vld [vmem:[#allocation2 + $0x148] sm:$0xf]
    %v12125 = vld [vmem:[#allocation2 + $0x14c] sm:$0xf]
    %v12126 = vld [vmem:[#allocation2 + $0x150] sm:$0xf]
    %v12127 = vld [vmem:[#allocation2 + $0x154] sm:$0xf]
    %v12128 = vld [vmem:[#allocation2 + $0x158] sm:$0xf]
    %v12129 = vld [vmem:[#allocation2 + $0x15c] sm:$0xf]
    %v12130 = vld [vmem:[#allocation2 + $0x160] sm:$0xf]
    %v12131 = vld [vmem:[#allocation2 + $0x164] sm:$0xf]
    %v12132 = vld [vmem:[#allocation2 + $0x168] sm:$0xf]
    %v12133 = vld [vmem:[#allocation2 + $0x16c] sm:$0xf]
    %v12134 = vld [vmem:[#allocation2 + $0x170] sm:$0xf]
    %v12135 = vld [vmem:[#allocation2 + $0x174] sm:$0xf]
    %v12136 = vld [vmem:[#allocation2 + $0x178] sm:$0xf]
    %v12137 = vld [vmem:[#allocation2 + $0x17c] sm:$0xf]
    %v12138 = vld [vmem:[#allocation2 + $0x180] sm:$0xf]
    %v12139 = vld [vmem:[#allocation2 + $0x184] sm:$0xf]
    %v12140 = vld [vmem:[#allocation2 + $0x188] sm:$0xf]
    %v12141 = vld [vmem:[#allocation2 + $0x18c] sm:$0xf]
    %v12142 = vld [vmem:[#allocation2 + $0x190] sm:$0xf]
    %v12143 = vld [vmem:[#allocation2 + $0x194] sm:$0xf]
    %v12144 = vld [vmem:[#allocation2 + $0x198] sm:$0xf]
    %v12145 = vld [vmem:[#allocation2 + $0x19c] sm:$0xf]
    %v12146 = vld [vmem:[#allocation2 + $0x1a0] sm:$0xf]
    %v12147 = vld [vmem:[#allocation2 + $0x1a4] sm:$0xf]
    %v12148 = vld [vmem:[#allocation2 + $0x1a8] sm:$0xf]
    %v12149 = vld [vmem:[#allocation2 + $0x1ac] sm:$0xf]
    %v12150 = vld [vmem:[#allocation2 + $0x1b0] sm:$0xf]
    %v12151 = vld [vmem:[#allocation2 + $0x1b4] sm:$0xf]
    %v12152 = vld [vmem:[#allocation2 + $0x1b8] sm:$0xf]
    %v12153 = vld [vmem:[#allocation2 + $0x1bc] sm:$0xf]
    %v12154 = vld [vmem:[#allocation2 + $0x1c0] sm:$0xf]
    %v12155 = vld [vmem:[#allocation2 + $0x1c4] sm:$0xf]
    %v12156 = vld [vmem:[#allocation2 + $0x1c8] sm:$0xf]
    %v12157 = vld [vmem:[#allocation2 + $0x1cc] sm:$0xf]
    %v12158 = vld [vmem:[#allocation2 + $0x1d0] sm:$0xf]
    %v12159 = vld [vmem:[#allocation2 + $0x1d4] sm:$0xf]
    %v12160 = vld [vmem:[#allocation2 + $0x1d8] sm:$0xf]
    %v12161 = vld [vmem:[#allocation2 + $0x1dc] sm:$0xf]
    %v12162 = vld [vmem:[#allocation2 + $0x1e0] sm:$0xf]
    %v12163 = vld [vmem:[#allocation2 + $0x1e4] sm:$0xf]
    %v12164 = vld [vmem:[#allocation2 + $0x1e8] sm:$0xf]
    %v12165 = vld [vmem:[#allocation2 + $0x1ec] sm:$0xf]
    %v12166 = vld [vmem:[#allocation2 + $0x1f0] sm:$0xf]
    %v12167 = vld [vmem:[#allocation2 + $0x1f4] sm:$0xf]
    %v12168 = vld [vmem:[#allocation2 + $0x1f8] sm:$0xf]
    %v12169 = vld [vmem:[#allocation2 + $0x1fc] sm:$0xf]
    %v12170 = vld [vmem:[#allocation2 + $0x200] sm:$0xf]
    %v12171 = vld [vmem:[#allocation2 + $0x204] sm:$0xf]
    %v12172 = vld [vmem:[#allocation2 + $0x208] sm:$0xf]
    %v12173 = vld [vmem:[#allocation2 + $0x20c] sm:$0xf]
    %v12174 = vld [vmem:[#allocation2 + $0x210] sm:$0xf]
    %v12175 = vld [vmem:[#allocation2 + $0x214] sm:$0xf]
    %v12176 = vld [vmem:[#allocation2 + $0x218] sm:$0xf]
    %v12177 = vld [vmem:[#allocation2 + $0x21c] sm:$0xf]
    %v12178 = vld [vmem:[#allocation2 + $0x220] sm:$0xf]
    %v12179 = vld [vmem:[#allocation2 + $0x224] sm:$0xf]
    %v12180 = vld [vmem:[#allocation2 + $0x228] sm:$0xf]
    %v12181 = vld [vmem:[#allocation2 + $0x22c] sm:$0xf]
    %v12182 = vld [vmem:[#allocation2 + $0x230] sm:$0xf]
    %v12183 = vld [vmem:[#allocation2 + $0x234] sm:$0xf]
    %v12184 = vld [vmem:[#allocation2 + $0x238] sm:$0xf]
    %v12185 = vld [vmem:[#allocation2 + $0x23c] sm:$0xf]
    %v12186 = vld [vmem:[#allocation2 + $0x240] sm:$0xf]
    %v12187 = vld [vmem:[#allocation2 + $0x244] sm:$0xf]
    %v12188 = vld [vmem:[#allocation2 + $0x248] sm:$0xf]
    %v12189 = vld [vmem:[#allocation2 + $0x24c] sm:$0xf]
    %v12190 = vld [vmem:[#allocation2 + $0x250] sm:$0xf]
    %v12191 = vld [vmem:[#allocation2 + $0x254] sm:$0xf]
    %v12192 = vld [vmem:[#allocation2 + $0x258] sm:$0xf]
    %v12193 = vld [vmem:[#allocation2 + $0x25c] sm:$0xf]
    %v12194 = vld [vmem:[#allocation2 + $0x260] sm:$0xf]
    %v12195 = vld [vmem:[#allocation2 + $0x264] sm:$0xf]
    %v12196 = vld [vmem:[#allocation2 + $0x268] sm:$0xf]
    %v12197 = vld [vmem:[#allocation2 + $0x26c] sm:$0xf]
    %v12198 = vld [vmem:[#allocation2 + $0x270] sm:$0xf]
    %v12199 = vld [vmem:[#allocation2 + $0x274] sm:$0xf]
    %v12200 = vld [vmem:[#allocation2 + $0x278] sm:$0xf]
    %v12201 = vld [vmem:[#allocation2 + $0x27c] sm:$0xf]
    %v12202 = vld [vmem:[#allocation2 + $0x280] sm:$0xf]
    %v12203 = vld [vmem:[#allocation2 + $0x284] sm:$0xf]
    %v12204 = vld [vmem:[#allocation2 + $0x288] sm:$0xf]
    %v12205 = vld [vmem:[#allocation2 + $0x28c] sm:$0xf]
    %v12206 = vld [vmem:[#allocation2 + $0x290] sm:$0xf]
    %v12207 = vld [vmem:[#allocation2 + $0x294] sm:$0xf]
    %v12208 = vld [vmem:[#allocation2 + $0x298] sm:$0xf]
    %v12209 = vld [vmem:[#allocation2 + $0x29c] sm:$0xf]
    %v12210 = vld [vmem:[#allocation2 + $0x2a0] sm:$0xf]
    %v12211 = vld [vmem:[#allocation2 + $0x2a4] sm:$0xf]
    %v12212 = vld [vmem:[#allocation2 + $0x2a8] sm:$0xf]
    %v12213 = vld [vmem:[#allocation2 + $0x2ac] sm:$0xf]
    %v12214 = vld [vmem:[#allocation2 + $0x2b0] sm:$0xf]
    %v12215 = vld [vmem:[#allocation2 + $0x2b4] sm:$0xf]
    %v12216 = vld [vmem:[#allocation2 + $0x2b8] sm:$0xf]
    %v12217 = vld [vmem:[#allocation2 + $0x2bc] sm:$0xf]
    %v12218 = vld [vmem:[#allocation2 + $0x2c0] sm:$0xf]
    %v12219 = vld [vmem:[#allocation2 + $0x2c4] sm:$0xf]
    %v12220 = vld [vmem:[#allocation2 + $0x2c8] sm:$0xf]
    %v12221 = vld [vmem:[#allocation2 + $0x2cc] sm:$0xf]
    %v12222 = vld [vmem:[#allocation2 + $0x2d0] sm:$0xf]
    %v12223 = vld [vmem:[#allocation2 + $0x2d4] sm:$0xf]
    %v12224 = vld [vmem:[#allocation2 + $0x2d8] sm:$0xf]
    %v12225 = vld [vmem:[#allocation2 + $0x2dc] sm:$0xf]
    %v12226 = vld [vmem:[#allocation2 + $0x2e0] sm:$0xf]
    %v12227 = vld [vmem:[#allocation2 + $0x2e4] sm:$0xf]
    %v12228 = vld [vmem:[#allocation2 + $0x2e8] sm:$0xf]
    %v12229 = vld [vmem:[#allocation2 + $0x2ec] sm:$0xf]
    %v12230 = vld [vmem:[#allocation2 + $0x2f0] sm:$0xf]
    %v12231 = vld [vmem:[#allocation2 + $0x2f4] sm:$0xf]
    %v12232 = vld [vmem:[#allocation2 + $0x2f8] sm:$0xf]
    %v12233 = vld [vmem:[#allocation2 + $0x2fc] sm:$0xf]
    %v12234 = vld [vmem:[#allocation2 + $0x300] sm:$0xf]
    %v12235 = vld [vmem:[#allocation2 + $0x304] sm:$0xf]
    %v12236 = vld [vmem:[#allocation2 + $0x308] sm:$0xf]
    %v12237 = vld [vmem:[#allocation2 + $0x30c] sm:$0xf]
    %v12238 = vld [vmem:[#allocation2 + $0x310] sm:$0xf]
    %v12239 = vld [vmem:[#allocation2 + $0x314] sm:$0xf]
    %v12240 = vld [vmem:[#allocation2 + $0x318] sm:$0xf]
    %v12241 = vld [vmem:[#allocation2 + $0x31c] sm:$0xf]
    %v12242 = vld [vmem:[#allocation2 + $0x320] sm:$0xf]
    %v12243 = vld [vmem:[#allocation2 + $0x324] sm:$0xf]
    %v12244 = vld [vmem:[#allocation2 + $0x328] sm:$0xf]
    %v12245 = vld [vmem:[#allocation2 + $0x32c] sm:$0xf]
    %v12246 = vld [vmem:[#allocation2 + $0x330] sm:$0xf]
    %v12247 = vld [vmem:[#allocation2 + $0x334] sm:$0xf]
    %v12248 = vld [vmem:[#allocation2 + $0x338] sm:$0xf]
    %v12249 = vld [vmem:[#allocation2 + $0x33c] sm:$0xf]
    %v12250 = vld [vmem:[#allocation2 + $0x340] sm:$0xf]
    %v12251 = vld [vmem:[#allocation2 + $0x344] sm:$0xf]
    %v12252 = vld [vmem:[#allocation2 + $0x348] sm:$0xf]
    %v12253 = vld [vmem:[#allocation2 + $0x34c] sm:$0xf]
    %v12254 = vld [vmem:[#allocation2 + $0x350] sm:$0xf]
    %v12255 = vld [vmem:[#allocation2 + $0x354] sm:$0xf]
    %v12256 = vld [vmem:[#allocation2 + $0x358] sm:$0xf]
    %v12257 = vld [vmem:[#allocation2 + $0x35c] sm:$0xf]
    %v12258 = vld [vmem:[#allocation2 + $0x360] sm:$0xf]
    %v12259 = vld [vmem:[#allocation2 + $0x364] sm:$0xf]
    %v12260 = vld [vmem:[#allocation2 + $0x368] sm:$0xf]
    %v12261 = vld [vmem:[#allocation2 + $0x36c] sm:$0xf]
    %v12262 = vld [vmem:[#allocation2 + $0x370] sm:$0xf]
    %v12263 = vld [vmem:[#allocation2 + $0x374] sm:$0xf]
    %v12264 = vld [vmem:[#allocation2 + $0x378] sm:$0xf]
    %v12265 = vld [vmem:[#allocation2 + $0x37c] sm:$0xf]
    %v12266 = vld [vmem:[%s5] sm:$0x1]
    %v12268 = vperm.slane %v12266, 0
    %v12494 = vunpack.c.l.b16 %v12042
    %v12495 = vunpack.c.l.b16 %v12043
    %v12496 = vunpack.c.l.b16 %v12044
    %v12497 = vunpack.c.l.b16 %v12045
    %v12498 = vunpack.c.l.b16 %v12046
    %v12499 = vunpack.c.l.b16 %v12047
    %v12500 = vunpack.c.l.b16 %v12048
    %v12501 = vunpack.c.l.b16 %v12049
    %v12502 = vunpack.c.l.b16 %v12050
    %v12503 = vunpack.c.l.b16 %v12051
    %v12504 = vunpack.c.l.b16 %v12052
    %v12505 = vunpack.c.l.b16 %v12053
    %v12506 = vunpack.c.l.b16 %v12054
    %v12507 = vunpack.c.l.b16 %v12055
    %v12508 = vunpack.c.l.b16 %v12056
    %v12509 = vunpack.c.l.b16 %v12057
    %v12510 = vunpack.c.l.b16 %v12058
    %v12511 = vunpack.c.l.b16 %v12059
    %v12512 = vunpack.c.l.b16 %v12060
    %v12513 = vunpack.c.l.b16 %v12061
    %v12514 = vunpack.c.l.b16 %v12062
    %v12515 = vunpack.c.l.b16 %v12063
    %v12516 = vunpack.c.l.b16 %v12064
    %v12517 = vunpack.c.l.b16 %v12065
    %v12518 = vunpack.c.l.b16 %v12066
    %v12519 = vunpack.c.l.b16 %v12067
    %v12520 = vunpack.c.l.b16 %v12068
    %v12521 = vunpack.c.l.b16 %v12069
    %v12522 = vunpack.c.l.b16 %v12070
    %v12523 = vunpack.c.l.b16 %v12071
    %v12524 = vunpack.c.l.b16 %v12072
    %v12525 = vunpack.c.l.b16 %v12073
    %v12526 = vunpack.c.l.b16 %v12074
    %v12527 = vunpack.c.l.b16 %v12075
    %v12528 = vunpack.c.l.b16 %v12076
    %v12529 = vunpack.c.l.b16 %v12077
    %v12530 = vunpack.c.l.b16 %v12078
    %v12531 = vunpack.c.l.b16 %v12079
    %v12532 = vunpack.c.l.b16 %v12080
    %v12533 = vunpack.c.l.b16 %v12081
    %v12534 = vunpack.c.l.b16 %v12082
    %v12535 = vunpack.c.l.b16 %v12083
    %v12536 = vunpack.c.l.b16 %v12084
    %v12537 = vunpack.c.l.b16 %v12085
    %v12538 = vunpack.c.l.b16 %v12086
    %v12539 = vunpack.c.l.b16 %v12087
    %v12540 = vunpack.c.l.b16 %v12088
    %v12541 = vunpack.c.l.b16 %v12089
    %v12542 = vunpack.c.l.b16 %v12090
    %v12543 = vunpack.c.l.b16 %v12091
    %v12544 = vunpack.c.l.b16 %v12092
    %v12545 = vunpack.c.l.b16 %v12093
    %v12546 = vunpack.c.l.b16 %v12094
    %v12547 = vunpack.c.l.b16 %v12095
    %v12548 = vunpack.c.l.b16 %v12096
    %v12549 = vunpack.c.l.b16 %v12097
    %v12550 = vunpack.c.l.b16 %v12098
    %v12551 = vunpack.c.l.b16 %v12099
    %v12552 = vunpack.c.l.b16 %v12100
    %v12553 = vunpack.c.l.b16 %v12101
    %v12554 = vunpack.c.l.b16 %v12102
    %v12555 = vunpack.c.l.b16 %v12103
    %v12556 = vunpack.c.l.b16 %v12104
    %v12557 = vunpack.c.l.b16 %v12105
    %v12558 = vunpack.c.l.b16 %v12106
    %v12559 = vunpack.c.l.b16 %v12107
    %v12560 = vunpack.c.l.b16 %v12108
    %v12561 = vunpack.c.l.b16 %v12109
    %v12562 = vunpack.c.l.b16 %v12110
    %v12563 = vunpack.c.l.b16 %v12111
    %v12564 = vunpack.c.l.b16 %v12112
    %v12565 = vunpack.c.l.b16 %v12113
    %v12566 = vunpack.c.l.b16 %v12114
    %v12567 = vunpack.c.l.b16 %v12115
    %v12568 = vunpack.c.l.b16 %v12116
    %v12569 = vunpack.c.l.b16 %v12117
    %v12570 = vunpack.c.l.b16 %v12118
    %v12571 = vunpack.c.l.b16 %v12119
    %v12572 = vunpack.c.l.b16 %v12120
    %v12573 = vunpack.c.l.b16 %v12121
    %v12574 = vunpack.c.l.b16 %v12122
    %v12575 = vunpack.c.l.b16 %v12123
    %v12576 = vunpack.c.l.b16 %v12124
    %v12577 = vunpack.c.l.b16 %v12125
    %v12578 = vunpack.c.l.b16 %v12126
    %v12579 = vunpack.c.l.b16 %v12127
    %v12580 = vunpack.c.l.b16 %v12128
    %v12581 = vunpack.c.l.b16 %v12129
    %v12582 = vunpack.c.l.b16 %v12130
    %v12583 = vunpack.c.l.b16 %v12131
    %v12584 = vunpack.c.l.b16 %v12132
    %v12585 = vunpack.c.l.b16 %v12133
    %v12586 = vunpack.c.l.b16 %v12134
    %v12587 = vunpack.c.l.b16 %v12135
    %v12588 = vunpack.c.l.b16 %v12136
    %v12589 = vunpack.c.l.b16 %v12137
    %v12590 = vunpack.c.l.b16 %v12138
    %v12591 = vunpack.c.l.b16 %v12139
    %v12592 = vunpack.c.l.b16 %v12140
    %v12593 = vunpack.c.l.b16 %v12141
    %v12594 = vunpack.c.l.b16 %v12142
    %v12595 = vunpack.c.l.b16 %v12143
    %v12596 = vunpack.c.l.b16 %v12144
    %v12597 = vunpack.c.l.b16 %v12145
    %v12598 = vunpack.c.l.b16 %v12146
    %v12599 = vunpack.c.l.b16 %v12147
    %v12600 = vunpack.c.l.b16 %v12148
    %v12601 = vunpack.c.l.b16 %v12149
    %v12602 = vunpack.c.l.b16 %v12150
    %v12603 = vunpack.c.l.b16 %v12151
    %v12604 = vunpack.c.l.b16 %v12152
    %v12605 = vunpack.c.l.b16 %v12153
    %v12606 = vunpack.c.l.b16 %v12154
    %v12607 = vunpack.c.l.b16 %v12155
    %v12608 = vunpack.c.l.b16 %v12156
    %v12609 = vunpack.c.l.b16 %v12157
    %v12610 = vunpack.c.l.b16 %v12158
    %v12611 = vunpack.c.l.b16 %v12159
    %v12612 = vunpack.c.l.b16 %v12160
    %v12613 = vunpack.c.l.b16 %v12161
    %v12614 = vunpack.c.l.b16 %v12162
    %v12615 = vunpack.c.l.b16 %v12163
    %v12616 = vunpack.c.l.b16 %v12164
    %v12617 = vunpack.c.l.b16 %v12165
    %v12618 = vunpack.c.l.b16 %v12166
    %v12619 = vunpack.c.l.b16 %v12167
    %v12620 = vunpack.c.l.b16 %v12168
    %v12621 = vunpack.c.l.b16 %v12169
    %v12622 = vunpack.c.l.b16 %v12170
    %v12623 = vunpack.c.l.b16 %v12171
    %v12624 = vunpack.c.l.b16 %v12172
    %v12625 = vunpack.c.l.b16 %v12173
    %v12626 = vunpack.c.l.b16 %v12174
    %v12627 = vunpack.c.l.b16 %v12175
    %v12628 = vunpack.c.l.b16 %v12176
    %v12629 = vunpack.c.l.b16 %v12177
    %v12630 = vunpack.c.l.b16 %v12178
    %v12631 = vunpack.c.l.b16 %v12179
    %v12632 = vunpack.c.l.b16 %v12180
    %v12633 = vunpack.c.l.b16 %v12181
    %v12634 = vunpack.c.l.b16 %v12182
    %v12635 = vunpack.c.l.b16 %v12183
    %v12636 = vunpack.c.l.b16 %v12184
    %v12637 = vunpack.c.l.b16 %v12185
    %v12638 = vunpack.c.l.b16 %v12186
    %v12639 = vunpack.c.l.b16 %v12187
    %v12640 = vunpack.c.l.b16 %v12188
    %v12641 = vunpack.c.l.b16 %v12189
    %v12642 = vunpack.c.l.b16 %v12190
    %v12643 = vunpack.c.l.b16 %v12191
    %v12644 = vunpack.c.l.b16 %v12192
    %v12645 = vunpack.c.l.b16 %v12193
    %v12646 = vunpack.c.l.b16 %v12194
    %v12647 = vunpack.c.l.b16 %v12195
    %v12648 = vunpack.c.l.b16 %v12196
    %v12649 = vunpack.c.l.b16 %v12197
    %v12650 = vunpack.c.l.b16 %v12198
    %v12651 = vunpack.c.l.b16 %v12199
    %v12652 = vunpack.c.l.b16 %v12200
    %v12653 = vunpack.c.l.b16 %v12201
    %v12654 = vunpack.c.l.b16 %v12202
    %v12655 = vunpack.c.l.b16 %v12203
    %v12656 = vunpack.c.l.b16 %v12204
    %v12657 = vunpack.c.l.b16 %v12205
    %v12658 = vunpack.c.l.b16 %v12206
    %v12659 = vunpack.c.l.b16 %v12207
    %v12660 = vunpack.c.l.b16 %v12208
    %v12661 = vunpack.c.l.b16 %v12209
    %v12662 = vunpack.c.l.b16 %v12210
    %v12663 = vunpack.c.l.b16 %v12211
    %v12664 = vunpack.c.l.b16 %v12212
    %v12665 = vunpack.c.l.b16 %v12213
    %v12666 = vunpack.c.l.b16 %v12214
    %v12667 = vunpack.c.l.b16 %v12215
    %v12668 = vunpack.c.l.b16 %v12216
    %v12669 = vunpack.c.l.b16 %v12217
    %v12670 = vunpack.c.l.b16 %v12218
    %v12671 = vunpack.c.l.b16 %v12219
    %v12672 = vunpack.c.l.b16 %v12220
    %v12673 = vunpack.c.l.b16 %v12221
    %v12674 = vunpack.c.l.b16 %v12222
    %v12675 = vunpack.c.l.b16 %v12223
    %v12676 = vunpack.c.l.b16 %v12224
    %v12677 = vunpack.c.l.b16 %v12225
    %v12678 = vunpack.c.l.b16 %v12226
    %v12679 = vunpack.c.l.b16 %v12227
    %v12680 = vunpack.c.l.b16 %v12228
    %v12681 = vunpack.c.l.b16 %v12229
    %v12682 = vunpack.c.l.b16 %v12230
    %v12683 = vunpack.c.l.b16 %v12231
    %v12684 = vunpack.c.l.b16 %v12232
    %v12685 = vunpack.c.l.b16 %v12233
    %v12686 = vunpack.c.l.b16 %v12234
    %v12687 = vunpack.c.l.b16 %v12235
    %v12688 = vunpack.c.l.b16 %v12236
    %v12689 = vunpack.c.l.b16 %v12237
    %v12690 = vunpack.c.l.b16 %v12238
    %v12691 = vunpack.c.l.b16 %v12239
    %v12692 = vunpack.c.l.b16 %v12240
    %v12693 = vunpack.c.l.b16 %v12241
    %v12694 = vunpack.c.l.b16 %v12242
    %v12695 = vunpack.c.l.b16 %v12243
    %v12696 = vunpack.c.l.b16 %v12244
    %v12697 = vunpack.c.l.b16 %v12245
    %v12698 = vunpack.c.l.b16 %v12246
    %v12699 = vunpack.c.l.b16 %v12247
    %v12700 = vunpack.c.l.b16 %v12248
    %v12701 = vunpack.c.l.b16 %v12249
    %v12702 = vunpack.c.l.b16 %v12250
    %v12703 = vunpack.c.l.b16 %v12251
    %v12704 = vunpack.c.l.b16 %v12252
    %v12705 = vunpack.c.l.b16 %v12253
    %v12706 = vunpack.c.l.b16 %v12254
    %v12707 = vunpack.c.l.b16 %v12255
    %v12708 = vunpack.c.l.b16 %v12256
    %v12709 = vunpack.c.l.b16 %v12257
    %v12710 = vunpack.c.l.b16 %v12258
    %v12711 = vunpack.c.l.b16 %v12259
    %v12712 = vunpack.c.l.b16 %v12260
    %v12713 = vunpack.c.l.b16 %v12261
    %v12714 = vunpack.c.l.b16 %v12262
    %v12715 = vunpack.c.l.b16 %v12263
    %v12716 = vunpack.c.l.b16 %v12264
    %v12717 = vunpack.c.l.b16 %v12265
    %v12718 = vpack.c.b16 %v12495, %v12494
    %v12719 = vpack.c.b16 %v12497, %v12496
    %v12720 = vpack.c.b16 %v12499, %v12498
    %v12721 = vpack.c.b16 %v12501, %v12500
    %v12722 = vpack.c.b16 %v12503, %v12502
    %v12723 = vpack.c.b16 %v12505, %v12504
    %v12724 = vpack.c.b16 %v12507, %v12506
    %v12725 = vpack.c.b16 %v12509, %v12508
    %v12726 = vpack.c.b16 %v12511, %v12510
    %v12727 = vpack.c.b16 %v12513, %v12512
    %v12728 = vpack.c.b16 %v12515, %v12514
    %v12729 = vpack.c.b16 %v12517, %v12516
    %v12730 = vpack.c.b16 %v12519, %v12518
    %v12731 = vpack.c.b16 %v12521, %v12520
    %v12732 = vpack.c.b16 %v12523, %v12522
    %v12733 = vpack.c.b16 %v12525, %v12524
    %v12734 = vpack.c.b16 %v12527, %v12526
    %v12735 = vpack.c.b16 %v12529, %v12528
    %v12736 = vpack.c.b16 %v12531, %v12530
    %v12737 = vpack.c.b16 %v12533, %v12532
    %v12738 = vpack.c.b16 %v12535, %v12534
    %v12739 = vpack.c.b16 %v12537, %v12536
    %v12740 = vpack.c.b16 %v12539, %v12538
    %v12741 = vpack.c.b16 %v12541, %v12540
    %v12742 = vpack.c.b16 %v12543, %v12542
    %v12743 = vpack.c.b16 %v12545, %v12544
    %v12744 = vpack.c.b16 %v12547, %v12546
    %v12745 = vpack.c.b16 %v12549, %v12548
    %v12746 = vpack.c.b16 %v12551, %v12550
    %v12747 = vpack.c.b16 %v12553, %v12552
    %v12748 = vpack.c.b16 %v12555, %v12554
    %v12749 = vpack.c.b16 %v12557, %v12556
    %v12750 = vpack.c.b16 %v12559, %v12558
    %v12751 = vpack.c.b16 %v12561, %v12560
    %v12752 = vpack.c.b16 %v12563, %v12562
    %v12753 = vpack.c.b16 %v12565, %v12564
    %v12754 = vpack.c.b16 %v12567, %v12566
    %v12755 = vpack.c.b16 %v12569, %v12568
    %v12756 = vpack.c.b16 %v12571, %v12570
    %v12757 = vpack.c.b16 %v12573, %v12572
    %v12758 = vpack.c.b16 %v12575, %v12574
    %v12759 = vpack.c.b16 %v12577, %v12576
    %v12760 = vpack.c.b16 %v12579, %v12578
    %v12761 = vpack.c.b16 %v12581, %v12580
    %v12762 = vpack.c.b16 %v12583, %v12582
    %v12763 = vpack.c.b16 %v12585, %v12584
    %v12764 = vpack.c.b16 %v12587, %v12586
    %v12765 = vpack.c.b16 %v12589, %v12588
    %v12766 = vpack.c.b16 %v12591, %v12590
    %v12767 = vpack.c.b16 %v12593, %v12592
    %v12768 = vpack.c.b16 %v12595, %v12594
    %v12769 = vpack.c.b16 %v12597, %v12596
    %v12770 = vpack.c.b16 %v12599, %v12598
    %v12771 = vpack.c.b16 %v12601, %v12600
    %v12772 = vpack.c.b16 %v12603, %v12602
    %v12773 = vpack.c.b16 %v12605, %v12604
    %v12774 = vpack.c.b16 %v12607, %v12606
    %v12775 = vpack.c.b16 %v12609, %v12608
    %v12776 = vpack.c.b16 %v12611, %v12610
    %v12777 = vpack.c.b16 %v12613, %v12612
    %v12778 = vpack.c.b16 %v12615, %v12614
    %v12779 = vpack.c.b16 %v12617, %v12616
    %v12780 = vpack.c.b16 %v12619, %v12618
    %v12781 = vpack.c.b16 %v12621, %v12620
    %v12782 = vpack.c.b16 %v12623, %v12622
    %v12783 = vpack.c.b16 %v12625, %v12624
    %v12784 = vpack.c.b16 %v12627, %v12626
    %v12785 = vpack.c.b16 %v12629, %v12628
    %v12786 = vpack.c.b16 %v12631, %v12630
    %v12787 = vpack.c.b16 %v12633, %v12632
    %v12788 = vpack.c.b16 %v12635, %v12634
    %v12789 = vpack.c.b16 %v12637, %v12636
    %v12790 = vpack.c.b16 %v12639, %v12638
    %v12791 = vpack.c.b16 %v12641, %v12640
    %v12792 = vpack.c.b16 %v12643, %v12642
    %v12793 = vpack.c.b16 %v12645, %v12644
    %v12794 = vpack.c.b16 %v12647, %v12646
    %v12795 = vpack.c.b16 %v12649, %v12648
    %v12796 = vpack.c.b16 %v12651, %v12650
    %v12797 = vpack.c.b16 %v12653, %v12652
    %v12798 = vpack.c.b16 %v12655, %v12654
    %v12799 = vpack.c.b16 %v12657, %v12656
    %v12800 = vpack.c.b16 %v12659, %v12658
    %v12801 = vpack.c.b16 %v12661, %v12660
    %v12802 = vpack.c.b16 %v12663, %v12662
    %v12803 = vpack.c.b16 %v12665, %v12664
    %v12804 = vpack.c.b16 %v12667, %v12666
    %v12805 = vpack.c.b16 %v12669, %v12668
    %v12806 = vpack.c.b16 %v12671, %v12670
    %v12807 = vpack.c.b16 %v12673, %v12672
    %v12808 = vpack.c.b16 %v12675, %v12674
    %v12809 = vpack.c.b16 %v12677, %v12676
    %v12810 = vpack.c.b16 %v12679, %v12678
    %v12811 = vpack.c.b16 %v12681, %v12680
    %v12812 = vpack.c.b16 %v12683, %v12682
    %v12813 = vpack.c.b16 %v12685, %v12684
    %v12814 = vpack.c.b16 %v12687, %v12686
    %v12815 = vpack.c.b16 %v12689, %v12688
    %v12816 = vpack.c.b16 %v12691, %v12690
    %v12817 = vpack.c.b16 %v12693, %v12692
    %v12818 = vpack.c.b16 %v12695, %v12694
    %v12819 = vpack.c.b16 %v12697, %v12696
    %v12820 = vpack.c.b16 %v12699, %v12698
    %v12821 = vpack.c.b16 %v12701, %v12700
    %v12822 = vpack.c.b16 %v12703, %v12702
    %v12823 = vpack.c.b16 %v12705, %v12704
    %v12824 = vpack.c.b16 %v12707, %v12706
    %v12825 = vpack.c.b16 %v12709, %v12708
    %v12826 = vpack.c.b16 %v12711, %v12710
    %v12827 = vpack.c.b16 %v12713, %v12712
    %v12828 = vpack.c.b16 %v12715, %v12714
    %v12829 = vpack.c.b16 %v12717, %v12716
    %12942 = vmatpush.bf16.msra.mxu0 %v12725
    %12943 = vmatpush.bf16.msra.mxu0 %v12724
    %12944 = vmatpush.bf16.msra.mxu0 %v12723
    %12945 = vmatpush.bf16.msra.mxu0 %v12722
    %12946 = vmatpush.bf16.msra.mxu0 %v12721
    %12947 = vmatpush.bf16.msra.mxu0 %v12720
    %12948 = vmatpush.bf16.msra.mxu0 %v12719
    %12949 = vmatpush.bf16.msra.mxu0 %v12718
    %12950 = vmatmul.bf16.gmra.mxu0 %v12028
    %v12951 = vpop.f32.mrf.mxu0
    %v12952 = vadd.f32 %v12268, %v12951
    %v12953 = vpop.f32.mrf.mxu0
    %12954 = vdwg.mxu0
    %12955 = vmatpush.bf16.msra.mxu0 %v12733
    %12956 = vmatpush.bf16.msra.mxu0 %v12732
    %12957 = vmatpush.bf16.msra.mxu0 %v12731
    %12958 = vmatpush.bf16.msra.mxu0 %v12730
    %12959 = vmatpush.bf16.msra.mxu0 %v12729
    %12960 = vmatpush.bf16.msra.mxu0 %v12728
    %12961 = vmatpush.bf16.msra.mxu0 %v12727
    %12962 = vmatpush.bf16.msra.mxu0 %v12726
    %12963 = vmatmul.bf16.gmra.mxu0 %v12029
    %v12964 = vpop.f32.mrf.mxu0
    %v12965 = vadd.f32 %v12952, %v12964
    %v12966 = vpop.f32.mrf.mxu0
    %12967 = vdwg.mxu0
    %12968 = vmatpush.bf16.msra.mxu0 %v12741
    %12969 = vmatpush.bf16.msra.mxu0 %v12740
    %12970 = vmatpush.bf16.msra.mxu0 %v12739
    %12971 = vmatpush.bf16.msra.mxu0 %v12738
    %12972 = vmatpush.bf16.msra.mxu0 %v12737
    %12973 = vmatpush.bf16.msra.mxu0 %v12736
    %12974 = vmatpush.bf16.msra.mxu0 %v12735
    %12975 = vmatpush.bf16.msra.mxu0 %v12734
    %12976 = vmatmul.bf16.gmra.mxu0 %v12030
    %v12977 = vpop.f32.mrf.mxu0
    %v12978 = vadd.f32 %v12965, %v12977
    %v12979 = vpop.f32.mrf.mxu0
    %12980 = vdwg.mxu0
    %12981 = vmatpush.bf16.msra.mxu0 %v12749
    %12982 = vmatpush.bf16.msra.mxu0 %v12748
    %12983 = vmatpush.bf16.msra.mxu0 %v12747
    %12984 = vmatpush.bf16.msra.mxu0 %v12746
    %12985 = vmatpush.bf16.msra.mxu0 %v12745
    %12986 = vmatpush.bf16.msra.mxu0 %v12744
    %12987 = vmatpush.bf16.msra.mxu0 %v12743
    %12988 = vmatpush.bf16.msra.mxu0 %v12742
    %12989 = vmatmul.bf16.gmra.mxu0 %v12031
    %v12990 = vpop.f32.mrf.mxu0
    %v12991 = vadd.f32 %v12978, %v12990
    %v12992 = vpop.f32.mrf.mxu0
    %12993 = vdwg.mxu0
    %12994 = vmatpush.bf16.msra.mxu0 %v12757
    %12995 = vmatpush.bf16.msra.mxu0 %v12756
    %12996 = vmatpush.bf16.msra.mxu0 %v12755
    %12997 = vmatpush.bf16.msra.mxu0 %v12754
    %12998 = vmatpush.bf16.msra.mxu0 %v12753
    %12999 = vmatpush.bf16.msra.mxu0 %v12752
    %13000 = vmatpush.bf16.msra.mxu0 %v12751
    %13001 = vmatpush.bf16.msra.mxu0 %v12750
    %13002 = vmatmul.bf16.gmra.mxu0 %v12032
    %v13003 = vpop.f32.mrf.mxu0
    %v13004 = vadd.f32 %v12991, %v13003
    %v13005 = vpop.f32.mrf.mxu0
    %13006 = vdwg.mxu0
    %13007 = vmatpush.bf16.msra.mxu0 %v12765
    %13008 = vmatpush.bf16.msra.mxu0 %v12764
    %13009 = vmatpush.bf16.msra.mxu0 %v12763
    %13010 = vmatpush.bf16.msra.mxu0 %v12762
    %13011 = vmatpush.bf16.msra.mxu0 %v12761
    %13012 = vmatpush.bf16.msra.mxu0 %v12760
    %13013 = vmatpush.bf16.msra.mxu0 %v12759
    %13014 = vmatpush.bf16.msra.mxu0 %v12758
    %13015 = vmatmul.bf16.gmra.mxu0 %v12033
    %v13016 = vpop.f32.mrf.mxu0
    %v13017 = vadd.f32 %v13004, %v13016
    %v13018 = vpop.f32.mrf.mxu0
    %13019 = vdwg.mxu0
    %13020 = vmatpush.bf16.msra.mxu0 %v12773
    %13021 = vmatpush.bf16.msra.mxu0 %v12772
    %13022 = vmatpush.bf16.msra.mxu0 %v12771
    %13023 = vmatpush.bf16.msra.mxu0 %v12770
    %13024 = vmatpush.bf16.msra.mxu0 %v12769
    %13025 = vmatpush.bf16.msra.mxu0 %v12768
    %13026 = vmatpush.bf16.msra.mxu0 %v12767
    %13027 = vmatpush.bf16.msra.mxu0 %v12766
    %13028 = vmatmul.bf16.gmra.mxu0 %v12034
    %v13029 = vpop.f32.mrf.mxu0
    %v13030 = vadd.f32 %v13017, %v13029
    %v13031 = vpop.f32.mrf.mxu0
    %13032 = vdwg.mxu0
    %13033 = vmatpush.bf16.msra.mxu0 %v12781
    %13034 = vmatpush.bf16.msra.mxu0 %v12780
    %13035 = vmatpush.bf16.msra.mxu0 %v12779
    %13036 = vmatpush.bf16.msra.mxu0 %v12778
    %13037 = vmatpush.bf16.msra.mxu0 %v12777
    %13038 = vmatpush.bf16.msra.mxu0 %v12776
    %13039 = vmatpush.bf16.msra.mxu0 %v12775
    %13040 = vmatpush.bf16.msra.mxu0 %v12774
    %13041 = vmatmul.bf16.gmra.mxu0 %v12035
    %v13042 = vpop.f32.mrf.mxu0
    %v13043 = vadd.f32 %v13030, %v13042
    %v13044 = vpop.f32.mrf.mxu0
    %13045 = vdwg.mxu0
    %13046 = vmatpush.bf16.msra.mxu0 %v12789
    %13047 = vmatpush.bf16.msra.mxu0 %v12788
    %13048 = vmatpush.bf16.msra.mxu0 %v12787
    %13049 = vmatpush.bf16.msra.mxu0 %v12786
    %13050 = vmatpush.bf16.msra.mxu0 %v12785
    %13051 = vmatpush.bf16.msra.mxu0 %v12784
    %13052 = vmatpush.bf16.msra.mxu0 %v12783
    %13053 = vmatpush.bf16.msra.mxu0 %v12782
    %13054 = vmatmul.bf16.gmra.mxu0 %v12036
    %v13055 = vpop.f32.mrf.mxu0
    %v13056 = vadd.f32 %v13043, %v13055
    %v13057 = vpop.f32.mrf.mxu0
    %13058 = vdwg.mxu0
    %13059 = vmatpush.bf16.msra.mxu0 %v12797
    %13060 = vmatpush.bf16.msra.mxu0 %v12796
    %13061 = vmatpush.bf16.msra.mxu0 %v12795
    %13062 = vmatpush.bf16.msra.mxu0 %v12794
    %13063 = vmatpush.bf16.msra.mxu0 %v12793
    %13064 = vmatpush.bf16.msra.mxu0 %v12792
    %13065 = vmatpush.bf16.msra.mxu0 %v12791
    %13066 = vmatpush.bf16.msra.mxu0 %v12790
    %13067 = vmatmul.bf16.gmra.mxu0 %v12037
    %v13068 = vpop.f32.mrf.mxu0
    %v13069 = vadd.f32 %v13056, %v13068
    %v13070 = vpop.f32.mrf.mxu0
    %13071 = vdwg.mxu0
    %13072 = vmatpush.bf16.msra.mxu0 %v12805
    %13073 = vmatpush.bf16.msra.mxu0 %v12804
    %13074 = vmatpush.bf16.msra.mxu0 %v12803
    %13075 = vmatpush.bf16.msra.mxu0 %v12802
    %13076 = vmatpush.bf16.msra.mxu0 %v12801
    %13077 = vmatpush.bf16.msra.mxu0 %v12800
    %13078 = vmatpush.bf16.msra.mxu0 %v12799
    %13079 = vmatpush.bf16.msra.mxu0 %v12798
    %13080 = vmatmul.bf16.gmra.mxu0 %v12038
    %v13081 = vpop.f32.mrf.mxu0
    %v13082 = vadd.f32 %v13069, %v13081
    %v13083 = vpop.f32.mrf.mxu0
    %13084 = vdwg.mxu0
    %13085 = vmatpush.bf16.msra.mxu0 %v12813
    %13086 = vmatpush.bf16.msra.mxu0 %v12812
    %13087 = vmatpush.bf16.msra.mxu0 %v12811
    %13088 = vmatpush.bf16.msra.mxu0 %v12810
    %13089 = vmatpush.bf16.msra.mxu0 %v12809
    %13090 = vmatpush.bf16.msra.mxu0 %v12808
    %13091 = vmatpush.bf16.msra.mxu0 %v12807
    %13092 = vmatpush.bf16.msra.mxu0 %v12806
    %13093 = vmatmul.bf16.gmra.mxu0 %v12039
    %v13094 = vpop.f32.mrf.mxu0
    %v13095 = vadd.f32 %v13082, %v13094
    %v13096 = vpop.f32.mrf.mxu0
    %13097 = vdwg.mxu0
    %13098 = vmatpush.bf16.msra.mxu0 %v12821
    %13099 = vmatpush.bf16.msra.mxu0 %v12820
    %13100 = vmatpush.bf16.msra.mxu0 %v12819
    %13101 = vmatpush.bf16.msra.mxu0 %v12818
    %13102 = vmatpush.bf16.msra.mxu0 %v12817
    %13103 = vmatpush.bf16.msra.mxu0 %v12816
    %13104 = vmatpush.bf16.msra.mxu0 %v12815
    %13105 = vmatpush.bf16.msra.mxu0 %v12814
    %13106 = vmatmul.bf16.gmra.mxu0 %v12040
    %v13107 = vpop.f32.mrf.mxu0
    %v13108 = vadd.f32 %v13095, %v13107
    %v13109 = vpop.f32.mrf.mxu0
    %13110 = vdwg.mxu0
    %13111 = vmatpush.bf16.msra.mxu0 %v12829
    %13112 = vmatpush.bf16.msra.mxu0 %v12828
    %13113 = vmatpush.bf16.msra.mxu0 %v12827
    %13114 = vmatpush.bf16.msra.mxu0 %v12826
    %13115 = vmatpush.bf16.msra.mxu0 %v12825
    %13116 = vmatpush.bf16.msra.mxu0 %v12824
    %13117 = vmatpush.bf16.msra.mxu0 %v12823
    %13118 = vmatpush.bf16.msra.mxu0 %v12822
    %13119 = vmatmul.bf16.gmra.mxu0 %v12041
    %v13120 = vpop.f32.mrf.mxu0
    %v13121 = vadd.f32 %v13108, %v13120
    %v13122 = vpop.f32.mrf.mxu0
    %13123 = vdwg.mxu0
    %v13124 = vmax.f32 %v13121, 0.0
    %v13125 = vld [vmem:[%s6] sm:$0xff]
    %v13126 = vld [vmem:[%s6 + $0x8] sm:$0xff]
    %v13127 = vld [vmem:[%s6 + $0x10] sm:$0xff]
    %v13128 = vld [vmem:[%s6 + $0x18] sm:$0xff]
    %v13129 = vld [vmem:[%s6 + $0x20] sm:$0xff]
    %v13130 = vld [vmem:[%s6 + $0x28] sm:$0xff]
    %v13131 = vld [vmem:[%s6 + $0x30] sm:$0xff]
    %v13132 = vld [vmem:[%s6 + $0x38] sm:$0xff]
    %v13133 = vld [vmem:[%s6 + $0x40] sm:$0xff]
    %v13134 = vld [vmem:[%s6 + $0x48] sm:$0xff]
    %v13135 = vld [vmem:[%s6 + $0x50] sm:$0xff]
    %v13136 = vld [vmem:[%s6 + $0x58] sm:$0xff]
    %v13137 = vld [vmem:[%s6 + $0x60] sm:$0xff]
    %v13138 = vld [vmem:[%s6 + $0x68] sm:$0xff]
    %v13139 = vld [vmem:[%s6 + $0x70] sm:$0xff]
    %v13140 = vld [vmem:[%s6 + $0x78] sm:$0xff]
    %v13141 = vld [vmem:[%s7] sm:$0x1]
    %v13143 = vperm.slane %v13141, 0
    %13145 = vmatpush.msra.mxu0 %v13140
    %13146 = vmatpush.msra.mxu0 %v13139
    %13147 = vmatpush.msra.mxu0 %v13138
    %13148 = vmatpush.msra.mxu0 %v13137
    %13149 = vmatpush.msra.mxu0 %v13136
    %13150 = vmatpush.msra.mxu0 %v13135
    %13151 = vmatpush.msra.mxu0 %v13134
    %13152 = vmatpush.msra.mxu0 %v13133
    %13153 = vmatpush.msra.mxu0 %v13132
    %13154 = vmatpush.msra.mxu0 %v13131
    %13155 = vmatpush.msra.mxu0 %v13130
    %13156 = vmatpush.msra.mxu0 %v13129
    %13157 = vmatpush.msra.mxu0 %v13128
    %13158 = vmatpush.msra.mxu0 %v13127
    %13159 = vmatpush.msra.mxu0 %v13126
    %13160 = vmatpush.msra.mxu0 %v13125
    %13161 = vmatmul.f32.gmra.mxu0 %v13124
    %v13162 = vpop.f32.mrf.mxu0
    %v13163 = vadd.f32 %v13143, %v13162
    %13164 = vdwg.mxu0
    %13165 = vmax.xlane.f32.xlu0 %v13163
    %v13166 = vpop.xlane.xlu0 %13165
    %v13167 = vsub.f32 %v13163, %v13166
    %v13168 = vmul.f32 %v13167, 1.442695
    %v13169 = vpow.pop %v13168
    %13170 = vadd.xlane.f32.xlu0 %v13169
    %v13171 = vpop.xlane.xlu0 %13170
    %v13172 = vlog2.pop %v13171
    %v13173 = vmul.f32 %v13172, 0.6931472
    %v13174 = vsub.f32 %v13167, %v13173
    %13175 = vst [vmem:[#allocation5] sm:$0xff] %v13174
    // Predicated region
    $region38: #{cnn_forward_pallas.1} parent=1 // pred_check
      _
    $region39: #{cnn_forward_pallas.1} parent=1 // pred_check_branch
      %13177 = sbr.rel (0) target = $region41
    $region40: #{cnn_forward_pallas.1} parent=1 // pred_region
      %13179 = vsyncadd [#allocation4], 0
      %s13181 = sshll.u32 [#allocation5], 4
      %s13182 = int_to_ptr.vmem [resolvable:$true] %s13181
      %s13183 = sshll.u32 %s8, 4
      %s13184 = int_to_ptr.hbm [resolvable:$true] %s13183
      %13186 = dma.vmem_to_hbm [thread:$0]  %s13182, 128, %s13184, [#allocation4]
    $region41: #{cnn_forward_pallas.1} parent=1 // pred_fallthru
      _
    // Predicated region
    $region42: #{cnn_forward_pallas.1} parent=1 // pred_check
      _
    $region43: #{cnn_forward_pallas.1} parent=1 // pred_check_branch
      %13188 = sbr.rel (0) target = $region45
    $region44: #{cnn_forward_pallas.1} parent=1 // pred_region
      %13190 = dma.done [#allocation4], 128
    $region45: #{cnn_forward_pallas.1} parent=1 // pred_fallthru
      _
    %13191 = vsyncpa [#allocation3], 1
    %13192 = vsyncpa [#allocation4], 1

</llo_original>
